<compile_context>
chip_gen: v7x
topology: tpu7x:2x2x1
jax: 0.10.0
libtpu: 0.0.40
codegen_flags: <defaults>
</compile_context>

<pallas_src>
import math

import jax
import jax.numpy as jnp
from jax.experimental import pallas as pl
from jax.experimental.pallas import tpu as pltpu

FEATURE_SIZE = 10   # d_model
NHEAD = 10          # -> head_dim == 1, attention scale == 1/sqrt(1) == 1
NUM_LAYERS = 3
DIM_FF = 2048       # nn.TransformerEncoderLayer default dim_feedforward
LN_EPS = 1e-5
MAX_LEN = 64        # positional-encoding table length (>= any seq len used)


# ---------------------------------------------------------------------------
# Pallas kernel: PE add, 3 encoder layers, decoder linear — all in one call
# ---------------------------------------------------------------------------
def transam_kernel(x_ref, pe_ref, wattn_ref, vec_ref, w1_ref, b1_ref, w2_ref,
                   wdec_ref, o_ref):
    S, B, E = x_ref.shape
    L = wattn_ref.shape[0]
    E3 = 3 * E

    # positional encoding (pe broadcasts over the batch axis); stays seq-first
    x = x_ref[...] + pe_ref[...]                                   # (S, B, E)

    # causal additive mask, built once, with the key (softmax) axis on lanes
    qi = jax.lax.broadcasted_iota(jnp.int32, (S, S), 0)
    kj = jax.lax.broadcasted_iota(jnp.int32, (S, S), 1)
    mask = jnp.where(kj <= qi, 0.0, -1e30).astype(jnp.float32)     # (Sq, Sk)
    mask3 = mask[:, None, :]                                       # (Sq, 1, Sk), hoisted

    def layer_norm(v, w, b):
        mu = jnp.mean(v, axis=-1, keepdims=True)
        d = v - mu
        var = jnp.mean(d * d, axis=-1, keepdims=True)
        return d * jax.lax.rsqrt(var + LN_EPS) * w + b

    wdec = wdec_ref[...]                                           # (E+1, E)

    x2 = x.reshape(S * B, E)                                       # rows = (s, b)
    for l in range(L):                                             # static unroll
        vec = vec_ref[l]       # (9, E): [bq, bk, bv, bo, ln1w, ln1b, b2, ln2w, ln2b]
        wa = wattn_ref[l]      # (E, 4E): [wq | wk | wv | wo]

        # ---- fused QKV projection: one MXU call instead of three ----------
        qkv = jnp.dot(x2, wa[:, :E3], preferred_element_type=jnp.float32)
        q3 = (qkv[:, 0:E] + vec[0:1, :]).reshape(S, B, E)
        k3 = (qkv[:, E:2 * E] + vec[1:2, :]).reshape(S, B, E)
        v3 = (qkv[:, 2 * E:E3] + vec[2:3, :]).reshape(S, B, E)

        # ---- self-attention (nhead == E -> head_dim == 1, scale == 1) -----
        # per-batch outer products with the key axis on lanes; softmax reduces
        # over lanes and is normalised once by a post-sum reciprocal.
        attn_parts = []
        for b in range(B):                                         # tiny, static
            q_b = q3[:, b, :]                                      # (Sq, H)
            kT = k3[:, b, :].T                                     # (H, Sk)
            vT = v3[:, b, :].T                                     # (H, Sk)
            s_b = q_b[:, :, None] * kT[None, :, :] + mask3         # (Sq, H, Sk)
            m_b = jnp.max(s_b, axis=-1)                            # (Sq, H)
            p_b = jnp.exp(s_b - m_b[:, :, None])
            den = jnp.sum(p_b, axis=-1)                            # (Sq, H)
            num = jnp.sum(p_b * vT[None, :, :], axis=-1)           # (Sq, H)
            attn_parts.append(num * pl.reciprocal(den, approx=True))
        attn = jnp.stack(attn_parts, axis=1).reshape(S * B, E)     # (S*B, E)

        attn = (jnp.dot(attn, wa[:, E3:], preferred_element_type=jnp.float32)
                + vec[3:4, :])
        # dropout1 == identity (eval)
        y = layer_norm(x2 + attn, vec[4:5, :], vec[5:6, :])

        # ---- feed forward (bf16 MXU operands, fp32 accumulation) ----------
        h = jnp.dot(y.astype(jnp.bfloat16), w1_ref[l],
                    preferred_element_type=jnp.float32) + b1_ref[l]
        h = jnp.maximum(h, 0.0)                                    # ReLU
        h = jnp.dot(h.astype(jnp.bfloat16), w2_ref[l],
                    preferred_element_type=jnp.float32) + vec[6:7, :]
        # dropout2 == identity (eval)
        x2 = layer_norm(y + h, vec[7:8, :], vec[8:9, :])

    # ---- decoder linear ----------------------------------------------------
    out = (jnp.dot(x2, wdec[:E, :], preferred_element_type=jnp.float32)
           + wdec[E:E + 1, :])
    o_ref[...] = out.reshape(S, B, E)


# ---------------------------------------------------------------------------
# Wrapper / glue (no transposes: kernel consumes and produces seq-first data)
# ---------------------------------------------------------------------------
def _transam_forward(src, kp):
    """src: (S, B, E) float32, seq-first like the PyTorch module."""
    S, B, E = src.shape
    pe_slice = kp["pe"][:S][:, None, :]                            # (S, 1, E)
    args = (src, pe_slice, kp["w_attn"], kp["vecs"],
            kp["w1"], kp["b1"], kp["w2"], kp["wdec"])
    return pl.pallas_call(
        transam_kernel,
        out_shape=jax.ShapeDtypeStruct((S, B, E), jnp.float32),
        in_specs=[pl.BlockSpec(memory_space=pltpu.MemorySpace.VMEM)] * len(args),
        out_specs=pl.BlockSpec(memory_space=pltpu.MemorySpace.VMEM),
    )(*args)


transam_forward = jax.jit(_transam_forward)


def positional_encoding(max_len, d_model):
    position = jnp.arange(max_len, dtype=jnp.float32)[:, None]
    div_term = jnp.exp(jnp.arange(0, d_model, 2, dtype=jnp.float32)
                       * (-math.log(10000.0) / d_model))
    pe = jnp.zeros((max_len, d_model), jnp.float32)
    pe = pe.at[:, 0::2].set(jnp.sin(position * div_term))
    pe = pe.at[:, 1::2].set(jnp.cos(position * div_term))
    return pe


def make_params(key):
    E, F, L = FEATURE_SIZE, DIM_FF, NUM_LAYERS
    ks = iter(jax.random.split(key, 20))

    def u(k, shape, scale=0.1):
        return jax.random.uniform(k, shape, jnp.float32, -scale, scale)

    p = {
        "pe":   positional_encoding(MAX_LEN, E),
        # weights stored pre-transposed so the kernel does x @ W_t directly
        "wq":   u(next(ks), (L, E, E)), "wk": u(next(ks), (L, E, E)),
        "wv":   u(next(ks), (L, E, E)), "wo": u(next(ks), (L, E, E)),
        "bq":   u(next(ks), (L, E), 0.05), "bk": u(next(ks), (L, E), 0.05),
        "bv":   u(next(ks), (L, E), 0.05), "bo": u(next(ks), (L, E), 0.05),
        "w1":   u(next(ks), (L, E, F)), "b1": u(next(ks), (L, F), 0.05),
        "w2":   u(next(ks), (L, F, E)), "b2": u(next(ks), (L, E), 0.05),
        "ln1w": 1.0 + u(next(ks), (L, E), 0.05), "ln1b": u(next(ks), (L, E), 0.05),
        "ln2w": 1.0 + u(next(ks), (L, E), 0.05), "ln2b": u(next(ks), (L, E), 0.05),
        # decoder: weight ~ U(-0.1, 0.1), bias zero (per TransAm.init_weights)
        "wd":   u(next(ks), (E, E)),
        "bd":   jnp.zeros((E,), jnp.float32),
    }
    return p


def pack_params(p):
    """Pack the many small tensors into a few kernel inputs (fewer DMAs)."""
    E = FEATURE_SIZE
    w_attn = jnp.concatenate([p["wq"], p["wk"], p["wv"], p["wo"]], axis=-1)  # (L,E,4E)
    vecs = jnp.stack([p["bq"], p["bk"], p["bv"], p["bo"],
                      p["ln1w"], p["ln1b"], p["b2"], p["ln2w"], p["ln2b"]],
                     axis=1)                                                 # (L,9,E)
    wdec = jnp.concatenate([p["wd"], p["bd"][None, :]], axis=0)              # (E+1,E)
    return {
        "pe":     p["pe"],
        "w_attn": w_attn,
        "vecs":   vecs,
        "w1":     p["w1"].astype(jnp.bfloat16),                              # (L,E,F)
        "b1":     p["b1"][:, None, :],                                       # (L,1,F)
        "w2":     p["w2"].astype(jnp.bfloat16),                              # (L,F,E)
        "wdec":   wdec,
    }


# ---------------------------------------------------------------------------
# Pure-JAX reference (numerical sanity check; ff_dtype selects FF precision)
# ---------------------------------------------------------------------------
def transam_reference(src, p, ff_dtype=jnp.float32):
    S, B, E = src.shape
    x = src + p["pe"][:S][:, None, :]
    qi = jnp.arange(S)[:, None]
    kj = jnp.arange(S)[None, :]
    mask = jnp.where(kj <= qi, 0.0, -1e30).astype(jnp.float32)

    def ln(v, w, b):
        mu = jnp.mean(v, -1, keepdims=True)
        var = jnp.mean((v - mu) ** 2, -1, keepdims=True)
        return (v - mu) / jnp.sqrt(var + LN_EPS) * w + b

    x2 = x.reshape(S * B, E)
    for l in range(NUM_LAYERS):
        q = (x2 @ p["wq"][l] + p["bq"][l]).reshape(S, B, E)
        k = (x2 @ p["wk"][l] + p["bk"][l]).reshape(S, B, E)
        v = (x2 @ p["wv"][l] + p["bv"][l]).reshape(S, B, E)
        scores = jnp.einsum("ibh,jbh->bhij", q, k) + mask[None, None]
        pr = jax.nn.softmax(scores, axis=-1)
        attn = jnp.einsum("bhij,jbh->ibh", pr, v).reshape(S * B, E)
        attn = attn @ p["wo"][l] + p["bo"][l]
        y = ln(x2 + attn, p["ln1w"][l], p["ln1b"][l])
        h = jnp.dot(y.astype(ff_dtype), p["w1"][l].astype(ff_dtype),
                    preferred_element_type=jnp.float32) + p["b1"][l]
        h = jnp.maximum(h, 0.0)
        h = jnp.dot(h.astype(ff_dtype), p["w2"][l].astype(ff_dtype),
                    preferred_element_type=jnp.float32) + p["b2"][l]
        x2 = ln(y + h, p["ln2w"][l], p["ln2b"][l])
    out = x2 @ p["wd"] + p["bd"]
    return out.reshape(S, B, E)


if __name__ == "__main__":
    key = jax.random.PRNGKey(0)
    k_param, k_src = jax.random.split(key)
    params = make_params(k_param)
    kp = pack_params(params)

    S, B, E = 8, 2, FEATURE_SIZE
    src = jax.random.normal(k_src, (S, B, E), jnp.float32)

    out = jax.block_until_ready(transam_forward(src, kp))
    assert out.shape == (S, B, E)
    assert not bool(jnp.any(jnp.isnan(out)))

    # tight check against a reference using the same bf16 FF operands
    ref_bf = transam_reference(src, params, ff_dtype=jnp.bfloat16)
    err_bf = float(jnp.max(jnp.abs(out - ref_bf)))
    assert err_bf < 1e-2, f"mismatch vs bf16-FF reference: {err_bf}"

    # module-semantics check against the pure fp32 reference
    ref32 = transam_reference(src, params, ff_dtype=jnp.float32)
    err32 = float(jnp.max(jnp.abs(out - ref32)))
    assert err32 < 3e-2, f"mismatch vs fp32 reference: {err32}"

    print("KERNEL_OK")
</pallas_src>

<mosaic_0001>
module attributes {stable_mosaic.version = 11 : i64} {
  func.func @transam_kernel(%arg0: memref<8x2x10xf32, #tpu.memory_space<vmem>>, %arg1: memref<8x1x10xf32, #tpu.memory_space<vmem>>, %arg2: memref<3x10x40xf32, #tpu.memory_space<vmem>>, %arg3: memref<3x9x10xf32, #tpu.memory_space<vmem>>, %arg4: memref<3x10x2048xbf16, #tpu.memory_space<vmem>>, %arg5: memref<3x1x2048xf32, #tpu.memory_space<vmem>>, %arg6: memref<3x2048x10xbf16, #tpu.memory_space<vmem>>, %arg7: memref<11x10xf32, #tpu.memory_space<vmem>>, %arg8: memref<8x2x10xf32, #tpu.memory_space<vmem>>) attributes {dimension_semantics = [], scalar_prefetch = 0 : i64, scratch_operands = 0 : i64, tpu.core_type = #tpu.core_type<tc>} {
    %c0 = arith.constant 0 : index
    %c0_0 = arith.constant 0 : index
    %c0_1 = arith.constant 0 : index
    %0 = vector.load %arg0[%c0, %c0_0, %c0_1] : memref<8x2x10xf32, #tpu.memory_space<vmem>>, vector<8x2x10xf32>
    %c0_2 = arith.constant 0 : index
    %c0_3 = arith.constant 0 : index
    %c0_4 = arith.constant 0 : index
    %1 = vector.load %arg1[%c0_2, %c0_3, %c0_4] : memref<8x1x10xf32, #tpu.memory_space<vmem>>, vector<8x1x10xf32>
    %2 = vector.broadcast %1 : vector<8x1x10xf32> to vector<8x2x10xf32>
    %3 = arith.addf %0, %2 : vector<8x2x10xf32>
    %4 = tpu.iota {dimensions = array<i32: 0>} : vector<8x8xi32>
    %5 = tpu.iota {dimensions = array<i32: 1>} : vector<8x8xi32>
    %6 = arith.cmpi sle, %5, %4 : vector<8x8xi32>
    %cst = arith.constant 0.000000e+00 : f32
    %cst_5 = arith.constant -1.000000e+30 : f32
    %7 = vector.broadcast %cst : f32 to vector<8x8xf32>
    %8 = vector.broadcast %cst_5 : f32 to vector<8x8xf32>
    %9 = arith.select %6, %7, %8 : vector<8x8xi1>, vector<8x8xf32>
    %10 = vector.shape_cast %9 : vector<8x8xf32> to vector<8x1x8xf32>
    %c0_6 = arith.constant 0 : index
    %c0_7 = arith.constant 0 : index
    %11 = vector.load %arg7[%c0_6, %c0_7] : memref<11x10xf32, #tpu.memory_space<vmem>>, vector<11x10xf32>
    %12 = vector.shape_cast %3 : vector<8x2x10xf32> to vector<16x10xf32>
    %c0_8 = arith.constant 0 : index
    %c0_9 = arith.constant 0 : index
    %c0_10 = arith.constant 0 : index
    %13 = vector.load %arg3[%c0_8, %c0_9, %c0_10] : memref<3x9x10xf32, #tpu.memory_space<vmem>>, vector<1x9x10xf32>
    %14 = vector.shape_cast %13 : vector<1x9x10xf32> to vector<9x10xf32>
    %c0_11 = arith.constant 0 : index
    %c0_12 = arith.constant 0 : index
    %c0_13 = arith.constant 0 : index
    %15 = vector.load %arg2[%c0_11, %c0_12, %c0_13] : memref<3x10x40xf32, #tpu.memory_space<vmem>>, vector<1x10x40xf32>
    %16 = vector.shape_cast %15 : vector<1x10x40xf32> to vector<10x40xf32>
    %17 = vector.extract_strided_slice %16 {offsets = [0, 0], sizes = [10, 30], strides = [1, 1]} : vector<10x40xf32> to vector<10x30xf32>
    %cst_14 = arith.constant dense<0.000000e+00> : vector<16x30xf32>
    %18 = tpu.matmul %12, %17, %cst_14 {dimension_numbers = #tpu.dot_dimension_numbers<[1], [0], [0], [1], [0, 0, 1, 1], [], []>} : vector<16x10xf32>, vector<10x30xf32>, vector<16x30xf32> -> vector<16x30xf32>
    %19 = vector.extract_strided_slice %18 {offsets = [0, 0], sizes = [16, 10], strides = [1, 1]} : vector<16x30xf32> to vector<16x10xf32>
    %20 = vector.extract_strided_slice %14 {offsets = [0, 0], sizes = [1, 10], strides = [1, 1]} : vector<9x10xf32> to vector<1x10xf32>
    %21 = vector.broadcast %20 : vector<1x10xf32> to vector<16x10xf32>
    %22 = arith.addf %19, %21 : vector<16x10xf32>
    %23 = vector.shape_cast %22 : vector<16x10xf32> to vector<8x2x10xf32>
    %24 = vector.extract_strided_slice %18 {offsets = [0, 10], sizes = [16, 10], strides = [1, 1]} : vector<16x30xf32> to vector<16x10xf32>
    %25 = vector.extract_strided_slice %14 {offsets = [1, 0], sizes = [1, 10], strides = [1, 1]} : vector<9x10xf32> to vector<1x10xf32>
    %26 = vector.broadcast %25 : vector<1x10xf32> to vector<16x10xf32>
    %27 = arith.addf %24, %26 : vector<16x10xf32>
    %28 = vector.shape_cast %27 : vector<16x10xf32> to vector<8x2x10xf32>
    %29 = vector.extract_strided_slice %18 {offsets = [0, 20], sizes = [16, 10], strides = [1, 1]} : vector<16x30xf32> to vector<16x10xf32>
    %30 = vector.extract_strided_slice %14 {offsets = [2, 0], sizes = [1, 10], strides = [1, 1]} : vector<9x10xf32> to vector<1x10xf32>
    %31 = vector.broadcast %30 : vector<1x10xf32> to vector<16x10xf32>
    %32 = arith.addf %29, %31 : vector<16x10xf32>
    %33 = vector.shape_cast %32 : vector<16x10xf32> to vector<8x2x10xf32>
    %34 = vector.extract_strided_slice %23 {offsets = [0, 0, 0], sizes = [8, 1, 10], strides = [1, 1, 1]} : vector<8x2x10xf32> to vector<8x1x10xf32>
    %35 = vector.shape_cast %34 : vector<8x1x10xf32> to vector<8x10xf32>
    %36 = vector.extract_strided_slice %28 {offsets = [0, 0, 0], sizes = [8, 1, 10], strides = [1, 1, 1]} : vector<8x2x10xf32> to vector<8x1x10xf32>
    %37 = vector.shape_cast %36 : vector<8x1x10xf32> to vector<8x10xf32>
    %38 = tpu.transpose %37, [1, 0] : vector<8x10xf32> -> vector<10x8xf32>
    %39 = vector.extract_strided_slice %33 {offsets = [0, 0, 0], sizes = [8, 1, 10], strides = [1, 1, 1]} : vector<8x2x10xf32> to vector<8x1x10xf32>
    %40 = vector.shape_cast %39 : vector<8x1x10xf32> to vector<8x10xf32>
    %41 = tpu.transpose %40, [1, 0] : vector<8x10xf32> -> vector<10x8xf32>
    %42 = vector.shape_cast %35 : vector<8x10xf32> to vector<8x10x1xf32>
    %43 = vector.shape_cast %38 : vector<10x8xf32> to vector<1x10x8xf32>
    %44 = vector.broadcast %42 : vector<8x10x1xf32> to vector<8x10x8xf32>
    %45 = vector.broadcast %43 : vector<1x10x8xf32> to vector<8x10x8xf32>
    %46 = arith.mulf %44, %45 : vector<8x10x8xf32>
    %47 = vector.broadcast %10 : vector<8x1x8xf32> to vector<8x10x8xf32>
    %48 = arith.addf %46, %47 : vector<8x10x8xf32>
    %cst_15 = arith.constant dense<0xFF800000> : vector<8x10xf32>
    %49 = vector.multi_reduction <maximumf>, %48, %cst_15 [2] : vector<8x10x8xf32> to vector<8x10xf32>
    %50 = vector.shape_cast %49 : vector<8x10xf32> to vector<8x10x1xf32>
    %51 = vector.broadcast %50 : vector<8x10x1xf32> to vector<8x10x8xf32>
    %52 = arith.subf %48, %51 : vector<8x10x8xf32>
    %53 = math.exp %52 : vector<8x10x8xf32>
    %cst_16 = arith.constant dense<0.000000e+00> : vector<8x10xf32>
    %54 = vector.multi_reduction <add>, %53, %cst_16 [2] : vector<8x10x8xf32> to vector<8x10xf32>
    %55 = vector.shape_cast %41 : vector<10x8xf32> to vector<1x10x8xf32>
    %56 = vector.broadcast %55 : vector<1x10x8xf32> to vector<8x10x8xf32>
    %57 = arith.mulf %53, %56 : vector<8x10x8xf32>
    %cst_17 = arith.constant dense<0.000000e+00> : vector<8x10xf32>
    %58 = vector.multi_reduction <add>, %57, %cst_17 [2] : vector<8x10x8xf32> to vector<8x10xf32>
    %59 = tpu.reciprocal %54 {approx = true} : vector<8x10xf32> -> vector<8x10xf32>
    %60 = arith.mulf %58, %59 : vector<8x10xf32>
    %61 = vector.extract_strided_slice %23 {offsets = [0, 1, 0], sizes = [8, 1, 10], strides = [1, 1, 1]} : vector<8x2x10xf32> to vector<8x1x10xf32>
    %62 = vector.shape_cast %61 : vector<8x1x10xf32> to vector<8x10xf32>
    %63 = vector.extract_strided_slice %28 {offsets = [0, 1, 0], sizes = [8, 1, 10], strides = [1, 1, 1]} : vector<8x2x10xf32> to vector<8x1x10xf32>
    %64 = vector.shape_cast %63 : vector<8x1x10xf32> to vector<8x10xf32>
    %65 = tpu.transpose %64, [1, 0] : vector<8x10xf32> -> vector<10x8xf32>
    %66 = vector.extract_strided_slice %33 {offsets = [0, 1, 0], sizes = [8, 1, 10], strides = [1, 1, 1]} : vector<8x2x10xf32> to vector<8x1x10xf32>
    %67 = vector.shape_cast %66 : vector<8x1x10xf32> to vector<8x10xf32>
    %68 = tpu.transpose %67, [1, 0] : vector<8x10xf32> -> vector<10x8xf32>
    %69 = vector.shape_cast %62 : vector<8x10xf32> to vector<8x10x1xf32>
    %70 = vector.shape_cast %65 : vector<10x8xf32> to vector<1x10x8xf32>
    %71 = vector.broadcast %69 : vector<8x10x1xf32> to vector<8x10x8xf32>
    %72 = vector.broadcast %70 : vector<1x10x8xf32> to vector<8x10x8xf32>
    %73 = arith.mulf %71, %72 : vector<8x10x8xf32>
    %74 = vector.broadcast %10 : vector<8x1x8xf32> to vector<8x10x8xf32>
    %75 = arith.addf %73, %74 : vector<8x10x8xf32>
    %cst_18 = arith.constant dense<0xFF800000> : vector<8x10xf32>
    %76 = vector.multi_reduction <maximumf>, %75, %cst_18 [2] : vector<8x10x8xf32> to vector<8x10xf32>
    %77 = vector.shape_cast %76 : vector<8x10xf32> to vector<8x10x1xf32>
    %78 = vector.broadcast %77 : vector<8x10x1xf32> to vector<8x10x8xf32>
    %79 = arith.subf %75, %78 : vector<8x10x8xf32>
    %80 = math.exp %79 : vector<8x10x8xf32>
    %cst_19 = arith.constant dense<0.000000e+00> : vector<8x10xf32>
    %81 = vector.multi_reduction <add>, %80, %cst_19 [2] : vector<8x10x8xf32> to vector<8x10xf32>
    %82 = vector.shape_cast %68 : vector<10x8xf32> to vector<1x10x8xf32>
    %83 = vector.broadcast %82 : vector<1x10x8xf32> to vector<8x10x8xf32>
    %84 = arith.mulf %80, %83 : vector<8x10x8xf32>
    %cst_20 = arith.constant dense<0.000000e+00> : vector<8x10xf32>
    %85 = vector.multi_reduction <add>, %84, %cst_20 [2] : vector<8x10x8xf32> to vector<8x10xf32>
    %86 = tpu.reciprocal %81 {approx = true} : vector<8x10xf32> -> vector<8x10xf32>
    %87 = arith.mulf %85, %86 : vector<8x10xf32>
    %88 = vector.shape_cast %60 : vector<8x10xf32> to vector<8x1x10xf32>
    %89 = vector.shape_cast %87 : vector<8x10xf32> to vector<8x1x10xf32>
    %90 = tpu.concatenate %88, %89 in 1 : vector<8x1x10xf32>, vector<8x1x10xf32> -> vector<8x2x10xf32>
    %91 = vector.shape_cast %90 : vector<8x2x10xf32> to vector<16x10xf32>
    %92 = vector.extract_strided_slice %16 {offsets = [0, 30], sizes = [10, 10], strides = [1, 1]} : vector<10x40xf32> to vector<10x10xf32>
    %cst_21 = arith.constant dense<0.000000e+00> : vector<16x10xf32>
    %93 = tpu.matmul %91, %92, %cst_21 {dimension_numbers = #tpu.dot_dimension_numbers<[1], [0], [0], [1], [0, 0, 1, 1], [], []>} : vector<16x10xf32>, vector<10x10xf32>, vector<16x10xf32> -> vector<16x10xf32>
    %94 = vector.extract_strided_slice %14 {offsets = [3, 0], sizes = [1, 10], strides = [1, 1]} : vector<9x10xf32> to vector<1x10xf32>
    %95 = vector.broadcast %94 : vector<1x10xf32> to vector<16x10xf32>
    %96 = arith.addf %93, %95 : vector<16x10xf32>
    %97 = arith.addf %12, %96 : vector<16x10xf32>
    %98 = vector.extract_strided_slice %14 {offsets = [4, 0], sizes = [1, 10], strides = [1, 1]} : vector<9x10xf32> to vector<1x10xf32>
    %99 = vector.extract_strided_slice %14 {offsets = [5, 0], sizes = [1, 10], strides = [1, 1]} : vector<9x10xf32> to vector<1x10xf32>
    %cst_22 = arith.constant dense<0.000000e+00> : vector<16xf32>
    %100 = vector.multi_reduction <add>, %97, %cst_22 [1] : vector<16x10xf32> to vector<16xf32>
    %101 = vector.shape_cast %100 : vector<16xf32> to vector<16x1xf32>
    %cst_23 = arith.constant 1.000000e+01 : f32
    %102 = vector.broadcast %cst_23 : f32 to vector<16x1xf32>
    %103 = arith.divf %101, %102 : vector<16x1xf32>
    %104 = vector.broadcast %103 : vector<16x1xf32> to vector<16x10xf32>
    %105 = arith.subf %97, %104 : vector<16x10xf32>
    %106 = arith.mulf %105, %105 : vector<16x10xf32>
    %cst_24 = arith.constant dense<0.000000e+00> : vector<16xf32>
    %107 = vector.multi_reduction <add>, %106, %cst_24 [1] : vector<16x10xf32> to vector<16xf32>
    %108 = vector.shape_cast %107 : vector<16xf32> to vector<16x1xf32>
    %cst_25 = arith.constant 1.000000e+01 : f32
    %109 = vector.broadcast %cst_25 : f32 to vector<16x1xf32>
    %110 = arith.divf %108, %109 : vector<16x1xf32>
    %cst_26 = arith.constant 9.99999974E-6 : f32
    %111 = vector.broadcast %cst_26 : f32 to vector<16x1xf32>
    %112 = arith.addf %110, %111 : vector<16x1xf32>
    %113 = math.rsqrt %112 : vector<16x1xf32>
    %114 = vector.broadcast %113 : vector<16x1xf32> to vector<16x10xf32>
    %115 = arith.mulf %105, %114 : vector<16x10xf32>
    %116 = vector.broadcast %98 : vector<1x10xf32> to vector<16x10xf32>
    %117 = arith.mulf %115, %116 : vector<16x10xf32>
    %118 = vector.broadcast %99 : vector<1x10xf32> to vector<16x10xf32>
    %119 = arith.addf %117, %118 : vector<16x10xf32>
    %120 = arith.truncf %119 : vector<16x10xf32> to vector<16x10xbf16>
    %c0_27 = arith.constant 0 : index
    %c0_28 = arith.constant 0 : index
    %c0_29 = arith.constant 0 : index
    %121 = vector.load %arg4[%c0_27, %c0_28, %c0_29] : memref<3x10x2048xbf16, #tpu.memory_space<vmem>>, vector<1x10x2048xbf16>
    %122 = vector.shape_cast %121 : vector<1x10x2048xbf16> to vector<10x2048xbf16>
    %cst_30 = arith.constant dense<0.000000e+00> : vector<16x2048xf32>
    %123 = tpu.matmul %120, %122, %cst_30 {dimension_numbers = #tpu.dot_dimension_numbers<[1], [0], [0], [1], [0, 0, 1, 1], [], []>} : vector<16x10xbf16>, vector<10x2048xbf16>, vector<16x2048xf32> -> vector<16x2048xf32>
    %c0_31 = arith.constant 0 : index
    %c0_32 = arith.constant 0 : index
    %c0_33 = arith.constant 0 : index
    %124 = vector.load %arg5[%c0_31, %c0_32, %c0_33] : memref<3x1x2048xf32, #tpu.memory_space<vmem>>, vector<1x1x2048xf32>
    %125 = vector.shape_cast %124 : vector<1x1x2048xf32> to vector<1x2048xf32>
    %126 = vector.broadcast %125 : vector<1x2048xf32> to vector<16x2048xf32>
    %127 = arith.addf %123, %126 : vector<16x2048xf32>
    %cst_34 = arith.constant 0.000000e+00 : f32
    %128 = vector.broadcast %cst_34 : f32 to vector<16x2048xf32>
    %129 = arith.maximumf %127, %128 : vector<16x2048xf32>
    %130 = arith.truncf %129 : vector<16x2048xf32> to vector<16x2048xbf16>
    %c0_35 = arith.constant 0 : index
    %c0_36 = arith.constant 0 : index
    %c0_37 = arith.constant 0 : index
    %131 = vector.load %arg6[%c0_35, %c0_36, %c0_37] : memref<3x2048x10xbf16, #tpu.memory_space<vmem>>, vector<1x2048x10xbf16>
    %132 = vector.shape_cast %131 : vector<1x2048x10xbf16> to vector<2048x10xbf16>
    %cst_38 = arith.constant dense<0.000000e+00> : vector<16x10xf32>
    %133 = tpu.matmul %130, %132, %cst_38 {dimension_numbers = #tpu.dot_dimension_numbers<[1], [0], [0], [1], [0, 0, 1, 1], [], []>} : vector<16x2048xbf16>, vector<2048x10xbf16>, vector<16x10xf32> -> vector<16x10xf32>
    %134 = vector.extract_strided_slice %14 {offsets = [6, 0], sizes = [1, 10], strides = [1, 1]} : vector<9x10xf32> to vector<1x10xf32>
    %135 = vector.broadcast %134 : vector<1x10xf32> to vector<16x10xf32>
    %136 = arith.addf %133, %135 : vector<16x10xf32>
    %137 = arith.addf %119, %136 : vector<16x10xf32>
    %138 = vector.extract_strided_slice %14 {offsets = [7, 0], sizes = [1, 10], strides = [1, 1]} : vector<9x10xf32> to vector<1x10xf32>
    %139 = vector.extract_strided_slice %14 {offsets = [8, 0], sizes = [1, 10], strides = [1, 1]} : vector<9x10xf32> to vector<1x10xf32>
    %cst_39 = arith.constant dense<0.000000e+00> : vector<16xf32>
    %140 = vector.multi_reduction <add>, %137, %cst_39 [1] : vector<16x10xf32> to vector<16xf32>
    %141 = vector.shape_cast %140 : vector<16xf32> to vector<16x1xf32>
    %cst_40 = arith.constant 1.000000e+01 : f32
    %142 = vector.broadcast %cst_40 : f32 to vector<16x1xf32>
    %143 = arith.divf %141, %142 : vector<16x1xf32>
    %144 = vector.broadcast %143 : vector<16x1xf32> to vector<16x10xf32>
    %145 = arith.subf %137, %144 : vector<16x10xf32>
    %146 = arith.mulf %145, %145 : vector<16x10xf32>
    %cst_41 = arith.constant dense<0.000000e+00> : vector<16xf32>
    %147 = vector.multi_reduction <add>, %146, %cst_41 [1] : vector<16x10xf32> to vector<16xf32>
    %148 = vector.shape_cast %147 : vector<16xf32> to vector<16x1xf32>
    %cst_42 = arith.constant 1.000000e+01 : f32
    %149 = vector.broadcast %cst_42 : f32 to vector<16x1xf32>
    %150 = arith.divf %148, %149 : vector<16x1xf32>
    %cst_43 = arith.constant 9.99999974E-6 : f32
    %151 = vector.broadcast %cst_43 : f32 to vector<16x1xf32>
    %152 = arith.addf %150, %151 : vector<16x1xf32>
    %153 = math.rsqrt %152 : vector<16x1xf32>
    %154 = vector.broadcast %153 : vector<16x1xf32> to vector<16x10xf32>
    %155 = arith.mulf %145, %154 : vector<16x10xf32>
    %156 = vector.broadcast %138 : vector<1x10xf32> to vector<16x10xf32>
    %157 = arith.mulf %155, %156 : vector<16x10xf32>
    %158 = vector.broadcast %139 : vector<1x10xf32> to vector<16x10xf32>
    %159 = arith.addf %157, %158 : vector<16x10xf32>
    %c1 = arith.constant 1 : index
    %c0_44 = arith.constant 0 : index
    %c0_45 = arith.constant 0 : index
    %160 = vector.load %arg3[%c1, %c0_44, %c0_45] : memref<3x9x10xf32, #tpu.memory_space<vmem>>, vector<1x9x10xf32>
    %161 = vector.shape_cast %160 : vector<1x9x10xf32> to vector<9x10xf32>
    %c1_46 = arith.constant 1 : index
    %c0_47 = arith.constant 0 : index
    %c0_48 = arith.constant 0 : index
    %162 = vector.load %arg2[%c1_46, %c0_47, %c0_48] : memref<3x10x40xf32, #tpu.memory_space<vmem>>, vector<1x10x40xf32>
    %163 = vector.shape_cast %162 : vector<1x10x40xf32> to vector<10x40xf32>
    %164 = vector.extract_strided_slice %163 {offsets = [0, 0], sizes = [10, 30], strides = [1, 1]} : vector<10x40xf32> to vector<10x30xf32>
    %cst_49 = arith.constant dense<0.000000e+00> : vector<16x30xf32>
    %165 = tpu.matmul %159, %164, %cst_49 {dimension_numbers = #tpu.dot_dimension_numbers<[1], [0], [0], [1], [0, 0, 1, 1], [], []>} : vector<16x10xf32>, vector<10x30xf32>, vector<16x30xf32> -> vector<16x30xf32>
    %166 = vector.extract_strided_slice %165 {offsets = [0, 0], sizes = [16, 10], strides = [1, 1]} : vector<16x30xf32> to vector<16x10xf32>
    %167 = vector.extract_strided_slice %161 {offsets = [0, 0], sizes = [1, 10], strides = [1, 1]} : vector<9x10xf32> to vector<1x10xf32>
    %168 = vector.broadcast %167 : vector<1x10xf32> to vector<16x10xf32>
    %169 = arith.addf %166, %168 : vector<16x10xf32>
    %170 = vector.shape_cast %169 : vector<16x10xf32> to vector<8x2x10xf32>
    %171 = vector.extract_strided_slice %165 {offsets = [0, 10], sizes = [16, 10], strides = [1, 1]} : vector<16x30xf32> to vector<16x10xf32>
    %172 = vector.extract_strided_slice %161 {offsets = [1, 0], sizes = [1, 10], strides = [1, 1]} : vector<9x10xf32> to vector<1x10xf32>
    %173 = vector.broadcast %172 : vector<1x10xf32> to vector<16x10xf32>
    %174 = arith.addf %171, %173 : vector<16x10xf32>
    %175 = vector.shape_cast %174 : vector<16x10xf32> to vector<8x2x10xf32>
    %176 = vector.extract_strided_slice %165 {offsets = [0, 20], sizes = [16, 10], strides = [1, 1]} : vector<16x30xf32> to vector<16x10xf32>
    %177 = vector.extract_strided_slice %161 {offsets = [2, 0], sizes = [1, 10], strides = [1, 1]} : vector<9x10xf32> to vector<1x10xf32>
    %178 = vector.broadcast %177 : vector<1x10xf32> to vector<16x10xf32>
    %179 = arith.addf %176, %178 : vector<16x10xf32>
    %180 = vector.shape_cast %179 : vector<16x10xf32> to vector<8x2x10xf32>
    %181 = vector.extract_strided_slice %170 {offsets = [0, 0, 0], sizes = [8, 1, 10], strides = [1, 1, 1]} : vector<8x2x10xf32> to vector<8x1x10xf32>
    %182 = vector.shape_cast %181 : vector<8x1x10xf32> to vector<8x10xf32>
    %183 = vector.extract_strided_slice %175 {offsets = [0, 0, 0], sizes = [8, 1, 10], strides = [1, 1, 1]} : vector<8x2x10xf32> to vector<8x1x10xf32>
    %184 = vector.shape_cast %183 : vector<8x1x10xf32> to vector<8x10xf32>
    %185 = tpu.transpose %184, [1, 0] : vector<8x10xf32> -> vector<10x8xf32>
    %186 = vector.extract_strided_slice %180 {offsets = [0, 0, 0], sizes = [8, 1, 10], strides = [1, 1, 1]} : vector<8x2x10xf32> to vector<8x1x10xf32>
    %187 = vector.shape_cast %186 : vector<8x1x10xf32> to vector<8x10xf32>
    %188 = tpu.transpose %187, [1, 0] : vector<8x10xf32> -> vector<10x8xf32>
    %189 = vector.shape_cast %182 : vector<8x10xf32> to vector<8x10x1xf32>
    %190 = vector.shape_cast %185 : vector<10x8xf32> to vector<1x10x8xf32>
    %191 = vector.broadcast %189 : vector<8x10x1xf32> to vector<8x10x8xf32>
    %192 = vector.broadcast %190 : vector<1x10x8xf32> to vector<8x10x8xf32>
    %193 = arith.mulf %191, %192 : vector<8x10x8xf32>
    %194 = vector.broadcast %10 : vector<8x1x8xf32> to vector<8x10x8xf32>
    %195 = arith.addf %193, %194 : vector<8x10x8xf32>
    %cst_50 = arith.constant dense<0xFF800000> : vector<8x10xf32>
    %196 = vector.multi_reduction <maximumf>, %195, %cst_50 [2] : vector<8x10x8xf32> to vector<8x10xf32>
    %197 = vector.shape_cast %196 : vector<8x10xf32> to vector<8x10x1xf32>
    %198 = vector.broadcast %197 : vector<8x10x1xf32> to vector<8x10x8xf32>
    %199 = arith.subf %195, %198 : vector<8x10x8xf32>
    %200 = math.exp %199 : vector<8x10x8xf32>
    %cst_51 = arith.constant dense<0.000000e+00> : vector<8x10xf32>
    %201 = vector.multi_reduction <add>, %200, %cst_51 [2] : vector<8x10x8xf32> to vector<8x10xf32>
    %202 = vector.shape_cast %188 : vector<10x8xf32> to vector<1x10x8xf32>
    %203 = vector.broadcast %202 : vector<1x10x8xf32> to vector<8x10x8xf32>
    %204 = arith.mulf %200, %203 : vector<8x10x8xf32>
    %cst_52 = arith.constant dense<0.000000e+00> : vector<8x10xf32>
    %205 = vector.multi_reduction <add>, %204, %cst_52 [2] : vector<8x10x8xf32> to vector<8x10xf32>
    %206 = tpu.reciprocal %201 {approx = true} : vector<8x10xf32> -> vector<8x10xf32>
    %207 = arith.mulf %205, %206 : vector<8x10xf32>
    %208 = vector.extract_strided_slice %170 {offsets = [0, 1, 0], sizes = [8, 1, 10], strides = [1, 1, 1]} : vector<8x2x10xf32> to vector<8x1x10xf32>
    %209 = vector.shape_cast %208 : vector<8x1x10xf32> to vector<8x10xf32>
    %210 = vector.extract_strided_slice %175 {offsets = [0, 1, 0], sizes = [8, 1, 10], strides = [1, 1, 1]} : vector<8x2x10xf32> to vector<8x1x10xf32>
    %211 = vector.shape_cast %210 : vector<8x1x10xf32> to vector<8x10xf32>
    %212 = tpu.transpose %211, [1, 0] : vector<8x10xf32> -> vector<10x8xf32>
    %213 = vector.extract_strided_slice %180 {offsets = [0, 1, 0], sizes = [8, 1, 10], strides = [1, 1, 1]} : vector<8x2x10xf32> to vector<8x1x10xf32>
    %214 = vector.shape_cast %213 : vector<8x1x10xf32> to vector<8x10xf32>
    %215 = tpu.transpose %214, [1, 0] : vector<8x10xf32> -> vector<10x8xf32>
    %216 = vector.shape_cast %209 : vector<8x10xf32> to vector<8x10x1xf32>
    %217 = vector.shape_cast %212 : vector<10x8xf32> to vector<1x10x8xf32>
    %218 = vector.broadcast %216 : vector<8x10x1xf32> to vector<8x10x8xf32>
    %219 = vector.broadcast %217 : vector<1x10x8xf32> to vector<8x10x8xf32>
    %220 = arith.mulf %218, %219 : vector<8x10x8xf32>
    %221 = vector.broadcast %10 : vector<8x1x8xf32> to vector<8x10x8xf32>
    %222 = arith.addf %220, %221 : vector<8x10x8xf32>
    %cst_53 = arith.constant dense<0xFF800000> : vector<8x10xf32>
    %223 = vector.multi_reduction <maximumf>, %222, %cst_53 [2] : vector<8x10x8xf32> to vector<8x10xf32>
    %224 = vector.shape_cast %223 : vector<8x10xf32> to vector<8x10x1xf32>
    %225 = vector.broadcast %224 : vector<8x10x1xf32> to vector<8x10x8xf32>
    %226 = arith.subf %222, %225 : vector<8x10x8xf32>
    %227 = math.exp %226 : vector<8x10x8xf32>
    %cst_54 = arith.constant dense<0.000000e+00> : vector<8x10xf32>
    %228 = vector.multi_reduction <add>, %227, %cst_54 [2] : vector<8x10x8xf32> to vector<8x10xf32>
    %229 = vector.shape_cast %215 : vector<10x8xf32> to vector<1x10x8xf32>
    %230 = vector.broadcast %229 : vector<1x10x8xf32> to vector<8x10x8xf32>
    %231 = arith.mulf %227, %230 : vector<8x10x8xf32>
    %cst_55 = arith.constant dense<0.000000e+00> : vector<8x10xf32>
    %232 = vector.multi_reduction <add>, %231, %cst_55 [2] : vector<8x10x8xf32> to vector<8x10xf32>
    %233 = tpu.reciprocal %228 {approx = true} : vector<8x10xf32> -> vector<8x10xf32>
    %234 = arith.mulf %232, %233 : vector<8x10xf32>
    %235 = vector.shape_cast %207 : vector<8x10xf32> to vector<8x1x10xf32>
    %236 = vector.shape_cast %234 : vector<8x10xf32> to vector<8x1x10xf32>
    %237 = tpu.concatenate %235, %236 in 1 : vector<8x1x10xf32>, vector<8x1x10xf32> -> vector<8x2x10xf32>
    %238 = vector.shape_cast %237 : vector<8x2x10xf32> to vector<16x10xf32>
    %239 = vector.extract_strided_slice %163 {offsets = [0, 30], sizes = [10, 10], strides = [1, 1]} : vector<10x40xf32> to vector<10x10xf32>
    %cst_56 = arith.constant dense<0.000000e+00> : vector<16x10xf32>
    %240 = tpu.matmul %238, %239, %cst_56 {dimension_numbers = #tpu.dot_dimension_numbers<[1], [0], [0], [1], [0, 0, 1, 1], [], []>} : vector<16x10xf32>, vector<10x10xf32>, vector<16x10xf32> -> vector<16x10xf32>
    %241 = vector.extract_strided_slice %161 {offsets = [3, 0], sizes = [1, 10], strides = [1, 1]} : vector<9x10xf32> to vector<1x10xf32>
    %242 = vector.broadcast %241 : vector<1x10xf32> to vector<16x10xf32>
    %243 = arith.addf %240, %242 : vector<16x10xf32>
    %244 = arith.addf %159, %243 : vector<16x10xf32>
    %245 = vector.extract_strided_slice %161 {offsets = [4, 0], sizes = [1, 10], strides = [1, 1]} : vector<9x10xf32> to vector<1x10xf32>
    %246 = vector.extract_strided_slice %161 {offsets = [5, 0], sizes = [1, 10], strides = [1, 1]} : vector<9x10xf32> to vector<1x10xf32>
    %cst_57 = arith.constant dense<0.000000e+00> : vector<16xf32>
    %247 = vector.multi_reduction <add>, %244, %cst_57 [1] : vector<16x10xf32> to vector<16xf32>
    %248 = vector.shape_cast %247 : vector<16xf32> to vector<16x1xf32>
    %cst_58 = arith.constant 1.000000e+01 : f32
    %249 = vector.broadcast %cst_58 : f32 to vector<16x1xf32>
    %250 = arith.divf %248, %249 : vector<16x1xf32>
    %251 = vector.broadcast %250 : vector<16x1xf32> to vector<16x10xf32>
    %252 = arith.subf %244, %251 : vector<16x10xf32>
    %253 = arith.mulf %252, %252 : vector<16x10xf32>
    %cst_59 = arith.constant dense<0.000000e+00> : vector<16xf32>
    %254 = vector.multi_reduction <add>, %253, %cst_59 [1] : vector<16x10xf32> to vector<16xf32>
    %255 = vector.shape_cast %254 : vector<16xf32> to vector<16x1xf32>
    %cst_60 = arith.constant 1.000000e+01 : f32
    %256 = vector.broadcast %cst_60 : f32 to vector<16x1xf32>
    %257 = arith.divf %255, %256 : vector<16x1xf32>
    %cst_61 = arith.constant 9.99999974E-6 : f32
    %258 = vector.broadcast %cst_61 : f32 to vector<16x1xf32>
    %259 = arith.addf %257, %258 : vector<16x1xf32>
    %260 = math.rsqrt %259 : vector<16x1xf32>
    %261 = vector.broadcast %260 : vector<16x1xf32> to vector<16x10xf32>
    %262 = arith.mulf %252, %261 : vector<16x10xf32>
    %263 = vector.broadcast %245 : vector<1x10xf32> to vector<16x10xf32>
    %264 = arith.mulf %262, %263 : vector<16x10xf32>
    %265 = vector.broadcast %246 : vector<1x10xf32> to vector<16x10xf32>
    %266 = arith.addf %264, %265 : vector<16x10xf32>
    %267 = arith.truncf %266 : vector<16x10xf32> to vector<16x10xbf16>
    %c1_62 = arith.constant 1 : index
    %c0_63 = arith.constant 0 : index
    %c0_64 = arith.constant 0 : index
    %268 = vector.load %arg4[%c1_62, %c0_63, %c0_64] : memref<3x10x2048xbf16, #tpu.memory_space<vmem>>, vector<1x10x2048xbf16>
    %269 = vector.shape_cast %268 : vector<1x10x2048xbf16> to vector<10x2048xbf16>
    %cst_65 = arith.constant dense<0.000000e+00> : vector<16x2048xf32>
    %270 = tpu.matmul %267, %269, %cst_65 {dimension_numbers = #tpu.dot_dimension_numbers<[1], [0], [0], [1], [0, 0, 1, 1], [], []>} : vector<16x10xbf16>, vector<10x2048xbf16>, vector<16x2048xf32> -> vector<16x2048xf32>
    %c1_66 = arith.constant 1 : index
    %c0_67 = arith.constant 0 : index
    %c0_68 = arith.constant 0 : index
    %271 = vector.load %arg5[%c1_66, %c0_67, %c0_68] : memref<3x1x2048xf32, #tpu.memory_space<vmem>>, vector<1x1x2048xf32>
    %272 = vector.shape_cast %271 : vector<1x1x2048xf32> to vector<1x2048xf32>
    %273 = vector.broadcast %272 : vector<1x2048xf32> to vector<16x2048xf32>
    %274 = arith.addf %270, %273 : vector<16x2048xf32>
    %cst_69 = arith.constant 0.000000e+00 : f32
    %275 = vector.broadcast %cst_69 : f32 to vector<16x2048xf32>
    %276 = arith.maximumf %274, %275 : vector<16x2048xf32>
    %277 = arith.truncf %276 : vector<16x2048xf32> to vector<16x2048xbf16>
    %c1_70 = arith.constant 1 : index
    %c0_71 = arith.constant 0 : index
    %c0_72 = arith.constant 0 : index
    %278 = vector.load %arg6[%c1_70, %c0_71, %c0_72] : memref<3x2048x10xbf16, #tpu.memory_space<vmem>>, vector<1x2048x10xbf16>
    %279 = vector.shape_cast %278 : vector<1x2048x10xbf16> to vector<2048x10xbf16>
    %cst_73 = arith.constant dense<0.000000e+00> : vector<16x10xf32>
    %280 = tpu.matmul %277, %279, %cst_73 {dimension_numbers = #tpu.dot_dimension_numbers<[1], [0], [0], [1], [0, 0, 1, 1], [], []>} : vector<16x2048xbf16>, vector<2048x10xbf16>, vector<16x10xf32> -> vector<16x10xf32>
    %281 = vector.extract_strided_slice %161 {offsets = [6, 0], sizes = [1, 10], strides = [1, 1]} : vector<9x10xf32> to vector<1x10xf32>
    %282 = vector.broadcast %281 : vector<1x10xf32> to vector<16x10xf32>
    %283 = arith.addf %280, %282 : vector<16x10xf32>
    %284 = arith.addf %266, %283 : vector<16x10xf32>
    %285 = vector.extract_strided_slice %161 {offsets = [7, 0], sizes = [1, 10], strides = [1, 1]} : vector<9x10xf32> to vector<1x10xf32>
    %286 = vector.extract_strided_slice %161 {offsets = [8, 0], sizes = [1, 10], strides = [1, 1]} : vector<9x10xf32> to vector<1x10xf32>
    %cst_74 = arith.constant dense<0.000000e+00> : vector<16xf32>
    %287 = vector.multi_reduction <add>, %284, %cst_74 [1] : vector<16x10xf32> to vector<16xf32>
    %288 = vector.shape_cast %287 : vector<16xf32> to vector<16x1xf32>
    %cst_75 = arith.constant 1.000000e+01 : f32
    %289 = vector.broadcast %cst_75 : f32 to vector<16x1xf32>
    %290 = arith.divf %288, %289 : vector<16x1xf32>
    %291 = vector.broadcast %290 : vector<16x1xf32> to vector<16x10xf32>
    %292 = arith.subf %284, %291 : vector<16x10xf32>
    %293 = arith.mulf %292, %292 : vector<16x10xf32>
    %cst_76 = arith.constant dense<0.000000e+00> : vector<16xf32>
    %294 = vector.multi_reduction <add>, %293, %cst_76 [1] : vector<16x10xf32> to vector<16xf32>
    %295 = vector.shape_cast %294 : vector<16xf32> to vector<16x1xf32>
    %cst_77 = arith.constant 1.000000e+01 : f32
    %296 = vector.broadcast %cst_77 : f32 to vector<16x1xf32>
    %297 = arith.divf %295, %296 : vector<16x1xf32>
    %cst_78 = arith.constant 9.99999974E-6 : f32
    %298 = vector.broadcast %cst_78 : f32 to vector<16x1xf32>
    %299 = arith.addf %297, %298 : vector<16x1xf32>
    %300 = math.rsqrt %299 : vector<16x1xf32>
    %301 = vector.broadcast %300 : vector<16x1xf32> to vector<16x10xf32>
    %302 = arith.mulf %292, %301 : vector<16x10xf32>
    %303 = vector.broadcast %285 : vector<1x10xf32> to vector<16x10xf32>
    %304 = arith.mulf %302, %303 : vector<16x10xf32>
    %305 = vector.broadcast %286 : vector<1x10xf32> to vector<16x10xf32>
    %306 = arith.addf %304, %305 : vector<16x10xf32>
    %c2 = arith.constant 2 : index
    %c0_79 = arith.constant 0 : index
    %c0_80 = arith.constant 0 : index
    %307 = vector.load %arg3[%c2, %c0_79, %c0_80] : memref<3x9x10xf32, #tpu.memory_space<vmem>>, vector<1x9x10xf32>
    %308 = vector.shape_cast %307 : vector<1x9x10xf32> to vector<9x10xf32>
    %c2_81 = arith.constant 2 : index
    %c0_82 = arith.constant 0 : index
    %c0_83 = arith.constant 0 : index
    %309 = vector.load %arg2[%c2_81, %c0_82, %c0_83] : memref<3x10x40xf32, #tpu.memory_space<vmem>>, vector<1x10x40xf32>
    %310 = vector.shape_cast %309 : vector<1x10x40xf32> to vector<10x40xf32>
    %311 = vector.extract_strided_slice %310 {offsets = [0, 0], sizes = [10, 30], strides = [1, 1]} : vector<10x40xf32> to vector<10x30xf32>
    %cst_84 = arith.constant dense<0.000000e+00> : vector<16x30xf32>
    %312 = tpu.matmul %306, %311, %cst_84 {dimension_numbers = #tpu.dot_dimension_numbers<[1], [0], [0], [1], [0, 0, 1, 1], [], []>} : vector<16x10xf32>, vector<10x30xf32>, vector<16x30xf32> -> vector<16x30xf32>
    %313 = vector.extract_strided_slice %312 {offsets = [0, 0], sizes = [16, 10], strides = [1, 1]} : vector<16x30xf32> to vector<16x10xf32>
    %314 = vector.extract_strided_slice %308 {offsets = [0, 0], sizes = [1, 10], strides = [1, 1]} : vector<9x10xf32> to vector<1x10xf32>
    %315 = vector.broadcast %314 : vector<1x10xf32> to vector<16x10xf32>
    %316 = arith.addf %313, %315 : vector<16x10xf32>
    %317 = vector.shape_cast %316 : vector<16x10xf32> to vector<8x2x10xf32>
    %318 = vector.extract_strided_slice %312 {offsets = [0, 10], sizes = [16, 10], strides = [1, 1]} : vector<16x30xf32> to vector<16x10xf32>
    %319 = vector.extract_strided_slice %308 {offsets = [1, 0], sizes = [1, 10], strides = [1, 1]} : vector<9x10xf32> to vector<1x10xf32>
    %320 = vector.broadcast %319 : vector<1x10xf32> to vector<16x10xf32>
    %321 = arith.addf %318, %320 : vector<16x10xf32>
    %322 = vector.shape_cast %321 : vector<16x10xf32> to vector<8x2x10xf32>
    %323 = vector.extract_strided_slice %312 {offsets = [0, 20], sizes = [16, 10], strides = [1, 1]} : vector<16x30xf32> to vector<16x10xf32>
    %324 = vector.extract_strided_slice %308 {offsets = [2, 0], sizes = [1, 10], strides = [1, 1]} : vector<9x10xf32> to vector<1x10xf32>
    %325 = vector.broadcast %324 : vector<1x10xf32> to vector<16x10xf32>
    %326 = arith.addf %323, %325 : vector<16x10xf32>
    %327 = vector.shape_cast %326 : vector<16x10xf32> to vector<8x2x10xf32>
    %328 = vector.extract_strided_slice %317 {offsets = [0, 0, 0], sizes = [8, 1, 10], strides = [1, 1, 1]} : vector<8x2x10xf32> to vector<8x1x10xf32>
    %329 = vector.shape_cast %328 : vector<8x1x10xf32> to vector<8x10xf32>
    %330 = vector.extract_strided_slice %322 {offsets = [0, 0, 0], sizes = [8, 1, 10], strides = [1, 1, 1]} : vector<8x2x10xf32> to vector<8x1x10xf32>
    %331 = vector.shape_cast %330 : vector<8x1x10xf32> to vector<8x10xf32>
    %332 = tpu.transpose %331, [1, 0] : vector<8x10xf32> -> vector<10x8xf32>
    %333 = vector.extract_strided_slice %327 {offsets = [0, 0, 0], sizes = [8, 1, 10], strides = [1, 1, 1]} : vector<8x2x10xf32> to vector<8x1x10xf32>
    %334 = vector.shape_cast %333 : vector<8x1x10xf32> to vector<8x10xf32>
    %335 = tpu.transpose %334, [1, 0] : vector<8x10xf32> -> vector<10x8xf32>
    %336 = vector.shape_cast %329 : vector<8x10xf32> to vector<8x10x1xf32>
    %337 = vector.shape_cast %332 : vector<10x8xf32> to vector<1x10x8xf32>
    %338 = vector.broadcast %336 : vector<8x10x1xf32> to vector<8x10x8xf32>
    %339 = vector.broadcast %337 : vector<1x10x8xf32> to vector<8x10x8xf32>
    %340 = arith.mulf %338, %339 : vector<8x10x8xf32>
    %341 = vector.broadcast %10 : vector<8x1x8xf32> to vector<8x10x8xf32>
    %342 = arith.addf %340, %341 : vector<8x10x8xf32>
    %cst_85 = arith.constant dense<0xFF800000> : vector<8x10xf32>
    %343 = vector.multi_reduction <maximumf>, %342, %cst_85 [2] : vector<8x10x8xf32> to vector<8x10xf32>
    %344 = vector.shape_cast %343 : vector<8x10xf32> to vector<8x10x1xf32>
    %345 = vector.broadcast %344 : vector<8x10x1xf32> to vector<8x10x8xf32>
    %346 = arith.subf %342, %345 : vector<8x10x8xf32>
    %347 = math.exp %346 : vector<8x10x8xf32>
    %cst_86 = arith.constant dense<0.000000e+00> : vector<8x10xf32>
    %348 = vector.multi_reduction <add>, %347, %cst_86 [2] : vector<8x10x8xf32> to vector<8x10xf32>
    %349 = vector.shape_cast %335 : vector<10x8xf32> to vector<1x10x8xf32>
    %350 = vector.broadcast %349 : vector<1x10x8xf32> to vector<8x10x8xf32>
    %351 = arith.mulf %347, %350 : vector<8x10x8xf32>
    %cst_87 = arith.constant dense<0.000000e+00> : vector<8x10xf32>
    %352 = vector.multi_reduction <add>, %351, %cst_87 [2] : vector<8x10x8xf32> to vector<8x10xf32>
    %353 = tpu.reciprocal %348 {approx = true} : vector<8x10xf32> -> vector<8x10xf32>
    %354 = arith.mulf %352, %353 : vector<8x10xf32>
    %355 = vector.extract_strided_slice %317 {offsets = [0, 1, 0], sizes = [8, 1, 10], strides = [1, 1, 1]} : vector<8x2x10xf32> to vector<8x1x10xf32>
    %356 = vector.shape_cast %355 : vector<8x1x10xf32> to vector<8x10xf32>
    %357 = vector.extract_strided_slice %322 {offsets = [0, 1, 0], sizes = [8, 1, 10], strides = [1, 1, 1]} : vector<8x2x10xf32> to vector<8x1x10xf32>
    %358 = vector.shape_cast %357 : vector<8x1x10xf32> to vector<8x10xf32>
    %359 = tpu.transpose %358, [1, 0] : vector<8x10xf32> -> vector<10x8xf32>
    %360 = vector.extract_strided_slice %327 {offsets = [0, 1, 0], sizes = [8, 1, 10], strides = [1, 1, 1]} : vector<8x2x10xf32> to vector<8x1x10xf32>
    %361 = vector.shape_cast %360 : vector<8x1x10xf32> to vector<8x10xf32>
    %362 = tpu.transpose %361, [1, 0] : vector<8x10xf32> -> vector<10x8xf32>
    %363 = vector.shape_cast %356 : vector<8x10xf32> to vector<8x10x1xf32>
    %364 = vector.shape_cast %359 : vector<10x8xf32> to vector<1x10x8xf32>
    %365 = vector.broadcast %363 : vector<8x10x1xf32> to vector<8x10x8xf32>
    %366 = vector.broadcast %364 : vector<1x10x8xf32> to vector<8x10x8xf32>
    %367 = arith.mulf %365, %366 : vector<8x10x8xf32>
    %368 = vector.broadcast %10 : vector<8x1x8xf32> to vector<8x10x8xf32>
    %369 = arith.addf %367, %368 : vector<8x10x8xf32>
    %cst_88 = arith.constant dense<0xFF800000> : vector<8x10xf32>
    %370 = vector.multi_reduction <maximumf>, %369, %cst_88 [2] : vector<8x10x8xf32> to vector<8x10xf32>
    %371 = vector.shape_cast %370 : vector<8x10xf32> to vector<8x10x1xf32>
    %372 = vector.broadcast %371 : vector<8x10x1xf32> to vector<8x10x8xf32>
    %373 = arith.subf %369, %372 : vector<8x10x8xf32>
    %374 = math.exp %373 : vector<8x10x8xf32>
    %cst_89 = arith.constant dense<0.000000e+00> : vector<8x10xf32>
    %375 = vector.multi_reduction <add>, %374, %cst_89 [2] : vector<8x10x8xf32> to vector<8x10xf32>
    %376 = vector.shape_cast %362 : vector<10x8xf32> to vector<1x10x8xf32>
    %377 = vector.broadcast %376 : vector<1x10x8xf32> to vector<8x10x8xf32>
    %378 = arith.mulf %374, %377 : vector<8x10x8xf32>
    %cst_90 = arith.constant dense<0.000000e+00> : vector<8x10xf32>
    %379 = vector.multi_reduction <add>, %378, %cst_90 [2] : vector<8x10x8xf32> to vector<8x10xf32>
    %380 = tpu.reciprocal %375 {approx = true} : vector<8x10xf32> -> vector<8x10xf32>
    %381 = arith.mulf %379, %380 : vector<8x10xf32>
    %382 = vector.shape_cast %354 : vector<8x10xf32> to vector<8x1x10xf32>
    %383 = vector.shape_cast %381 : vector<8x10xf32> to vector<8x1x10xf32>
    %384 = tpu.concatenate %382, %383 in 1 : vector<8x1x10xf32>, vector<8x1x10xf32> -> vector<8x2x10xf32>
    %385 = vector.shape_cast %384 : vector<8x2x10xf32> to vector<16x10xf32>
    %386 = vector.extract_strided_slice %310 {offsets = [0, 30], sizes = [10, 10], strides = [1, 1]} : vector<10x40xf32> to vector<10x10xf32>
    %cst_91 = arith.constant dense<0.000000e+00> : vector<16x10xf32>
    %387 = tpu.matmul %385, %386, %cst_91 {dimension_numbers = #tpu.dot_dimension_numbers<[1], [0], [0], [1], [0, 0, 1, 1], [], []>} : vector<16x10xf32>, vector<10x10xf32>, vector<16x10xf32> -> vector<16x10xf32>
    %388 = vector.extract_strided_slice %308 {offsets = [3, 0], sizes = [1, 10], strides = [1, 1]} : vector<9x10xf32> to vector<1x10xf32>
    %389 = vector.broadcast %388 : vector<1x10xf32> to vector<16x10xf32>
    %390 = arith.addf %387, %389 : vector<16x10xf32>
    %391 = arith.addf %306, %390 : vector<16x10xf32>
    %392 = vector.extract_strided_slice %308 {offsets = [4, 0], sizes = [1, 10], strides = [1, 1]} : vector<9x10xf32> to vector<1x10xf32>
    %393 = vector.extract_strided_slice %308 {offsets = [5, 0], sizes = [1, 10], strides = [1, 1]} : vector<9x10xf32> to vector<1x10xf32>
    %cst_92 = arith.constant dense<0.000000e+00> : vector<16xf32>
    %394 = vector.multi_reduction <add>, %391, %cst_92 [1] : vector<16x10xf32> to vector<16xf32>
    %395 = vector.shape_cast %394 : vector<16xf32> to vector<16x1xf32>
    %cst_93 = arith.constant 1.000000e+01 : f32
    %396 = vector.broadcast %cst_93 : f32 to vector<16x1xf32>
    %397 = arith.divf %395, %396 : vector<16x1xf32>
    %398 = vector.broadcast %397 : vector<16x1xf32> to vector<16x10xf32>
    %399 = arith.subf %391, %398 : vector<16x10xf32>
    %400 = arith.mulf %399, %399 : vector<16x10xf32>
    %cst_94 = arith.constant dense<0.000000e+00> : vector<16xf32>
    %401 = vector.multi_reduction <add>, %400, %cst_94 [1] : vector<16x10xf32> to vector<16xf32>
    %402 = vector.shape_cast %401 : vector<16xf32> to vector<16x1xf32>
    %cst_95 = arith.constant 1.000000e+01 : f32
    %403 = vector.broadcast %cst_95 : f32 to vector<16x1xf32>
    %404 = arith.divf %402, %403 : vector<16x1xf32>
    %cst_96 = arith.constant 9.99999974E-6 : f32
    %405 = vector.broadcast %cst_96 : f32 to vector<16x1xf32>
    %406 = arith.addf %404, %405 : vector<16x1xf32>
    %407 = math.rsqrt %406 : vector<16x1xf32>
    %408 = vector.broadcast %407 : vector<16x1xf32> to vector<16x10xf32>
    %409 = arith.mulf %399, %408 : vector<16x10xf32>
    %410 = vector.broadcast %392 : vector<1x10xf32> to vector<16x10xf32>
    %411 = arith.mulf %409, %410 : vector<16x10xf32>
    %412 = vector.broadcast %393 : vector<1x10xf32> to vector<16x10xf32>
    %413 = arith.addf %411, %412 : vector<16x10xf32>
    %414 = arith.truncf %413 : vector<16x10xf32> to vector<16x10xbf16>
    %c2_97 = arith.constant 2 : index
    %c0_98 = arith.constant 0 : index
    %c0_99 = arith.constant 0 : index
    %415 = vector.load %arg4[%c2_97, %c0_98, %c0_99] : memref<3x10x2048xbf16, #tpu.memory_space<vmem>>, vector<1x10x2048xbf16>
    %416 = vector.shape_cast %415 : vector<1x10x2048xbf16> to vector<10x2048xbf16>
    %cst_100 = arith.constant dense<0.000000e+00> : vector<16x2048xf32>
    %417 = tpu.matmul %414, %416, %cst_100 {dimension_numbers = #tpu.dot_dimension_numbers<[1], [0], [0], [1], [0, 0, 1, 1], [], []>} : vector<16x10xbf16>, vector<10x2048xbf16>, vector<16x2048xf32> -> vector<16x2048xf32>
    %c2_101 = arith.constant 2 : index
    %c0_102 = arith.constant 0 : index
    %c0_103 = arith.constant 0 : index
    %418 = vector.load %arg5[%c2_101, %c0_102, %c0_103] : memref<3x1x2048xf32, #tpu.memory_space<vmem>>, vector<1x1x2048xf32>
    %419 = vector.shape_cast %418 : vector<1x1x2048xf32> to vector<1x2048xf32>
    %420 = vector.broadcast %419 : vector<1x2048xf32> to vector<16x2048xf32>
    %421 = arith.addf %417, %420 : vector<16x2048xf32>
    %cst_104 = arith.constant 0.000000e+00 : f32
    %422 = vector.broadcast %cst_104 : f32 to vector<16x2048xf32>
    %423 = arith.maximumf %421, %422 : vector<16x2048xf32>
    %424 = arith.truncf %423 : vector<16x2048xf32> to vector<16x2048xbf16>
    %c2_105 = arith.constant 2 : index
    %c0_106 = arith.constant 0 : index
    %c0_107 = arith.constant 0 : index
    %425 = vector.load %arg6[%c2_105, %c0_106, %c0_107] : memref<3x2048x10xbf16, #tpu.memory_space<vmem>>, vector<1x2048x10xbf16>
    %426 = vector.shape_cast %425 : vector<1x2048x10xbf16> to vector<2048x10xbf16>
    %cst_108 = arith.constant dense<0.000000e+00> : vector<16x10xf32>
    %427 = tpu.matmul %424, %426, %cst_108 {dimension_numbers = #tpu.dot_dimension_numbers<[1], [0], [0], [1], [0, 0, 1, 1], [], []>} : vector<16x2048xbf16>, vector<2048x10xbf16>, vector<16x10xf32> -> vector<16x10xf32>
    %428 = vector.extract_strided_slice %308 {offsets = [6, 0], sizes = [1, 10], strides = [1, 1]} : vector<9x10xf32> to vector<1x10xf32>
    %429 = vector.broadcast %428 : vector<1x10xf32> to vector<16x10xf32>
    %430 = arith.addf %427, %429 : vector<16x10xf32>
    %431 = arith.addf %413, %430 : vector<16x10xf32>
    %432 = vector.extract_strided_slice %308 {offsets = [7, 0], sizes = [1, 10], strides = [1, 1]} : vector<9x10xf32> to vector<1x10xf32>
    %433 = vector.extract_strided_slice %308 {offsets = [8, 0], sizes = [1, 10], strides = [1, 1]} : vector<9x10xf32> to vector<1x10xf32>
    %cst_109 = arith.constant dense<0.000000e+00> : vector<16xf32>
    %434 = vector.multi_reduction <add>, %431, %cst_109 [1] : vector<16x10xf32> to vector<16xf32>
    %435 = vector.shape_cast %434 : vector<16xf32> to vector<16x1xf32>
    %cst_110 = arith.constant 1.000000e+01 : f32
    %436 = vector.broadcast %cst_110 : f32 to vector<16x1xf32>
    %437 = arith.divf %435, %436 : vector<16x1xf32>
    %438 = vector.broadcast %437 : vector<16x1xf32> to vector<16x10xf32>
    %439 = arith.subf %431, %438 : vector<16x10xf32>
    %440 = arith.mulf %439, %439 : vector<16x10xf32>
    %cst_111 = arith.constant dense<0.000000e+00> : vector<16xf32>
    %441 = vector.multi_reduction <add>, %440, %cst_111 [1] : vector<16x10xf32> to vector<16xf32>
    %442 = vector.shape_cast %441 : vector<16xf32> to vector<16x1xf32>
    %cst_112 = arith.constant 1.000000e+01 : f32
    %443 = vector.broadcast %cst_112 : f32 to vector<16x1xf32>
    %444 = arith.divf %442, %443 : vector<16x1xf32>
    %cst_113 = arith.constant 9.99999974E-6 : f32
    %445 = vector.broadcast %cst_113 : f32 to vector<16x1xf32>
    %446 = arith.addf %444, %445 : vector<16x1xf32>
    %447 = math.rsqrt %446 : vector<16x1xf32>
    %448 = vector.broadcast %447 : vector<16x1xf32> to vector<16x10xf32>
    %449 = arith.mulf %439, %448 : vector<16x10xf32>
    %450 = vector.broadcast %432 : vector<1x10xf32> to vector<16x10xf32>
    %451 = arith.mulf %449, %450 : vector<16x10xf32>
    %452 = vector.broadcast %433 : vector<1x10xf32> to vector<16x10xf32>
    %453 = arith.addf %451, %452 : vector<16x10xf32>
    %454 = vector.extract_strided_slice %11 {offsets = [0, 0], sizes = [10, 10], strides = [1, 1]} : vector<11x10xf32> to vector<10x10xf32>
    %cst_114 = arith.constant dense<0.000000e+00> : vector<16x10xf32>
    %455 = tpu.matmul %453, %454, %cst_114 {dimension_numbers = #tpu.dot_dimension_numbers<[1], [0], [0], [1], [0, 0, 1, 1], [], []>} : vector<16x10xf32>, vector<10x10xf32>, vector<16x10xf32> -> vector<16x10xf32>
    %456 = vector.extract_strided_slice %11 {offsets = [10, 0], sizes = [1, 10], strides = [1, 1]} : vector<11x10xf32> to vector<1x10xf32>
    %457 = vector.broadcast %456 : vector<1x10xf32> to vector<16x10xf32>
    %458 = arith.addf %455, %457 : vector<16x10xf32>
    %459 = vector.shape_cast %458 : vector<16x10xf32> to vector<8x2x10xf32>
    %c0_115 = arith.constant 0 : index
    %c0_116 = arith.constant 0 : index
    %c0_117 = arith.constant 0 : index
    %460 = vector.load %arg8[%c0_115, %c0_116, %c0_117] : memref<8x2x10xf32, #tpu.memory_space<vmem>>, vector<8x2x10xf32>
    tpu.vector_store %arg8[%c0_115, %c0_116, %c0_117], %459 {strides = array<i32>} : memref<8x2x10xf32, #tpu.memory_space<vmem>>, vector<8x2x10xf32>,
    return
  }
}

</mosaic_0001>

<llo_original>
// kernel: _transam_forward.1
$region0: #{_transam_forward.1}
  #allocation0 [shape = 'u32[]', space=smem, size = 0x4, offset = 0x4, fixed_abs, tag = 'smem constant byte address 0x4 - core index']
  #allocation1 [shape = 'u32[144,128]{1,0:T(1,128)}', space=vmem, size = 0x12000, scoped, tag = 'internal scratch']
  %s0 = inlined_call_operand.vmem [shape: f32[8,2,10], index: 0, kind: input, shape index: {}]
  %s1 = inlined_call_operand.vmem [shape: f32[8,1,10], index: 1, kind: input, shape index: {}]
  %s2 = inlined_call_operand.vmem [shape: f32[3,10,40], index: 2, kind: input, shape index: {}]
  %s3 = inlined_call_operand.vmem [shape: f32[3,9,10], index: 3, kind: input, shape index: {}]
  %s4 = inlined_call_operand.vmem [shape: bf16[3,10,2048], index: 4, kind: input, shape index: {}]
  %s5 = inlined_call_operand.vmem [shape: f32[3,1,2048], index: 5, kind: input, shape index: {}]
  %s6 = inlined_call_operand.vmem [shape: bf16[3,2048,10], index: 6, kind: input, shape index: {}]
  %s7 = inlined_call_operand.vmem [shape: f32[11,10], index: 7, kind: input, shape index: {}]
  %s8 = inlined_call_operand.hbm [shape: f32[8,2,10], index: 8, kind: output, shape index: {}]
  %s9 = sld [smem:[#allocation0]]
  $region42: #{_transam_forward.1} parent=0
    _
  %s11 = ssub.s32 1, %s9
  %s12 = scalar_select 0, %s11, %s9
  $region1: #{_transam_forward.1} parent=0
    #allocation2 [shape = 'u8[8192]{0}', space=vmem, size = 0x2000, scoped, tag = 'output window, operand 0, single buffered']
    #allocation3 [shape = 's32[1]{0}', space=sflag, size = 0x4, scoped, tag = 'scoped memory for _transam_forward.1']
    %13 = vsyncpa [#allocation3], 0
    // Predicated region
    $region2: #{_transam_forward.1} parent=1 // pred_check
      _
    $region3: #{_transam_forward.1} parent=1 // pred_check_branch
      %15 = sbr.rel (0) target = $region5
    $region4: #{_transam_forward.1} parent=1 // pred_region
      _
    $region5: #{_transam_forward.1} parent=1 // pred_fallthru
      _
    // Predicated region
    $region6: #{_transam_forward.1} parent=1 // pred_check
      _
    $region7: #{_transam_forward.1} parent=1 // pred_check_branch
      %17 = sbr.rel (0) target = $region9
    $region8: #{_transam_forward.1} parent=1 // pred_region
      _
    $region9: #{_transam_forward.1} parent=1 // pred_fallthru
      _
    // Predicated region
    $region10: #{_transam_forward.1} parent=1 // pred_check
      _
    $region11: #{_transam_forward.1} parent=1 // pred_check_branch
      %19 = sbr.rel (0) target = $region13
    $region12: #{_transam_forward.1} parent=1 // pred_region
      _
    $region13: #{_transam_forward.1} parent=1 // pred_fallthru
      _
    // Predicated region
    $region14: #{_transam_forward.1} parent=1 // pred_check
      _
    $region15: #{_transam_forward.1} parent=1 // pred_check_branch
      %21 = sbr.rel (0) target = $region17
    $region16: #{_transam_forward.1} parent=1 // pred_region
      _
    $region17: #{_transam_forward.1} parent=1 // pred_fallthru
      _
    // Predicated region
    $region18: #{_transam_forward.1} parent=1 // pred_check
      _
    $region19: #{_transam_forward.1} parent=1 // pred_check_branch
      %23 = sbr.rel (0) target = $region21
    $region20: #{_transam_forward.1} parent=1 // pred_region
      _
    $region21: #{_transam_forward.1} parent=1 // pred_fallthru
      _
    // Predicated region
    $region22: #{_transam_forward.1} parent=1 // pred_check
      _
    $region23: #{_transam_forward.1} parent=1 // pred_check_branch
      %25 = sbr.rel (0) target = $region25
    $region24: #{_transam_forward.1} parent=1 // pred_region
      _
    $region25: #{_transam_forward.1} parent=1 // pred_fallthru
      _
    // Predicated region
    $region26: #{_transam_forward.1} parent=1 // pred_check
      _
    $region27: #{_transam_forward.1} parent=1 // pred_check_branch
      %27 = sbr.rel (0) target = $region29
    $region28: #{_transam_forward.1} parent=1 // pred_region
      _
    $region29: #{_transam_forward.1} parent=1 // pred_fallthru
      _
    // Predicated region
    $region30: #{_transam_forward.1} parent=1 // pred_check
      _
    $region31: #{_transam_forward.1} parent=1 // pred_check_branch
      %29 = sbr.rel (0) target = $region33
    $region32: #{_transam_forward.1} parent=1 // pred_region
      _
    $region33: #{_transam_forward.1} parent=1 // pred_fallthru
      _
    %v31 = vld [vmem:[%s0] sm:$0x3]
    %v32 = vld [vmem:[%s0 + $0x2] sm:$0x3]
    %v33 = vld [vmem:[%s0 + $0x4] sm:$0x3]
    %v34 = vld [vmem:[%s0 + $0x6] sm:$0x3]
    %v35 = vld [vmem:[%s0 + $0x8] sm:$0x3]
    %v36 = vld [vmem:[%s0 + $0xa] sm:$0x3]
    %v37 = vld [vmem:[%s0 + $0xc] sm:$0x3]
    %v38 = vld [vmem:[%s0 + $0xe] sm:$0x3]
    %v39 = vld [vmem:[%s1] sm:$0x1]
    %v40 = vld [vmem:[%s1 + $0x1] sm:$0x1]
    %v41 = vld [vmem:[%s1 + $0x2] sm:$0x1]
    %v42 = vld [vmem:[%s1 + $0x3] sm:$0x1]
    %v43 = vld [vmem:[%s1 + $0x4] sm:$0x1]
    %v44 = vld [vmem:[%s1 + $0x5] sm:$0x1]
    %v45 = vld [vmem:[%s1 + $0x6] sm:$0x1]
    %v46 = vld [vmem:[%s1 + $0x7] sm:$0x1]
    %v55 = vlaneseq
    %v56 = vshrl.u32 %v55, 7
    %v57 = vsub.s32 0, %v56
    %v58 = vrot.slane %v39, %v57
    %v59 = vlaneseq
    %v60 = vshrl.u32 %v59, 7
    %v61 = vsub.s32 0, %v60
    %v62 = vrot.slane %v40, %v61
    %v63 = vlaneseq
    %v64 = vshrl.u32 %v63, 7
    %v65 = vsub.s32 0, %v64
    %v66 = vrot.slane %v41, %v65
    %v67 = vlaneseq
    %v68 = vshrl.u32 %v67, 7
    %v69 = vsub.s32 0, %v68
    %v70 = vrot.slane %v42, %v69
    %v71 = vlaneseq
    %v72 = vshrl.u32 %v71, 7
    %v73 = vsub.s32 0, %v72
    %v74 = vrot.slane %v43, %v73
    %v75 = vlaneseq
    %v76 = vshrl.u32 %v75, 7
    %v77 = vsub.s32 0, %v76
    %v78 = vrot.slane %v44, %v77
    %v79 = vlaneseq
    %v80 = vshrl.u32 %v79, 7
    %v81 = vsub.s32 0, %v80
    %v82 = vrot.slane %v45, %v81
    %v83 = vlaneseq
    %v84 = vshrl.u32 %v83, 7
    %v85 = vsub.s32 0, %v84
    %v86 = vrot.slane %v46, %v85
    %v95 = vadd.f32 %v31, %v58
    %v96 = vadd.f32 %v32, %v62
    %v97 = vadd.f32 %v33, %v66
    %v98 = vadd.f32 %v34, %v70
    %v99 = vadd.f32 %v35, %v74
    %v100 = vadd.f32 %v36, %v78
    %v101 = vadd.f32 %v37, %v82
    %v102 = vadd.f32 %v38, %v86
    %v103 = vlaneseq
    %v104 = vshrl.u32 %v103, 7
    %v105 = vlaneseq
    %v106 = vand.u32 %v105, 127
    %vm107 = vcmp.le.s32.totalorder %v106, %v104
    %v108 = vsel %vm107, 0.0, -1e+30
    %v110 = vcombine.high %v108, %v108
    %v112 = vunpack.c.l.s4 1966171168
    %v113 = vunpack.c.0.s8 %v112
    %v114 = vlaneseq
    %v115 = vshrl.u32 %v114, 7
    %v116 = vsub.s32 %v113, %v115
    %v117 = vrot.slane %v108, %v116
    %v119 = vunpack.c.l.s4 1966171168
    %v120 = vunpack.c.0.s8 %v119
    %v121 = vlaneseq
    %v122 = vshrl.u32 %v121, 7
    %v123 = vsub.s32 %v120, %v122
    %v124 = vrot.slane %v110, %v123
    %v125 = vcombine.high %v117, %v117
    %v126 = vcombine.high %v124, %v124
    %v128 = vunpack.c.l.s4 1966171168
    %v129 = vunpack.c.0.s8 %v128
    %v130 = vlaneseq
    %v131 = vshrl.u32 %v130, 7
    %v132 = vsub.s32 %v129, %v131
    %v133 = vrot.slane %v117, %v132
    %v135 = vunpack.c.l.s4 1966171168
    %v136 = vunpack.c.0.s8 %v135
    %v137 = vlaneseq
    %v138 = vshrl.u32 %v137, 7
    %v139 = vsub.s32 %v136, %v138
    %v140 = vrot.slane %v124, %v139
    %v142 = vunpack.c.l.s4 1966171168
    %v143 = vunpack.c.0.s8 %v142
    %v144 = vlaneseq
    %v145 = vshrl.u32 %v144, 7
    %v146 = vsub.s32 %v143, %v145
    %v147 = vrot.slane %v125, %v146
    %v149 = vunpack.c.l.s4 1966171168
    %v150 = vunpack.c.0.s8 %v149
    %v151 = vlaneseq
    %v152 = vshrl.u32 %v151, 7
    %v153 = vsub.s32 %v150, %v152
    %v154 = vrot.slane %v126, %v153
    %v155 = vcombine.high %v133, %v133
    %v156 = vcombine.high %v140, %v140
    %v157 = vcombine.high %v147, %v147
    %v158 = vcombine.high %v154, %v154
    %v159 = vld [vmem:[%s7] sm:$0xff]
    %v160 = vld [vmem:[%s7 + $0x8] sm:$0x7]
    %v161 = vld [vmem:[%s3] sm:$0xff]
    %v162 = vld [vmem:[%s3 + $0x8] sm:$0x1]
    %v163 = vld [vmem:[%s2] sm:$0xff]
    %v164 = vld [vmem:[%s2 + $0x8] sm:$0x3]
    %v173 = vcombine.low %v95, %v96
    %v174 = vcombine.low %v97, %v98
    %v176 = vunpack.c.l.s4 1983009808
    %v177 = vunpack.c.0.s8 %v176
    %v178 = vlaneseq
    %v179 = vshrl.u32 %v178, 7
    %v180 = vsub.s32 %v177, %v179
    %v181 = vrot.slane %v173, %v180
    %v183 = vunpack.c.l.s4 1983009808
    %v184 = vunpack.c.0.s8 %v183
    %v185 = vlaneseq
    %v186 = vshrl.u32 %v185, 7
    %v187 = vsub.s32 %v184, %v186
    %v188 = vrot.slane %v174, %v187
    %v189 = vcombine.low %v181, %v188
    %v190 = vcombine.low %v99, %v100
    %v191 = vcombine.low %v101, %v102
    %v193 = vunpack.c.l.s4 1983009808
    %v194 = vunpack.c.0.s8 %v193
    %v195 = vlaneseq
    %v196 = vshrl.u32 %v195, 7
    %v197 = vsub.s32 %v194, %v196
    %v198 = vrot.slane %v190, %v197
    %v200 = vunpack.c.l.s4 1983009808
    %v201 = vunpack.c.0.s8 %v200
    %v202 = vlaneseq
    %v203 = vshrl.u32 %v202, 7
    %v204 = vsub.s32 %v201, %v203
    %v205 = vrot.slane %v191, %v204
    %v206 = vcombine.low %v198, %v205
    %vm207 = vcmask 80896
    %v208 = vsel %vm207, %v189, 0
    %v210 = vsel %vm207, %v206, 0
    %vm212 = vcmask 1041408
    %v214 = vsel %vm212, %v164, 0
    %216 = vmatprep.subr.mxu0 0.0
    %217 = vmatpush1.msra.mxu0 %v163
    %218 = vmatprep.subr.mxu0 0.0
    %219 = vmatpush1.msra.mxu0 %v214
    %220 = vmatprep.subr.mxu0 0.0
    %221 = vmatpush1.msra.mxu0 0.0
    %222 = vmatprep.subr.mxu0 0.0
    %223 = vmatpush1.msra.mxu0 0.0
    %224 = vmatprep.subr.mxu0 0.0
    %225 = vmatpush1.msra.mxu0 0.0
    %226 = vmatprep.subr.mxu0 0.0
    %227 = vmatpush1.msra.mxu0 0.0
    %228 = vmatprep.subr.mxu0 0.0
    %229 = vmatpush1.msra.mxu0 0.0
    %230 = vmatprep.subr.mxu0 0.0
    %231 = vmatpush1.msra.mxu0 0.0
    %232 = vmatprep.subr.mxu0 0.0
    %233 = vmatpush1.msra.mxu0 0.0
    %234 = vmatprep.subr.mxu0 0.0
    %235 = vmatpush1.msra.mxu0 0.0
    %236 = vmatprep.subr.mxu0 0.0
    %237 = vmatpush1.msra.mxu0 0.0
    %238 = vmatprep.subr.mxu0 0.0
    %239 = vmatpush1.msra.mxu0 0.0
    %240 = vmatprep.subr.mxu0 0.0
    %241 = vmatpush1.msra.mxu0 0.0
    %242 = vmatprep.subr.mxu0 0.0
    %243 = vmatpush1.msra.mxu0 0.0
    %244 = vmatprep.subr.mxu0 0.0
    %245 = vmatpush1.msra.mxu0 0.0
    %246 = vmatprep.subr.mxu0 0.0
    %247 = vmatpush1.msra.mxu0 0.0
    %248 = vmatprep.subr.mxu0 0.0
    %249 = vmatpush1.msra.mxu0 0.0
    %250 = vmatprep.subr.mxu0 0.0
    %251 = vmatpush1.msra.mxu0 0.0
    %252 = vmatprep.subr.mxu0 0.0
    %253 = vmatpush1.msra.mxu0 0.0
    %254 = vmatprep.subr.mxu0 0.0
    %255 = vmatpush1.msra.mxu0 0.0
    %256 = vmatprep.subr.mxu0 0.0
    %257 = vmatpush1.msra.mxu0 0.0
    %258 = vmatprep.subr.mxu0 0.0
    %259 = vmatpush1.msra.mxu0 0.0
    %260 = vmatprep.subr.mxu0 0.0
    %261 = vmatpush1.msra.mxu0 0.0
    %262 = vmatprep.subr.mxu0 0.0
    %263 = vmatpush1.msra.mxu0 0.0
    %264 = vmatprep.subr.mxu0 0.0
    %265 = vmatpush1.msra.mxu0 0.0
    %266 = vmatprep.subr.mxu0 0.0
    %267 = vmatpush1.msra.mxu0 0.0
    %268 = vmatprep.subr.mxu0 0.0
    %269 = vmatpush1.msra.mxu0 0.0
    %270 = vmatprep.subr.mxu0 0.0
    %271 = vmatpush1.msra.mxu0 0.0
    %272 = vmatprep.subr.mxu0 0.0
    %273 = vmatpush1.msra.mxu0 0.0
    %274 = vmatprep.subr.mxu0 0.0
    %275 = vmatpush1.msra.mxu0 0.0
    %276 = vmatprep.subr.mxu0 0.0
    %277 = vmatpush1.msra.mxu0 0.0
    %278 = vmatprep.subr.mxu0 0.0
    %279 = vmatpush1.msra.mxu0 0.0
    %280 = vmatprep.mubr.f32.mxu0 0.0
    %281 = vmatmul.mubr.f32.gmra.mrb[0].mxu0 %v208
    %v282 = vpop.f32.mrb[0].mxu0
    %v283 = vadd.f32 0.0, %v282
    %v284 = vpop.f32.mrb[0].mxu0
    %285 = vmatprep.mubr.f32.mxu0 0.0
    %286 = vmatmul.mubr.f32.gmra.mrb[0].mxu0 %v210
    %v287 = vpop.f32.mrb[0].mxu0
    %v288 = vadd.f32 0.0, %v287
    %v289 = vpop.f32.mrb[0].mxu0
    %290 = vdwg.mxu0
    %v291 = vlaneseq
    %v292 = vshrl.u32 %v291, 7
    %v293 = vsub.s32 0, %v292
    %v294 = vrot.slane %v161, %v293
    %v295 = vadd.f32 %v283, %v294
    %v296 = vadd.f32 %v288, %v294
    %v299 = vcombine.high %v295, %v295
    %v301 = vunpack.c.l.s4 1983009808
    %v302 = vunpack.c.0.s8 %v301
    %v303 = vlaneseq
    %v304 = vshrl.u32 %v303, 7
    %v305 = vsub.s32 %v302, %v304
    %v306 = vrot.slane %v295, %v305
    %v308 = vunpack.c.l.s4 1983009808
    %v309 = vunpack.c.0.s8 %v308
    %v310 = vlaneseq
    %v311 = vshrl.u32 %v310, 7
    %v312 = vsub.s32 %v309, %v311
    %v313 = vrot.slane %v299, %v312
    %v314 = vcombine.high %v306, %v306
    %v315 = vcombine.high %v313, %v313
    %v316 = vcombine.high %v296, %v296
    %v318 = vunpack.c.l.s4 1983009808
    %v319 = vunpack.c.0.s8 %v318
    %v320 = vlaneseq
    %v321 = vshrl.u32 %v320, 7
    %v322 = vsub.s32 %v319, %v321
    %v323 = vrot.slane %v296, %v322
    %v325 = vunpack.c.l.s4 1983009808
    %v326 = vunpack.c.0.s8 %v325
    %v327 = vlaneseq
    %v328 = vshrl.u32 %v327, 7
    %v329 = vsub.s32 %v326, %v328
    %v330 = vrot.slane %v316, %v329
    %v331 = vcombine.high %v323, %v323
    %v332 = vcombine.high %v330, %v330
    %v341 = vlaneseq
    %v342 = vshrl.u32 %v341, 7
    %v343 = vsub.s32 1, %v342
    %v344 = vrot.slane %v161, %v343
    %346 = vrot.lane.b32.xlu0 %v344, 10
    %v347 = vpop.permute.xlu0 %346
    %v349 = vadd.f32 %v283, %v347
    %v350 = vadd.f32 %v288, %v347
    %v353 = vcombine.high %v349, %v349
    %v355 = vunpack.c.l.s4 1983009808
    %v356 = vunpack.c.0.s8 %v355
    %v357 = vlaneseq
    %v358 = vshrl.u32 %v357, 7
    %v359 = vsub.s32 %v356, %v358
    %v360 = vrot.slane %v349, %v359
    %v362 = vunpack.c.l.s4 1983009808
    %v363 = vunpack.c.0.s8 %v362
    %v364 = vlaneseq
    %v365 = vshrl.u32 %v364, 7
    %v366 = vsub.s32 %v363, %v365
    %v367 = vrot.slane %v353, %v366
    %v368 = vcombine.high %v360, %v360
    %v369 = vcombine.high %v367, %v367
    %v370 = vcombine.high %v350, %v350
    %v372 = vunpack.c.l.s4 1983009808
    %v373 = vunpack.c.0.s8 %v372
    %v374 = vlaneseq
    %v375 = vshrl.u32 %v374, 7
    %v376 = vsub.s32 %v373, %v375
    %v377 = vrot.slane %v350, %v376
    %v379 = vunpack.c.l.s4 1983009808
    %v380 = vunpack.c.0.s8 %v379
    %v381 = vlaneseq
    %v382 = vshrl.u32 %v381, 7
    %v383 = vsub.s32 %v380, %v382
    %v384 = vrot.slane %v370, %v383
    %v385 = vcombine.high %v377, %v377
    %v386 = vcombine.high %v384, %v384
    %v387 = vlaneseq
    %v388 = vshrl.u32 %v387, 7
    %v389 = vsub.s32 2, %v388
    %v390 = vrot.slane %v161, %v389
    %392 = vrot.lane.b32.xlu0 %v390, 20
    %v393 = vpop.permute.xlu0 %392
    %v395 = vadd.f32 %v283, %v393
    %v396 = vadd.f32 %v288, %v393
    %v399 = vcombine.high %v395, %v395
    %v401 = vunpack.c.l.s4 1983009808
    %v402 = vunpack.c.0.s8 %v401
    %v403 = vlaneseq
    %v404 = vshrl.u32 %v403, 7
    %v405 = vsub.s32 %v402, %v404
    %v406 = vrot.slane %v395, %v405
    %v408 = vunpack.c.l.s4 1983009808
    %v409 = vunpack.c.0.s8 %v408
    %v410 = vlaneseq
    %v411 = vshrl.u32 %v410, 7
    %v412 = vsub.s32 %v409, %v411
    %v413 = vrot.slane %v399, %v412
    %v414 = vcombine.high %v406, %v406
    %v415 = vcombine.high %v413, %v413
    %v416 = vcombine.high %v396, %v396
    %v418 = vunpack.c.l.s4 1983009808
    %v419 = vunpack.c.0.s8 %v418
    %v420 = vlaneseq
    %v421 = vshrl.u32 %v420, 7
    %v422 = vsub.s32 %v419, %v421
    %v423 = vrot.slane %v396, %v422
    %v425 = vunpack.c.l.s4 1983009808
    %v426 = vunpack.c.0.s8 %v425
    %v427 = vlaneseq
    %v428 = vshrl.u32 %v427, 7
    %v429 = vsub.s32 %v426, %v428
    %v430 = vrot.slane %v416, %v429
    %v431 = vcombine.high %v423, %v423
    %v432 = vcombine.high %v430, %v430
    %v433 = vlaneseq
    %v434 = vshrl.u32 %v433, 7
    %v435 = vsub.s32 0, %v434
    %v436 = vrot.slane %v360, %v435
    %v437 = vlaneseq
    %v438 = vshrl.u32 %v437, 7
    %v439 = vsub.s32 0, %v438
    %v440 = vrot.slane %v368, %v439
    %v441 = vlaneseq
    %v442 = vshrl.u32 %v441, 7
    %v443 = vsub.s32 0, %v442
    %v444 = vrot.slane %v367, %v443
    %v445 = vlaneseq
    %v446 = vshrl.u32 %v445, 7
    %v447 = vsub.s32 0, %v446
    %v448 = vrot.slane %v369, %v447
    %v449 = vlaneseq
    %v450 = vshrl.u32 %v449, 7
    %v451 = vsub.s32 0, %v450
    %v452 = vrot.slane %v377, %v451
    %v453 = vlaneseq
    %v454 = vshrl.u32 %v453, 7
    %v455 = vsub.s32 0, %v454
    %v456 = vrot.slane %v385, %v455
    %v457 = vlaneseq
    %v458 = vshrl.u32 %v457, 7
    %v459 = vsub.s32 0, %v458
    %v460 = vrot.slane %v384, %v459
    %v461 = vlaneseq
    %v462 = vshrl.u32 %v461, 7
    %v463 = vsub.s32 0, %v462
    %v464 = vrot.slane %v386, %v463
    %vm465 = vcmask 1041409
    %v466 = vsel %vm465, %v440, %v436
    %vm467 = vcmask 1042434
    %v468 = vsel %vm467, %v444, %v466
    %vm469 = vcmask 1043459
    %v470 = vsel %vm469, %v448, %v468
    %vm471 = vcmask 1044484
    %v472 = vsel %vm471, %v452, %v470
    %vm473 = vcmask 1045509
    %v474 = vsel %vm473, %v456, %v472
    %vm475 = vcmask 1046534
    %v476 = vsel %vm475, %v460, %v474
    %vm477 = vcmask 1047559
    %v478 = vsel %vm477, %v464, %v476
    %479 = vrot.lane.b32.xlu0 %v478, 118
    %v480 = vpop.permute.xlu0 %479
    %482 = vxpose.xlu0.b32.start [1/16] %v480, 128
    %483 = vxpose.xlu0.b32.cont [2/16] 0.0, 128
    %484 = vxpose.xlu0.b32.cont [3/16] 0.0, 128
    %485 = vxpose.xlu0.b32.cont [4/16] 0.0, 128
    %486 = vxpose.xlu0.b32.cont [5/16] 0.0, 128
    %487 = vxpose.xlu0.b32.cont [6/16] 0.0, 128
    %488 = vxpose.xlu0.b32.cont [7/16] 0.0, 128
    %489 = vxpose.xlu0.b32.cont [8/16] 0.0, 128
    %490 = vxpose.xlu0.b32.cont [9/16] 0.0, 128
    %491 = vxpose.xlu0.b32.cont [10/16] 0.0, 128
    %492 = vxpose.xlu0.b32.cont [11/16] 0.0, 128
    %493 = vxpose.xlu0.b32.cont [12/16] 0.0, 128
    %494 = vxpose.xlu0.b32.cont [13/16] 0.0, 128
    %495 = vxpose.xlu0.b32.cont [14/16] 0.0, 128
    %496 = vxpose.xlu0.b32.cont [15/16] 0.0, 128
    %497 = vxpose.xlu0.b32.end [16/16] 0.0, 128
    %v498 = vpop.trf.xlu0
    %v499 = vpop.trf.xlu0
    %v500 = vpop.trf.xlu0
    %v501 = vpop.trf.xlu0
    %v502 = vpop.trf.xlu0
    %v503 = vpop.trf.xlu0
    %v504 = vpop.trf.xlu0
    %v505 = vpop.trf.xlu0
    %v506 = vpop.trf.xlu0
    %v507 = vpop.trf.xlu0
    %v508 = vpop.trf.xlu0
    %v509 = vpop.trf.xlu0
    %v510 = vpop.trf.xlu0
    %v511 = vpop.trf.xlu0
    %v512 = vpop.trf.xlu0
    %v513 = vpop.trf.xlu0
    %v514 = vlaneseq
    %v515 = vshrl.u32 %v514, 7
    %v516 = vsub.s32 0, %v515
    %v517 = vrot.slane %v406, %v516
    %v518 = vlaneseq
    %v519 = vshrl.u32 %v518, 7
    %v520 = vsub.s32 0, %v519
    %v521 = vrot.slane %v414, %v520
    %v522 = vlaneseq
    %v523 = vshrl.u32 %v522, 7
    %v524 = vsub.s32 0, %v523
    %v525 = vrot.slane %v413, %v524
    %v526 = vlaneseq
    %v527 = vshrl.u32 %v526, 7
    %v528 = vsub.s32 0, %v527
    %v529 = vrot.slane %v415, %v528
    %v530 = vlaneseq
    %v531 = vshrl.u32 %v530, 7
    %v532 = vsub.s32 0, %v531
    %v533 = vrot.slane %v423, %v532
    %v534 = vlaneseq
    %v535 = vshrl.u32 %v534, 7
    %v536 = vsub.s32 0, %v535
    %v537 = vrot.slane %v431, %v536
    %v538 = vlaneseq
    %v539 = vshrl.u32 %v538, 7
    %v540 = vsub.s32 0, %v539
    %v541 = vrot.slane %v430, %v540
    %v542 = vlaneseq
    %v543 = vshrl.u32 %v542, 7
    %v544 = vsub.s32 0, %v543
    %v545 = vrot.slane %v432, %v544
    %v546 = vsel %vm465, %v521, %v517
    %v547 = vsel %vm467, %v525, %v546
    %v548 = vsel %vm469, %v529, %v547
    %v549 = vsel %vm471, %v533, %v548
    %v550 = vsel %vm473, %v537, %v549
    %v551 = vsel %vm475, %v541, %v550
    %v552 = vsel %vm477, %v545, %v551
    %553 = vrot.lane.b32.xlu0 %v552, 108
    %v554 = vpop.permute.xlu0 %553
    %556 = vxpose.xlu0.b32.start [1/16] %v554, 128
    %557 = vxpose.xlu0.b32.cont [2/16] 0.0, 128
    %558 = vxpose.xlu0.b32.cont [3/16] 0.0, 128
    %559 = vxpose.xlu0.b32.cont [4/16] 0.0, 128
    %560 = vxpose.xlu0.b32.cont [5/16] 0.0, 128
    %561 = vxpose.xlu0.b32.cont [6/16] 0.0, 128
    %562 = vxpose.xlu0.b32.cont [7/16] 0.0, 128
    %563 = vxpose.xlu0.b32.cont [8/16] 0.0, 128
    %564 = vxpose.xlu0.b32.cont [9/16] 0.0, 128
    %565 = vxpose.xlu0.b32.cont [10/16] 0.0, 128
    %566 = vxpose.xlu0.b32.cont [11/16] 0.0, 128
    %567 = vxpose.xlu0.b32.cont [12/16] 0.0, 128
    %568 = vxpose.xlu0.b32.cont [13/16] 0.0, 128
    %569 = vxpose.xlu0.b32.cont [14/16] 0.0, 128
    %570 = vxpose.xlu0.b32.cont [15/16] 0.0, 128
    %571 = vxpose.xlu0.b32.end [16/16] 0.0, 128
    %v572 = vpop.trf.xlu0
    %v573 = vpop.trf.xlu0
    %v574 = vpop.trf.xlu0
    %v575 = vpop.trf.xlu0
    %v576 = vpop.trf.xlu0
    %v577 = vpop.trf.xlu0
    %v578 = vpop.trf.xlu0
    %v579 = vpop.trf.xlu0
    %v580 = vpop.trf.xlu0
    %v581 = vpop.trf.xlu0
    %v582 = vpop.trf.xlu0
    %v583 = vpop.trf.xlu0
    %v584 = vpop.trf.xlu0
    %v585 = vpop.trf.xlu0
    %v586 = vpop.trf.xlu0
    %v587 = vpop.trf.xlu0
    %v588 = vlaneseq
    %v589 = vshrl.u32 %v588, 7
    %v590 = vsub.s32 0, %v589
    %v591 = vrot.slane %v306, %v590
    %593 = vbcast.lane.b32.xlu0 %v591, 256
    %v594 = vpop.permute.xlu0 %593
    %s596 = sor.u32 256, 8
    %597 = vbcast.lane.b32.xlu0 %v591, %s596
    %v598 = vpop.permute.xlu0 %597
    %v599 = vlaneseq
    %v600 = vshrl.u32 %v599, 7
    %v601 = vsub.s32 0, %v600
    %v602 = vrot.slane %v314, %v601
    %604 = vbcast.lane.b32.xlu0 %v602, 256
    %v605 = vpop.permute.xlu0 %604
    %s607 = sor.u32 256, 8
    %608 = vbcast.lane.b32.xlu0 %v602, %s607
    %v609 = vpop.permute.xlu0 %608
    %v610 = vlaneseq
    %v611 = vshrl.u32 %v610, 7
    %v612 = vsub.s32 0, %v611
    %v613 = vrot.slane %v313, %v612
    %615 = vbcast.lane.b32.xlu0 %v613, 256
    %v616 = vpop.permute.xlu0 %615
    %s618 = sor.u32 256, 8
    %619 = vbcast.lane.b32.xlu0 %v613, %s618
    %v620 = vpop.permute.xlu0 %619
    %v621 = vlaneseq
    %v622 = vshrl.u32 %v621, 7
    %v623 = vsub.s32 0, %v622
    %v624 = vrot.slane %v315, %v623
    %626 = vbcast.lane.b32.xlu0 %v624, 256
    %v627 = vpop.permute.xlu0 %626
    %s629 = sor.u32 256, 8
    %630 = vbcast.lane.b32.xlu0 %v624, %s629
    %v631 = vpop.permute.xlu0 %630
    %v632 = vlaneseq
    %v633 = vshrl.u32 %v632, 7
    %v634 = vsub.s32 0, %v633
    %v635 = vrot.slane %v323, %v634
    %637 = vbcast.lane.b32.xlu0 %v635, 256
    %v638 = vpop.permute.xlu0 %637
    %s640 = sor.u32 256, 8
    %641 = vbcast.lane.b32.xlu0 %v635, %s640
    %v642 = vpop.permute.xlu0 %641
    %v643 = vlaneseq
    %v644 = vshrl.u32 %v643, 7
    %v645 = vsub.s32 0, %v644
    %v646 = vrot.slane %v331, %v645
    %648 = vbcast.lane.b32.xlu0 %v646, 256
    %v649 = vpop.permute.xlu0 %648
    %s651 = sor.u32 256, 8
    %652 = vbcast.lane.b32.xlu0 %v646, %s651
    %v653 = vpop.permute.xlu0 %652
    %v654 = vlaneseq
    %v655 = vshrl.u32 %v654, 7
    %v656 = vsub.s32 0, %v655
    %v657 = vrot.slane %v330, %v656
    %659 = vbcast.lane.b32.xlu0 %v657, 256
    %v660 = vpop.permute.xlu0 %659
    %s662 = sor.u32 256, 8
    %663 = vbcast.lane.b32.xlu0 %v657, %s662
    %v664 = vpop.permute.xlu0 %663
    %v665 = vlaneseq
    %v666 = vshrl.u32 %v665, 7
    %v667 = vsub.s32 0, %v666
    %v668 = vrot.slane %v332, %v667
    %670 = vbcast.lane.b32.xlu0 %v668, 256
    %v671 = vpop.permute.xlu0 %670
    %s673 = sor.u32 256, 8
    %674 = vbcast.lane.b32.xlu0 %v668, %s673
    %v675 = vpop.permute.xlu0 %674
    %v676 = vmul.f32 %v594, %v498
    %v677 = vmul.f32 %v598, %v499
    %v678 = vmul.f32 %v605, %v498
    %v679 = vmul.f32 %v609, %v499
    %v680 = vmul.f32 %v616, %v498
    %v681 = vmul.f32 %v620, %v499
    %v682 = vmul.f32 %v627, %v498
    %v683 = vmul.f32 %v631, %v499
    %v684 = vmul.f32 %v638, %v498
    %v685 = vmul.f32 %v642, %v499
    %v686 = vmul.f32 %v649, %v498
    %v687 = vmul.f32 %v653, %v499
    %v688 = vmul.f32 %v660, %v498
    %v689 = vmul.f32 %v664, %v499
    %v690 = vmul.f32 %v671, %v498
    %v691 = vmul.f32 %v675, %v499
    %v692 = vlaneseq
    %v693 = vshrl.u32 %v692, 7
    %v694 = vsub.s32 0, %v693
    %v695 = vrot.slane %v133, %v694
    %v696 = vlaneseq
    %v697 = vshrl.u32 %v696, 7
    %v698 = vsub.s32 0, %v697
    %v699 = vrot.slane %v147, %v698
    %v700 = vlaneseq
    %v701 = vshrl.u32 %v700, 7
    %v702 = vsub.s32 0, %v701
    %v703 = vrot.slane %v155, %v702
    %v704 = vlaneseq
    %v705 = vshrl.u32 %v704, 7
    %v706 = vsub.s32 0, %v705
    %v707 = vrot.slane %v157, %v706
    %v708 = vlaneseq
    %v709 = vshrl.u32 %v708, 7
    %v710 = vsub.s32 0, %v709
    %v711 = vrot.slane %v140, %v710
    %v712 = vlaneseq
    %v713 = vshrl.u32 %v712, 7
    %v714 = vsub.s32 0, %v713
    %v715 = vrot.slane %v154, %v714
    %v716 = vlaneseq
    %v717 = vshrl.u32 %v716, 7
    %v718 = vsub.s32 0, %v717
    %v719 = vrot.slane %v156, %v718
    %v720 = vlaneseq
    %v721 = vshrl.u32 %v720, 7
    %v722 = vsub.s32 0, %v721
    %v723 = vrot.slane %v158, %v722
    %v732 = vadd.f32 %v676, %v695
    %v733 = vadd.f32 %v677, %v695
    %v734 = vadd.f32 %v678, %v699
    %v735 = vadd.f32 %v679, %v699
    %v736 = vadd.f32 %v680, %v703
    %v737 = vadd.f32 %v681, %v703
    %v738 = vadd.f32 %v682, %v707
    %v739 = vadd.f32 %v683, %v707
    %v740 = vadd.f32 %v684, %v711
    %v741 = vadd.f32 %v685, %v711
    %v742 = vadd.f32 %v686, %v715
    %v743 = vadd.f32 %v687, %v715
    %v744 = vadd.f32 %v688, %v719
    %v745 = vadd.f32 %v689, %v719
    %v746 = vadd.f32 %v690, %v723
    %v747 = vadd.f32 %v691, %v723
    %vm748 = vcmask 64512
    %v749 = vsel %vm748, %v732, -inf
    %750 = vmax.xlane.f32.xlu0 %v749
    %v751 = vpop.xlane.xlu0 %750
    %vm752 = vcmask 58368
    %v753 = vsel %vm752, %v733, -inf
    %754 = vmax.xlane.f32.xlu0 %v753
    %v755 = vpop.xlane.xlu0 %754
    %v756 = vsel %vm748, %v734, -inf
    %757 = vmax.xlane.f32.xlu0 %v756
    %v758 = vpop.xlane.xlu0 %757
    %v759 = vsel %vm752, %v735, -inf
    %760 = vmax.xlane.f32.xlu0 %v759
    %v761 = vpop.xlane.xlu0 %760
    %v762 = vsel %vm748, %v736, -inf
    %763 = vmax.xlane.f32.xlu0 %v762
    %v764 = vpop.xlane.xlu0 %763
    %v765 = vsel %vm752, %v737, -inf
    %766 = vmax.xlane.f32.xlu0 %v765
    %v767 = vpop.xlane.xlu0 %766
    %v768 = vsel %vm748, %v738, -inf
    %769 = vmax.xlane.f32.xlu0 %v768
    %v770 = vpop.xlane.xlu0 %769
    %v771 = vsel %vm752, %v739, -inf
    %772 = vmax.xlane.f32.xlu0 %v771
    %v773 = vpop.xlane.xlu0 %772
    %v774 = vsel %vm748, %v740, -inf
    %775 = vmax.xlane.f32.xlu0 %v774
    %v776 = vpop.xlane.xlu0 %775
    %v777 = vsel %vm752, %v741, -inf
    %778 = vmax.xlane.f32.xlu0 %v777
    %v779 = vpop.xlane.xlu0 %778
    %v780 = vsel %vm748, %v742, -inf
    %781 = vmax.xlane.f32.xlu0 %v780
    %v782 = vpop.xlane.xlu0 %781
    %v783 = vsel %vm752, %v743, -inf
    %784 = vmax.xlane.f32.xlu0 %v783
    %v785 = vpop.xlane.xlu0 %784
    %v786 = vsel %vm748, %v744, -inf
    %787 = vmax.xlane.f32.xlu0 %v786
    %v788 = vpop.xlane.xlu0 %787
    %v789 = vsel %vm752, %v745, -inf
    %790 = vmax.xlane.f32.xlu0 %v789
    %v791 = vpop.xlane.xlu0 %790
    %v792 = vsel %vm748, %v746, -inf
    %793 = vmax.xlane.f32.xlu0 %v792
    %v794 = vpop.xlane.xlu0 %793
    %v795 = vsel %vm752, %v747, -inf
    %796 = vmax.xlane.f32.xlu0 %v795
    %v797 = vpop.xlane.xlu0 %796
    %v798 = vsub.f32 %v732, %v751
    %v799 = vsub.f32 %v733, %v755
    %v800 = vsub.f32 %v734, %v758
    %v801 = vsub.f32 %v735, %v761
    %v802 = vsub.f32 %v736, %v764
    %v803 = vsub.f32 %v737, %v767
    %v804 = vsub.f32 %v738, %v770
    %v805 = vsub.f32 %v739, %v773
    %v806 = vsub.f32 %v740, %v776
    %v807 = vsub.f32 %v741, %v779
    %v808 = vsub.f32 %v742, %v782
    %v809 = vsub.f32 %v743, %v785
    %v810 = vsub.f32 %v744, %v788
    %v811 = vsub.f32 %v745, %v791
    %v812 = vsub.f32 %v746, %v794
    %v813 = vsub.f32 %v747, %v797
    %v814 = vmul.f32 %v798, 1.442695
    %v815 = vpow.pop %v814
    %v816 = vmul.f32 %v799, 1.442695
    %v817 = vpow.pop %v816
    %v818 = vmul.f32 %v800, 1.442695
    %v819 = vpow.pop %v818
    %v820 = vmul.f32 %v801, 1.442695
    %v821 = vpow.pop %v820
    %v822 = vmul.f32 %v802, 1.442695
    %v823 = vpow.pop %v822
    %v824 = vmul.f32 %v803, 1.442695
    %v825 = vpow.pop %v824
    %v826 = vmul.f32 %v804, 1.442695
    %v827 = vpow.pop %v826
    %v828 = vmul.f32 %v805, 1.442695
    %v829 = vpow.pop %v828
    %v830 = vmul.f32 %v806, 1.442695
    %v831 = vpow.pop %v830
    %v832 = vmul.f32 %v807, 1.442695
    %v833 = vpow.pop %v832
    %v834 = vmul.f32 %v808, 1.442695
    %v835 = vpow.pop %v834
    %v836 = vmul.f32 %v809, 1.442695
    %v837 = vpow.pop %v836
    %v838 = vmul.f32 %v810, 1.442695
    %v839 = vpow.pop %v838
    %v840 = vmul.f32 %v811, 1.442695
    %v841 = vpow.pop %v840
    %v842 = vmul.f32 %v812, 1.442695
    %v843 = vpow.pop %v842
    %v844 = vmul.f32 %v813, 1.442695
    %v845 = vpow.pop %v844
    %v846 = vsel %vm748, %v815, 0.0
    %847 = vadd.xlane.f32.xlu0 %v846
    %v848 = vpop.xlane.xlu0 %847
    %v849 = vsel %vm752, %v817, 0.0
    %850 = vadd.xlane.f32.xlu0 %v849
    %v851 = vpop.xlane.xlu0 %850
    %v852 = vsel %vm748, %v819, 0.0
    %853 = vadd.xlane.f32.xlu0 %v852
    %v854 = vpop.xlane.xlu0 %853
    %v855 = vsel %vm752, %v821, 0.0
    %856 = vadd.xlane.f32.xlu0 %v855
    %v857 = vpop.xlane.xlu0 %856
    %v858 = vsel %vm748, %v823, 0.0
    %859 = vadd.xlane.f32.xlu0 %v858
    %v860 = vpop.xlane.xlu0 %859
    %v861 = vsel %vm752, %v825, 0.0
    %862 = vadd.xlane.f32.xlu0 %v861
    %v863 = vpop.xlane.xlu0 %862
    %v864 = vsel %vm748, %v827, 0.0
    %865 = vadd.xlane.f32.xlu0 %v864
    %v866 = vpop.xlane.xlu0 %865
    %v867 = vsel %vm752, %v829, 0.0
    %868 = vadd.xlane.f32.xlu0 %v867
    %v869 = vpop.xlane.xlu0 %868
    %v870 = vsel %vm748, %v831, 0.0
    %871 = vadd.xlane.f32.xlu0 %v870
    %v872 = vpop.xlane.xlu0 %871
    %v873 = vsel %vm752, %v833, 0.0
    %874 = vadd.xlane.f32.xlu0 %v873
    %v875 = vpop.xlane.xlu0 %874
    %v876 = vsel %vm748, %v835, 0.0
    %877 = vadd.xlane.f32.xlu0 %v876
    %v878 = vpop.xlane.xlu0 %877
    %v879 = vsel %vm752, %v837, 0.0
    %880 = vadd.xlane.f32.xlu0 %v879
    %v881 = vpop.xlane.xlu0 %880
    %v882 = vsel %vm748, %v839, 0.0
    %883 = vadd.xlane.f32.xlu0 %v882
    %v884 = vpop.xlane.xlu0 %883
    %v885 = vsel %vm752, %v841, 0.0
    %886 = vadd.xlane.f32.xlu0 %v885
    %v887 = vpop.xlane.xlu0 %886
    %v888 = vsel %vm748, %v843, 0.0
    %889 = vadd.xlane.f32.xlu0 %v888
    %v890 = vpop.xlane.xlu0 %889
    %v891 = vsel %vm752, %v845, 0.0
    %892 = vadd.xlane.f32.xlu0 %v891
    %v893 = vpop.xlane.xlu0 %892
    %v894 = vmul.f32 %v815, %v572
    %v895 = vmul.f32 %v817, %v573
    %v896 = vmul.f32 %v819, %v572
    %v897 = vmul.f32 %v821, %v573
    %v898 = vmul.f32 %v823, %v572
    %v899 = vmul.f32 %v825, %v573
    %v900 = vmul.f32 %v827, %v572
    %v901 = vmul.f32 %v829, %v573
    %v902 = vmul.f32 %v831, %v572
    %v903 = vmul.f32 %v833, %v573
    %v904 = vmul.f32 %v835, %v572
    %v905 = vmul.f32 %v837, %v573
    %v906 = vmul.f32 %v839, %v572
    %v907 = vmul.f32 %v841, %v573
    %v908 = vmul.f32 %v843, %v572
    %v909 = vmul.f32 %v845, %v573
    %v910 = vsel %vm748, %v894, 0.0
    %911 = vadd.xlane.f32.xlu0 %v910
    %v912 = vpop.xlane.xlu0 %911
    %v913 = vsel %vm752, %v895, 0.0
    %914 = vadd.xlane.f32.xlu0 %v913
    %v915 = vpop.xlane.xlu0 %914
    %v916 = vsel %vm748, %v896, 0.0
    %917 = vadd.xlane.f32.xlu0 %v916
    %v918 = vpop.xlane.xlu0 %917
    %v919 = vsel %vm752, %v897, 0.0
    %920 = vadd.xlane.f32.xlu0 %v919
    %v921 = vpop.xlane.xlu0 %920
    %v922 = vsel %vm748, %v898, 0.0
    %923 = vadd.xlane.f32.xlu0 %v922
    %v924 = vpop.xlane.xlu0 %923
    %v925 = vsel %vm752, %v899, 0.0
    %926 = vadd.xlane.f32.xlu0 %v925
    %v927 = vpop.xlane.xlu0 %926
    %v928 = vsel %vm748, %v900, 0.0
    %929 = vadd.xlane.f32.xlu0 %v928
    %v930 = vpop.xlane.xlu0 %929
    %v931 = vsel %vm752, %v901, 0.0
    %932 = vadd.xlane.f32.xlu0 %v931
    %v933 = vpop.xlane.xlu0 %932
    %v934 = vsel %vm748, %v902, 0.0
    %935 = vadd.xlane.f32.xlu0 %v934
    %v936 = vpop.xlane.xlu0 %935
    %v937 = vsel %vm752, %v903, 0.0
    %938 = vadd.xlane.f32.xlu0 %v937
    %v939 = vpop.xlane.xlu0 %938
    %v940 = vsel %vm748, %v904, 0.0
    %941 = vadd.xlane.f32.xlu0 %v940
    %v942 = vpop.xlane.xlu0 %941
    %v943 = vsel %vm752, %v905, 0.0
    %944 = vadd.xlane.f32.xlu0 %v943
    %v945 = vpop.xlane.xlu0 %944
    %v946 = vsel %vm748, %v906, 0.0
    %947 = vadd.xlane.f32.xlu0 %v946
    %v948 = vpop.xlane.xlu0 %947
    %v949 = vsel %vm752, %v907, 0.0
    %950 = vadd.xlane.f32.xlu0 %v949
    %v951 = vpop.xlane.xlu0 %950
    %v952 = vsel %vm748, %v908, 0.0
    %953 = vadd.xlane.f32.xlu0 %v952
    %v954 = vpop.xlane.xlu0 %953
    %v955 = vsel %vm752, %v909, 0.0
    %956 = vadd.xlane.f32.xlu0 %v955
    %v957 = vpop.xlane.xlu0 %956
    %v958 = vrcp.pop %v848
    %v959 = vrcp.pop %v851
    %v960 = vrcp.pop %v854
    %v961 = vrcp.pop %v857
    %v962 = vrcp.pop %v860
    %v963 = vrcp.pop %v863
    %v964 = vrcp.pop %v866
    %v965 = vrcp.pop %v869
    %v966 = vrcp.pop %v872
    %v967 = vrcp.pop %v875
    %v968 = vrcp.pop %v878
    %v969 = vrcp.pop %v881
    %v970 = vrcp.pop %v884
    %v971 = vrcp.pop %v887
    %v972 = vrcp.pop %v890
    %v973 = vrcp.pop %v893
    %v974 = vmul.f32 %v912, %v958
    %v975 = vmul.f32 %v915, %v959
    %v976 = vmul.f32 %v918, %v960
    %v977 = vmul.f32 %v921, %v961
    %v978 = vmul.f32 %v924, %v962
    %v979 = vmul.f32 %v927, %v963
    %v980 = vmul.f32 %v930, %v964
    %v981 = vmul.f32 %v933, %v965
    %v982 = vmul.f32 %v936, %v966
    %v983 = vmul.f32 %v939, %v967
    %v984 = vmul.f32 %v942, %v968
    %v985 = vmul.f32 %v945, %v969
    %v986 = vmul.f32 %v948, %v970
    %v987 = vmul.f32 %v951, %v971
    %v988 = vmul.f32 %v954, %v972
    %v989 = vmul.f32 %v957, %v973
    %v990 = vlaneseq
    %v991 = vshrl.u32 %v990, 7
    %v992 = vsub.s32 1, %v991
    %v993 = vrot.slane %v360, %v992
    %v994 = vlaneseq
    %v995 = vshrl.u32 %v994, 7
    %v996 = vsub.s32 1, %v995
    %v997 = vrot.slane %v368, %v996
    %v998 = vlaneseq
    %v999 = vshrl.u32 %v998, 7
    %v1000 = vsub.s32 1, %v999
    %v1001 = vrot.slane %v367, %v1000
    %v1002 = vlaneseq
    %v1003 = vshrl.u32 %v1002, 7
    %v1004 = vsub.s32 1, %v1003
    %v1005 = vrot.slane %v369, %v1004
    %v1006 = vlaneseq
    %v1007 = vshrl.u32 %v1006, 7
    %v1008 = vsub.s32 1, %v1007
    %v1009 = vrot.slane %v377, %v1008
    %v1010 = vlaneseq
    %v1011 = vshrl.u32 %v1010, 7
    %v1012 = vsub.s32 1, %v1011
    %v1013 = vrot.slane %v385, %v1012
    %v1014 = vlaneseq
    %v1015 = vshrl.u32 %v1014, 7
    %v1016 = vsub.s32 1, %v1015
    %v1017 = vrot.slane %v384, %v1016
    %v1018 = vlaneseq
    %v1019 = vshrl.u32 %v1018, 7
    %v1020 = vsub.s32 1, %v1019
    %v1021 = vrot.slane %v386, %v1020
    %v1022 = vsel %vm465, %v997, %v993
    %v1023 = vsel %vm467, %v1001, %v1022
    %v1024 = vsel %vm469, %v1005, %v1023
    %v1025 = vsel %vm471, %v1009, %v1024
    %v1026 = vsel %vm473, %v1013, %v1025
    %v1027 = vsel %vm475, %v1017, %v1026
    %v1028 = vsel %vm477, %v1021, %v1027
    %1029 = vrot.lane.b32.xlu0 %v1028, 118
    %v1030 = vpop.permute.xlu0 %1029
    %1032 = vxpose.xlu0.b32.start [1/16] %v1030, 128
    %1033 = vxpose.xlu0.b32.cont [2/16] 0.0, 128
    %1034 = vxpose.xlu0.b32.cont [3/16] 0.0, 128
    %1035 = vxpose.xlu0.b32.cont [4/16] 0.0, 128
    %1036 = vxpose.xlu0.b32.cont [5/16] 0.0, 128
    %1037 = vxpose.xlu0.b32.cont [6/16] 0.0, 128
    %1038 = vxpose.xlu0.b32.cont [7/16] 0.0, 128
    %1039 = vxpose.xlu0.b32.cont [8/16] 0.0, 128
    %1040 = vxpose.xlu0.b32.cont [9/16] 0.0, 128
    %1041 = vxpose.xlu0.b32.cont [10/16] 0.0, 128
    %1042 = vxpose.xlu0.b32.cont [11/16] 0.0, 128
    %1043 = vxpose.xlu0.b32.cont [12/16] 0.0, 128
    %1044 = vxpose.xlu0.b32.cont [13/16] 0.0, 128
    %1045 = vxpose.xlu0.b32.cont [14/16] 0.0, 128
    %1046 = vxpose.xlu0.b32.cont [15/16] 0.0, 128
    %1047 = vxpose.xlu0.b32.end [16/16] 0.0, 128
    %v1048 = vpop.trf.xlu0
    %v1049 = vpop.trf.xlu0
    %v1050 = vpop.trf.xlu0
    %v1051 = vpop.trf.xlu0
    %v1052 = vpop.trf.xlu0
    %v1053 = vpop.trf.xlu0
    %v1054 = vpop.trf.xlu0
    %v1055 = vpop.trf.xlu0
    %v1056 = vpop.trf.xlu0
    %v1057 = vpop.trf.xlu0
    %v1058 = vpop.trf.xlu0
    %v1059 = vpop.trf.xlu0
    %v1060 = vpop.trf.xlu0
    %v1061 = vpop.trf.xlu0
    %v1062 = vpop.trf.xlu0
    %v1063 = vpop.trf.xlu0
    %v1064 = vlaneseq
    %v1065 = vshrl.u32 %v1064, 7
    %v1066 = vsub.s32 1, %v1065
    %v1067 = vrot.slane %v406, %v1066
    %v1068 = vlaneseq
    %v1069 = vshrl.u32 %v1068, 7
    %v1070 = vsub.s32 1, %v1069
    %v1071 = vrot.slane %v414, %v1070
    %v1072 = vlaneseq
    %v1073 = vshrl.u32 %v1072, 7
    %v1074 = vsub.s32 1, %v1073
    %v1075 = vrot.slane %v413, %v1074
    %v1076 = vlaneseq
    %v1077 = vshrl.u32 %v1076, 7
    %v1078 = vsub.s32 1, %v1077
    %v1079 = vrot.slane %v415, %v1078
    %v1080 = vlaneseq
    %v1081 = vshrl.u32 %v1080, 7
    %v1082 = vsub.s32 1, %v1081
    %v1083 = vrot.slane %v423, %v1082
    %v1084 = vlaneseq
    %v1085 = vshrl.u32 %v1084, 7
    %v1086 = vsub.s32 1, %v1085
    %v1087 = vrot.slane %v431, %v1086
    %v1088 = vlaneseq
    %v1089 = vshrl.u32 %v1088, 7
    %v1090 = vsub.s32 1, %v1089
    %v1091 = vrot.slane %v430, %v1090
    %v1092 = vlaneseq
    %v1093 = vshrl.u32 %v1092, 7
    %v1094 = vsub.s32 1, %v1093
    %v1095 = vrot.slane %v432, %v1094
    %v1096 = vsel %vm465, %v1071, %v1067
    %v1097 = vsel %vm467, %v1075, %v1096
    %v1098 = vsel %vm469, %v1079, %v1097
    %v1099 = vsel %vm471, %v1083, %v1098
    %v1100 = vsel %vm473, %v1087, %v1099
    %v1101 = vsel %vm475, %v1091, %v1100
    %v1102 = vsel %vm477, %v1095, %v1101
    %1103 = vrot.lane.b32.xlu0 %v1102, 108
    %v1104 = vpop.permute.xlu0 %1103
    %1106 = vxpose.xlu0.b32.start [1/16] %v1104, 128
    %1107 = vxpose.xlu0.b32.cont [2/16] 0.0, 128
    %1108 = vxpose.xlu0.b32.cont [3/16] 0.0, 128
    %1109 = vxpose.xlu0.b32.cont [4/16] 0.0, 128
    %1110 = vxpose.xlu0.b32.cont [5/16] 0.0, 128
    %1111 = vxpose.xlu0.b32.cont [6/16] 0.0, 128
    %1112 = vxpose.xlu0.b32.cont [7/16] 0.0, 128
    %1113 = vxpose.xlu0.b32.cont [8/16] 0.0, 128
    %1114 = vxpose.xlu0.b32.cont [9/16] 0.0, 128
    %1115 = vxpose.xlu0.b32.cont [10/16] 0.0, 128
    %1116 = vxpose.xlu0.b32.cont [11/16] 0.0, 128
    %1117 = vxpose.xlu0.b32.cont [12/16] 0.0, 128
    %1118 = vxpose.xlu0.b32.cont [13/16] 0.0, 128
    %1119 = vxpose.xlu0.b32.cont [14/16] 0.0, 128
    %1120 = vxpose.xlu0.b32.cont [15/16] 0.0, 128
    %1121 = vxpose.xlu0.b32.end [16/16] 0.0, 128
    %v1122 = vpop.trf.xlu0
    %v1123 = vpop.trf.xlu0
    %v1124 = vpop.trf.xlu0
    %v1125 = vpop.trf.xlu0
    %v1126 = vpop.trf.xlu0
    %v1127 = vpop.trf.xlu0
    %v1128 = vpop.trf.xlu0
    %v1129 = vpop.trf.xlu0
    %v1130 = vpop.trf.xlu0
    %v1131 = vpop.trf.xlu0
    %v1132 = vpop.trf.xlu0
    %v1133 = vpop.trf.xlu0
    %v1134 = vpop.trf.xlu0
    %v1135 = vpop.trf.xlu0
    %v1136 = vpop.trf.xlu0
    %v1137 = vpop.trf.xlu0
    %v1138 = vlaneseq
    %v1139 = vshrl.u32 %v1138, 7
    %v1140 = vsub.s32 1, %v1139
    %v1141 = vrot.slane %v306, %v1140
    %1143 = vbcast.lane.b32.xlu0 %v1141, 256
    %v1144 = vpop.permute.xlu0 %1143
    %s1146 = sor.u32 256, 8
    %1147 = vbcast.lane.b32.xlu0 %v1141, %s1146
    %v1148 = vpop.permute.xlu0 %1147
    %v1149 = vlaneseq
    %v1150 = vshrl.u32 %v1149, 7
    %v1151 = vsub.s32 1, %v1150
    %v1152 = vrot.slane %v314, %v1151
    %1154 = vbcast.lane.b32.xlu0 %v1152, 256
    %v1155 = vpop.permute.xlu0 %1154
    %s1157 = sor.u32 256, 8
    %1158 = vbcast.lane.b32.xlu0 %v1152, %s1157
    %v1159 = vpop.permute.xlu0 %1158
    %v1160 = vlaneseq
    %v1161 = vshrl.u32 %v1160, 7
    %v1162 = vsub.s32 1, %v1161
    %v1163 = vrot.slane %v313, %v1162
    %1165 = vbcast.lane.b32.xlu0 %v1163, 256
    %v1166 = vpop.permute.xlu0 %1165
    %s1168 = sor.u32 256, 8
    %1169 = vbcast.lane.b32.xlu0 %v1163, %s1168
    %v1170 = vpop.permute.xlu0 %1169
    %v1171 = vlaneseq
    %v1172 = vshrl.u32 %v1171, 7
    %v1173 = vsub.s32 1, %v1172
    %v1174 = vrot.slane %v315, %v1173
    %1176 = vbcast.lane.b32.xlu0 %v1174, 256
    %v1177 = vpop.permute.xlu0 %1176
    %s1179 = sor.u32 256, 8
    %1180 = vbcast.lane.b32.xlu0 %v1174, %s1179
    %v1181 = vpop.permute.xlu0 %1180
    %v1182 = vlaneseq
    %v1183 = vshrl.u32 %v1182, 7
    %v1184 = vsub.s32 1, %v1183
    %v1185 = vrot.slane %v323, %v1184
    %1187 = vbcast.lane.b32.xlu0 %v1185, 256
    %v1188 = vpop.permute.xlu0 %1187
    %s1190 = sor.u32 256, 8
    %1191 = vbcast.lane.b32.xlu0 %v1185, %s1190
    %v1192 = vpop.permute.xlu0 %1191
    %v1193 = vlaneseq
    %v1194 = vshrl.u32 %v1193, 7
    %v1195 = vsub.s32 1, %v1194
    %v1196 = vrot.slane %v331, %v1195
    %1198 = vbcast.lane.b32.xlu0 %v1196, 256
    %v1199 = vpop.permute.xlu0 %1198
    %s1201 = sor.u32 256, 8
    %1202 = vbcast.lane.b32.xlu0 %v1196, %s1201
    %v1203 = vpop.permute.xlu0 %1202
    %v1204 = vlaneseq
    %v1205 = vshrl.u32 %v1204, 7
    %v1206 = vsub.s32 1, %v1205
    %v1207 = vrot.slane %v330, %v1206
    %1209 = vbcast.lane.b32.xlu0 %v1207, 256
    %v1210 = vpop.permute.xlu0 %1209
    %s1212 = sor.u32 256, 8
    %1213 = vbcast.lane.b32.xlu0 %v1207, %s1212
    %v1214 = vpop.permute.xlu0 %1213
    %v1215 = vlaneseq
    %v1216 = vshrl.u32 %v1215, 7
    %v1217 = vsub.s32 1, %v1216
    %v1218 = vrot.slane %v332, %v1217
    %1220 = vbcast.lane.b32.xlu0 %v1218, 256
    %v1221 = vpop.permute.xlu0 %1220
    %s1223 = sor.u32 256, 8
    %1224 = vbcast.lane.b32.xlu0 %v1218, %s1223
    %v1225 = vpop.permute.xlu0 %1224
    %v1226 = vmul.f32 %v1144, %v1048
    %v1227 = vmul.f32 %v1148, %v1049
    %v1228 = vmul.f32 %v1155, %v1048
    %v1229 = vmul.f32 %v1159, %v1049
    %v1230 = vmul.f32 %v1166, %v1048
    %v1231 = vmul.f32 %v1170, %v1049
    %v1232 = vmul.f32 %v1177, %v1048
    %v1233 = vmul.f32 %v1181, %v1049
    %v1234 = vmul.f32 %v1188, %v1048
    %v1235 = vmul.f32 %v1192, %v1049
    %v1236 = vmul.f32 %v1199, %v1048
    %v1237 = vmul.f32 %v1203, %v1049
    %v1238 = vmul.f32 %v1210, %v1048
    %v1239 = vmul.f32 %v1214, %v1049
    %v1240 = vmul.f32 %v1221, %v1048
    %v1241 = vmul.f32 %v1225, %v1049
    %v1242 = vadd.f32 %v1226, %v695
    %v1243 = vadd.f32 %v1227, %v695
    %v1244 = vadd.f32 %v1228, %v699
    %v1245 = vadd.f32 %v1229, %v699
    %v1246 = vadd.f32 %v1230, %v703
    %v1247 = vadd.f32 %v1231, %v703
    %v1248 = vadd.f32 %v1232, %v707
    %v1249 = vadd.f32 %v1233, %v707
    %v1250 = vadd.f32 %v1234, %v711
    %v1251 = vadd.f32 %v1235, %v711
    %v1252 = vadd.f32 %v1236, %v715
    %v1253 = vadd.f32 %v1237, %v715
    %v1254 = vadd.f32 %v1238, %v719
    %v1255 = vadd.f32 %v1239, %v719
    %v1256 = vadd.f32 %v1240, %v723
    %v1257 = vadd.f32 %v1241, %v723
    %v1258 = vsel %vm748, %v1242, -inf
    %1259 = vmax.xlane.f32.xlu0 %v1258
    %v1260 = vpop.xlane.xlu0 %1259
    %v1261 = vsel %vm752, %v1243, -inf
    %1262 = vmax.xlane.f32.xlu0 %v1261
    %v1263 = vpop.xlane.xlu0 %1262
    %v1264 = vsel %vm748, %v1244, -inf
    %1265 = vmax.xlane.f32.xlu0 %v1264
    %v1266 = vpop.xlane.xlu0 %1265
    %v1267 = vsel %vm752, %v1245, -inf
    %1268 = vmax.xlane.f32.xlu0 %v1267
    %v1269 = vpop.xlane.xlu0 %1268
    %v1270 = vsel %vm748, %v1246, -inf
    %1271 = vmax.xlane.f32.xlu0 %v1270
    %v1272 = vpop.xlane.xlu0 %1271
    %v1273 = vsel %vm752, %v1247, -inf
    %1274 = vmax.xlane.f32.xlu0 %v1273
    %v1275 = vpop.xlane.xlu0 %1274
    %v1276 = vsel %vm748, %v1248, -inf
    %1277 = vmax.xlane.f32.xlu0 %v1276
    %v1278 = vpop.xlane.xlu0 %1277
    %v1279 = vsel %vm752, %v1249, -inf
    %1280 = vmax.xlane.f32.xlu0 %v1279
    %v1281 = vpop.xlane.xlu0 %1280
    %v1282 = vsel %vm748, %v1250, -inf
    %1283 = vmax.xlane.f32.xlu0 %v1282
    %v1284 = vpop.xlane.xlu0 %1283
    %v1285 = vsel %vm752, %v1251, -inf
    %1286 = vmax.xlane.f32.xlu0 %v1285
    %v1287 = vpop.xlane.xlu0 %1286
    %v1288 = vsel %vm748, %v1252, -inf
    %1289 = vmax.xlane.f32.xlu0 %v1288
    %v1290 = vpop.xlane.xlu0 %1289
    %v1291 = vsel %vm752, %v1253, -inf
    %1292 = vmax.xlane.f32.xlu0 %v1291
    %v1293 = vpop.xlane.xlu0 %1292
    %v1294 = vsel %vm748, %v1254, -inf
    %1295 = vmax.xlane.f32.xlu0 %v1294
    %v1296 = vpop.xlane.xlu0 %1295
    %v1297 = vsel %vm752, %v1255, -inf
    %1298 = vmax.xlane.f32.xlu0 %v1297
    %v1299 = vpop.xlane.xlu0 %1298
    %v1300 = vsel %vm748, %v1256, -inf
    %1301 = vmax.xlane.f32.xlu0 %v1300
    %v1302 = vpop.xlane.xlu0 %1301
    %v1303 = vsel %vm752, %v1257, -inf
    %1304 = vmax.xlane.f32.xlu0 %v1303
    %v1305 = vpop.xlane.xlu0 %1304
    %v1306 = vsub.f32 %v1242, %v1260
    %v1307 = vsub.f32 %v1243, %v1263
    %v1308 = vsub.f32 %v1244, %v1266
    %v1309 = vsub.f32 %v1245, %v1269
    %v1310 = vsub.f32 %v1246, %v1272
    %v1311 = vsub.f32 %v1247, %v1275
    %v1312 = vsub.f32 %v1248, %v1278
    %v1313 = vsub.f32 %v1249, %v1281
    %v1314 = vsub.f32 %v1250, %v1284
    %v1315 = vsub.f32 %v1251, %v1287
    %v1316 = vsub.f32 %v1252, %v1290
    %v1317 = vsub.f32 %v1253, %v1293
    %v1318 = vsub.f32 %v1254, %v1296
    %v1319 = vsub.f32 %v1255, %v1299
    %v1320 = vsub.f32 %v1256, %v1302
    %v1321 = vsub.f32 %v1257, %v1305
    %v1322 = vmul.f32 %v1306, 1.442695
    %v1323 = vpow.pop %v1322
    %v1324 = vmul.f32 %v1307, 1.442695
    %v1325 = vpow.pop %v1324
    %v1326 = vmul.f32 %v1308, 1.442695
    %v1327 = vpow.pop %v1326
    %v1328 = vmul.f32 %v1309, 1.442695
    %v1329 = vpow.pop %v1328
    %v1330 = vmul.f32 %v1310, 1.442695
    %v1331 = vpow.pop %v1330
    %v1332 = vmul.f32 %v1311, 1.442695
    %v1333 = vpow.pop %v1332
    %v1334 = vmul.f32 %v1312, 1.442695
    %v1335 = vpow.pop %v1334
    %v1336 = vmul.f32 %v1313, 1.442695
    %v1337 = vpow.pop %v1336
    %v1338 = vmul.f32 %v1314, 1.442695
    %v1339 = vpow.pop %v1338
    %v1340 = vmul.f32 %v1315, 1.442695
    %v1341 = vpow.pop %v1340
    %v1342 = vmul.f32 %v1316, 1.442695
    %v1343 = vpow.pop %v1342
    %v1344 = vmul.f32 %v1317, 1.442695
    %v1345 = vpow.pop %v1344
    %v1346 = vmul.f32 %v1318, 1.442695
    %v1347 = vpow.pop %v1346
    %v1348 = vmul.f32 %v1319, 1.442695
    %v1349 = vpow.pop %v1348
    %v1350 = vmul.f32 %v1320, 1.442695
    %v1351 = vpow.pop %v1350
    %v1352 = vmul.f32 %v1321, 1.442695
    %v1353 = vpow.pop %v1352
    %v1354 = vsel %vm748, %v1323, 0.0
    %1355 = vadd.xlane.f32.xlu0 %v1354
    %v1356 = vpop.xlane.xlu0 %1355
    %v1357 = vsel %vm752, %v1325, 0.0
    %1358 = vadd.xlane.f32.xlu0 %v1357
    %v1359 = vpop.xlane.xlu0 %1358
    %v1360 = vsel %vm748, %v1327, 0.0
    %1361 = vadd.xlane.f32.xlu0 %v1360
    %v1362 = vpop.xlane.xlu0 %1361
    %v1363 = vsel %vm752, %v1329, 0.0
    %1364 = vadd.xlane.f32.xlu0 %v1363
    %v1365 = vpop.xlane.xlu0 %1364
    %v1366 = vsel %vm748, %v1331, 0.0
    %1367 = vadd.xlane.f32.xlu0 %v1366
    %v1368 = vpop.xlane.xlu0 %1367
    %v1369 = vsel %vm752, %v1333, 0.0
    %1370 = vadd.xlane.f32.xlu0 %v1369
    %v1371 = vpop.xlane.xlu0 %1370
    %v1372 = vsel %vm748, %v1335, 0.0
    %1373 = vadd.xlane.f32.xlu0 %v1372
    %v1374 = vpop.xlane.xlu0 %1373
    %v1375 = vsel %vm752, %v1337, 0.0
    %1376 = vadd.xlane.f32.xlu0 %v1375
    %v1377 = vpop.xlane.xlu0 %1376
    %v1378 = vsel %vm748, %v1339, 0.0
    %1379 = vadd.xlane.f32.xlu0 %v1378
    %v1380 = vpop.xlane.xlu0 %1379
    %v1381 = vsel %vm752, %v1341, 0.0
    %1382 = vadd.xlane.f32.xlu0 %v1381
    %v1383 = vpop.xlane.xlu0 %1382
    %v1384 = vsel %vm748, %v1343, 0.0
    %1385 = vadd.xlane.f32.xlu0 %v1384
    %v1386 = vpop.xlane.xlu0 %1385
    %v1387 = vsel %vm752, %v1345, 0.0
    %1388 = vadd.xlane.f32.xlu0 %v1387
    %v1389 = vpop.xlane.xlu0 %1388
    %v1390 = vsel %vm748, %v1347, 0.0
    %1391 = vadd.xlane.f32.xlu0 %v1390
    %v1392 = vpop.xlane.xlu0 %1391
    %v1393 = vsel %vm752, %v1349, 0.0
    %1394 = vadd.xlane.f32.xlu0 %v1393
    %v1395 = vpop.xlane.xlu0 %1394
    %v1396 = vsel %vm748, %v1351, 0.0
    %1397 = vadd.xlane.f32.xlu0 %v1396
    %v1398 = vpop.xlane.xlu0 %1397
    %v1399 = vsel %vm752, %v1353, 0.0
    %1400 = vadd.xlane.f32.xlu0 %v1399
    %v1401 = vpop.xlane.xlu0 %1400
    %v1402 = vmul.f32 %v1323, %v1122
    %v1403 = vmul.f32 %v1325, %v1123
    %v1404 = vmul.f32 %v1327, %v1122
    %v1405 = vmul.f32 %v1329, %v1123
    %v1406 = vmul.f32 %v1331, %v1122
    %v1407 = vmul.f32 %v1333, %v1123
    %v1408 = vmul.f32 %v1335, %v1122
    %v1409 = vmul.f32 %v1337, %v1123
    %v1410 = vmul.f32 %v1339, %v1122
    %v1411 = vmul.f32 %v1341, %v1123
    %v1412 = vmul.f32 %v1343, %v1122
    %v1413 = vmul.f32 %v1345, %v1123
    %v1414 = vmul.f32 %v1347, %v1122
    %v1415 = vmul.f32 %v1349, %v1123
    %v1416 = vmul.f32 %v1351, %v1122
    %v1417 = vmul.f32 %v1353, %v1123
    %v1418 = vsel %vm748, %v1402, 0.0
    %1419 = vadd.xlane.f32.xlu0 %v1418
    %v1420 = vpop.xlane.xlu0 %1419
    %v1421 = vsel %vm752, %v1403, 0.0
    %1422 = vadd.xlane.f32.xlu0 %v1421
    %v1423 = vpop.xlane.xlu0 %1422
    %v1424 = vsel %vm748, %v1404, 0.0
    %1425 = vadd.xlane.f32.xlu0 %v1424
    %v1426 = vpop.xlane.xlu0 %1425
    %v1427 = vsel %vm752, %v1405, 0.0
    %1428 = vadd.xlane.f32.xlu0 %v1427
    %v1429 = vpop.xlane.xlu0 %1428
    %v1430 = vsel %vm748, %v1406, 0.0
    %1431 = vadd.xlane.f32.xlu0 %v1430
    %v1432 = vpop.xlane.xlu0 %1431
    %v1433 = vsel %vm752, %v1407, 0.0
    %1434 = vadd.xlane.f32.xlu0 %v1433
    %v1435 = vpop.xlane.xlu0 %1434
    %v1436 = vsel %vm748, %v1408, 0.0
    %1437 = vadd.xlane.f32.xlu0 %v1436
    %v1438 = vpop.xlane.xlu0 %1437
    %v1439 = vsel %vm752, %v1409, 0.0
    %1440 = vadd.xlane.f32.xlu0 %v1439
    %v1441 = vpop.xlane.xlu0 %1440
    %v1442 = vsel %vm748, %v1410, 0.0
    %1443 = vadd.xlane.f32.xlu0 %v1442
    %v1444 = vpop.xlane.xlu0 %1443
    %v1445 = vsel %vm752, %v1411, 0.0
    %1446 = vadd.xlane.f32.xlu0 %v1445
    %v1447 = vpop.xlane.xlu0 %1446
    %v1448 = vsel %vm748, %v1412, 0.0
    %1449 = vadd.xlane.f32.xlu0 %v1448
    %v1450 = vpop.xlane.xlu0 %1449
    %v1451 = vsel %vm752, %v1413, 0.0
    %1452 = vadd.xlane.f32.xlu0 %v1451
    %v1453 = vpop.xlane.xlu0 %1452
    %v1454 = vsel %vm748, %v1414, 0.0
    %1455 = vadd.xlane.f32.xlu0 %v1454
    %v1456 = vpop.xlane.xlu0 %1455
    %v1457 = vsel %vm752, %v1415, 0.0
    %1458 = vadd.xlane.f32.xlu0 %v1457
    %v1459 = vpop.xlane.xlu0 %1458
    %v1460 = vsel %vm748, %v1416, 0.0
    %1461 = vadd.xlane.f32.xlu0 %v1460
    %v1462 = vpop.xlane.xlu0 %1461
    %v1463 = vsel %vm752, %v1417, 0.0
    %1464 = vadd.xlane.f32.xlu0 %v1463
    %v1465 = vpop.xlane.xlu0 %1464
    %v1466 = vrcp.pop %v1356
    %v1467 = vrcp.pop %v1359
    %v1468 = vrcp.pop %v1362
    %v1469 = vrcp.pop %v1365
    %v1470 = vrcp.pop %v1368
    %v1471 = vrcp.pop %v1371
    %v1472 = vrcp.pop %v1374
    %v1473 = vrcp.pop %v1377
    %v1474 = vrcp.pop %v1380
    %v1475 = vrcp.pop %v1383
    %v1476 = vrcp.pop %v1386
    %v1477 = vrcp.pop %v1389
    %v1478 = vrcp.pop %v1392
    %v1479 = vrcp.pop %v1395
    %v1480 = vrcp.pop %v1398
    %v1481 = vrcp.pop %v1401
    %v1482 = vmul.f32 %v1420, %v1466
    %v1483 = vmul.f32 %v1423, %v1467
    %v1484 = vmul.f32 %v1426, %v1468
    %v1485 = vmul.f32 %v1429, %v1469
    %v1486 = vmul.f32 %v1432, %v1470
    %v1487 = vmul.f32 %v1435, %v1471
    %v1488 = vmul.f32 %v1438, %v1472
    %v1489 = vmul.f32 %v1441, %v1473
    %v1490 = vmul.f32 %v1444, %v1474
    %v1491 = vmul.f32 %v1447, %v1475
    %v1492 = vmul.f32 %v1450, %v1476
    %v1493 = vmul.f32 %v1453, %v1477
    %v1494 = vmul.f32 %v1456, %v1478
    %v1495 = vmul.f32 %v1459, %v1479
    %v1496 = vmul.f32 %v1462, %v1480
    %v1497 = vmul.f32 %v1465, %v1481
    %v1514 = vlaneseq
    %v1515 = vshrl.u32 %v1514, 7
    %v1516 = vsub.s32 %v106, %v1515
    %v1517 = vrot.slane %v974, %v1516
    %v1518 = vadd.s32 %v106, 4294967288
    %v1519 = vlaneseq
    %v1520 = vshrl.u32 %v1519, 7
    %v1521 = vsub.s32 %v1518, %v1520
    %v1522 = vrot.slane %v975, %v1521
    %vm1523 = vcmask 130112
    %v1524 = vsel %vm1523, %v1522, %v1517
    %v1525 = vlaneseq
    %v1526 = vshrl.u32 %v1525, 7
    %v1527 = vsub.s32 %v106, %v1526
    %v1528 = vrot.slane %v976, %v1527
    %v1529 = vlaneseq
    %v1530 = vshrl.u32 %v1529, 7
    %v1531 = vsub.s32 %v1518, %v1530
    %v1532 = vrot.slane %v977, %v1531
    %v1533 = vsel %vm1523, %v1532, %v1528
    %v1534 = vlaneseq
    %v1535 = vshrl.u32 %v1534, 7
    %v1536 = vsub.s32 %v106, %v1535
    %v1537 = vrot.slane %v978, %v1536
    %v1538 = vlaneseq
    %v1539 = vshrl.u32 %v1538, 7
    %v1540 = vsub.s32 %v1518, %v1539
    %v1541 = vrot.slane %v979, %v1540
    %v1542 = vsel %vm1523, %v1541, %v1537
    %v1543 = vlaneseq
    %v1544 = vshrl.u32 %v1543, 7
    %v1545 = vsub.s32 %v106, %v1544
    %v1546 = vrot.slane %v980, %v1545
    %v1547 = vlaneseq
    %v1548 = vshrl.u32 %v1547, 7
    %v1549 = vsub.s32 %v1518, %v1548
    %v1550 = vrot.slane %v981, %v1549
    %v1551 = vsel %vm1523, %v1550, %v1546
    %v1552 = vlaneseq
    %v1553 = vshrl.u32 %v1552, 7
    %v1554 = vsub.s32 %v106, %v1553
    %v1555 = vrot.slane %v982, %v1554
    %v1556 = vlaneseq
    %v1557 = vshrl.u32 %v1556, 7
    %v1558 = vsub.s32 %v1518, %v1557
    %v1559 = vrot.slane %v983, %v1558
    %v1560 = vsel %vm1523, %v1559, %v1555
    %v1561 = vlaneseq
    %v1562 = vshrl.u32 %v1561, 7
    %v1563 = vsub.s32 %v106, %v1562
    %v1564 = vrot.slane %v984, %v1563
    %v1565 = vlaneseq
    %v1566 = vshrl.u32 %v1565, 7
    %v1567 = vsub.s32 %v1518, %v1566
    %v1568 = vrot.slane %v985, %v1567
    %v1569 = vsel %vm1523, %v1568, %v1564
    %v1570 = vlaneseq
    %v1571 = vshrl.u32 %v1570, 7
    %v1572 = vsub.s32 %v106, %v1571
    %v1573 = vrot.slane %v986, %v1572
    %v1574 = vlaneseq
    %v1575 = vshrl.u32 %v1574, 7
    %v1576 = vsub.s32 %v1518, %v1575
    %v1577 = vrot.slane %v987, %v1576
    %v1578 = vsel %vm1523, %v1577, %v1573
    %v1579 = vlaneseq
    %v1580 = vshrl.u32 %v1579, 7
    %v1581 = vsub.s32 %v106, %v1580
    %v1582 = vrot.slane %v988, %v1581
    %v1583 = vlaneseq
    %v1584 = vshrl.u32 %v1583, 7
    %v1585 = vsub.s32 %v1518, %v1584
    %v1586 = vrot.slane %v989, %v1585
    %v1587 = vsel %vm1523, %v1586, %v1582
    %v1612 = vlaneseq
    %v1613 = vshrl.u32 %v1612, 7
    %v1614 = vsub.s32 %v106, %v1613
    %v1615 = vrot.slane %v1482, %v1614
    %v1616 = vlaneseq
    %v1617 = vshrl.u32 %v1616, 7
    %v1618 = vsub.s32 %v1518, %v1617
    %v1619 = vrot.slane %v1483, %v1618
    %v1620 = vsel %vm1523, %v1619, %v1615
    %v1621 = vlaneseq
    %v1622 = vshrl.u32 %v1621, 7
    %v1623 = vsub.s32 %v106, %v1622
    %v1624 = vrot.slane %v1484, %v1623
    %v1625 = vlaneseq
    %v1626 = vshrl.u32 %v1625, 7
    %v1627 = vsub.s32 %v1518, %v1626
    %v1628 = vrot.slane %v1485, %v1627
    %v1629 = vsel %vm1523, %v1628, %v1624
    %v1630 = vlaneseq
    %v1631 = vshrl.u32 %v1630, 7
    %v1632 = vsub.s32 %v106, %v1631
    %v1633 = vrot.slane %v1486, %v1632
    %v1634 = vlaneseq
    %v1635 = vshrl.u32 %v1634, 7
    %v1636 = vsub.s32 %v1518, %v1635
    %v1637 = vrot.slane %v1487, %v1636
    %v1638 = vsel %vm1523, %v1637, %v1633
    %v1639 = vlaneseq
    %v1640 = vshrl.u32 %v1639, 7
    %v1641 = vsub.s32 %v106, %v1640
    %v1642 = vrot.slane %v1488, %v1641
    %v1643 = vlaneseq
    %v1644 = vshrl.u32 %v1643, 7
    %v1645 = vsub.s32 %v1518, %v1644
    %v1646 = vrot.slane %v1489, %v1645
    %v1647 = vsel %vm1523, %v1646, %v1642
    %v1648 = vlaneseq
    %v1649 = vshrl.u32 %v1648, 7
    %v1650 = vsub.s32 %v106, %v1649
    %v1651 = vrot.slane %v1490, %v1650
    %v1652 = vlaneseq
    %v1653 = vshrl.u32 %v1652, 7
    %v1654 = vsub.s32 %v1518, %v1653
    %v1655 = vrot.slane %v1491, %v1654
    %v1656 = vsel %vm1523, %v1655, %v1651
    %v1657 = vlaneseq
    %v1658 = vshrl.u32 %v1657, 7
    %v1659 = vsub.s32 %v106, %v1658
    %v1660 = vrot.slane %v1492, %v1659
    %v1661 = vlaneseq
    %v1662 = vshrl.u32 %v1661, 7
    %v1663 = vsub.s32 %v1518, %v1662
    %v1664 = vrot.slane %v1493, %v1663
    %v1665 = vsel %vm1523, %v1664, %v1660
    %v1666 = vlaneseq
    %v1667 = vshrl.u32 %v1666, 7
    %v1668 = vsub.s32 %v106, %v1667
    %v1669 = vrot.slane %v1494, %v1668
    %v1670 = vlaneseq
    %v1671 = vshrl.u32 %v1670, 7
    %v1672 = vsub.s32 %v1518, %v1671
    %v1673 = vrot.slane %v1495, %v1672
    %v1674 = vsel %vm1523, %v1673, %v1669
    %v1675 = vlaneseq
    %v1676 = vshrl.u32 %v1675, 7
    %v1677 = vsub.s32 %v106, %v1676
    %v1678 = vrot.slane %v1496, %v1677
    %v1679 = vlaneseq
    %v1680 = vshrl.u32 %v1679, 7
    %v1681 = vsub.s32 %v1518, %v1680
    %v1682 = vrot.slane %v1497, %v1681
    %v1683 = vsel %vm1523, %v1682, %v1678
    %vm1692 = vcmask 1040384
    %v1693 = vsel %vm1692, %v1524, %v1620
    %v1694 = vsel %vm1692, %v1533, %v1629
    %v1695 = vsel %vm1692, %v1542, %v1638
    %v1696 = vsel %vm1692, %v1551, %v1647
    %v1697 = vsel %vm1692, %v1560, %v1656
    %v1698 = vsel %vm1692, %v1569, %v1665
    %v1699 = vsel %vm1692, %v1578, %v1674
    %v1700 = vsel %vm1692, %v1587, %v1683
    %v1701 = vlaneseq
    %v1702 = vshrl.u32 %v1701, 7
    %v1703 = vsub.s32 3, %v1702
    %v1704 = vrot.slane %v161, %v1703
    %v1713 = vcombine.low %v1693, %v1694
    %v1714 = vcombine.low %v1695, %v1696
    %v1716 = vunpack.c.l.s4 1983009808
    %v1717 = vunpack.c.0.s8 %v1716
    %v1718 = vlaneseq
    %v1719 = vshrl.u32 %v1718, 7
    %v1720 = vsub.s32 %v1717, %v1719
    %v1721 = vrot.slane %v1713, %v1720
    %v1723 = vunpack.c.l.s4 1983009808
    %v1724 = vunpack.c.0.s8 %v1723
    %v1725 = vlaneseq
    %v1726 = vshrl.u32 %v1725, 7
    %v1727 = vsub.s32 %v1724, %v1726
    %v1728 = vrot.slane %v1714, %v1727
    %v1729 = vcombine.low %v1721, %v1728
    %v1730 = vcombine.low %v1697, %v1698
    %v1731 = vcombine.low %v1699, %v1700
    %v1733 = vunpack.c.l.s4 1983009808
    %v1734 = vunpack.c.0.s8 %v1733
    %v1735 = vlaneseq
    %v1736 = vshrl.u32 %v1735, 7
    %v1737 = vsub.s32 %v1734, %v1736
    %v1738 = vrot.slane %v1730, %v1737
    %v1740 = vunpack.c.l.s4 1983009808
    %v1741 = vunpack.c.0.s8 %v1740
    %v1742 = vlaneseq
    %v1743 = vshrl.u32 %v1742, 7
    %v1744 = vsub.s32 %v1741, %v1743
    %v1745 = vrot.slane %v1731, %v1744
    %v1746 = vcombine.low %v1738, %v1745
    %1748 = vrot.lane.b32.xlu0 %v163, 98
    %v1749 = vpop.permute.xlu0 %1748
    %1750 = vrot.lane.b32.xlu0 %v164, 98
    %v1751 = vpop.permute.xlu0 %1750
    %v1753 = vsel %vm207, %v1729, 0
    %v1755 = vsel %vm207, %v1746, 0
    %v1757 = vsel %vm212, %v1751, 0
    %1759 = vmatprep.subr.mxu0 0.0
    %1760 = vmatpush1.msra.mxu0 %v1749
    %1761 = vmatprep.subr.mxu0 0.0
    %1762 = vmatpush1.msra.mxu0 %v1757
    %1763 = vmatprep.subr.mxu0 0.0
    %1764 = vmatpush1.msra.mxu0 0.0
    %1765 = vmatprep.subr.mxu0 0.0
    %1766 = vmatpush1.msra.mxu0 0.0
    %1767 = vmatprep.subr.mxu0 0.0
    %1768 = vmatpush1.msra.mxu0 0.0
    %1769 = vmatprep.subr.mxu0 0.0
    %1770 = vmatpush1.msra.mxu0 0.0
    %1771 = vmatprep.subr.mxu0 0.0
    %1772 = vmatpush1.msra.mxu0 0.0
    %1773 = vmatprep.subr.mxu0 0.0
    %1774 = vmatpush1.msra.mxu0 0.0
    %1775 = vmatprep.subr.mxu0 0.0
    %1776 = vmatpush1.msra.mxu0 0.0
    %1777 = vmatprep.subr.mxu0 0.0
    %1778 = vmatpush1.msra.mxu0 0.0
    %1779 = vmatprep.subr.mxu0 0.0
    %1780 = vmatpush1.msra.mxu0 0.0
    %1781 = vmatprep.subr.mxu0 0.0
    %1782 = vmatpush1.msra.mxu0 0.0
    %1783 = vmatprep.subr.mxu0 0.0
    %1784 = vmatpush1.msra.mxu0 0.0
    %1785 = vmatprep.subr.mxu0 0.0
    %1786 = vmatpush1.msra.mxu0 0.0
    %1787 = vmatprep.subr.mxu0 0.0
    %1788 = vmatpush1.msra.mxu0 0.0
    %1789 = vmatprep.subr.mxu0 0.0
    %1790 = vmatpush1.msra.mxu0 0.0
    %1791 = vmatprep.subr.mxu0 0.0
    %1792 = vmatpush1.msra.mxu0 0.0
    %1793 = vmatprep.subr.mxu0 0.0
    %1794 = vmatpush1.msra.mxu0 0.0
    %1795 = vmatprep.subr.mxu0 0.0
    %1796 = vmatpush1.msra.mxu0 0.0
    %1797 = vmatprep.subr.mxu0 0.0
    %1798 = vmatpush1.msra.mxu0 0.0
    %1799 = vmatprep.subr.mxu0 0.0
    %1800 = vmatpush1.msra.mxu0 0.0
    %1801 = vmatprep.subr.mxu0 0.0
    %1802 = vmatpush1.msra.mxu0 0.0
    %1803 = vmatprep.subr.mxu0 0.0
    %1804 = vmatpush1.msra.mxu0 0.0
    %1805 = vmatprep.subr.mxu0 0.0
    %1806 = vmatpush1.msra.mxu0 0.0
    %1807 = vmatprep.subr.mxu0 0.0
    %1808 = vmatpush1.msra.mxu0 0.0
    %1809 = vmatprep.subr.mxu0 0.0
    %1810 = vmatpush1.msra.mxu0 0.0
    %1811 = vmatprep.subr.mxu0 0.0
    %1812 = vmatpush1.msra.mxu0 0.0
    %1813 = vmatprep.subr.mxu0 0.0
    %1814 = vmatpush1.msra.mxu0 0.0
    %1815 = vmatprep.subr.mxu0 0.0
    %1816 = vmatpush1.msra.mxu0 0.0
    %1817 = vmatprep.subr.mxu0 0.0
    %1818 = vmatpush1.msra.mxu0 0.0
    %1819 = vmatprep.subr.mxu0 0.0
    %1820 = vmatpush1.msra.mxu0 0.0
    %1821 = vmatprep.subr.mxu0 0.0
    %1822 = vmatpush1.msra.mxu0 0.0
    %1823 = vmatprep.mubr.f32.mxu0 0.0
    %1824 = vmatmul.mubr.f32.gmra.mrb[0].mxu0 %v1753
    %v1825 = vpop.f32.mrb[0].mxu0
    %v1826 = vadd.f32 %v1704, %v1825
    %v1827 = vpop.f32.mrb[0].mxu0
    %1828 = vmatprep.mubr.f32.mxu0 0.0
    %1829 = vmatmul.mubr.f32.gmra.mrb[0].mxu0 %v1755
    %v1830 = vpop.f32.mrb[0].mxu0
    %v1831 = vadd.f32 %v1704, %v1830
    %v1832 = vpop.f32.mrb[0].mxu0
    %1833 = vdwg.mxu0
    %v1836 = vcombine.high %v1826, %v1826
    %v1838 = vunpack.c.l.s4 1983009808
    %v1839 = vunpack.c.0.s8 %v1838
    %v1840 = vlaneseq
    %v1841 = vshrl.u32 %v1840, 7
    %v1842 = vsub.s32 %v1839, %v1841
    %v1843 = vrot.slane %v1826, %v1842
    %v1845 = vunpack.c.l.s4 1983009808
    %v1846 = vunpack.c.0.s8 %v1845
    %v1847 = vlaneseq
    %v1848 = vshrl.u32 %v1847, 7
    %v1849 = vsub.s32 %v1846, %v1848
    %v1850 = vrot.slane %v1836, %v1849
    %v1851 = vcombine.high %v1843, %v1843
    %v1852 = vcombine.high %v1850, %v1850
    %v1853 = vcombine.high %v1831, %v1831
    %v1855 = vunpack.c.l.s4 1983009808
    %v1856 = vunpack.c.0.s8 %v1855
    %v1857 = vlaneseq
    %v1858 = vshrl.u32 %v1857, 7
    %v1859 = vsub.s32 %v1856, %v1858
    %v1860 = vrot.slane %v1831, %v1859
    %v1862 = vunpack.c.l.s4 1983009808
    %v1863 = vunpack.c.0.s8 %v1862
    %v1864 = vlaneseq
    %v1865 = vshrl.u32 %v1864, 7
    %v1866 = vsub.s32 %v1863, %v1865
    %v1867 = vrot.slane %v1853, %v1866
    %v1868 = vcombine.high %v1860, %v1860
    %v1869 = vcombine.high %v1867, %v1867
    %v1878 = vadd.f32 %v95, %v1843
    %v1879 = vadd.f32 %v96, %v1851
    %v1880 = vadd.f32 %v97, %v1850
    %v1881 = vadd.f32 %v98, %v1852
    %v1882 = vadd.f32 %v99, %v1860
    %v1883 = vadd.f32 %v100, %v1868
    %v1884 = vadd.f32 %v101, %v1867
    %v1885 = vadd.f32 %v102, %v1869
    %v1894 = vcombine.low %v1878, %v1879
    %v1895 = vcombine.low %v1880, %v1881
    %v1897 = vunpack.c.l.s4 1983009808
    %v1898 = vunpack.c.0.s8 %v1897
    %v1899 = vlaneseq
    %v1900 = vshrl.u32 %v1899, 7
    %v1901 = vsub.s32 %v1898, %v1900
    %v1902 = vrot.slane %v1894, %v1901
    %v1904 = vunpack.c.l.s4 1983009808
    %v1905 = vunpack.c.0.s8 %v1904
    %v1906 = vlaneseq
    %v1907 = vshrl.u32 %v1906, 7
    %v1908 = vsub.s32 %v1905, %v1907
    %v1909 = vrot.slane %v1895, %v1908
    %v1910 = vcombine.low %v1902, %v1909
    %v1911 = vcombine.low %v1882, %v1883
    %v1912 = vcombine.low %v1884, %v1885
    %v1914 = vunpack.c.l.s4 1983009808
    %v1915 = vunpack.c.0.s8 %v1914
    %v1916 = vlaneseq
    %v1917 = vshrl.u32 %v1916, 7
    %v1918 = vsub.s32 %v1915, %v1917
    %v1919 = vrot.slane %v1911, %v1918
    %v1921 = vunpack.c.l.s4 1983009808
    %v1922 = vunpack.c.0.s8 %v1921
    %v1923 = vlaneseq
    %v1924 = vshrl.u32 %v1923, 7
    %v1925 = vsub.s32 %v1922, %v1924
    %v1926 = vrot.slane %v1912, %v1925
    %v1927 = vcombine.low %v1919, %v1926
    %v1930 = vsel %vm207, %v1910, 0.0
    %1931 = vadd.xlane.f32.xlu0 %v1930
    %v1932 = vpop.xlane.xlu0 %1931
    %v1933 = vsel %vm207, %v1927, 0.0
    %1934 = vadd.xlane.f32.xlu0 %v1933
    %v1935 = vpop.xlane.xlu0 %1934
    %v1936 = vrcp.pop 10.0
    %v1937 = vmul.f32 %v1932, %v1936
    %v1938 = vmul.f32 %v1935, %v1936
    %v1942 = vunpack.c.l.s4 269488144
    %v1943 = vunpack.c.0.s8 %v1942
    %v1944 = vlaneseq
    %v1945 = vshrl.u32 %v1944, 7
    %v1946 = vsub.s32 %v1943, %v1945
    %v1947 = vrot.slane %v1937, %v1946
    %v1949 = vunpack.c.l.s4 842150450
    %v1950 = vunpack.c.0.s8 %v1949
    %v1951 = vlaneseq
    %v1952 = vshrl.u32 %v1951, 7
    %v1953 = vsub.s32 %v1950, %v1952
    %v1954 = vrot.slane %v1937, %v1953
    %v1956 = vunpack.c.l.s4 1414812756
    %v1957 = vunpack.c.0.s8 %v1956
    %v1958 = vlaneseq
    %v1959 = vshrl.u32 %v1958, 7
    %v1960 = vsub.s32 %v1957, %v1959
    %v1961 = vrot.slane %v1937, %v1960
    %v1963 = vunpack.c.l.s4 1987475062
    %v1964 = vunpack.c.0.s8 %v1963
    %v1965 = vlaneseq
    %v1966 = vshrl.u32 %v1965, 7
    %v1967 = vsub.s32 %v1964, %v1966
    %v1968 = vrot.slane %v1937, %v1967
    %v1970 = vunpack.c.l.s4 269488144
    %v1971 = vunpack.c.0.s8 %v1970
    %v1972 = vlaneseq
    %v1973 = vshrl.u32 %v1972, 7
    %v1974 = vsub.s32 %v1971, %v1973
    %v1975 = vrot.slane %v1938, %v1974
    %v1977 = vunpack.c.l.s4 842150450
    %v1978 = vunpack.c.0.s8 %v1977
    %v1979 = vlaneseq
    %v1980 = vshrl.u32 %v1979, 7
    %v1981 = vsub.s32 %v1978, %v1980
    %v1982 = vrot.slane %v1938, %v1981
    %v1984 = vunpack.c.l.s4 1414812756
    %v1985 = vunpack.c.0.s8 %v1984
    %v1986 = vlaneseq
    %v1987 = vshrl.u32 %v1986, 7
    %v1988 = vsub.s32 %v1985, %v1987
    %v1989 = vrot.slane %v1938, %v1988
    %v1991 = vunpack.c.l.s4 1987475062
    %v1992 = vunpack.c.0.s8 %v1991
    %v1993 = vlaneseq
    %v1994 = vshrl.u32 %v1993, 7
    %v1995 = vsub.s32 %v1992, %v1994
    %v1996 = vrot.slane %v1938, %v1995
    %v2005 = vsub.f32 %v1878, %v1947
    %v2006 = vsub.f32 %v1879, %v1954
    %v2007 = vsub.f32 %v1880, %v1961
    %v2008 = vsub.f32 %v1881, %v1968
    %v2009 = vsub.f32 %v1882, %v1975
    %v2010 = vsub.f32 %v1883, %v1982
    %v2011 = vsub.f32 %v1884, %v1989
    %v2012 = vsub.f32 %v1885, %v1996
    %v2013 = vmul.f32 %v2005, %v2005
    %v2014 = vmul.f32 %v2006, %v2006
    %v2015 = vmul.f32 %v2007, %v2007
    %v2016 = vmul.f32 %v2008, %v2008
    %v2017 = vmul.f32 %v2009, %v2009
    %v2018 = vmul.f32 %v2010, %v2010
    %v2019 = vmul.f32 %v2011, %v2011
    %v2020 = vmul.f32 %v2012, %v2012
    %v2029 = vcombine.low %v2013, %v2014
    %v2030 = vcombine.low %v2015, %v2016
    %v2032 = vunpack.c.l.s4 1983009808
    %v2033 = vunpack.c.0.s8 %v2032
    %v2034 = vlaneseq
    %v2035 = vshrl.u32 %v2034, 7
    %v2036 = vsub.s32 %v2033, %v2035
    %v2037 = vrot.slane %v2029, %v2036
    %v2039 = vunpack.c.l.s4 1983009808
    %v2040 = vunpack.c.0.s8 %v2039
    %v2041 = vlaneseq
    %v2042 = vshrl.u32 %v2041, 7
    %v2043 = vsub.s32 %v2040, %v2042
    %v2044 = vrot.slane %v2030, %v2043
    %v2045 = vcombine.low %v2037, %v2044
    %v2046 = vcombine.low %v2017, %v2018
    %v2047 = vcombine.low %v2019, %v2020
    %v2049 = vunpack.c.l.s4 1983009808
    %v2050 = vunpack.c.0.s8 %v2049
    %v2051 = vlaneseq
    %v2052 = vshrl.u32 %v2051, 7
    %v2053 = vsub.s32 %v2050, %v2052
    %v2054 = vrot.slane %v2046, %v2053
    %v2056 = vunpack.c.l.s4 1983009808
    %v2057 = vunpack.c.0.s8 %v2056
    %v2058 = vlaneseq
    %v2059 = vshrl.u32 %v2058, 7
    %v2060 = vsub.s32 %v2057, %v2059
    %v2061 = vrot.slane %v2047, %v2060
    %v2062 = vcombine.low %v2054, %v2061
    %v2065 = vsel %vm207, %v2045, 0.0
    %2066 = vadd.xlane.f32.xlu0 %v2065
    %v2067 = vpop.xlane.xlu0 %2066
    %v2068 = vsel %vm207, %v2062, 0.0
    %2069 = vadd.xlane.f32.xlu0 %v2068
    %v2070 = vpop.xlane.xlu0 %2069
    %v2071 = vmul.f32 %v2067, %v1936
    %v2072 = vmul.f32 %v2070, %v1936
    %v2073 = vadd.f32 %v2071, 1e-05
    %v2074 = vadd.f32 %v2072, 1e-05
    %v2075 = vrsqrt.pop %v2073
    %v2076 = vrsqrt.pop %v2074
    %v2080 = vunpack.c.l.s4 269488144
    %v2081 = vunpack.c.0.s8 %v2080
    %v2082 = vlaneseq
    %v2083 = vshrl.u32 %v2082, 7
    %v2084 = vsub.s32 %v2081, %v2083
    %v2085 = vrot.slane %v2075, %v2084
    %v2087 = vunpack.c.l.s4 842150450
    %v2088 = vunpack.c.0.s8 %v2087
    %v2089 = vlaneseq
    %v2090 = vshrl.u32 %v2089, 7
    %v2091 = vsub.s32 %v2088, %v2090
    %v2092 = vrot.slane %v2075, %v2091
    %v2094 = vunpack.c.l.s4 1414812756
    %v2095 = vunpack.c.0.s8 %v2094
    %v2096 = vlaneseq
    %v2097 = vshrl.u32 %v2096, 7
    %v2098 = vsub.s32 %v2095, %v2097
    %v2099 = vrot.slane %v2075, %v2098
    %v2101 = vunpack.c.l.s4 1987475062
    %v2102 = vunpack.c.0.s8 %v2101
    %v2103 = vlaneseq
    %v2104 = vshrl.u32 %v2103, 7
    %v2105 = vsub.s32 %v2102, %v2104
    %v2106 = vrot.slane %v2075, %v2105
    %v2108 = vunpack.c.l.s4 269488144
    %v2109 = vunpack.c.0.s8 %v2108
    %v2110 = vlaneseq
    %v2111 = vshrl.u32 %v2110, 7
    %v2112 = vsub.s32 %v2109, %v2111
    %v2113 = vrot.slane %v2076, %v2112
    %v2115 = vunpack.c.l.s4 842150450
    %v2116 = vunpack.c.0.s8 %v2115
    %v2117 = vlaneseq
    %v2118 = vshrl.u32 %v2117, 7
    %v2119 = vsub.s32 %v2116, %v2118
    %v2120 = vrot.slane %v2076, %v2119
    %v2122 = vunpack.c.l.s4 1414812756
    %v2123 = vunpack.c.0.s8 %v2122
    %v2124 = vlaneseq
    %v2125 = vshrl.u32 %v2124, 7
    %v2126 = vsub.s32 %v2123, %v2125
    %v2127 = vrot.slane %v2076, %v2126
    %v2129 = vunpack.c.l.s4 1987475062
    %v2130 = vunpack.c.0.s8 %v2129
    %v2131 = vlaneseq
    %v2132 = vshrl.u32 %v2131, 7
    %v2133 = vsub.s32 %v2130, %v2132
    %v2134 = vrot.slane %v2076, %v2133
    %v2143 = vmul.f32 %v2005, %v2085
    %v2144 = vmul.f32 %v2006, %v2092
    %v2145 = vmul.f32 %v2007, %v2099
    %v2146 = vmul.f32 %v2008, %v2106
    %v2147 = vmul.f32 %v2009, %v2113
    %v2148 = vmul.f32 %v2010, %v2120
    %v2149 = vmul.f32 %v2011, %v2127
    %v2150 = vmul.f32 %v2012, %v2134
    %v2151 = vlaneseq
    %v2152 = vshrl.u32 %v2151, 7
    %v2153 = vsub.s32 4, %v2152
    %v2154 = vrot.slane %v161, %v2153
    %v2156 = vcombine.high %v2154, %v2154
    %v2158 = vunpack.c.l.s4 1983009808
    %v2159 = vunpack.c.0.s8 %v2158
    %v2160 = vlaneseq
    %v2161 = vshrl.u32 %v2160, 7
    %v2162 = vsub.s32 %v2159, %v2161
    %v2163 = vrot.slane %v2154, %v2162
    %v2165 = vunpack.c.l.s4 1983009808
    %v2166 = vunpack.c.0.s8 %v2165
    %v2167 = vlaneseq
    %v2168 = vshrl.u32 %v2167, 7
    %v2169 = vsub.s32 %v2166, %v2168
    %v2170 = vrot.slane %v2156, %v2169
    %v2171 = vcombine.high %v2163, %v2163
    %v2172 = vcombine.high %v2170, %v2170
    %v2177 = vmul.f32 %v2143, %v2163
    %v2178 = vmul.f32 %v2144, %v2171
    %v2179 = vmul.f32 %v2145, %v2170
    %v2180 = vmul.f32 %v2146, %v2172
    %v2181 = vmul.f32 %v2147, %v2163
    %v2182 = vmul.f32 %v2148, %v2171
    %v2183 = vmul.f32 %v2149, %v2170
    %v2184 = vmul.f32 %v2150, %v2172
    %v2185 = vlaneseq
    %v2186 = vshrl.u32 %v2185, 7
    %v2187 = vsub.s32 5, %v2186
    %v2188 = vrot.slane %v161, %v2187
    %v2190 = vcombine.high %v2188, %v2188
    %v2192 = vunpack.c.l.s4 1983009808
    %v2193 = vunpack.c.0.s8 %v2192
    %v2194 = vlaneseq
    %v2195 = vshrl.u32 %v2194, 7
    %v2196 = vsub.s32 %v2193, %v2195
    %v2197 = vrot.slane %v2188, %v2196
    %v2199 = vunpack.c.l.s4 1983009808
    %v2200 = vunpack.c.0.s8 %v2199
    %v2201 = vlaneseq
    %v2202 = vshrl.u32 %v2201, 7
    %v2203 = vsub.s32 %v2200, %v2202
    %v2204 = vrot.slane %v2190, %v2203
    %v2205 = vcombine.high %v2197, %v2197
    %v2206 = vcombine.high %v2204, %v2204
    %v2211 = vadd.f32 %v2177, %v2197
    %v2212 = vadd.f32 %v2178, %v2205
    %v2213 = vadd.f32 %v2179, %v2204
    %v2214 = vadd.f32 %v2180, %v2206
    %v2215 = vadd.f32 %v2181, %v2197
    %v2216 = vadd.f32 %v2182, %v2205
    %v2217 = vadd.f32 %v2183, %v2204
    %v2218 = vadd.f32 %v2184, %v2206
    %v2227 = vcombine.low %v2211, %v2212
    %v2228 = vcombine.low %v2213, %v2214
    %v2230 = vunpack.c.l.s4 1983009808
    %v2231 = vunpack.c.0.s8 %v2230
    %v2232 = vlaneseq
    %v2233 = vshrl.u32 %v2232, 7
    %v2234 = vsub.s32 %v2231, %v2233
    %v2235 = vrot.slane %v2227, %v2234
    %v2237 = vunpack.c.l.s4 1983009808
    %v2238 = vunpack.c.0.s8 %v2237
    %v2239 = vlaneseq
    %v2240 = vshrl.u32 %v2239, 7
    %v2241 = vsub.s32 %v2238, %v2240
    %v2242 = vrot.slane %v2228, %v2241
    %v2243 = vcombine.low %v2235, %v2242
    %v2244 = vcombine.low %v2215, %v2216
    %v2245 = vcombine.low %v2217, %v2218
    %v2247 = vunpack.c.l.s4 1983009808
    %v2248 = vunpack.c.0.s8 %v2247
    %v2249 = vlaneseq
    %v2250 = vshrl.u32 %v2249, 7
    %v2251 = vsub.s32 %v2248, %v2250
    %v2252 = vrot.slane %v2244, %v2251
    %v2254 = vunpack.c.l.s4 1983009808
    %v2255 = vunpack.c.0.s8 %v2254
    %v2256 = vlaneseq
    %v2257 = vshrl.u32 %v2256, 7
    %v2258 = vsub.s32 %v2255, %v2257
    %v2259 = vrot.slane %v2245, %v2258
    %v2260 = vcombine.low %v2252, %v2259
    %v2263 = vpack.c.bf16 %v2260, %v2243
    %v2264 = vld [vmem:[%s4] sm:$0xff]
    %v2265 = vld [vmem:[%s4 + $0x8] sm:$0xff]
    %v2266 = vld [vmem:[%s4 + $0x10] sm:$0xff]
    %v2267 = vld [vmem:[%s4 + $0x18] sm:$0xff]
    %v2268 = vld [vmem:[%s4 + $0x20] sm:$0xff]
    %v2269 = vld [vmem:[%s4 + $0x28] sm:$0xff]
    %v2270 = vld [vmem:[%s4 + $0x30] sm:$0xff]
    %v2271 = vld [vmem:[%s4 + $0x38] sm:$0xff]
    %v2272 = vld [vmem:[%s4 + $0x40] sm:$0x11]
    %v2273 = vld [vmem:[%s4 + $0x48] sm:$0x11]
    %v2274 = vld [vmem:[%s4 + $0x50] sm:$0x11]
    %v2275 = vld [vmem:[%s4 + $0x58] sm:$0x11]
    %v2276 = vld [vmem:[%s4 + $0x60] sm:$0x11]
    %v2277 = vld [vmem:[%s4 + $0x68] sm:$0x11]
    %v2278 = vld [vmem:[%s4 + $0x70] sm:$0x11]
    %v2279 = vld [vmem:[%s4 + $0x78] sm:$0x11]
    %v2280 = vld [vmem:[%s5] sm:$0xff]
    %v2281 = vld [vmem:[%s5 + $0x8] sm:$0xff]
    %v2284 = vlaneseq
    %v2285 = vshrl.u32 %v2284, 7
    %v2286 = vsub.s32 0, %v2285
    %v2287 = vrot.slane %v2280, %v2286
    %v2288 = vlaneseq
    %v2289 = vshrl.u32 %v2288, 7
    %v2290 = vsub.s32 1, %v2289
    %v2291 = vrot.slane %v2280, %v2290
    %v2292 = vlaneseq
    %v2293 = vshrl.u32 %v2292, 7
    %v2294 = vsub.s32 2, %v2293
    %v2295 = vrot.slane %v2280, %v2294
    %v2296 = vlaneseq
    %v2297 = vshrl.u32 %v2296, 7
    %v2298 = vsub.s32 3, %v2297
    %v2299 = vrot.slane %v2280, %v2298
    %v2300 = vlaneseq
    %v2301 = vshrl.u32 %v2300, 7
    %v2302 = vsub.s32 4, %v2301
    %v2303 = vrot.slane %v2280, %v2302
    %v2304 = vlaneseq
    %v2305 = vshrl.u32 %v2304, 7
    %v2306 = vsub.s32 5, %v2305
    %v2307 = vrot.slane %v2280, %v2306
    %v2308 = vlaneseq
    %v2309 = vshrl.u32 %v2308, 7
    %v2310 = vsub.s32 6, %v2309
    %v2311 = vrot.slane %v2280, %v2310
    %v2312 = vlaneseq
    %v2313 = vshrl.u32 %v2312, 7
    %v2314 = vsub.s32 7, %v2313
    %v2315 = vrot.slane %v2280, %v2314
    %v2316 = vlaneseq
    %v2317 = vshrl.u32 %v2316, 7
    %v2318 = vsub.s32 0, %v2317
    %v2319 = vrot.slane %v2281, %v2318
    %v2320 = vlaneseq
    %v2321 = vshrl.u32 %v2320, 7
    %v2322 = vsub.s32 1, %v2321
    %v2323 = vrot.slane %v2281, %v2322
    %v2324 = vlaneseq
    %v2325 = vshrl.u32 %v2324, 7
    %v2326 = vsub.s32 2, %v2325
    %v2327 = vrot.slane %v2281, %v2326
    %v2328 = vlaneseq
    %v2329 = vshrl.u32 %v2328, 7
    %v2330 = vsub.s32 3, %v2329
    %v2331 = vrot.slane %v2281, %v2330
    %v2332 = vlaneseq
    %v2333 = vshrl.u32 %v2332, 7
    %v2334 = vsub.s32 4, %v2333
    %v2335 = vrot.slane %v2281, %v2334
    %v2336 = vlaneseq
    %v2337 = vshrl.u32 %v2336, 7
    %v2338 = vsub.s32 5, %v2337
    %v2339 = vrot.slane %v2281, %v2338
    %v2340 = vlaneseq
    %v2341 = vshrl.u32 %v2340, 7
    %v2342 = vsub.s32 6, %v2341
    %v2343 = vrot.slane %v2281, %v2342
    %v2344 = vlaneseq
    %v2345 = vshrl.u32 %v2344, 7
    %v2346 = vsub.s32 7, %v2345
    %v2347 = vrot.slane %v2281, %v2346
    %v2380 = vunpack.c.l.b16 %v2264
    %v2381 = vunpack.c.h.b16 %v2264
    %v2382 = vunpack.c.l.b16 %v2265
    %v2383 = vunpack.c.h.b16 %v2265
    %v2384 = vunpack.c.l.b16 %v2266
    %v2385 = vunpack.c.h.b16 %v2266
    %v2386 = vunpack.c.l.b16 %v2267
    %v2387 = vunpack.c.h.b16 %v2267
    %v2388 = vunpack.c.l.b16 %v2268
    %v2389 = vunpack.c.h.b16 %v2268
    %v2390 = vunpack.c.l.b16 %v2269
    %v2391 = vunpack.c.h.b16 %v2269
    %v2392 = vunpack.c.l.b16 %v2270
    %v2393 = vunpack.c.h.b16 %v2270
    %v2394 = vunpack.c.l.b16 %v2271
    %v2395 = vunpack.c.h.b16 %v2271
    %v2396 = vunpack.c.l.b16 %v2272
    %v2397 = vunpack.c.h.b16 %v2272
    %v2398 = vunpack.c.l.b16 %v2273
    %v2399 = vunpack.c.h.b16 %v2273
    %v2400 = vunpack.c.l.b16 %v2274
    %v2401 = vunpack.c.h.b16 %v2274
    %v2402 = vunpack.c.l.b16 %v2275
    %v2403 = vunpack.c.h.b16 %v2275
    %v2404 = vunpack.c.l.b16 %v2276
    %v2405 = vunpack.c.h.b16 %v2276
    %v2406 = vunpack.c.l.b16 %v2277
    %v2407 = vunpack.c.h.b16 %v2277
    %v2408 = vunpack.c.l.b16 %v2278
    %v2409 = vunpack.c.h.b16 %v2278
    %v2410 = vunpack.c.l.b16 %v2279
    %v2411 = vunpack.c.h.b16 %v2279
    %v2412 = vpack.c.b16 %v2396, %v2380
    %v2413 = vpack.c.b16 %v2397, %v2381
    %v2414 = vpack.c.b16 %v2398, %v2382
    %v2415 = vpack.c.b16 %v2399, %v2383
    %v2416 = vpack.c.b16 %v2400, %v2384
    %v2417 = vpack.c.b16 %v2401, %v2385
    %v2418 = vpack.c.b16 %v2402, %v2386
    %v2419 = vpack.c.b16 %v2403, %v2387
    %v2420 = vpack.c.b16 %v2404, %v2388
    %v2421 = vpack.c.b16 %v2405, %v2389
    %v2422 = vpack.c.b16 %v2406, %v2390
    %v2423 = vpack.c.b16 %v2407, %v2391
    %v2424 = vpack.c.b16 %v2408, %v2392
    %v2425 = vpack.c.b16 %v2409, %v2393
    %v2426 = vpack.c.b16 %v2410, %v2394
    %v2427 = vpack.c.b16 %v2411, %v2395
    %v2429 = vsel %vm207, %v2263, 0
    %vm2431 = vcmask 1044480
    %v2433 = vsel %vm2431, %v2412, 0
    %v2436 = vsel %vm2431, %v2413, 0
    %v2439 = vsel %vm2431, %v2414, 0
    %v2442 = vsel %vm2431, %v2415, 0
    %v2445 = vsel %vm2431, %v2416, 0
    %v2448 = vsel %vm2431, %v2417, 0
    %v2451 = vsel %vm2431, %v2418, 0
    %v2454 = vsel %vm2431, %v2419, 0
    %v2457 = vsel %vm2431, %v2420, 0
    %v2460 = vsel %vm2431, %v2421, 0
    %v2463 = vsel %vm2431, %v2422, 0
    %v2466 = vsel %vm2431, %v2423, 0
    %v2469 = vsel %vm2431, %v2424, 0
    %v2472 = vsel %vm2431, %v2425, 0
    %v2475 = vsel %vm2431, %v2426, 0
    %v2478 = vsel %vm2431, %v2427, 0
    %2480 = vmatprep.subr.bf16.mxu0 %v2436
    %2481 = vmatpush1.bf16.msra.mxu0 %v2433
    %2482 = vmatprep.subr.bf16.mxu0 0
    %2483 = vmatpush1.bf16.msra.mxu0 0
    %2484 = vmatprep.subr.bf16.mxu0 0
    %2485 = vmatpush1.bf16.msra.mxu0 0
    %2486 = vmatprep.subr.bf16.mxu0 0
    %2487 = vmatpush1.bf16.msra.mxu0 0
    %2488 = vmatprep.subr.bf16.mxu0 0
    %2489 = vmatpush1.bf16.msra.mxu0 0
    %2490 = vmatprep.subr.bf16.mxu0 0
    %2491 = vmatpush1.bf16.msra.mxu0 0
    %2492 = vmatprep.subr.bf16.mxu0 0
    %2493 = vmatpush1.bf16.msra.mxu0 0
    %2494 = vmatprep.subr.bf16.mxu0 0
    %2495 = vmatpush1.bf16.msra.mxu0 0
    %2496 = vmatprep.subr.bf16.mxu0 0
    %2497 = vmatpush1.bf16.msra.mxu0 0
    %2498 = vmatprep.subr.bf16.mxu0 0
    %2499 = vmatpush1.bf16.msra.mxu0 0
    %2500 = vmatprep.subr.bf16.mxu0 0
    %2501 = vmatpush1.bf16.msra.mxu0 0
    %2502 = vmatprep.subr.bf16.mxu0 0
    %2503 = vmatpush1.bf16.msra.mxu0 0
    %2504 = vmatprep.subr.bf16.mxu0 0
    %2505 = vmatpush1.bf16.msra.mxu0 0
    %2506 = vmatprep.subr.bf16.mxu0 0
    %2507 = vmatpush1.bf16.msra.mxu0 0
    %2508 = vmatprep.subr.bf16.mxu0 0
    %2509 = vmatpush1.bf16.msra.mxu0 0
    %2510 = vmatprep.subr.bf16.mxu0 0
    %2511 = vmatpush1.bf16.msra.mxu0 0
    %2512 = vmatprep.mubr.bf16.mxu0 0
    %2513 = vmatmul.mubr.bf16.gmra.mrb[0].mxu0 %v2429
    %v2514 = vpop.f32.mrb[0].mxu0
    %v2515 = vadd.f32 %v2287, %v2514
    %v2516 = vpop.f32.mrb[0].mxu0
    %v2517 = vadd.f32 %v2291, %v2516
    %v2518 = vpop.f32.mrb[0].mxu0
    %v2519 = vadd.f32 %v2287, %v2518
    %v2520 = vpop.f32.mrb[0].mxu0
    %v2521 = vadd.f32 %v2291, %v2520
    %2522 = vdwg.mxu0
    %2523 = vmatprep.subr.bf16.mxu0 %v2442
    %2524 = vmatpush1.bf16.msra.mxu0 %v2439
    %2525 = vmatprep.subr.bf16.mxu0 0
    %2526 = vmatpush1.bf16.msra.mxu0 0
    %2527 = vmatprep.subr.bf16.mxu0 0
    %2528 = vmatpush1.bf16.msra.mxu0 0
    %2529 = vmatprep.subr.bf16.mxu0 0
    %2530 = vmatpush1.bf16.msra.mxu0 0
    %2531 = vmatprep.subr.bf16.mxu0 0
    %2532 = vmatpush1.bf16.msra.mxu0 0
    %2533 = vmatprep.subr.bf16.mxu0 0
    %2534 = vmatpush1.bf16.msra.mxu0 0
    %2535 = vmatprep.subr.bf16.mxu0 0
    %2536 = vmatpush1.bf16.msra.mxu0 0
    %2537 = vmatprep.subr.bf16.mxu0 0
    %2538 = vmatpush1.bf16.msra.mxu0 0
    %2539 = vmatprep.subr.bf16.mxu0 0
    %2540 = vmatpush1.bf16.msra.mxu0 0
    %2541 = vmatprep.subr.bf16.mxu0 0
    %2542 = vmatpush1.bf16.msra.mxu0 0
    %2543 = vmatprep.subr.bf16.mxu0 0
    %2544 = vmatpush1.bf16.msra.mxu0 0
    %2545 = vmatprep.subr.bf16.mxu0 0
    %2546 = vmatpush1.bf16.msra.mxu0 0
    %2547 = vmatprep.subr.bf16.mxu0 0
    %2548 = vmatpush1.bf16.msra.mxu0 0
    %2549 = vmatprep.subr.bf16.mxu0 0
    %2550 = vmatpush1.bf16.msra.mxu0 0
    %2551 = vmatprep.subr.bf16.mxu0 0
    %2552 = vmatpush1.bf16.msra.mxu0 0
    %2553 = vmatprep.subr.bf16.mxu0 0
    %2554 = vmatpush1.bf16.msra.mxu0 0
    %2555 = vmatprep.mubr.bf16.mxu0 0
    %2556 = vmatmul.mubr.bf16.gmra.mrb[0].mxu0 %v2429
    %v2557 = vpop.f32.mrb[0].mxu0
    %v2558 = vadd.f32 %v2295, %v2557
    %v2559 = vpop.f32.mrb[0].mxu0
    %v2560 = vadd.f32 %v2299, %v2559
    %v2561 = vpop.f32.mrb[0].mxu0
    %v2562 = vadd.f32 %v2295, %v2561
    %v2563 = vpop.f32.mrb[0].mxu0
    %v2564 = vadd.f32 %v2299, %v2563
    %2565 = vdwg.mxu0
    %2566 = vmatprep.subr.bf16.mxu0 %v2448
    %2567 = vmatpush1.bf16.msra.mxu0 %v2445
    %2568 = vmatprep.subr.bf16.mxu0 0
    %2569 = vmatpush1.bf16.msra.mxu0 0
    %2570 = vmatprep.subr.bf16.mxu0 0
    %2571 = vmatpush1.bf16.msra.mxu0 0
    %2572 = vmatprep.subr.bf16.mxu0 0
    %2573 = vmatpush1.bf16.msra.mxu0 0
    %2574 = vmatprep.subr.bf16.mxu0 0
    %2575 = vmatpush1.bf16.msra.mxu0 0
    %2576 = vmatprep.subr.bf16.mxu0 0
    %2577 = vmatpush1.bf16.msra.mxu0 0
    %2578 = vmatprep.subr.bf16.mxu0 0
    %2579 = vmatpush1.bf16.msra.mxu0 0
    %2580 = vmatprep.subr.bf16.mxu0 0
    %2581 = vmatpush1.bf16.msra.mxu0 0
    %2582 = vmatprep.subr.bf16.mxu0 0
    %2583 = vmatpush1.bf16.msra.mxu0 0
    %2584 = vmatprep.subr.bf16.mxu0 0
    %2585 = vmatpush1.bf16.msra.mxu0 0
    %2586 = vmatprep.subr.bf16.mxu0 0
    %2587 = vmatpush1.bf16.msra.mxu0 0
    %2588 = vmatprep.subr.bf16.mxu0 0
    %2589 = vmatpush1.bf16.msra.mxu0 0
    %2590 = vmatprep.subr.bf16.mxu0 0
    %2591 = vmatpush1.bf16.msra.mxu0 0
    %2592 = vmatprep.subr.bf16.mxu0 0
    %2593 = vmatpush1.bf16.msra.mxu0 0
    %2594 = vmatprep.subr.bf16.mxu0 0
    %2595 = vmatpush1.bf16.msra.mxu0 0
    %2596 = vmatprep.subr.bf16.mxu0 0
    %2597 = vmatpush1.bf16.msra.mxu0 0
    %2598 = vmatprep.mubr.bf16.mxu0 0
    %2599 = vmatmul.mubr.bf16.gmra.mrb[0].mxu0 %v2429
    %v2600 = vpop.f32.mrb[0].mxu0
    %v2601 = vadd.f32 %v2303, %v2600
    %v2602 = vpop.f32.mrb[0].mxu0
    %v2603 = vadd.f32 %v2307, %v2602
    %v2604 = vpop.f32.mrb[0].mxu0
    %v2605 = vadd.f32 %v2303, %v2604
    %v2606 = vpop.f32.mrb[0].mxu0
    %v2607 = vadd.f32 %v2307, %v2606
    %2608 = vdwg.mxu0
    %2609 = vmatprep.subr.bf16.mxu0 %v2454
    %2610 = vmatpush1.bf16.msra.mxu0 %v2451
    %2611 = vmatprep.subr.bf16.mxu0 0
    %2612 = vmatpush1.bf16.msra.mxu0 0
    %2613 = vmatprep.subr.bf16.mxu0 0
    %2614 = vmatpush1.bf16.msra.mxu0 0
    %2615 = vmatprep.subr.bf16.mxu0 0
    %2616 = vmatpush1.bf16.msra.mxu0 0
    %2617 = vmatprep.subr.bf16.mxu0 0
    %2618 = vmatpush1.bf16.msra.mxu0 0
    %2619 = vmatprep.subr.bf16.mxu0 0
    %2620 = vmatpush1.bf16.msra.mxu0 0
    %2621 = vmatprep.subr.bf16.mxu0 0
    %2622 = vmatpush1.bf16.msra.mxu0 0
    %2623 = vmatprep.subr.bf16.mxu0 0
    %2624 = vmatpush1.bf16.msra.mxu0 0
    %2625 = vmatprep.subr.bf16.mxu0 0
    %2626 = vmatpush1.bf16.msra.mxu0 0
    %2627 = vmatprep.subr.bf16.mxu0 0
    %2628 = vmatpush1.bf16.msra.mxu0 0
    %2629 = vmatprep.subr.bf16.mxu0 0
    %2630 = vmatpush1.bf16.msra.mxu0 0
    %2631 = vmatprep.subr.bf16.mxu0 0
    %2632 = vmatpush1.bf16.msra.mxu0 0
    %2633 = vmatprep.subr.bf16.mxu0 0
    %2634 = vmatpush1.bf16.msra.mxu0 0
    %2635 = vmatprep.subr.bf16.mxu0 0
    %2636 = vmatpush1.bf16.msra.mxu0 0
    %2637 = vmatprep.subr.bf16.mxu0 0
    %2638 = vmatpush1.bf16.msra.mxu0 0
    %2639 = vmatprep.subr.bf16.mxu0 0
    %2640 = vmatpush1.bf16.msra.mxu0 0
    %2641 = vmatprep.mubr.bf16.mxu0 0
    %2642 = vmatmul.mubr.bf16.gmra.mrb[0].mxu0 %v2429
    %v2643 = vpop.f32.mrb[0].mxu0
    %v2644 = vadd.f32 %v2311, %v2643
    %v2645 = vpop.f32.mrb[0].mxu0
    %v2646 = vadd.f32 %v2315, %v2645
    %v2647 = vpop.f32.mrb[0].mxu0
    %v2648 = vadd.f32 %v2311, %v2647
    %v2649 = vpop.f32.mrb[0].mxu0
    %v2650 = vadd.f32 %v2315, %v2649
    %2651 = vdwg.mxu0
    %2652 = vmatprep.subr.bf16.mxu0 %v2460
    %2653 = vmatpush1.bf16.msra.mxu0 %v2457
    %2654 = vmatprep.subr.bf16.mxu0 0
    %2655 = vmatpush1.bf16.msra.mxu0 0
    %2656 = vmatprep.subr.bf16.mxu0 0
    %2657 = vmatpush1.bf16.msra.mxu0 0
    %2658 = vmatprep.subr.bf16.mxu0 0
    %2659 = vmatpush1.bf16.msra.mxu0 0
    %2660 = vmatprep.subr.bf16.mxu0 0
    %2661 = vmatpush1.bf16.msra.mxu0 0
    %2662 = vmatprep.subr.bf16.mxu0 0
    %2663 = vmatpush1.bf16.msra.mxu0 0
    %2664 = vmatprep.subr.bf16.mxu0 0
    %2665 = vmatpush1.bf16.msra.mxu0 0
    %2666 = vmatprep.subr.bf16.mxu0 0
    %2667 = vmatpush1.bf16.msra.mxu0 0
    %2668 = vmatprep.subr.bf16.mxu0 0
    %2669 = vmatpush1.bf16.msra.mxu0 0
    %2670 = vmatprep.subr.bf16.mxu0 0
    %2671 = vmatpush1.bf16.msra.mxu0 0
    %2672 = vmatprep.subr.bf16.mxu0 0
    %2673 = vmatpush1.bf16.msra.mxu0 0
    %2674 = vmatprep.subr.bf16.mxu0 0
    %2675 = vmatpush1.bf16.msra.mxu0 0
    %2676 = vmatprep.subr.bf16.mxu0 0
    %2677 = vmatpush1.bf16.msra.mxu0 0
    %2678 = vmatprep.subr.bf16.mxu0 0
    %2679 = vmatpush1.bf16.msra.mxu0 0
    %2680 = vmatprep.subr.bf16.mxu0 0
    %2681 = vmatpush1.bf16.msra.mxu0 0
    %2682 = vmatprep.subr.bf16.mxu0 0
    %2683 = vmatpush1.bf16.msra.mxu0 0
    %2684 = vmatprep.mubr.bf16.mxu0 0
    %2685 = vmatmul.mubr.bf16.gmra.mrb[0].mxu0 %v2429
    %v2686 = vpop.f32.mrb[0].mxu0
    %v2687 = vadd.f32 %v2319, %v2686
    %v2688 = vpop.f32.mrb[0].mxu0
    %v2689 = vadd.f32 %v2323, %v2688
    %v2690 = vpop.f32.mrb[0].mxu0
    %v2691 = vadd.f32 %v2319, %v2690
    %v2692 = vpop.f32.mrb[0].mxu0
    %v2693 = vadd.f32 %v2323, %v2692
    %2694 = vdwg.mxu0
    %2695 = vmatprep.subr.bf16.mxu0 %v2466
    %2696 = vmatpush1.bf16.msra.mxu0 %v2463
    %2697 = vmatprep.subr.bf16.mxu0 0
    %2698 = vmatpush1.bf16.msra.mxu0 0
    %2699 = vmatprep.subr.bf16.mxu0 0
    %2700 = vmatpush1.bf16.msra.mxu0 0
    %2701 = vmatprep.subr.bf16.mxu0 0
    %2702 = vmatpush1.bf16.msra.mxu0 0
    %2703 = vmatprep.subr.bf16.mxu0 0
    %2704 = vmatpush1.bf16.msra.mxu0 0
    %2705 = vmatprep.subr.bf16.mxu0 0
    %2706 = vmatpush1.bf16.msra.mxu0 0
    %2707 = vmatprep.subr.bf16.mxu0 0
    %2708 = vmatpush1.bf16.msra.mxu0 0
    %2709 = vmatprep.subr.bf16.mxu0 0
    %2710 = vmatpush1.bf16.msra.mxu0 0
    %2711 = vmatprep.subr.bf16.mxu0 0
    %2712 = vmatpush1.bf16.msra.mxu0 0
    %2713 = vmatprep.subr.bf16.mxu0 0
    %2714 = vmatpush1.bf16.msra.mxu0 0
    %2715 = vmatprep.subr.bf16.mxu0 0
    %2716 = vmatpush1.bf16.msra.mxu0 0
    %2717 = vmatprep.subr.bf16.mxu0 0
    %2718 = vmatpush1.bf16.msra.mxu0 0
    %2719 = vmatprep.subr.bf16.mxu0 0
    %2720 = vmatpush1.bf16.msra.mxu0 0
    %2721 = vmatprep.subr.bf16.mxu0 0
    %2722 = vmatpush1.bf16.msra.mxu0 0
    %2723 = vmatprep.subr.bf16.mxu0 0
    %2724 = vmatpush1.bf16.msra.mxu0 0
    %2725 = vmatprep.subr.bf16.mxu0 0
    %2726 = vmatpush1.bf16.msra.mxu0 0
    %2727 = vmatprep.mubr.bf16.mxu0 0
    %2728 = vmatmul.mubr.bf16.gmra.mrb[0].mxu0 %v2429
    %v2729 = vpop.f32.mrb[0].mxu0
    %v2730 = vadd.f32 %v2327, %v2729
    %v2731 = vpop.f32.mrb[0].mxu0
    %v2732 = vadd.f32 %v2331, %v2731
    %v2733 = vpop.f32.mrb[0].mxu0
    %v2734 = vadd.f32 %v2327, %v2733
    %v2735 = vpop.f32.mrb[0].mxu0
    %v2736 = vadd.f32 %v2331, %v2735
    %2737 = vdwg.mxu0
    %2738 = vmatprep.subr.bf16.mxu0 %v2472
    %2739 = vmatpush1.bf16.msra.mxu0 %v2469
    %2740 = vmatprep.subr.bf16.mxu0 0
    %2741 = vmatpush1.bf16.msra.mxu0 0
    %2742 = vmatprep.subr.bf16.mxu0 0
    %2743 = vmatpush1.bf16.msra.mxu0 0
    %2744 = vmatprep.subr.bf16.mxu0 0
    %2745 = vmatpush1.bf16.msra.mxu0 0
    %2746 = vmatprep.subr.bf16.mxu0 0
    %2747 = vmatpush1.bf16.msra.mxu0 0
    %2748 = vmatprep.subr.bf16.mxu0 0
    %2749 = vmatpush1.bf16.msra.mxu0 0
    %2750 = vmatprep.subr.bf16.mxu0 0
    %2751 = vmatpush1.bf16.msra.mxu0 0
    %2752 = vmatprep.subr.bf16.mxu0 0
    %2753 = vmatpush1.bf16.msra.mxu0 0
    %2754 = vmatprep.subr.bf16.mxu0 0
    %2755 = vmatpush1.bf16.msra.mxu0 0
    %2756 = vmatprep.subr.bf16.mxu0 0
    %2757 = vmatpush1.bf16.msra.mxu0 0
    %2758 = vmatprep.subr.bf16.mxu0 0
    %2759 = vmatpush1.bf16.msra.mxu0 0
    %2760 = vmatprep.subr.bf16.mxu0 0
    %2761 = vmatpush1.bf16.msra.mxu0 0
    %2762 = vmatprep.subr.bf16.mxu0 0
    %2763 = vmatpush1.bf16.msra.mxu0 0
    %2764 = vmatprep.subr.bf16.mxu0 0
    %2765 = vmatpush1.bf16.msra.mxu0 0
    %2766 = vmatprep.subr.bf16.mxu0 0
    %2767 = vmatpush1.bf16.msra.mxu0 0
    %2768 = vmatprep.subr.bf16.mxu0 0
    %2769 = vmatpush1.bf16.msra.mxu0 0
    %2770 = vmatprep.mubr.bf16.mxu0 0
    %2771 = vmatmul.mubr.bf16.gmra.mrb[0].mxu0 %v2429
    %v2772 = vpop.f32.mrb[0].mxu0
    %v2773 = vadd.f32 %v2335, %v2772
    %v2774 = vpop.f32.mrb[0].mxu0
    %v2775 = vadd.f32 %v2339, %v2774
    %v2776 = vpop.f32.mrb[0].mxu0
    %v2777 = vadd.f32 %v2335, %v2776
    %v2778 = vpop.f32.mrb[0].mxu0
    %v2779 = vadd.f32 %v2339, %v2778
    %2780 = vdwg.mxu0
    %2781 = vmatprep.subr.bf16.mxu0 %v2478
    %2782 = vmatpush1.bf16.msra.mxu0 %v2475
    %2783 = vmatprep.subr.bf16.mxu0 0
    %2784 = vmatpush1.bf16.msra.mxu0 0
    %2785 = vmatprep.subr.bf16.mxu0 0
    %2786 = vmatpush1.bf16.msra.mxu0 0
    %2787 = vmatprep.subr.bf16.mxu0 0
    %2788 = vmatpush1.bf16.msra.mxu0 0
    %2789 = vmatprep.subr.bf16.mxu0 0
    %2790 = vmatpush1.bf16.msra.mxu0 0
    %2791 = vmatprep.subr.bf16.mxu0 0
    %2792 = vmatpush1.bf16.msra.mxu0 0
    %2793 = vmatprep.subr.bf16.mxu0 0
    %2794 = vmatpush1.bf16.msra.mxu0 0
    %2795 = vmatprep.subr.bf16.mxu0 0
    %2796 = vmatpush1.bf16.msra.mxu0 0
    %2797 = vmatprep.subr.bf16.mxu0 0
    %2798 = vmatpush1.bf16.msra.mxu0 0
    %2799 = vmatprep.subr.bf16.mxu0 0
    %2800 = vmatpush1.bf16.msra.mxu0 0
    %2801 = vmatprep.subr.bf16.mxu0 0
    %2802 = vmatpush1.bf16.msra.mxu0 0
    %2803 = vmatprep.subr.bf16.mxu0 0
    %2804 = vmatpush1.bf16.msra.mxu0 0
    %2805 = vmatprep.subr.bf16.mxu0 0
    %2806 = vmatpush1.bf16.msra.mxu0 0
    %2807 = vmatprep.subr.bf16.mxu0 0
    %2808 = vmatpush1.bf16.msra.mxu0 0
    %2809 = vmatprep.subr.bf16.mxu0 0
    %2810 = vmatpush1.bf16.msra.mxu0 0
    %2811 = vmatprep.subr.bf16.mxu0 0
    %2812 = vmatpush1.bf16.msra.mxu0 0
    %2813 = vmatprep.mubr.bf16.mxu0 0
    %2814 = vmatmul.mubr.bf16.gmra.mrb[0].mxu0 %v2429
    %v2815 = vpop.f32.mrb[0].mxu0
    %v2816 = vadd.f32 %v2343, %v2815
    %v2817 = vpop.f32.mrb[0].mxu0
    %v2818 = vadd.f32 %v2347, %v2817
    %v2819 = vpop.f32.mrb[0].mxu0
    %v2820 = vadd.f32 %v2343, %v2819
    %v2821 = vpop.f32.mrb[0].mxu0
    %v2822 = vadd.f32 %v2347, %v2821
    %2823 = vdwg.mxu0
    %v2824 = vmax.f32 %v2515, 0.0
    %v2825 = vmax.f32 %v2517, 0.0
    %v2826 = vmax.f32 %v2558, 0.0
    %v2827 = vmax.f32 %v2560, 0.0
    %v2828 = vmax.f32 %v2601, 0.0
    %v2829 = vmax.f32 %v2603, 0.0
    %v2830 = vmax.f32 %v2644, 0.0
    %v2831 = vmax.f32 %v2646, 0.0
    %v2832 = vmax.f32 %v2687, 0.0
    %v2833 = vmax.f32 %v2689, 0.0
    %v2834 = vmax.f32 %v2730, 0.0
    %v2835 = vmax.f32 %v2732, 0.0
    %v2836 = vmax.f32 %v2773, 0.0
    %v2837 = vmax.f32 %v2775, 0.0
    %v2838 = vmax.f32 %v2816, 0.0
    %v2839 = vmax.f32 %v2818, 0.0
    %v2840 = vmax.f32 %v2519, 0.0
    %v2841 = vmax.f32 %v2521, 0.0
    %v2842 = vmax.f32 %v2562, 0.0
    %v2843 = vmax.f32 %v2564, 0.0
    %v2844 = vmax.f32 %v2605, 0.0
    %v2845 = vmax.f32 %v2607, 0.0
    %v2846 = vmax.f32 %v2648, 0.0
    %v2847 = vmax.f32 %v2650, 0.0
    %v2848 = vmax.f32 %v2691, 0.0
    %v2849 = vmax.f32 %v2693, 0.0
    %v2850 = vmax.f32 %v2734, 0.0
    %v2851 = vmax.f32 %v2736, 0.0
    %v2852 = vmax.f32 %v2777, 0.0
    %v2853 = vmax.f32 %v2779, 0.0
    %v2854 = vmax.f32 %v2820, 0.0
    %v2855 = vmax.f32 %v2822, 0.0
    %v2856 = vpack.c.bf16 %v2840, %v2824
    %v2857 = vpack.c.bf16 %v2841, %v2825
    %v2858 = vpack.c.bf16 %v2842, %v2826
    %v2859 = vpack.c.bf16 %v2843, %v2827
    %v2860 = vpack.c.bf16 %v2844, %v2828
    %v2861 = vpack.c.bf16 %v2845, %v2829
    %v2862 = vpack.c.bf16 %v2846, %v2830
    %v2863 = vpack.c.bf16 %v2847, %v2831
    %v2864 = vpack.c.bf16 %v2848, %v2832
    %v2865 = vpack.c.bf16 %v2849, %v2833
    %v2866 = vpack.c.bf16 %v2850, %v2834
    %v2867 = vpack.c.bf16 %v2851, %v2835
    %v2868 = vpack.c.bf16 %v2852, %v2836
    %v2869 = vpack.c.bf16 %v2853, %v2837
    %v2870 = vpack.c.bf16 %v2854, %v2838
    %v2871 = vpack.c.bf16 %v2855, %v2839
    %v2872 = vld [vmem:[%s6] sm:$0xf]
    %v2873 = vld [vmem:[%s6 + $0x4] sm:$0xf]
    %v2874 = vld [vmem:[%s6 + $0x8] sm:$0xf]
    %v2875 = vld [vmem:[%s6 + $0xc] sm:$0xf]
    %v2876 = vld [vmem:[%s6 + $0x10] sm:$0xf]
    %v2877 = vld [vmem:[%s6 + $0x14] sm:$0xf]
    %v2878 = vld [vmem:[%s6 + $0x18] sm:$0xf]
    %v2879 = vld [vmem:[%s6 + $0x1c] sm:$0xf]
    %v2880 = vld [vmem:[%s6 + $0x20] sm:$0xf]
    %v2881 = vld [vmem:[%s6 + $0x24] sm:$0xf]
    %v2882 = vld [vmem:[%s6 + $0x28] sm:$0xf]
    %v2883 = vld [vmem:[%s6 + $0x2c] sm:$0xf]
    %v2884 = vld [vmem:[%s6 + $0x30] sm:$0xf]
    %v2885 = vld [vmem:[%s6 + $0x34] sm:$0xf]
    %v2886 = vld [vmem:[%s6 + $0x38] sm:$0xf]
    %v2887 = vld [vmem:[%s6 + $0x3c] sm:$0xf]
    %v2888 = vld [vmem:[%s6 + $0x40] sm:$0xf]
    %v2889 = vld [vmem:[%s6 + $0x44] sm:$0xf]
    %v2890 = vld [vmem:[%s6 + $0x48] sm:$0xf]
    %v2891 = vld [vmem:[%s6 + $0x4c] sm:$0xf]
    %v2892 = vld [vmem:[%s6 + $0x50] sm:$0xf]
    %v2893 = vld [vmem:[%s6 + $0x54] sm:$0xf]
    %v2894 = vld [vmem:[%s6 + $0x58] sm:$0xf]
    %v2895 = vld [vmem:[%s6 + $0x5c] sm:$0xf]
    %v2896 = vld [vmem:[%s6 + $0x60] sm:$0xf]
    %v2897 = vld [vmem:[%s6 + $0x64] sm:$0xf]
    %v2898 = vld [vmem:[%s6 + $0x68] sm:$0xf]
    %v2899 = vld [vmem:[%s6 + $0x6c] sm:$0xf]
    %v2900 = vld [vmem:[%s6 + $0x70] sm:$0xf]
    %v2901 = vld [vmem:[%s6 + $0x74] sm:$0xf]
    %v2902 = vld [vmem:[%s6 + $0x78] sm:$0xf]
    %v2903 = vld [vmem:[%s6 + $0x7c] sm:$0xf]
    %v2904 = vld [vmem:[%s6 + $0x80] sm:$0xf]
    %v2905 = vld [vmem:[%s6 + $0x84] sm:$0xf]
    %v2906 = vld [vmem:[%s6 + $0x88] sm:$0xf]
    %v2907 = vld [vmem:[%s6 + $0x8c] sm:$0xf]
    %v2908 = vld [vmem:[%s6 + $0x90] sm:$0xf]
    %v2909 = vld [vmem:[%s6 + $0x94] sm:$0xf]
    %v2910 = vld [vmem:[%s6 + $0x98] sm:$0xf]
    %v2911 = vld [vmem:[%s6 + $0x9c] sm:$0xf]
    %v2912 = vld [vmem:[%s6 + $0xa0] sm:$0xf]
    %v2913 = vld [vmem:[%s6 + $0xa4] sm:$0xf]
    %v2914 = vld [vmem:[%s6 + $0xa8] sm:$0xf]
    %v2915 = vld [vmem:[%s6 + $0xac] sm:$0xf]
    %v2916 = vld [vmem:[%s6 + $0xb0] sm:$0xf]
    %v2917 = vld [vmem:[%s6 + $0xb4] sm:$0xf]
    %v2918 = vld [vmem:[%s6 + $0xb8] sm:$0xf]
    %v2919 = vld [vmem:[%s6 + $0xbc] sm:$0xf]
    %v2920 = vld [vmem:[%s6 + $0xc0] sm:$0xf]
    %v2921 = vld [vmem:[%s6 + $0xc4] sm:$0xf]
    %v2922 = vld [vmem:[%s6 + $0xc8] sm:$0xf]
    %v2923 = vld [vmem:[%s6 + $0xcc] sm:$0xf]
    %v2924 = vld [vmem:[%s6 + $0xd0] sm:$0xf]
    %v2925 = vld [vmem:[%s6 + $0xd4] sm:$0xf]
    %v2926 = vld [vmem:[%s6 + $0xd8] sm:$0xf]
    %v2927 = vld [vmem:[%s6 + $0xdc] sm:$0xf]
    %v2928 = vld [vmem:[%s6 + $0xe0] sm:$0xf]
    %v2929 = vld [vmem:[%s6 + $0xe4] sm:$0xf]
    %v2930 = vld [vmem:[%s6 + $0xe8] sm:$0xf]
    %v2931 = vld [vmem:[%s6 + $0xec] sm:$0xf]
    %v2932 = vld [vmem:[%s6 + $0xf0] sm:$0xf]
    %v2933 = vld [vmem:[%s6 + $0xf4] sm:$0xf]
    %v2934 = vld [vmem:[%s6 + $0xf8] sm:$0xf]
    %v2935 = vld [vmem:[%s6 + $0xfc] sm:$0xf]
    %v2936 = vld [vmem:[%s6 + $0x100] sm:$0xf]
    %v2937 = vld [vmem:[%s6 + $0x104] sm:$0xf]
    %v2938 = vld [vmem:[%s6 + $0x108] sm:$0xf]
    %v2939 = vld [vmem:[%s6 + $0x10c] sm:$0xf]
    %v2940 = vld [vmem:[%s6 + $0x110] sm:$0xf]
    %v2941 = vld [vmem:[%s6 + $0x114] sm:$0xf]
    %v2942 = vld [vmem:[%s6 + $0x118] sm:$0xf]
    %v2943 = vld [vmem:[%s6 + $0x11c] sm:$0xf]
    %v2944 = vld [vmem:[%s6 + $0x120] sm:$0xf]
    %v2945 = vld [vmem:[%s6 + $0x124] sm:$0xf]
    %v2946 = vld [vmem:[%s6 + $0x128] sm:$0xf]
    %v2947 = vld [vmem:[%s6 + $0x12c] sm:$0xf]
    %v2948 = vld [vmem:[%s6 + $0x130] sm:$0xf]
    %v2949 = vld [vmem:[%s6 + $0x134] sm:$0xf]
    %v2950 = vld [vmem:[%s6 + $0x138] sm:$0xf]
    %v2951 = vld [vmem:[%s6 + $0x13c] sm:$0xf]
    %v2952 = vld [vmem:[%s6 + $0x140] sm:$0xf]
    %v2953 = vld [vmem:[%s6 + $0x144] sm:$0xf]
    %v2954 = vld [vmem:[%s6 + $0x148] sm:$0xf]
    %v2955 = vld [vmem:[%s6 + $0x14c] sm:$0xf]
    %v2956 = vld [vmem:[%s6 + $0x150] sm:$0xf]
    %v2957 = vld [vmem:[%s6 + $0x154] sm:$0xf]
    %v2958 = vld [vmem:[%s6 + $0x158] sm:$0xf]
    %v2959 = vld [vmem:[%s6 + $0x15c] sm:$0xf]
    %v2960 = vld [vmem:[%s6 + $0x160] sm:$0xf]
    %v2961 = vld [vmem:[%s6 + $0x164] sm:$0xf]
    %v2962 = vld [vmem:[%s6 + $0x168] sm:$0xf]
    %v2963 = vld [vmem:[%s6 + $0x16c] sm:$0xf]
    %v2964 = vld [vmem:[%s6 + $0x170] sm:$0xf]
    %v2965 = vld [vmem:[%s6 + $0x174] sm:$0xf]
    %v2966 = vld [vmem:[%s6 + $0x178] sm:$0xf]
    %v2967 = vld [vmem:[%s6 + $0x17c] sm:$0xf]
    %v2968 = vld [vmem:[%s6 + $0x180] sm:$0xf]
    %v2969 = vld [vmem:[%s6 + $0x184] sm:$0xf]
    %v2970 = vld [vmem:[%s6 + $0x188] sm:$0xf]
    %v2971 = vld [vmem:[%s6 + $0x18c] sm:$0xf]
    %v2972 = vld [vmem:[%s6 + $0x190] sm:$0xf]
    %v2973 = vld [vmem:[%s6 + $0x194] sm:$0xf]
    %v2974 = vld [vmem:[%s6 + $0x198] sm:$0xf]
    %v2975 = vld [vmem:[%s6 + $0x19c] sm:$0xf]
    %v2976 = vld [vmem:[%s6 + $0x1a0] sm:$0xf]
    %v2977 = vld [vmem:[%s6 + $0x1a4] sm:$0xf]
    %v2978 = vld [vmem:[%s6 + $0x1a8] sm:$0xf]
    %v2979 = vld [vmem:[%s6 + $0x1ac] sm:$0xf]
    %v2980 = vld [vmem:[%s6 + $0x1b0] sm:$0xf]
    %v2981 = vld [vmem:[%s6 + $0x1b4] sm:$0xf]
    %v2982 = vld [vmem:[%s6 + $0x1b8] sm:$0xf]
    %v2983 = vld [vmem:[%s6 + $0x1bc] sm:$0xf]
    %v2984 = vld [vmem:[%s6 + $0x1c0] sm:$0xf]
    %v2985 = vld [vmem:[%s6 + $0x1c4] sm:$0xf]
    %v2986 = vld [vmem:[%s6 + $0x1c8] sm:$0xf]
    %v2987 = vld [vmem:[%s6 + $0x1cc] sm:$0xf]
    %v2988 = vld [vmem:[%s6 + $0x1d0] sm:$0xf]
    %v2989 = vld [vmem:[%s6 + $0x1d4] sm:$0xf]
    %v2990 = vld [vmem:[%s6 + $0x1d8] sm:$0xf]
    %v2991 = vld [vmem:[%s6 + $0x1dc] sm:$0xf]
    %v2992 = vld [vmem:[%s6 + $0x1e0] sm:$0xf]
    %v2993 = vld [vmem:[%s6 + $0x1e4] sm:$0xf]
    %v2994 = vld [vmem:[%s6 + $0x1e8] sm:$0xf]
    %v2995 = vld [vmem:[%s6 + $0x1ec] sm:$0xf]
    %v2996 = vld [vmem:[%s6 + $0x1f0] sm:$0xf]
    %v2997 = vld [vmem:[%s6 + $0x1f4] sm:$0xf]
    %v2998 = vld [vmem:[%s6 + $0x1f8] sm:$0xf]
    %v2999 = vld [vmem:[%s6 + $0x1fc] sm:$0xf]
    %v3000 = vld [vmem:[%s6 + $0x200] sm:$0xf]
    %v3001 = vld [vmem:[%s6 + $0x204] sm:$0xf]
    %v3002 = vld [vmem:[%s6 + $0x208] sm:$0xf]
    %v3003 = vld [vmem:[%s6 + $0x20c] sm:$0xf]
    %v3004 = vld [vmem:[%s6 + $0x210] sm:$0xf]
    %v3005 = vld [vmem:[%s6 + $0x214] sm:$0xf]
    %v3006 = vld [vmem:[%s6 + $0x218] sm:$0xf]
    %v3007 = vld [vmem:[%s6 + $0x21c] sm:$0xf]
    %v3008 = vld [vmem:[%s6 + $0x220] sm:$0xf]
    %v3009 = vld [vmem:[%s6 + $0x224] sm:$0xf]
    %v3010 = vld [vmem:[%s6 + $0x228] sm:$0xf]
    %v3011 = vld [vmem:[%s6 + $0x22c] sm:$0xf]
    %v3012 = vld [vmem:[%s6 + $0x230] sm:$0xf]
    %v3013 = vld [vmem:[%s6 + $0x234] sm:$0xf]
    %v3014 = vld [vmem:[%s6 + $0x238] sm:$0xf]
    %v3015 = vld [vmem:[%s6 + $0x23c] sm:$0xf]
    %v3016 = vld [vmem:[%s6 + $0x240] sm:$0xf]
    %v3017 = vld [vmem:[%s6 + $0x244] sm:$0xf]
    %v3018 = vld [vmem:[%s6 + $0x248] sm:$0xf]
    %v3019 = vld [vmem:[%s6 + $0x24c] sm:$0xf]
    %v3020 = vld [vmem:[%s6 + $0x250] sm:$0xf]
    %v3021 = vld [vmem:[%s6 + $0x254] sm:$0xf]
    %v3022 = vld [vmem:[%s6 + $0x258] sm:$0xf]
    %v3023 = vld [vmem:[%s6 + $0x25c] sm:$0xf]
    %v3024 = vld [vmem:[%s6 + $0x260] sm:$0xf]
    %v3025 = vld [vmem:[%s6 + $0x264] sm:$0xf]
    %v3026 = vld [vmem:[%s6 + $0x268] sm:$0xf]
    %v3027 = vld [vmem:[%s6 + $0x26c] sm:$0xf]
    %v3028 = vld [vmem:[%s6 + $0x270] sm:$0xf]
    %v3029 = vld [vmem:[%s6 + $0x274] sm:$0xf]
    %v3030 = vld [vmem:[%s6 + $0x278] sm:$0xf]
    %v3031 = vld [vmem:[%s6 + $0x27c] sm:$0xf]
    %v3032 = vld [vmem:[%s6 + $0x280] sm:$0xf]
    %v3033 = vld [vmem:[%s6 + $0x284] sm:$0xf]
    %v3034 = vld [vmem:[%s6 + $0x288] sm:$0xf]
    %v3035 = vld [vmem:[%s6 + $0x28c] sm:$0xf]
    %v3036 = vld [vmem:[%s6 + $0x290] sm:$0xf]
    %v3037 = vld [vmem:[%s6 + $0x294] sm:$0xf]
    %v3038 = vld [vmem:[%s6 + $0x298] sm:$0xf]
    %v3039 = vld [vmem:[%s6 + $0x29c] sm:$0xf]
    %v3040 = vld [vmem:[%s6 + $0x2a0] sm:$0xf]
    %v3041 = vld [vmem:[%s6 + $0x2a4] sm:$0xf]
    %v3042 = vld [vmem:[%s6 + $0x2a8] sm:$0xf]
    %v3043 = vld [vmem:[%s6 + $0x2ac] sm:$0xf]
    %v3044 = vld [vmem:[%s6 + $0x2b0] sm:$0xf]
    %v3045 = vld [vmem:[%s6 + $0x2b4] sm:$0xf]
    %v3046 = vld [vmem:[%s6 + $0x2b8] sm:$0xf]
    %v3047 = vld [vmem:[%s6 + $0x2bc] sm:$0xf]
    %v3048 = vld [vmem:[%s6 + $0x2c0] sm:$0xf]
    %v3049 = vld [vmem:[%s6 + $0x2c4] sm:$0xf]
    %v3050 = vld [vmem:[%s6 + $0x2c8] sm:$0xf]
    %v3051 = vld [vmem:[%s6 + $0x2cc] sm:$0xf]
    %v3052 = vld [vmem:[%s6 + $0x2d0] sm:$0xf]
    %v3053 = vld [vmem:[%s6 + $0x2d4] sm:$0xf]
    %v3054 = vld [vmem:[%s6 + $0x2d8] sm:$0xf]
    %v3055 = vld [vmem:[%s6 + $0x2dc] sm:$0xf]
    %v3056 = vld [vmem:[%s6 + $0x2e0] sm:$0xf]
    %v3057 = vld [vmem:[%s6 + $0x2e4] sm:$0xf]
    %v3058 = vld [vmem:[%s6 + $0x2e8] sm:$0xf]
    %v3059 = vld [vmem:[%s6 + $0x2ec] sm:$0xf]
    %v3060 = vld [vmem:[%s6 + $0x2f0] sm:$0xf]
    %v3061 = vld [vmem:[%s6 + $0x2f4] sm:$0xf]
    %v3062 = vld [vmem:[%s6 + $0x2f8] sm:$0xf]
    %v3063 = vld [vmem:[%s6 + $0x2fc] sm:$0xf]
    %v3064 = vld [vmem:[%s6 + $0x300] sm:$0xf]
    %v3065 = vld [vmem:[%s6 + $0x304] sm:$0xf]
    %v3066 = vld [vmem:[%s6 + $0x308] sm:$0xf]
    %v3067 = vld [vmem:[%s6 + $0x30c] sm:$0xf]
    %v3068 = vld [vmem:[%s6 + $0x310] sm:$0xf]
    %v3069 = vld [vmem:[%s6 + $0x314] sm:$0xf]
    %v3070 = vld [vmem:[%s6 + $0x318] sm:$0xf]
    %v3071 = vld [vmem:[%s6 + $0x31c] sm:$0xf]
    %v3072 = vld [vmem:[%s6 + $0x320] sm:$0xf]
    %v3073 = vld [vmem:[%s6 + $0x324] sm:$0xf]
    %v3074 = vld [vmem:[%s6 + $0x328] sm:$0xf]
    %v3075 = vld [vmem:[%s6 + $0x32c] sm:$0xf]
    %v3076 = vld [vmem:[%s6 + $0x330] sm:$0xf]
    %v3077 = vld [vmem:[%s6 + $0x334] sm:$0xf]
    %v3078 = vld [vmem:[%s6 + $0x338] sm:$0xf]
    %v3079 = vld [vmem:[%s6 + $0x33c] sm:$0xf]
    %v3080 = vld [vmem:[%s6 + $0x340] sm:$0xf]
    %v3081 = vld [vmem:[%s6 + $0x344] sm:$0xf]
    %v3082 = vld [vmem:[%s6 + $0x348] sm:$0xf]
    %v3083 = vld [vmem:[%s6 + $0x34c] sm:$0xf]
    %v3084 = vld [vmem:[%s6 + $0x350] sm:$0xf]
    %v3085 = vld [vmem:[%s6 + $0x354] sm:$0xf]
    %v3086 = vld [vmem:[%s6 + $0x358] sm:$0xf]
    %v3087 = vld [vmem:[%s6 + $0x35c] sm:$0xf]
    %v3088 = vld [vmem:[%s6 + $0x360] sm:$0xf]
    %v3089 = vld [vmem:[%s6 + $0x364] sm:$0xf]
    %v3090 = vld [vmem:[%s6 + $0x368] sm:$0xf]
    %v3091 = vld [vmem:[%s6 + $0x36c] sm:$0xf]
    %v3092 = vld [vmem:[%s6 + $0x370] sm:$0xf]
    %v3093 = vld [vmem:[%s6 + $0x374] sm:$0xf]
    %v3094 = vld [vmem:[%s6 + $0x378] sm:$0xf]
    %v3095 = vld [vmem:[%s6 + $0x37c] sm:$0xf]
    %v3096 = vld [vmem:[%s6 + $0x380] sm:$0xf]
    %v3097 = vld [vmem:[%s6 + $0x384] sm:$0xf]
    %v3098 = vld [vmem:[%s6 + $0x388] sm:$0xf]
    %v3099 = vld [vmem:[%s6 + $0x38c] sm:$0xf]
    %v3100 = vld [vmem:[%s6 + $0x390] sm:$0xf]
    %v3101 = vld [vmem:[%s6 + $0x394] sm:$0xf]
    %v3102 = vld [vmem:[%s6 + $0x398] sm:$0xf]
    %v3103 = vld [vmem:[%s6 + $0x39c] sm:$0xf]
    %v3104 = vld [vmem:[%s6 + $0x3a0] sm:$0xf]
    %v3105 = vld [vmem:[%s6 + $0x3a4] sm:$0xf]
    %v3106 = vld [vmem:[%s6 + $0x3a8] sm:$0xf]
    %v3107 = vld [vmem:[%s6 + $0x3ac] sm:$0xf]
    %v3108 = vld [vmem:[%s6 + $0x3b0] sm:$0xf]
    %v3109 = vld [vmem:[%s6 + $0x3b4] sm:$0xf]
    %v3110 = vld [vmem:[%s6 + $0x3b8] sm:$0xf]
    %v3111 = vld [vmem:[%s6 + $0x3bc] sm:$0xf]
    %v3112 = vld [vmem:[%s6 + $0x3c0] sm:$0xf]
    %v3113 = vld [vmem:[%s6 + $0x3c4] sm:$0xf]
    %v3114 = vld [vmem:[%s6 + $0x3c8] sm:$0xf]
    %v3115 = vld [vmem:[%s6 + $0x3cc] sm:$0xf]
    %v3116 = vld [vmem:[%s6 + $0x3d0] sm:$0xf]
    %v3117 = vld [vmem:[%s6 + $0x3d4] sm:$0xf]
    %v3118 = vld [vmem:[%s6 + $0x3d8] sm:$0xf]
    %v3119 = vld [vmem:[%s6 + $0x3dc] sm:$0xf]
    %v3120 = vld [vmem:[%s6 + $0x3e0] sm:$0xf]
    %v3121 = vld [vmem:[%s6 + $0x3e4] sm:$0xf]
    %v3122 = vld [vmem:[%s6 + $0x3e8] sm:$0xf]
    %v3123 = vld [vmem:[%s6 + $0x3ec] sm:$0xf]
    %v3124 = vld [vmem:[%s6 + $0x3f0] sm:$0xf]
    %v3125 = vld [vmem:[%s6 + $0x3f4] sm:$0xf]
    %v3126 = vld [vmem:[%s6 + $0x3f8] sm:$0xf]
    %v3127 = vld [vmem:[%s6 + $0x3fc] sm:$0xf]
    %v3128 = vlaneseq
    %v3129 = vshrl.u32 %v3128, 7
    %v3130 = vsub.s32 6, %v3129
    %v3131 = vrot.slane %v161, %v3130
    %v3388 = vunpack.c.l.b16 %v2872
    %v3389 = vunpack.c.l.b16 %v2873
    %v3390 = vunpack.c.l.b16 %v2874
    %v3391 = vunpack.c.l.b16 %v2875
    %v3392 = vunpack.c.l.b16 %v2876
    %v3393 = vunpack.c.l.b16 %v2877
    %v3394 = vunpack.c.l.b16 %v2878
    %v3395 = vunpack.c.l.b16 %v2879
    %v3396 = vunpack.c.l.b16 %v2880
    %v3397 = vunpack.c.l.b16 %v2881
    %v3398 = vunpack.c.l.b16 %v2882
    %v3399 = vunpack.c.l.b16 %v2883
    %v3400 = vunpack.c.l.b16 %v2884
    %v3401 = vunpack.c.l.b16 %v2885
    %v3402 = vunpack.c.l.b16 %v2886
    %v3403 = vunpack.c.l.b16 %v2887
    %v3404 = vunpack.c.l.b16 %v2888
    %v3405 = vunpack.c.l.b16 %v2889
    %v3406 = vunpack.c.l.b16 %v2890
    %v3407 = vunpack.c.l.b16 %v2891
    %v3408 = vunpack.c.l.b16 %v2892
    %v3409 = vunpack.c.l.b16 %v2893
    %v3410 = vunpack.c.l.b16 %v2894
    %v3411 = vunpack.c.l.b16 %v2895
    %v3412 = vunpack.c.l.b16 %v2896
    %v3413 = vunpack.c.l.b16 %v2897
    %v3414 = vunpack.c.l.b16 %v2898
    %v3415 = vunpack.c.l.b16 %v2899
    %v3416 = vunpack.c.l.b16 %v2900
    %v3417 = vunpack.c.l.b16 %v2901
    %v3418 = vunpack.c.l.b16 %v2902
    %v3419 = vunpack.c.l.b16 %v2903
    %v3420 = vunpack.c.l.b16 %v2904
    %v3421 = vunpack.c.l.b16 %v2905
    %v3422 = vunpack.c.l.b16 %v2906
    %v3423 = vunpack.c.l.b16 %v2907
    %v3424 = vunpack.c.l.b16 %v2908
    %v3425 = vunpack.c.l.b16 %v2909
    %v3426 = vunpack.c.l.b16 %v2910
    %v3427 = vunpack.c.l.b16 %v2911
    %v3428 = vunpack.c.l.b16 %v2912
    %v3429 = vunpack.c.l.b16 %v2913
    %v3430 = vunpack.c.l.b16 %v2914
    %v3431 = vunpack.c.l.b16 %v2915
    %v3432 = vunpack.c.l.b16 %v2916
    %v3433 = vunpack.c.l.b16 %v2917
    %v3434 = vunpack.c.l.b16 %v2918
    %v3435 = vunpack.c.l.b16 %v2919
    %v3436 = vunpack.c.l.b16 %v2920
    %v3437 = vunpack.c.l.b16 %v2921
    %v3438 = vunpack.c.l.b16 %v2922
    %v3439 = vunpack.c.l.b16 %v2923
    %v3440 = vunpack.c.l.b16 %v2924
    %v3441 = vunpack.c.l.b16 %v2925
    %v3442 = vunpack.c.l.b16 %v2926
    %v3443 = vunpack.c.l.b16 %v2927
    %v3444 = vunpack.c.l.b16 %v2928
    %v3445 = vunpack.c.l.b16 %v2929
    %v3446 = vunpack.c.l.b16 %v2930
    %v3447 = vunpack.c.l.b16 %v2931
    %v3448 = vunpack.c.l.b16 %v2932
    %v3449 = vunpack.c.l.b16 %v2933
    %v3450 = vunpack.c.l.b16 %v2934
    %v3451 = vunpack.c.l.b16 %v2935
    %v3452 = vunpack.c.l.b16 %v2936
    %v3453 = vunpack.c.l.b16 %v2937
    %v3454 = vunpack.c.l.b16 %v2938
    %v3455 = vunpack.c.l.b16 %v2939
    %v3456 = vunpack.c.l.b16 %v2940
    %v3457 = vunpack.c.l.b16 %v2941
    %v3458 = vunpack.c.l.b16 %v2942
    %v3459 = vunpack.c.l.b16 %v2943
    %v3460 = vunpack.c.l.b16 %v2944
    %v3461 = vunpack.c.l.b16 %v2945
    %v3462 = vunpack.c.l.b16 %v2946
    %v3463 = vunpack.c.l.b16 %v2947
    %v3464 = vunpack.c.l.b16 %v2948
    %v3465 = vunpack.c.l.b16 %v2949
    %v3466 = vunpack.c.l.b16 %v2950
    %v3467 = vunpack.c.l.b16 %v2951
    %v3468 = vunpack.c.l.b16 %v2952
    %v3469 = vunpack.c.l.b16 %v2953
    %v3470 = vunpack.c.l.b16 %v2954
    %v3471 = vunpack.c.l.b16 %v2955
    %v3472 = vunpack.c.l.b16 %v2956
    %v3473 = vunpack.c.l.b16 %v2957
    %v3474 = vunpack.c.l.b16 %v2958
    %v3475 = vunpack.c.l.b16 %v2959
    %v3476 = vunpack.c.l.b16 %v2960
    %v3477 = vunpack.c.l.b16 %v2961
    %v3478 = vunpack.c.l.b16 %v2962
    %v3479 = vunpack.c.l.b16 %v2963
    %v3480 = vunpack.c.l.b16 %v2964
    %v3481 = vunpack.c.l.b16 %v2965
    %v3482 = vunpack.c.l.b16 %v2966
    %v3483 = vunpack.c.l.b16 %v2967
    %v3484 = vunpack.c.l.b16 %v2968
    %v3485 = vunpack.c.l.b16 %v2969
    %v3486 = vunpack.c.l.b16 %v2970
    %v3487 = vunpack.c.l.b16 %v2971
    %v3488 = vunpack.c.l.b16 %v2972
    %v3489 = vunpack.c.l.b16 %v2973
    %v3490 = vunpack.c.l.b16 %v2974
    %v3491 = vunpack.c.l.b16 %v2975
    %v3492 = vunpack.c.l.b16 %v2976
    %v3493 = vunpack.c.l.b16 %v2977
    %v3494 = vunpack.c.l.b16 %v2978
    %v3495 = vunpack.c.l.b16 %v2979
    %v3496 = vunpack.c.l.b16 %v2980
    %v3497 = vunpack.c.l.b16 %v2981
    %v3498 = vunpack.c.l.b16 %v2982
    %v3499 = vunpack.c.l.b16 %v2983
    %v3500 = vunpack.c.l.b16 %v2984
    %v3501 = vunpack.c.l.b16 %v2985
    %v3502 = vunpack.c.l.b16 %v2986
    %v3503 = vunpack.c.l.b16 %v2987
    %v3504 = vunpack.c.l.b16 %v2988
    %v3505 = vunpack.c.l.b16 %v2989
    %v3506 = vunpack.c.l.b16 %v2990
    %v3507 = vunpack.c.l.b16 %v2991
    %v3508 = vunpack.c.l.b16 %v2992
    %v3509 = vunpack.c.l.b16 %v2993
    %v3510 = vunpack.c.l.b16 %v2994
    %v3511 = vunpack.c.l.b16 %v2995
    %v3512 = vunpack.c.l.b16 %v2996
    %v3513 = vunpack.c.l.b16 %v2997
    %v3514 = vunpack.c.l.b16 %v2998
    %v3515 = vunpack.c.l.b16 %v2999
    %v3516 = vunpack.c.l.b16 %v3000
    %v3517 = vunpack.c.l.b16 %v3001
    %v3518 = vunpack.c.l.b16 %v3002
    %v3519 = vunpack.c.l.b16 %v3003
    %v3520 = vunpack.c.l.b16 %v3004
    %v3521 = vunpack.c.l.b16 %v3005
    %v3522 = vunpack.c.l.b16 %v3006
    %v3523 = vunpack.c.l.b16 %v3007
    %v3524 = vunpack.c.l.b16 %v3008
    %v3525 = vunpack.c.l.b16 %v3009
    %v3526 = vunpack.c.l.b16 %v3010
    %v3527 = vunpack.c.l.b16 %v3011
    %v3528 = vunpack.c.l.b16 %v3012
    %v3529 = vunpack.c.l.b16 %v3013
    %v3530 = vunpack.c.l.b16 %v3014
    %v3531 = vunpack.c.l.b16 %v3015
    %v3532 = vunpack.c.l.b16 %v3016
    %v3533 = vunpack.c.l.b16 %v3017
    %v3534 = vunpack.c.l.b16 %v3018
    %v3535 = vunpack.c.l.b16 %v3019
    %v3536 = vunpack.c.l.b16 %v3020
    %v3537 = vunpack.c.l.b16 %v3021
    %v3538 = vunpack.c.l.b16 %v3022
    %v3539 = vunpack.c.l.b16 %v3023
    %v3540 = vunpack.c.l.b16 %v3024
    %v3541 = vunpack.c.l.b16 %v3025
    %v3542 = vunpack.c.l.b16 %v3026
    %v3543 = vunpack.c.l.b16 %v3027
    %v3544 = vunpack.c.l.b16 %v3028
    %v3545 = vunpack.c.l.b16 %v3029
    %v3546 = vunpack.c.l.b16 %v3030
    %v3547 = vunpack.c.l.b16 %v3031
    %v3548 = vunpack.c.l.b16 %v3032
    %v3549 = vunpack.c.l.b16 %v3033
    %v3550 = vunpack.c.l.b16 %v3034
    %v3551 = vunpack.c.l.b16 %v3035
    %v3552 = vunpack.c.l.b16 %v3036
    %v3553 = vunpack.c.l.b16 %v3037
    %v3554 = vunpack.c.l.b16 %v3038
    %v3555 = vunpack.c.l.b16 %v3039
    %v3556 = vunpack.c.l.b16 %v3040
    %v3557 = vunpack.c.l.b16 %v3041
    %v3558 = vunpack.c.l.b16 %v3042
    %v3559 = vunpack.c.l.b16 %v3043
    %v3560 = vunpack.c.l.b16 %v3044
    %v3561 = vunpack.c.l.b16 %v3045
    %v3562 = vunpack.c.l.b16 %v3046
    %v3563 = vunpack.c.l.b16 %v3047
    %v3564 = vunpack.c.l.b16 %v3048
    %v3565 = vunpack.c.l.b16 %v3049
    %v3566 = vunpack.c.l.b16 %v3050
    %v3567 = vunpack.c.l.b16 %v3051
    %v3568 = vunpack.c.l.b16 %v3052
    %v3569 = vunpack.c.l.b16 %v3053
    %v3570 = vunpack.c.l.b16 %v3054
    %v3571 = vunpack.c.l.b16 %v3055
    %v3572 = vunpack.c.l.b16 %v3056
    %v3573 = vunpack.c.l.b16 %v3057
    %v3574 = vunpack.c.l.b16 %v3058
    %v3575 = vunpack.c.l.b16 %v3059
    %v3576 = vunpack.c.l.b16 %v3060
    %v3577 = vunpack.c.l.b16 %v3061
    %v3578 = vunpack.c.l.b16 %v3062
    %v3579 = vunpack.c.l.b16 %v3063
    %v3580 = vunpack.c.l.b16 %v3064
    %v3581 = vunpack.c.l.b16 %v3065
    %v3582 = vunpack.c.l.b16 %v3066
    %v3583 = vunpack.c.l.b16 %v3067
    %v3584 = vunpack.c.l.b16 %v3068
    %v3585 = vunpack.c.l.b16 %v3069
    %v3586 = vunpack.c.l.b16 %v3070
    %v3587 = vunpack.c.l.b16 %v3071
    %v3588 = vunpack.c.l.b16 %v3072
    %v3589 = vunpack.c.l.b16 %v3073
    %v3590 = vunpack.c.l.b16 %v3074
    %v3591 = vunpack.c.l.b16 %v3075
    %v3592 = vunpack.c.l.b16 %v3076
    %v3593 = vunpack.c.l.b16 %v3077
    %v3594 = vunpack.c.l.b16 %v3078
    %v3595 = vunpack.c.l.b16 %v3079
    %v3596 = vunpack.c.l.b16 %v3080
    %v3597 = vunpack.c.l.b16 %v3081
    %v3598 = vunpack.c.l.b16 %v3082
    %v3599 = vunpack.c.l.b16 %v3083
    %v3600 = vunpack.c.l.b16 %v3084
    %v3601 = vunpack.c.l.b16 %v3085
    %v3602 = vunpack.c.l.b16 %v3086
    %v3603 = vunpack.c.l.b16 %v3087
    %v3604 = vunpack.c.l.b16 %v3088
    %v3605 = vunpack.c.l.b16 %v3089
    %v3606 = vunpack.c.l.b16 %v3090
    %v3607 = vunpack.c.l.b16 %v3091
    %v3608 = vunpack.c.l.b16 %v3092
    %v3609 = vunpack.c.l.b16 %v3093
    %v3610 = vunpack.c.l.b16 %v3094
    %v3611 = vunpack.c.l.b16 %v3095
    %v3612 = vunpack.c.l.b16 %v3096
    %v3613 = vunpack.c.l.b16 %v3097
    %v3614 = vunpack.c.l.b16 %v3098
    %v3615 = vunpack.c.l.b16 %v3099
    %v3616 = vunpack.c.l.b16 %v3100
    %v3617 = vunpack.c.l.b16 %v3101
    %v3618 = vunpack.c.l.b16 %v3102
    %v3619 = vunpack.c.l.b16 %v3103
    %v3620 = vunpack.c.l.b16 %v3104
    %v3621 = vunpack.c.l.b16 %v3105
    %v3622 = vunpack.c.l.b16 %v3106
    %v3623 = vunpack.c.l.b16 %v3107
    %v3624 = vunpack.c.l.b16 %v3108
    %v3625 = vunpack.c.l.b16 %v3109
    %v3626 = vunpack.c.l.b16 %v3110
    %v3627 = vunpack.c.l.b16 %v3111
    %v3628 = vunpack.c.l.b16 %v3112
    %v3629 = vunpack.c.l.b16 %v3113
    %v3630 = vunpack.c.l.b16 %v3114
    %v3631 = vunpack.c.l.b16 %v3115
    %v3632 = vunpack.c.l.b16 %v3116
    %v3633 = vunpack.c.l.b16 %v3117
    %v3634 = vunpack.c.l.b16 %v3118
    %v3635 = vunpack.c.l.b16 %v3119
    %v3636 = vunpack.c.l.b16 %v3120
    %v3637 = vunpack.c.l.b16 %v3121
    %v3638 = vunpack.c.l.b16 %v3122
    %v3639 = vunpack.c.l.b16 %v3123
    %v3640 = vunpack.c.l.b16 %v3124
    %v3641 = vunpack.c.l.b16 %v3125
    %v3642 = vunpack.c.l.b16 %v3126
    %v3643 = vunpack.c.l.b16 %v3127
    %v3644 = vpack.c.b16 %v3389, %v3388
    %v3645 = vpack.c.b16 %v3391, %v3390
    %v3646 = vpack.c.b16 %v3393, %v3392
    %v3647 = vpack.c.b16 %v3395, %v3394
    %v3648 = vpack.c.b16 %v3397, %v3396
    %v3649 = vpack.c.b16 %v3399, %v3398
    %v3650 = vpack.c.b16 %v3401, %v3400
    %v3651 = vpack.c.b16 %v3403, %v3402
    %v3652 = vpack.c.b16 %v3405, %v3404
    %v3653 = vpack.c.b16 %v3407, %v3406
    %v3654 = vpack.c.b16 %v3409, %v3408
    %v3655 = vpack.c.b16 %v3411, %v3410
    %v3656 = vpack.c.b16 %v3413, %v3412
    %v3657 = vpack.c.b16 %v3415, %v3414
    %v3658 = vpack.c.b16 %v3417, %v3416
    %v3659 = vpack.c.b16 %v3419, %v3418
    %v3660 = vpack.c.b16 %v3421, %v3420
    %v3661 = vpack.c.b16 %v3423, %v3422
    %v3662 = vpack.c.b16 %v3425, %v3424
    %v3663 = vpack.c.b16 %v3427, %v3426
    %v3664 = vpack.c.b16 %v3429, %v3428
    %v3665 = vpack.c.b16 %v3431, %v3430
    %v3666 = vpack.c.b16 %v3433, %v3432
    %v3667 = vpack.c.b16 %v3435, %v3434
    %v3668 = vpack.c.b16 %v3437, %v3436
    %v3669 = vpack.c.b16 %v3439, %v3438
    %v3670 = vpack.c.b16 %v3441, %v3440
    %v3671 = vpack.c.b16 %v3443, %v3442
    %v3672 = vpack.c.b16 %v3445, %v3444
    %v3673 = vpack.c.b16 %v3447, %v3446
    %v3674 = vpack.c.b16 %v3449, %v3448
    %v3675 = vpack.c.b16 %v3451, %v3450
    %v3676 = vpack.c.b16 %v3453, %v3452
    %v3677 = vpack.c.b16 %v3455, %v3454
    %v3678 = vpack.c.b16 %v3457, %v3456
    %v3679 = vpack.c.b16 %v3459, %v3458
    %v3680 = vpack.c.b16 %v3461, %v3460
    %v3681 = vpack.c.b16 %v3463, %v3462
    %v3682 = vpack.c.b16 %v3465, %v3464
    %v3683 = vpack.c.b16 %v3467, %v3466
    %v3684 = vpack.c.b16 %v3469, %v3468
    %v3685 = vpack.c.b16 %v3471, %v3470
    %v3686 = vpack.c.b16 %v3473, %v3472
    %v3687 = vpack.c.b16 %v3475, %v3474
    %v3688 = vpack.c.b16 %v3477, %v3476
    %v3689 = vpack.c.b16 %v3479, %v3478
    %v3690 = vpack.c.b16 %v3481, %v3480
    %v3691 = vpack.c.b16 %v3483, %v3482
    %v3692 = vpack.c.b16 %v3485, %v3484
    %v3693 = vpack.c.b16 %v3487, %v3486
    %v3694 = vpack.c.b16 %v3489, %v3488
    %v3695 = vpack.c.b16 %v3491, %v3490
    %v3696 = vpack.c.b16 %v3493, %v3492
    %v3697 = vpack.c.b16 %v3495, %v3494
    %v3698 = vpack.c.b16 %v3497, %v3496
    %v3699 = vpack.c.b16 %v3499, %v3498
    %v3700 = vpack.c.b16 %v3501, %v3500
    %v3701 = vpack.c.b16 %v3503, %v3502
    %v3702 = vpack.c.b16 %v3505, %v3504
    %v3703 = vpack.c.b16 %v3507, %v3506
    %v3704 = vpack.c.b16 %v3509, %v3508
    %v3705 = vpack.c.b16 %v3511, %v3510
    %v3706 = vpack.c.b16 %v3513, %v3512
    %v3707 = vpack.c.b16 %v3515, %v3514
    %v3708 = vpack.c.b16 %v3517, %v3516
    %v3709 = vpack.c.b16 %v3519, %v3518
    %v3710 = vpack.c.b16 %v3521, %v3520
    %v3711 = vpack.c.b16 %v3523, %v3522
    %v3712 = vpack.c.b16 %v3525, %v3524
    %v3713 = vpack.c.b16 %v3527, %v3526
    %v3714 = vpack.c.b16 %v3529, %v3528
    %v3715 = vpack.c.b16 %v3531, %v3530
    %v3716 = vpack.c.b16 %v3533, %v3532
    %v3717 = vpack.c.b16 %v3535, %v3534
    %v3718 = vpack.c.b16 %v3537, %v3536
    %v3719 = vpack.c.b16 %v3539, %v3538
    %v3720 = vpack.c.b16 %v3541, %v3540
    %v3721 = vpack.c.b16 %v3543, %v3542
    %v3722 = vpack.c.b16 %v3545, %v3544
    %v3723 = vpack.c.b16 %v3547, %v3546
    %v3724 = vpack.c.b16 %v3549, %v3548
    %v3725 = vpack.c.b16 %v3551, %v3550
    %v3726 = vpack.c.b16 %v3553, %v3552
    %v3727 = vpack.c.b16 %v3555, %v3554
    %v3728 = vpack.c.b16 %v3557, %v3556
    %v3729 = vpack.c.b16 %v3559, %v3558
    %v3730 = vpack.c.b16 %v3561, %v3560
    %v3731 = vpack.c.b16 %v3563, %v3562
    %v3732 = vpack.c.b16 %v3565, %v3564
    %v3733 = vpack.c.b16 %v3567, %v3566
    %v3734 = vpack.c.b16 %v3569, %v3568
    %v3735 = vpack.c.b16 %v3571, %v3570
    %v3736 = vpack.c.b16 %v3573, %v3572
    %v3737 = vpack.c.b16 %v3575, %v3574
    %v3738 = vpack.c.b16 %v3577, %v3576
    %v3739 = vpack.c.b16 %v3579, %v3578
    %v3740 = vpack.c.b16 %v3581, %v3580
    %v3741 = vpack.c.b16 %v3583, %v3582
    %v3742 = vpack.c.b16 %v3585, %v3584
    %v3743 = vpack.c.b16 %v3587, %v3586
    %v3744 = vpack.c.b16 %v3589, %v3588
    %v3745 = vpack.c.b16 %v3591, %v3590
    %v3746 = vpack.c.b16 %v3593, %v3592
    %v3747 = vpack.c.b16 %v3595, %v3594
    %v3748 = vpack.c.b16 %v3597, %v3596
    %v3749 = vpack.c.b16 %v3599, %v3598
    %v3750 = vpack.c.b16 %v3601, %v3600
    %v3751 = vpack.c.b16 %v3603, %v3602
    %v3752 = vpack.c.b16 %v3605, %v3604
    %v3753 = vpack.c.b16 %v3607, %v3606
    %v3754 = vpack.c.b16 %v3609, %v3608
    %v3755 = vpack.c.b16 %v3611, %v3610
    %v3756 = vpack.c.b16 %v3613, %v3612
    %v3757 = vpack.c.b16 %v3615, %v3614
    %v3758 = vpack.c.b16 %v3617, %v3616
    %v3759 = vpack.c.b16 %v3619, %v3618
    %v3760 = vpack.c.b16 %v3621, %v3620
    %v3761 = vpack.c.b16 %v3623, %v3622
    %v3762 = vpack.c.b16 %v3625, %v3624
    %v3763 = vpack.c.b16 %v3627, %v3626
    %v3764 = vpack.c.b16 %v3629, %v3628
    %v3765 = vpack.c.b16 %v3631, %v3630
    %v3766 = vpack.c.b16 %v3633, %v3632
    %v3767 = vpack.c.b16 %v3635, %v3634
    %v3768 = vpack.c.b16 %v3637, %v3636
    %v3769 = vpack.c.b16 %v3639, %v3638
    %v3770 = vpack.c.b16 %v3641, %v3640
    %v3771 = vpack.c.b16 %v3643, %v3642
    %3900 = vmatprep.subr.bf16.mxu0 0
    %3901 = vmatpush1.bf16.msra.mxu0 %v3644
    %3902 = vmatprep.subr.bf16.mxu0 0
    %3903 = vmatpush1.bf16.msra.mxu0 %v3645
    %3904 = vmatprep.subr.bf16.mxu0 0
    %3905 = vmatpush1.bf16.msra.mxu0 %v3646
    %3906 = vmatprep.subr.bf16.mxu0 0
    %3907 = vmatpush1.bf16.msra.mxu0 %v3647
    %3908 = vmatprep.subr.bf16.mxu0 0
    %3909 = vmatpush1.bf16.msra.mxu0 %v3648
    %3910 = vmatprep.subr.bf16.mxu0 0
    %3911 = vmatpush1.bf16.msra.mxu0 %v3649
    %3912 = vmatprep.subr.bf16.mxu0 0
    %3913 = vmatpush1.bf16.msra.mxu0 %v3650
    %3914 = vmatprep.subr.bf16.mxu0 0
    %3915 = vmatpush1.bf16.msra.mxu0 %v3651
    %3916 = vmatprep.subr.bf16.mxu0 0
    %3917 = vmatpush1.bf16.msra.mxu0 %v3652
    %3918 = vmatprep.subr.bf16.mxu0 0
    %3919 = vmatpush1.bf16.msra.mxu0 %v3653
    %3920 = vmatprep.subr.bf16.mxu0 0
    %3921 = vmatpush1.bf16.msra.mxu0 %v3654
    %3922 = vmatprep.subr.bf16.mxu0 0
    %3923 = vmatpush1.bf16.msra.mxu0 %v3655
    %3924 = vmatprep.subr.bf16.mxu0 0
    %3925 = vmatpush1.bf16.msra.mxu0 %v3656
    %3926 = vmatprep.subr.bf16.mxu0 0
    %3927 = vmatpush1.bf16.msra.mxu0 %v3657
    %3928 = vmatprep.subr.bf16.mxu0 0
    %3929 = vmatpush1.bf16.msra.mxu0 %v3658
    %3930 = vmatprep.subr.bf16.mxu0 0
    %3931 = vmatpush1.bf16.msra.mxu0 %v3659
    %3932 = vmatprep.mubr.bf16.mxu0 %v2857
    %3933 = vmatmul.mubr.bf16.gmra.mrb[0].mxu0 %v2856
    %v3934 = vpop.f32.mrb[0].mxu0
    %v3935 = vadd.f32 %v3131, %v3934
    %v3936 = vpop.f32.mrb[0].mxu0
    %v3937 = vpop.f32.mrb[0].mxu0
    %v3938 = vadd.f32 %v3131, %v3937
    %v3939 = vpop.f32.mrb[0].mxu0
    %3940 = vdwg.mxu0
    %3941 = vmatprep.subr.bf16.mxu0 0
    %3942 = vmatpush1.bf16.msra.mxu0 %v3660
    %3943 = vmatprep.subr.bf16.mxu0 0
    %3944 = vmatpush1.bf16.msra.mxu0 %v3661
    %3945 = vmatprep.subr.bf16.mxu0 0
    %3946 = vmatpush1.bf16.msra.mxu0 %v3662
    %3947 = vmatprep.subr.bf16.mxu0 0
    %3948 = vmatpush1.bf16.msra.mxu0 %v3663
    %3949 = vmatprep.subr.bf16.mxu0 0
    %3950 = vmatpush1.bf16.msra.mxu0 %v3664
    %3951 = vmatprep.subr.bf16.mxu0 0
    %3952 = vmatpush1.bf16.msra.mxu0 %v3665
    %3953 = vmatprep.subr.bf16.mxu0 0
    %3954 = vmatpush1.bf16.msra.mxu0 %v3666
    %3955 = vmatprep.subr.bf16.mxu0 0
    %3956 = vmatpush1.bf16.msra.mxu0 %v3667
    %3957 = vmatprep.subr.bf16.mxu0 0
    %3958 = vmatpush1.bf16.msra.mxu0 %v3668
    %3959 = vmatprep.subr.bf16.mxu0 0
    %3960 = vmatpush1.bf16.msra.mxu0 %v3669
    %3961 = vmatprep.subr.bf16.mxu0 0
    %3962 = vmatpush1.bf16.msra.mxu0 %v3670
    %3963 = vmatprep.subr.bf16.mxu0 0
    %3964 = vmatpush1.bf16.msra.mxu0 %v3671
    %3965 = vmatprep.subr.bf16.mxu0 0
    %3966 = vmatpush1.bf16.msra.mxu0 %v3672
    %3967 = vmatprep.subr.bf16.mxu0 0
    %3968 = vmatpush1.bf16.msra.mxu0 %v3673
    %3969 = vmatprep.subr.bf16.mxu0 0
    %3970 = vmatpush1.bf16.msra.mxu0 %v3674
    %3971 = vmatprep.subr.bf16.mxu0 0
    %3972 = vmatpush1.bf16.msra.mxu0 %v3675
    %3973 = vmatprep.mubr.bf16.mxu0 %v2859
    %3974 = vmatmul.mubr.bf16.gmra.mrb[0].mxu0 %v2858
    %v3975 = vpop.f32.mrb[0].mxu0
    %v3976 = vadd.f32 %v3935, %v3975
    %v3977 = vpop.f32.mrb[0].mxu0
    %v3978 = vpop.f32.mrb[0].mxu0
    %v3979 = vadd.f32 %v3938, %v3978
    %v3980 = vpop.f32.mrb[0].mxu0
    %3981 = vdwg.mxu0
    %3982 = vmatprep.subr.bf16.mxu0 0
    %3983 = vmatpush1.bf16.msra.mxu0 %v3676
    %3984 = vmatprep.subr.bf16.mxu0 0
    %3985 = vmatpush1.bf16.msra.mxu0 %v3677
    %3986 = vmatprep.subr.bf16.mxu0 0
    %3987 = vmatpush1.bf16.msra.mxu0 %v3678
    %3988 = vmatprep.subr.bf16.mxu0 0
    %3989 = vmatpush1.bf16.msra.mxu0 %v3679
    %3990 = vmatprep.subr.bf16.mxu0 0
    %3991 = vmatpush1.bf16.msra.mxu0 %v3680
    %3992 = vmatprep.subr.bf16.mxu0 0
    %3993 = vmatpush1.bf16.msra.mxu0 %v3681
    %3994 = vmatprep.subr.bf16.mxu0 0
    %3995 = vmatpush1.bf16.msra.mxu0 %v3682
    %3996 = vmatprep.subr.bf16.mxu0 0
    %3997 = vmatpush1.bf16.msra.mxu0 %v3683
    %3998 = vmatprep.subr.bf16.mxu0 0
    %3999 = vmatpush1.bf16.msra.mxu0 %v3684
    %4000 = vmatprep.subr.bf16.mxu0 0
    %4001 = vmatpush1.bf16.msra.mxu0 %v3685
    %4002 = vmatprep.subr.bf16.mxu0 0
    %4003 = vmatpush1.bf16.msra.mxu0 %v3686
    %4004 = vmatprep.subr.bf16.mxu0 0
    %4005 = vmatpush1.bf16.msra.mxu0 %v3687
    %4006 = vmatprep.subr.bf16.mxu0 0
    %4007 = vmatpush1.bf16.msra.mxu0 %v3688
    %4008 = vmatprep.subr.bf16.mxu0 0
    %4009 = vmatpush1.bf16.msra.mxu0 %v3689
    %4010 = vmatprep.subr.bf16.mxu0 0
    %4011 = vmatpush1.bf16.msra.mxu0 %v3690
    %4012 = vmatprep.subr.bf16.mxu0 0
    %4013 = vmatpush1.bf16.msra.mxu0 %v3691
    %4014 = vmatprep.mubr.bf16.mxu0 %v2861
    %4015 = vmatmul.mubr.bf16.gmra.mrb[0].mxu0 %v2860
    %v4016 = vpop.f32.mrb[0].mxu0
    %v4017 = vadd.f32 %v3976, %v4016
    %v4018 = vpop.f32.mrb[0].mxu0
    %v4019 = vpop.f32.mrb[0].mxu0
    %v4020 = vadd.f32 %v3979, %v4019
    %v4021 = vpop.f32.mrb[0].mxu0
    %4022 = vdwg.mxu0
    %4023 = vmatprep.subr.bf16.mxu0 0
    %4024 = vmatpush1.bf16.msra.mxu0 %v3692
    %4025 = vmatprep.subr.bf16.mxu0 0
    %4026 = vmatpush1.bf16.msra.mxu0 %v3693
    %4027 = vmatprep.subr.bf16.mxu0 0
    %4028 = vmatpush1.bf16.msra.mxu0 %v3694
    %4029 = vmatprep.subr.bf16.mxu0 0
    %4030 = vmatpush1.bf16.msra.mxu0 %v3695
    %4031 = vmatprep.subr.bf16.mxu0 0
    %4032 = vmatpush1.bf16.msra.mxu0 %v3696
    %4033 = vmatprep.subr.bf16.mxu0 0
    %4034 = vmatpush1.bf16.msra.mxu0 %v3697
    %4035 = vmatprep.subr.bf16.mxu0 0
    %4036 = vmatpush1.bf16.msra.mxu0 %v3698
    %4037 = vmatprep.subr.bf16.mxu0 0
    %4038 = vmatpush1.bf16.msra.mxu0 %v3699
    %4039 = vmatprep.subr.bf16.mxu0 0
    %4040 = vmatpush1.bf16.msra.mxu0 %v3700
    %4041 = vmatprep.subr.bf16.mxu0 0
    %4042 = vmatpush1.bf16.msra.mxu0 %v3701
    %4043 = vmatprep.subr.bf16.mxu0 0
    %4044 = vmatpush1.bf16.msra.mxu0 %v3702
    %4045 = vmatprep.subr.bf16.mxu0 0
    %4046 = vmatpush1.bf16.msra.mxu0 %v3703
    %4047 = vmatprep.subr.bf16.mxu0 0
    %4048 = vmatpush1.bf16.msra.mxu0 %v3704
    %4049 = vmatprep.subr.bf16.mxu0 0
    %4050 = vmatpush1.bf16.msra.mxu0 %v3705
    %4051 = vmatprep.subr.bf16.mxu0 0
    %4052 = vmatpush1.bf16.msra.mxu0 %v3706
    %4053 = vmatprep.subr.bf16.mxu0 0
    %4054 = vmatpush1.bf16.msra.mxu0 %v3707
    %4055 = vmatprep.mubr.bf16.mxu0 %v2863
    %4056 = vmatmul.mubr.bf16.gmra.mrb[0].mxu0 %v2862
    %v4057 = vpop.f32.mrb[0].mxu0
    %v4058 = vadd.f32 %v4017, %v4057
    %v4059 = vpop.f32.mrb[0].mxu0
    %v4060 = vpop.f32.mrb[0].mxu0
    %v4061 = vadd.f32 %v4020, %v4060
    %v4062 = vpop.f32.mrb[0].mxu0
    %4063 = vdwg.mxu0
    %4064 = vmatprep.subr.bf16.mxu0 0
    %4065 = vmatpush1.bf16.msra.mxu0 %v3708
    %4066 = vmatprep.subr.bf16.mxu0 0
    %4067 = vmatpush1.bf16.msra.mxu0 %v3709
    %4068 = vmatprep.subr.bf16.mxu0 0
    %4069 = vmatpush1.bf16.msra.mxu0 %v3710
    %4070 = vmatprep.subr.bf16.mxu0 0
    %4071 = vmatpush1.bf16.msra.mxu0 %v3711
    %4072 = vmatprep.subr.bf16.mxu0 0
    %4073 = vmatpush1.bf16.msra.mxu0 %v3712
    %4074 = vmatprep.subr.bf16.mxu0 0
    %4075 = vmatpush1.bf16.msra.mxu0 %v3713
    %4076 = vmatprep.subr.bf16.mxu0 0
    %4077 = vmatpush1.bf16.msra.mxu0 %v3714
    %4078 = vmatprep.subr.bf16.mxu0 0
    %4079 = vmatpush1.bf16.msra.mxu0 %v3715
    %4080 = vmatprep.subr.bf16.mxu0 0
    %4081 = vmatpush1.bf16.msra.mxu0 %v3716
    %4082 = vmatprep.subr.bf16.mxu0 0
    %4083 = vmatpush1.bf16.msra.mxu0 %v3717
    %4084 = vmatprep.subr.bf16.mxu0 0
    %4085 = vmatpush1.bf16.msra.mxu0 %v3718
    %4086 = vmatprep.subr.bf16.mxu0 0
    %4087 = vmatpush1.bf16.msra.mxu0 %v3719
    %4088 = vmatprep.subr.bf16.mxu0 0
    %4089 = vmatpush1.bf16.msra.mxu0 %v3720
    %4090 = vmatprep.subr.bf16.mxu0 0
    %4091 = vmatpush1.bf16.msra.mxu0 %v3721
    %4092 = vmatprep.subr.bf16.mxu0 0
    %4093 = vmatpush1.bf16.msra.mxu0 %v3722
    %4094 = vmatprep.subr.bf16.mxu0 0
    %4095 = vmatpush1.bf16.msra.mxu0 %v3723
    %4096 = vmatprep.mubr.bf16.mxu0 %v2865
    %4097 = vmatmul.mubr.bf16.gmra.mrb[0].mxu0 %v2864
    %v4098 = vpop.f32.mrb[0].mxu0
    %v4099 = vadd.f32 %v4058, %v4098
    %v4100 = vpop.f32.mrb[0].mxu0
    %v4101 = vpop.f32.mrb[0].mxu0
    %v4102 = vadd.f32 %v4061, %v4101
    %v4103 = vpop.f32.mrb[0].mxu0
    %4104 = vdwg.mxu0
    %4105 = vmatprep.subr.bf16.mxu0 0
    %4106 = vmatpush1.bf16.msra.mxu0 %v3724
    %4107 = vmatprep.subr.bf16.mxu0 0
    %4108 = vmatpush1.bf16.msra.mxu0 %v3725
    %4109 = vmatprep.subr.bf16.mxu0 0
    %4110 = vmatpush1.bf16.msra.mxu0 %v3726
    %4111 = vmatprep.subr.bf16.mxu0 0
    %4112 = vmatpush1.bf16.msra.mxu0 %v3727
    %4113 = vmatprep.subr.bf16.mxu0 0
    %4114 = vmatpush1.bf16.msra.mxu0 %v3728
    %4115 = vmatprep.subr.bf16.mxu0 0
    %4116 = vmatpush1.bf16.msra.mxu0 %v3729
    %4117 = vmatprep.subr.bf16.mxu0 0
    %4118 = vmatpush1.bf16.msra.mxu0 %v3730
    %4119 = vmatprep.subr.bf16.mxu0 0
    %4120 = vmatpush1.bf16.msra.mxu0 %v3731
    %4121 = vmatprep.subr.bf16.mxu0 0
    %4122 = vmatpush1.bf16.msra.mxu0 %v3732
    %4123 = vmatprep.subr.bf16.mxu0 0
    %4124 = vmatpush1.bf16.msra.mxu0 %v3733
    %4125 = vmatprep.subr.bf16.mxu0 0
    %4126 = vmatpush1.bf16.msra.mxu0 %v3734
    %4127 = vmatprep.subr.bf16.mxu0 0
    %4128 = vmatpush1.bf16.msra.mxu0 %v3735
    %4129 = vmatprep.subr.bf16.mxu0 0
    %4130 = vmatpush1.bf16.msra.mxu0 %v3736
    %4131 = vmatprep.subr.bf16.mxu0 0
    %4132 = vmatpush1.bf16.msra.mxu0 %v3737
    %4133 = vmatprep.subr.bf16.mxu0 0
    %4134 = vmatpush1.bf16.msra.mxu0 %v3738
    %4135 = vmatprep.subr.bf16.mxu0 0
    %4136 = vmatpush1.bf16.msra.mxu0 %v3739
    %4137 = vmatprep.mubr.bf16.mxu0 %v2867
    %4138 = vmatmul.mubr.bf16.gmra.mrb[0].mxu0 %v2866
    %v4139 = vpop.f32.mrb[0].mxu0
    %v4140 = vadd.f32 %v4099, %v4139
    %v4141 = vpop.f32.mrb[0].mxu0
    %v4142 = vpop.f32.mrb[0].mxu0
    %v4143 = vadd.f32 %v4102, %v4142
    %v4144 = vpop.f32.mrb[0].mxu0
    %4145 = vdwg.mxu0
    %4146 = vmatprep.subr.bf16.mxu0 0
    %4147 = vmatpush1.bf16.msra.mxu0 %v3740
    %4148 = vmatprep.subr.bf16.mxu0 0
    %4149 = vmatpush1.bf16.msra.mxu0 %v3741
    %4150 = vmatprep.subr.bf16.mxu0 0
    %4151 = vmatpush1.bf16.msra.mxu0 %v3742
    %4152 = vmatprep.subr.bf16.mxu0 0
    %4153 = vmatpush1.bf16.msra.mxu0 %v3743
    %4154 = vmatprep.subr.bf16.mxu0 0
    %4155 = vmatpush1.bf16.msra.mxu0 %v3744
    %4156 = vmatprep.subr.bf16.mxu0 0
    %4157 = vmatpush1.bf16.msra.mxu0 %v3745
    %4158 = vmatprep.subr.bf16.mxu0 0
    %4159 = vmatpush1.bf16.msra.mxu0 %v3746
    %4160 = vmatprep.subr.bf16.mxu0 0
    %4161 = vmatpush1.bf16.msra.mxu0 %v3747
    %4162 = vmatprep.subr.bf16.mxu0 0
    %4163 = vmatpush1.bf16.msra.mxu0 %v3748
    %4164 = vmatprep.subr.bf16.mxu0 0
    %4165 = vmatpush1.bf16.msra.mxu0 %v3749
    %4166 = vmatprep.subr.bf16.mxu0 0
    %4167 = vmatpush1.bf16.msra.mxu0 %v3750
    %4168 = vmatprep.subr.bf16.mxu0 0
    %4169 = vmatpush1.bf16.msra.mxu0 %v3751
    %4170 = vmatprep.subr.bf16.mxu0 0
    %4171 = vmatpush1.bf16.msra.mxu0 %v3752
    %4172 = vmatprep.subr.bf16.mxu0 0
    %4173 = vmatpush1.bf16.msra.mxu0 %v3753
    %4174 = vmatprep.subr.bf16.mxu0 0
    %4175 = vmatpush1.bf16.msra.mxu0 %v3754
    %4176 = vmatprep.subr.bf16.mxu0 0
    %4177 = vmatpush1.bf16.msra.mxu0 %v3755
    %4178 = vmatprep.mubr.bf16.mxu0 %v2869
    %4179 = vmatmul.mubr.bf16.gmra.mrb[0].mxu0 %v2868
    %v4180 = vpop.f32.mrb[0].mxu0
    %v4181 = vadd.f32 %v4140, %v4180
    %v4182 = vpop.f32.mrb[0].mxu0
    %v4183 = vpop.f32.mrb[0].mxu0
    %v4184 = vadd.f32 %v4143, %v4183
    %v4185 = vpop.f32.mrb[0].mxu0
    %4186 = vdwg.mxu0
    %4187 = vmatprep.subr.bf16.mxu0 0
    %4188 = vmatpush1.bf16.msra.mxu0 %v3756
    %4189 = vmatprep.subr.bf16.mxu0 0
    %4190 = vmatpush1.bf16.msra.mxu0 %v3757
    %4191 = vmatprep.subr.bf16.mxu0 0
    %4192 = vmatpush1.bf16.msra.mxu0 %v3758
    %4193 = vmatprep.subr.bf16.mxu0 0
    %4194 = vmatpush1.bf16.msra.mxu0 %v3759
    %4195 = vmatprep.subr.bf16.mxu0 0
    %4196 = vmatpush1.bf16.msra.mxu0 %v3760
    %4197 = vmatprep.subr.bf16.mxu0 0
    %4198 = vmatpush1.bf16.msra.mxu0 %v3761
    %4199 = vmatprep.subr.bf16.mxu0 0
    %4200 = vmatpush1.bf16.msra.mxu0 %v3762
    %4201 = vmatprep.subr.bf16.mxu0 0
    %4202 = vmatpush1.bf16.msra.mxu0 %v3763
    %4203 = vmatprep.subr.bf16.mxu0 0
    %4204 = vmatpush1.bf16.msra.mxu0 %v3764
    %4205 = vmatprep.subr.bf16.mxu0 0
    %4206 = vmatpush1.bf16.msra.mxu0 %v3765
    %4207 = vmatprep.subr.bf16.mxu0 0
    %4208 = vmatpush1.bf16.msra.mxu0 %v3766
    %4209 = vmatprep.subr.bf16.mxu0 0
    %4210 = vmatpush1.bf16.msra.mxu0 %v3767
    %4211 = vmatprep.subr.bf16.mxu0 0
    %4212 = vmatpush1.bf16.msra.mxu0 %v3768
    %4213 = vmatprep.subr.bf16.mxu0 0
    %4214 = vmatpush1.bf16.msra.mxu0 %v3769
    %4215 = vmatprep.subr.bf16.mxu0 0
    %4216 = vmatpush1.bf16.msra.mxu0 %v3770
    %4217 = vmatprep.subr.bf16.mxu0 0
    %4218 = vmatpush1.bf16.msra.mxu0 %v3771
    %4219 = vmatprep.mubr.bf16.mxu0 %v2871
    %4220 = vmatmul.mubr.bf16.gmra.mrb[0].mxu0 %v2870
    %v4221 = vpop.f32.mrb[0].mxu0
    %v4222 = vadd.f32 %v4181, %v4221
    %v4223 = vpop.f32.mrb[0].mxu0
    %v4224 = vpop.f32.mrb[0].mxu0
    %v4225 = vadd.f32 %v4184, %v4224
    %v4226 = vpop.f32.mrb[0].mxu0
    %4227 = vdwg.mxu0
    %v4230 = vcombine.high %v4222, %v4222
    %v4232 = vunpack.c.l.s4 1983009808
    %v4233 = vunpack.c.0.s8 %v4232
    %v4234 = vlaneseq
    %v4235 = vshrl.u32 %v4234, 7
    %v4236 = vsub.s32 %v4233, %v4235
    %v4237 = vrot.slane %v4222, %v4236
    %v4239 = vunpack.c.l.s4 1983009808
    %v4240 = vunpack.c.0.s8 %v4239
    %v4241 = vlaneseq
    %v4242 = vshrl.u32 %v4241, 7
    %v4243 = vsub.s32 %v4240, %v4242
    %v4244 = vrot.slane %v4230, %v4243
    %v4245 = vcombine.high %v4237, %v4237
    %v4246 = vcombine.high %v4244, %v4244
    %v4247 = vcombine.high %v4225, %v4225
    %v4249 = vunpack.c.l.s4 1983009808
    %v4250 = vunpack.c.0.s8 %v4249
    %v4251 = vlaneseq
    %v4252 = vshrl.u32 %v4251, 7
    %v4253 = vsub.s32 %v4250, %v4252
    %v4254 = vrot.slane %v4225, %v4253
    %v4256 = vunpack.c.l.s4 1983009808
    %v4257 = vunpack.c.0.s8 %v4256
    %v4258 = vlaneseq
    %v4259 = vshrl.u32 %v4258, 7
    %v4260 = vsub.s32 %v4257, %v4259
    %v4261 = vrot.slane %v4247, %v4260
    %v4262 = vcombine.high %v4254, %v4254
    %v4263 = vcombine.high %v4261, %v4261
    %v4272 = vadd.f32 %v2211, %v4237
    %v4273 = vadd.f32 %v2212, %v4245
    %v4274 = vadd.f32 %v2213, %v4244
    %v4275 = vadd.f32 %v2214, %v4246
    %v4276 = vadd.f32 %v2215, %v4254
    %v4277 = vadd.f32 %v2216, %v4262
    %v4278 = vadd.f32 %v2217, %v4261
    %v4279 = vadd.f32 %v2218, %v4263
    %v4288 = vcombine.low %v4272, %v4273
    %v4289 = vcombine.low %v4274, %v4275
    %v4291 = vunpack.c.l.s4 1983009808
    %v4292 = vunpack.c.0.s8 %v4291
    %v4293 = vlaneseq
    %v4294 = vshrl.u32 %v4293, 7
    %v4295 = vsub.s32 %v4292, %v4294
    %v4296 = vrot.slane %v4288, %v4295
    %v4298 = vunpack.c.l.s4 1983009808
    %v4299 = vunpack.c.0.s8 %v4298
    %v4300 = vlaneseq
    %v4301 = vshrl.u32 %v4300, 7
    %v4302 = vsub.s32 %v4299, %v4301
    %v4303 = vrot.slane %v4289, %v4302
    %v4304 = vcombine.low %v4296, %v4303
    %v4305 = vcombine.low %v4276, %v4277
    %v4306 = vcombine.low %v4278, %v4279
    %v4308 = vunpack.c.l.s4 1983009808
    %v4309 = vunpack.c.0.s8 %v4308
    %v4310 = vlaneseq
    %v4311 = vshrl.u32 %v4310, 7
    %v4312 = vsub.s32 %v4309, %v4311
    %v4313 = vrot.slane %v4305, %v4312
    %v4315 = vunpack.c.l.s4 1983009808
    %v4316 = vunpack.c.0.s8 %v4315
    %v4317 = vlaneseq
    %v4318 = vshrl.u32 %v4317, 7
    %v4319 = vsub.s32 %v4316, %v4318
    %v4320 = vrot.slane %v4306, %v4319
    %v4321 = vcombine.low %v4313, %v4320
    %v4324 = vsel %vm207, %v4304, 0.0
    %4325 = vadd.xlane.f32.xlu0 %v4324
    %v4326 = vpop.xlane.xlu0 %4325
    %v4327 = vsel %vm207, %v4321, 0.0
    %4328 = vadd.xlane.f32.xlu0 %v4327
    %v4329 = vpop.xlane.xlu0 %4328
    %v4330 = vmul.f32 %v4326, %v1936
    %v4331 = vmul.f32 %v4329, %v1936
    %v4335 = vunpack.c.l.s4 269488144
    %v4336 = vunpack.c.0.s8 %v4335
    %v4337 = vlaneseq
    %v4338 = vshrl.u32 %v4337, 7
    %v4339 = vsub.s32 %v4336, %v4338
    %v4340 = vrot.slane %v4330, %v4339
    %v4342 = vunpack.c.l.s4 842150450
    %v4343 = vunpack.c.0.s8 %v4342
    %v4344 = vlaneseq
    %v4345 = vshrl.u32 %v4344, 7
    %v4346 = vsub.s32 %v4343, %v4345
    %v4347 = vrot.slane %v4330, %v4346
    %v4349 = vunpack.c.l.s4 1414812756
    %v4350 = vunpack.c.0.s8 %v4349
    %v4351 = vlaneseq
    %v4352 = vshrl.u32 %v4351, 7
    %v4353 = vsub.s32 %v4350, %v4352
    %v4354 = vrot.slane %v4330, %v4353
    %v4356 = vunpack.c.l.s4 1987475062
    %v4357 = vunpack.c.0.s8 %v4356
    %v4358 = vlaneseq
    %v4359 = vshrl.u32 %v4358, 7
    %v4360 = vsub.s32 %v4357, %v4359
    %v4361 = vrot.slane %v4330, %v4360
    %v4363 = vunpack.c.l.s4 269488144
    %v4364 = vunpack.c.0.s8 %v4363
    %v4365 = vlaneseq
    %v4366 = vshrl.u32 %v4365, 7
    %v4367 = vsub.s32 %v4364, %v4366
    %v4368 = vrot.slane %v4331, %v4367
    %v4370 = vunpack.c.l.s4 842150450
    %v4371 = vunpack.c.0.s8 %v4370
    %v4372 = vlaneseq
    %v4373 = vshrl.u32 %v4372, 7
    %v4374 = vsub.s32 %v4371, %v4373
    %v4375 = vrot.slane %v4331, %v4374
    %v4377 = vunpack.c.l.s4 1414812756
    %v4378 = vunpack.c.0.s8 %v4377
    %v4379 = vlaneseq
    %v4380 = vshrl.u32 %v4379, 7
    %v4381 = vsub.s32 %v4378, %v4380
    %v4382 = vrot.slane %v4331, %v4381
    %v4384 = vunpack.c.l.s4 1987475062
    %v4385 = vunpack.c.0.s8 %v4384
    %v4386 = vlaneseq
    %v4387 = vshrl.u32 %v4386, 7
    %v4388 = vsub.s32 %v4385, %v4387
    %v4389 = vrot.slane %v4331, %v4388
    %v4398 = vsub.f32 %v4272, %v4340
    %v4399 = vsub.f32 %v4273, %v4347
    %v4400 = vsub.f32 %v4274, %v4354
    %v4401 = vsub.f32 %v4275, %v4361
    %v4402 = vsub.f32 %v4276, %v4368
    %v4403 = vsub.f32 %v4277, %v4375
    %v4404 = vsub.f32 %v4278, %v4382
    %v4405 = vsub.f32 %v4279, %v4389
    %v4406 = vmul.f32 %v4398, %v4398
    %v4407 = vmul.f32 %v4399, %v4399
    %v4408 = vmul.f32 %v4400, %v4400
    %v4409 = vmul.f32 %v4401, %v4401
    %v4410 = vmul.f32 %v4402, %v4402
    %v4411 = vmul.f32 %v4403, %v4403
    %v4412 = vmul.f32 %v4404, %v4404
    %v4413 = vmul.f32 %v4405, %v4405
    %v4422 = vcombine.low %v4406, %v4407
    %v4423 = vcombine.low %v4408, %v4409
    %v4425 = vunpack.c.l.s4 1983009808
    %v4426 = vunpack.c.0.s8 %v4425
    %v4427 = vlaneseq
    %v4428 = vshrl.u32 %v4427, 7
    %v4429 = vsub.s32 %v4426, %v4428
    %v4430 = vrot.slane %v4422, %v4429
    %v4432 = vunpack.c.l.s4 1983009808
    %v4433 = vunpack.c.0.s8 %v4432
    %v4434 = vlaneseq
    %v4435 = vshrl.u32 %v4434, 7
    %v4436 = vsub.s32 %v4433, %v4435
    %v4437 = vrot.slane %v4423, %v4436
    %v4438 = vcombine.low %v4430, %v4437
    %v4439 = vcombine.low %v4410, %v4411
    %v4440 = vcombine.low %v4412, %v4413
    %v4442 = vunpack.c.l.s4 1983009808
    %v4443 = vunpack.c.0.s8 %v4442
    %v4444 = vlaneseq
    %v4445 = vshrl.u32 %v4444, 7
    %v4446 = vsub.s32 %v4443, %v4445
    %v4447 = vrot.slane %v4439, %v4446
    %v4449 = vunpack.c.l.s4 1983009808
    %v4450 = vunpack.c.0.s8 %v4449
    %v4451 = vlaneseq
    %v4452 = vshrl.u32 %v4451, 7
    %v4453 = vsub.s32 %v4450, %v4452
    %v4454 = vrot.slane %v4440, %v4453
    %v4455 = vcombine.low %v4447, %v4454
    %v4458 = vsel %vm207, %v4438, 0.0
    %4459 = vadd.xlane.f32.xlu0 %v4458
    %v4460 = vpop.xlane.xlu0 %4459
    %v4461 = vsel %vm207, %v4455, 0.0
    %4462 = vadd.xlane.f32.xlu0 %v4461
    %v4463 = vpop.xlane.xlu0 %4462
    %v4464 = vmul.f32 %v4460, %v1936
    %v4465 = vmul.f32 %v4463, %v1936
    %v4466 = vadd.f32 %v4464, 1e-05
    %v4467 = vadd.f32 %v4465, 1e-05
    %v4468 = vrsqrt.pop %v4466
    %v4469 = vrsqrt.pop %v4467
    %v4473 = vunpack.c.l.s4 269488144
    %v4474 = vunpack.c.0.s8 %v4473
    %v4475 = vlaneseq
    %v4476 = vshrl.u32 %v4475, 7
    %v4477 = vsub.s32 %v4474, %v4476
    %v4478 = vrot.slane %v4468, %v4477
    %v4480 = vunpack.c.l.s4 842150450
    %v4481 = vunpack.c.0.s8 %v4480
    %v4482 = vlaneseq
    %v4483 = vshrl.u32 %v4482, 7
    %v4484 = vsub.s32 %v4481, %v4483
    %v4485 = vrot.slane %v4468, %v4484
    %v4487 = vunpack.c.l.s4 1414812756
    %v4488 = vunpack.c.0.s8 %v4487
    %v4489 = vlaneseq
    %v4490 = vshrl.u32 %v4489, 7
    %v4491 = vsub.s32 %v4488, %v4490
    %v4492 = vrot.slane %v4468, %v4491
    %v4494 = vunpack.c.l.s4 1987475062
    %v4495 = vunpack.c.0.s8 %v4494
    %v4496 = vlaneseq
    %v4497 = vshrl.u32 %v4496, 7
    %v4498 = vsub.s32 %v4495, %v4497
    %v4499 = vrot.slane %v4468, %v4498
    %v4501 = vunpack.c.l.s4 269488144
    %v4502 = vunpack.c.0.s8 %v4501
    %v4503 = vlaneseq
    %v4504 = vshrl.u32 %v4503, 7
    %v4505 = vsub.s32 %v4502, %v4504
    %v4506 = vrot.slane %v4469, %v4505
    %v4508 = vunpack.c.l.s4 842150450
    %v4509 = vunpack.c.0.s8 %v4508
    %v4510 = vlaneseq
    %v4511 = vshrl.u32 %v4510, 7
    %v4512 = vsub.s32 %v4509, %v4511
    %v4513 = vrot.slane %v4469, %v4512
    %v4515 = vunpack.c.l.s4 1414812756
    %v4516 = vunpack.c.0.s8 %v4515
    %v4517 = vlaneseq
    %v4518 = vshrl.u32 %v4517, 7
    %v4519 = vsub.s32 %v4516, %v4518
    %v4520 = vrot.slane %v4469, %v4519
    %v4522 = vunpack.c.l.s4 1987475062
    %v4523 = vunpack.c.0.s8 %v4522
    %v4524 = vlaneseq
    %v4525 = vshrl.u32 %v4524, 7
    %v4526 = vsub.s32 %v4523, %v4525
    %v4527 = vrot.slane %v4469, %v4526
    %v4536 = vmul.f32 %v4398, %v4478
    %v4537 = vmul.f32 %v4399, %v4485
    %v4538 = vmul.f32 %v4400, %v4492
    %v4539 = vmul.f32 %v4401, %v4499
    %v4540 = vmul.f32 %v4402, %v4506
    %v4541 = vmul.f32 %v4403, %v4513
    %v4542 = vmul.f32 %v4404, %v4520
    %v4543 = vmul.f32 %v4405, %v4527
    %v4544 = vlaneseq
    %v4545 = vshrl.u32 %v4544, 7
    %v4546 = vsub.s32 7, %v4545
    %v4547 = vrot.slane %v161, %v4546
    %v4549 = vcombine.high %v4547, %v4547
    %v4551 = vunpack.c.l.s4 1983009808
    %v4552 = vunpack.c.0.s8 %v4551
    %v4553 = vlaneseq
    %v4554 = vshrl.u32 %v4553, 7
    %v4555 = vsub.s32 %v4552, %v4554
    %v4556 = vrot.slane %v4547, %v4555
    %v4558 = vunpack.c.l.s4 1983009808
    %v4559 = vunpack.c.0.s8 %v4558
    %v4560 = vlaneseq
    %v4561 = vshrl.u32 %v4560, 7
    %v4562 = vsub.s32 %v4559, %v4561
    %v4563 = vrot.slane %v4549, %v4562
    %v4564 = vcombine.high %v4556, %v4556
    %v4565 = vcombine.high %v4563, %v4563
    %v4570 = vmul.f32 %v4536, %v4556
    %v4571 = vmul.f32 %v4537, %v4564
    %v4572 = vmul.f32 %v4538, %v4563
    %v4573 = vmul.f32 %v4539, %v4565
    %v4574 = vmul.f32 %v4540, %v4556
    %v4575 = vmul.f32 %v4541, %v4564
    %v4576 = vmul.f32 %v4542, %v4563
    %v4577 = vmul.f32 %v4543, %v4565
    %v4578 = vlaneseq
    %v4579 = vshrl.u32 %v4578, 7
    %v4580 = vsub.s32 0, %v4579
    %v4581 = vrot.slane %v162, %v4580
    %v4583 = vcombine.high %v4581, %v4581
    %v4585 = vunpack.c.l.s4 1983009808
    %v4586 = vunpack.c.0.s8 %v4585
    %v4587 = vlaneseq
    %v4588 = vshrl.u32 %v4587, 7
    %v4589 = vsub.s32 %v4586, %v4588
    %v4590 = vrot.slane %v4581, %v4589
    %v4592 = vunpack.c.l.s4 1983009808
    %v4593 = vunpack.c.0.s8 %v4592
    %v4594 = vlaneseq
    %v4595 = vshrl.u32 %v4594, 7
    %v4596 = vsub.s32 %v4593, %v4595
    %v4597 = vrot.slane %v4583, %v4596
    %v4598 = vcombine.high %v4590, %v4590
    %v4599 = vcombine.high %v4597, %v4597
    %v4604 = vadd.f32 %v4570, %v4590
    %v4605 = vadd.f32 %v4571, %v4598
    %v4606 = vadd.f32 %v4572, %v4597
    %v4607 = vadd.f32 %v4573, %v4599
    %v4608 = vadd.f32 %v4574, %v4590
    %v4609 = vadd.f32 %v4575, %v4598
    %v4610 = vadd.f32 %v4576, %v4597
    %v4611 = vadd.f32 %v4577, %v4599
    %s4612 = scalar_lea.vmem %s3, 16
    %v4613 = vld [vmem:[%s4612] sm:$0xff]
    %v4614 = vld [vmem:[%s4612 + $0x8] sm:$0x1]
    %s4615 = scalar_lea.vmem %s2, 16
    %v4616 = vld [vmem:[%s4615] sm:$0xff]
    %v4617 = vld [vmem:[%s4615 + $0x8] sm:$0x3]
    %v4626 = vcombine.low %v4604, %v4605
    %v4627 = vcombine.low %v4606, %v4607
    %v4629 = vunpack.c.l.s4 1983009808
    %v4630 = vunpack.c.0.s8 %v4629
    %v4631 = vlaneseq
    %v4632 = vshrl.u32 %v4631, 7
    %v4633 = vsub.s32 %v4630, %v4632
    %v4634 = vrot.slane %v4626, %v4633
    %v4636 = vunpack.c.l.s4 1983009808
    %v4637 = vunpack.c.0.s8 %v4636
    %v4638 = vlaneseq
    %v4639 = vshrl.u32 %v4638, 7
    %v4640 = vsub.s32 %v4637, %v4639
    %v4641 = vrot.slane %v4627, %v4640
    %v4642 = vcombine.low %v4634, %v4641
    %v4643 = vcombine.low %v4608, %v4609
    %v4644 = vcombine.low %v4610, %v4611
    %v4646 = vunpack.c.l.s4 1983009808
    %v4647 = vunpack.c.0.s8 %v4646
    %v4648 = vlaneseq
    %v4649 = vshrl.u32 %v4648, 7
    %v4650 = vsub.s32 %v4647, %v4649
    %v4651 = vrot.slane %v4643, %v4650
    %v4653 = vunpack.c.l.s4 1983009808
    %v4654 = vunpack.c.0.s8 %v4653
    %v4655 = vlaneseq
    %v4656 = vshrl.u32 %v4655, 7
    %v4657 = vsub.s32 %v4654, %v4656
    %v4658 = vrot.slane %v4644, %v4657
    %v4659 = vcombine.low %v4651, %v4658
    %v4660 = vsel %vm207, %v4642, 0
    %v4662 = vsel %vm207, %v4659, 0
    %v4665 = vsel %vm212, %v4617, 0
    %4667 = vmatprep.subr.mxu0 0.0
    %4668 = vmatpush1.msra.mxu0 %v4616
    %4669 = vmatprep.subr.mxu0 0.0
    %4670 = vmatpush1.msra.mxu0 %v4665
    %4671 = vmatprep.subr.mxu0 0.0
    %4672 = vmatpush1.msra.mxu0 0.0
    %4673 = vmatprep.subr.mxu0 0.0
    %4674 = vmatpush1.msra.mxu0 0.0
    %4675 = vmatprep.subr.mxu0 0.0
    %4676 = vmatpush1.msra.mxu0 0.0
    %4677 = vmatprep.subr.mxu0 0.0
    %4678 = vmatpush1.msra.mxu0 0.0
    %4679 = vmatprep.subr.mxu0 0.0
    %4680 = vmatpush1.msra.mxu0 0.0
    %4681 = vmatprep.subr.mxu0 0.0
    %4682 = vmatpush1.msra.mxu0 0.0
    %4683 = vmatprep.subr.mxu0 0.0
    %4684 = vmatpush1.msra.mxu0 0.0
    %4685 = vmatprep.subr.mxu0 0.0
    %4686 = vmatpush1.msra.mxu0 0.0
    %4687 = vmatprep.subr.mxu0 0.0
    %4688 = vmatpush1.msra.mxu0 0.0
    %4689 = vmatprep.subr.mxu0 0.0
    %4690 = vmatpush1.msra.mxu0 0.0
    %4691 = vmatprep.subr.mxu0 0.0
    %4692 = vmatpush1.msra.mxu0 0.0
    %4693 = vmatprep.subr.mxu0 0.0
    %4694 = vmatpush1.msra.mxu0 0.0
    %4695 = vmatprep.subr.mxu0 0.0
    %4696 = vmatpush1.msra.mxu0 0.0
    %4697 = vmatprep.subr.mxu0 0.0
    %4698 = vmatpush1.msra.mxu0 0.0
    %4699 = vmatprep.subr.mxu0 0.0
    %4700 = vmatpush1.msra.mxu0 0.0
    %4701 = vmatprep.subr.mxu0 0.0
    %4702 = vmatpush1.msra.mxu0 0.0
    %4703 = vmatprep.subr.mxu0 0.0
    %4704 = vmatpush1.msra.mxu0 0.0
    %4705 = vmatprep.subr.mxu0 0.0
    %4706 = vmatpush1.msra.mxu0 0.0
    %4707 = vmatprep.subr.mxu0 0.0
    %4708 = vmatpush1.msra.mxu0 0.0
    %4709 = vmatprep.subr.mxu0 0.0
    %4710 = vmatpush1.msra.mxu0 0.0
    %4711 = vmatprep.subr.mxu0 0.0
    %4712 = vmatpush1.msra.mxu0 0.0
    %4713 = vmatprep.subr.mxu0 0.0
    %4714 = vmatpush1.msra.mxu0 0.0
    %4715 = vmatprep.subr.mxu0 0.0
    %4716 = vmatpush1.msra.mxu0 0.0
    %4717 = vmatprep.subr.mxu0 0.0
    %4718 = vmatpush1.msra.mxu0 0.0
    %4719 = vmatprep.subr.mxu0 0.0
    %4720 = vmatpush1.msra.mxu0 0.0
    %4721 = vmatprep.subr.mxu0 0.0
    %4722 = vmatpush1.msra.mxu0 0.0
    %4723 = vmatprep.subr.mxu0 0.0
    %4724 = vmatpush1.msra.mxu0 0.0
    %4725 = vmatprep.subr.mxu0 0.0
    %4726 = vmatpush1.msra.mxu0 0.0
    %4727 = vmatprep.subr.mxu0 0.0
    %4728 = vmatpush1.msra.mxu0 0.0
    %4729 = vmatprep.subr.mxu0 0.0
    %4730 = vmatpush1.msra.mxu0 0.0
    %4731 = vmatprep.mubr.f32.mxu0 0.0
    %4732 = vmatmul.mubr.f32.gmra.mrb[0].mxu0 %v4660
    %v4733 = vpop.f32.mrb[0].mxu0
    %v4734 = vadd.f32 0.0, %v4733
    %v4735 = vpop.f32.mrb[0].mxu0
    %4736 = vmatprep.mubr.f32.mxu0 0.0
    %4737 = vmatmul.mubr.f32.gmra.mrb[0].mxu0 %v4662
    %v4738 = vpop.f32.mrb[0].mxu0
    %v4739 = vadd.f32 0.0, %v4738
    %v4740 = vpop.f32.mrb[0].mxu0
    %4741 = vdwg.mxu0
    %v4742 = vlaneseq
    %v4743 = vshrl.u32 %v4742, 7
    %v4744 = vsub.s32 0, %v4743
    %v4745 = vrot.slane %v4613, %v4744
    %v4746 = vadd.f32 %v4734, %v4745
    %v4747 = vadd.f32 %v4739, %v4745
    %v4750 = vcombine.high %v4746, %v4746
    %v4752 = vunpack.c.l.s4 1983009808
    %v4753 = vunpack.c.0.s8 %v4752
    %v4754 = vlaneseq
    %v4755 = vshrl.u32 %v4754, 7
    %v4756 = vsub.s32 %v4753, %v4755
    %v4757 = vrot.slane %v4746, %v4756
    %v4759 = vunpack.c.l.s4 1983009808
    %v4760 = vunpack.c.0.s8 %v4759
    %v4761 = vlaneseq
    %v4762 = vshrl.u32 %v4761, 7
    %v4763 = vsub.s32 %v4760, %v4762
    %v4764 = vrot.slane %v4750, %v4763
    %v4765 = vcombine.high %v4757, %v4757
    %v4766 = vcombine.high %v4764, %v4764
    %v4767 = vcombine.high %v4747, %v4747
    %v4769 = vunpack.c.l.s4 1983009808
    %v4770 = vunpack.c.0.s8 %v4769
    %v4771 = vlaneseq
    %v4772 = vshrl.u32 %v4771, 7
    %v4773 = vsub.s32 %v4770, %v4772
    %v4774 = vrot.slane %v4747, %v4773
    %v4776 = vunpack.c.l.s4 1983009808
    %v4777 = vunpack.c.0.s8 %v4776
    %v4778 = vlaneseq
    %v4779 = vshrl.u32 %v4778, 7
    %v4780 = vsub.s32 %v4777, %v4779
    %v4781 = vrot.slane %v4767, %v4780
    %v4782 = vcombine.high %v4774, %v4774
    %v4783 = vcombine.high %v4781, %v4781
    %v4792 = vlaneseq
    %v4793 = vshrl.u32 %v4792, 7
    %v4794 = vsub.s32 1, %v4793
    %v4795 = vrot.slane %v4613, %v4794
    %4797 = vrot.lane.b32.xlu0 %v4795, 10
    %v4798 = vpop.permute.xlu0 %4797
    %v4800 = vadd.f32 %v4734, %v4798
    %v4801 = vadd.f32 %v4739, %v4798
    %v4804 = vcombine.high %v4800, %v4800
    %v4806 = vunpack.c.l.s4 1983009808
    %v4807 = vunpack.c.0.s8 %v4806
    %v4808 = vlaneseq
    %v4809 = vshrl.u32 %v4808, 7
    %v4810 = vsub.s32 %v4807, %v4809
    %v4811 = vrot.slane %v4800, %v4810
    %v4813 = vunpack.c.l.s4 1983009808
    %v4814 = vunpack.c.0.s8 %v4813
    %v4815 = vlaneseq
    %v4816 = vshrl.u32 %v4815, 7
    %v4817 = vsub.s32 %v4814, %v4816
    %v4818 = vrot.slane %v4804, %v4817
    %v4819 = vcombine.high %v4811, %v4811
    %v4820 = vcombine.high %v4818, %v4818
    %v4821 = vcombine.high %v4801, %v4801
    %v4823 = vunpack.c.l.s4 1983009808
    %v4824 = vunpack.c.0.s8 %v4823
    %v4825 = vlaneseq
    %v4826 = vshrl.u32 %v4825, 7
    %v4827 = vsub.s32 %v4824, %v4826
    %v4828 = vrot.slane %v4801, %v4827
    %v4830 = vunpack.c.l.s4 1983009808
    %v4831 = vunpack.c.0.s8 %v4830
    %v4832 = vlaneseq
    %v4833 = vshrl.u32 %v4832, 7
    %v4834 = vsub.s32 %v4831, %v4833
    %v4835 = vrot.slane %v4821, %v4834
    %v4836 = vcombine.high %v4828, %v4828
    %v4837 = vcombine.high %v4835, %v4835
    %v4838 = vlaneseq
    %v4839 = vshrl.u32 %v4838, 7
    %v4840 = vsub.s32 2, %v4839
    %v4841 = vrot.slane %v4613, %v4840
    %4843 = vrot.lane.b32.xlu0 %v4841, 20
    %v4844 = vpop.permute.xlu0 %4843
    %v4846 = vadd.f32 %v4734, %v4844
    %v4847 = vadd.f32 %v4739, %v4844
    %v4850 = vcombine.high %v4846, %v4846
    %v4852 = vunpack.c.l.s4 1983009808
    %v4853 = vunpack.c.0.s8 %v4852
    %v4854 = vlaneseq
    %v4855 = vshrl.u32 %v4854, 7
    %v4856 = vsub.s32 %v4853, %v4855
    %v4857 = vrot.slane %v4846, %v4856
    %v4859 = vunpack.c.l.s4 1983009808
    %v4860 = vunpack.c.0.s8 %v4859
    %v4861 = vlaneseq
    %v4862 = vshrl.u32 %v4861, 7
    %v4863 = vsub.s32 %v4860, %v4862
    %v4864 = vrot.slane %v4850, %v4863
    %v4865 = vcombine.high %v4857, %v4857
    %v4866 = vcombine.high %v4864, %v4864
    %v4867 = vcombine.high %v4847, %v4847
    %v4869 = vunpack.c.l.s4 1983009808
    %v4870 = vunpack.c.0.s8 %v4869
    %v4871 = vlaneseq
    %v4872 = vshrl.u32 %v4871, 7
    %v4873 = vsub.s32 %v4870, %v4872
    %v4874 = vrot.slane %v4847, %v4873
    %v4876 = vunpack.c.l.s4 1983009808
    %v4877 = vunpack.c.0.s8 %v4876
    %v4878 = vlaneseq
    %v4879 = vshrl.u32 %v4878, 7
    %v4880 = vsub.s32 %v4877, %v4879
    %v4881 = vrot.slane %v4867, %v4880
    %v4882 = vcombine.high %v4874, %v4874
    %v4883 = vcombine.high %v4881, %v4881
    %v4884 = vlaneseq
    %v4885 = vshrl.u32 %v4884, 7
    %v4886 = vsub.s32 0, %v4885
    %v4887 = vrot.slane %v4811, %v4886
    %v4888 = vlaneseq
    %v4889 = vshrl.u32 %v4888, 7
    %v4890 = vsub.s32 0, %v4889
    %v4891 = vrot.slane %v4819, %v4890
    %v4892 = vlaneseq
    %v4893 = vshrl.u32 %v4892, 7
    %v4894 = vsub.s32 0, %v4893
    %v4895 = vrot.slane %v4818, %v4894
    %v4896 = vlaneseq
    %v4897 = vshrl.u32 %v4896, 7
    %v4898 = vsub.s32 0, %v4897
    %v4899 = vrot.slane %v4820, %v4898
    %v4900 = vlaneseq
    %v4901 = vshrl.u32 %v4900, 7
    %v4902 = vsub.s32 0, %v4901
    %v4903 = vrot.slane %v4828, %v4902
    %v4904 = vlaneseq
    %v4905 = vshrl.u32 %v4904, 7
    %v4906 = vsub.s32 0, %v4905
    %v4907 = vrot.slane %v4836, %v4906
    %v4908 = vlaneseq
    %v4909 = vshrl.u32 %v4908, 7
    %v4910 = vsub.s32 0, %v4909
    %v4911 = vrot.slane %v4835, %v4910
    %v4912 = vlaneseq
    %v4913 = vshrl.u32 %v4912, 7
    %v4914 = vsub.s32 0, %v4913
    %v4915 = vrot.slane %v4837, %v4914
    %v4916 = vsel %vm465, %v4891, %v4887
    %v4917 = vsel %vm467, %v4895, %v4916
    %v4918 = vsel %vm469, %v4899, %v4917
    %v4919 = vsel %vm471, %v4903, %v4918
    %v4920 = vsel %vm473, %v4907, %v4919
    %v4921 = vsel %vm475, %v4911, %v4920
    %v4922 = vsel %vm477, %v4915, %v4921
    %4923 = vrot.lane.b32.xlu0 %v4922, 118
    %v4924 = vpop.permute.xlu0 %4923
    %4926 = vxpose.xlu0.b32.start [1/16] %v4924, 128
    %4927 = vxpose.xlu0.b32.cont [2/16] 0.0, 128
    %4928 = vxpose.xlu0.b32.cont [3/16] 0.0, 128
    %4929 = vxpose.xlu0.b32.cont [4/16] 0.0, 128
    %4930 = vxpose.xlu0.b32.cont [5/16] 0.0, 128
    %4931 = vxpose.xlu0.b32.cont [6/16] 0.0, 128
    %4932 = vxpose.xlu0.b32.cont [7/16] 0.0, 128
    %4933 = vxpose.xlu0.b32.cont [8/16] 0.0, 128
    %4934 = vxpose.xlu0.b32.cont [9/16] 0.0, 128
    %4935 = vxpose.xlu0.b32.cont [10/16] 0.0, 128
    %4936 = vxpose.xlu0.b32.cont [11/16] 0.0, 128
    %4937 = vxpose.xlu0.b32.cont [12/16] 0.0, 128
    %4938 = vxpose.xlu0.b32.cont [13/16] 0.0, 128
    %4939 = vxpose.xlu0.b32.cont [14/16] 0.0, 128
    %4940 = vxpose.xlu0.b32.cont [15/16] 0.0, 128
    %4941 = vxpose.xlu0.b32.end [16/16] 0.0, 128
    %v4942 = vpop.trf.xlu0
    %v4943 = vpop.trf.xlu0
    %v4944 = vpop.trf.xlu0
    %v4945 = vpop.trf.xlu0
    %v4946 = vpop.trf.xlu0
    %v4947 = vpop.trf.xlu0
    %v4948 = vpop.trf.xlu0
    %v4949 = vpop.trf.xlu0
    %v4950 = vpop.trf.xlu0
    %v4951 = vpop.trf.xlu0
    %v4952 = vpop.trf.xlu0
    %v4953 = vpop.trf.xlu0
    %v4954 = vpop.trf.xlu0
    %v4955 = vpop.trf.xlu0
    %v4956 = vpop.trf.xlu0
    %v4957 = vpop.trf.xlu0
    %v4958 = vlaneseq
    %v4959 = vshrl.u32 %v4958, 7
    %v4960 = vsub.s32 0, %v4959
    %v4961 = vrot.slane %v4857, %v4960
    %v4962 = vlaneseq
    %v4963 = vshrl.u32 %v4962, 7
    %v4964 = vsub.s32 0, %v4963
    %v4965 = vrot.slane %v4865, %v4964
    %v4966 = vlaneseq
    %v4967 = vshrl.u32 %v4966, 7
    %v4968 = vsub.s32 0, %v4967
    %v4969 = vrot.slane %v4864, %v4968
    %v4970 = vlaneseq
    %v4971 = vshrl.u32 %v4970, 7
    %v4972 = vsub.s32 0, %v4971
    %v4973 = vrot.slane %v4866, %v4972
    %v4974 = vlaneseq
    %v4975 = vshrl.u32 %v4974, 7
    %v4976 = vsub.s32 0, %v4975
    %v4977 = vrot.slane %v4874, %v4976
    %v4978 = vlaneseq
    %v4979 = vshrl.u32 %v4978, 7
    %v4980 = vsub.s32 0, %v4979
    %v4981 = vrot.slane %v4882, %v4980
    %v4982 = vlaneseq
    %v4983 = vshrl.u32 %v4982, 7
    %v4984 = vsub.s32 0, %v4983
    %v4985 = vrot.slane %v4881, %v4984
    %v4986 = vlaneseq
    %v4987 = vshrl.u32 %v4986, 7
    %v4988 = vsub.s32 0, %v4987
    %v4989 = vrot.slane %v4883, %v4988
    %v4990 = vsel %vm465, %v4965, %v4961
    %v4991 = vsel %vm467, %v4969, %v4990
    %v4992 = vsel %vm469, %v4973, %v4991
    %v4993 = vsel %vm471, %v4977, %v4992
    %v4994 = vsel %vm473, %v4981, %v4993
    %v4995 = vsel %vm475, %v4985, %v4994
    %v4996 = vsel %vm477, %v4989, %v4995
    %4997 = vrot.lane.b32.xlu0 %v4996, 108
    %v4998 = vpop.permute.xlu0 %4997
    %5000 = vxpose.xlu0.b32.start [1/16] %v4998, 128
    %5001 = vxpose.xlu0.b32.cont [2/16] 0.0, 128
    %5002 = vxpose.xlu0.b32.cont [3/16] 0.0, 128
    %5003 = vxpose.xlu0.b32.cont [4/16] 0.0, 128
    %5004 = vxpose.xlu0.b32.cont [5/16] 0.0, 128
    %5005 = vxpose.xlu0.b32.cont [6/16] 0.0, 128
    %5006 = vxpose.xlu0.b32.cont [7/16] 0.0, 128
    %5007 = vxpose.xlu0.b32.cont [8/16] 0.0, 128
    %5008 = vxpose.xlu0.b32.cont [9/16] 0.0, 128
    %5009 = vxpose.xlu0.b32.cont [10/16] 0.0, 128
    %5010 = vxpose.xlu0.b32.cont [11/16] 0.0, 128
    %5011 = vxpose.xlu0.b32.cont [12/16] 0.0, 128
    %5012 = vxpose.xlu0.b32.cont [13/16] 0.0, 128
    %5013 = vxpose.xlu0.b32.cont [14/16] 0.0, 128
    %5014 = vxpose.xlu0.b32.cont [15/16] 0.0, 128
    %5015 = vxpose.xlu0.b32.end [16/16] 0.0, 128
    %v5016 = vpop.trf.xlu0
    %v5017 = vpop.trf.xlu0
    %v5018 = vpop.trf.xlu0
    %v5019 = vpop.trf.xlu0
    %v5020 = vpop.trf.xlu0
    %v5021 = vpop.trf.xlu0
    %v5022 = vpop.trf.xlu0
    %v5023 = vpop.trf.xlu0
    %v5024 = vpop.trf.xlu0
    %v5025 = vpop.trf.xlu0
    %v5026 = vpop.trf.xlu0
    %v5027 = vpop.trf.xlu0
    %v5028 = vpop.trf.xlu0
    %v5029 = vpop.trf.xlu0
    %v5030 = vpop.trf.xlu0
    %v5031 = vpop.trf.xlu0
    %v5032 = vlaneseq
    %v5033 = vshrl.u32 %v5032, 7
    %v5034 = vsub.s32 0, %v5033
    %v5035 = vrot.slane %v4757, %v5034
    %5037 = vbcast.lane.b32.xlu0 %v5035, 256
    %v5038 = vpop.permute.xlu0 %5037
    %s5040 = sor.u32 256, 8
    %5041 = vbcast.lane.b32.xlu0 %v5035, %s5040
    %v5042 = vpop.permute.xlu0 %5041
    %v5043 = vlaneseq
    %v5044 = vshrl.u32 %v5043, 7
    %v5045 = vsub.s32 0, %v5044
    %v5046 = vrot.slane %v4765, %v5045
    %5048 = vbcast.lane.b32.xlu0 %v5046, 256
    %v5049 = vpop.permute.xlu0 %5048
    %s5051 = sor.u32 256, 8
    %5052 = vbcast.lane.b32.xlu0 %v5046, %s5051
    %v5053 = vpop.permute.xlu0 %5052
    %v5054 = vlaneseq
    %v5055 = vshrl.u32 %v5054, 7
    %v5056 = vsub.s32 0, %v5055
    %v5057 = vrot.slane %v4764, %v5056
    %5059 = vbcast.lane.b32.xlu0 %v5057, 256
    %v5060 = vpop.permute.xlu0 %5059
    %s5062 = sor.u32 256, 8
    %5063 = vbcast.lane.b32.xlu0 %v5057, %s5062
    %v5064 = vpop.permute.xlu0 %5063
    %v5065 = vlaneseq
    %v5066 = vshrl.u32 %v5065, 7
    %v5067 = vsub.s32 0, %v5066
    %v5068 = vrot.slane %v4766, %v5067
    %5070 = vbcast.lane.b32.xlu0 %v5068, 256
    %v5071 = vpop.permute.xlu0 %5070
    %s5073 = sor.u32 256, 8
    %5074 = vbcast.lane.b32.xlu0 %v5068, %s5073
    %v5075 = vpop.permute.xlu0 %5074
    %v5076 = vlaneseq
    %v5077 = vshrl.u32 %v5076, 7
    %v5078 = vsub.s32 0, %v5077
    %v5079 = vrot.slane %v4774, %v5078
    %5081 = vbcast.lane.b32.xlu0 %v5079, 256
    %v5082 = vpop.permute.xlu0 %5081
    %s5084 = sor.u32 256, 8
    %5085 = vbcast.lane.b32.xlu0 %v5079, %s5084
    %v5086 = vpop.permute.xlu0 %5085
    %v5087 = vlaneseq
    %v5088 = vshrl.u32 %v5087, 7
    %v5089 = vsub.s32 0, %v5088
    %v5090 = vrot.slane %v4782, %v5089
    %5092 = vbcast.lane.b32.xlu0 %v5090, 256
    %v5093 = vpop.permute.xlu0 %5092
    %s5095 = sor.u32 256, 8
    %5096 = vbcast.lane.b32.xlu0 %v5090, %s5095
    %v5097 = vpop.permute.xlu0 %5096
    %v5098 = vlaneseq
    %v5099 = vshrl.u32 %v5098, 7
    %v5100 = vsub.s32 0, %v5099
    %v5101 = vrot.slane %v4781, %v5100
    %5103 = vbcast.lane.b32.xlu0 %v5101, 256
    %v5104 = vpop.permute.xlu0 %5103
    %s5106 = sor.u32 256, 8
    %5107 = vbcast.lane.b32.xlu0 %v5101, %s5106
    %v5108 = vpop.permute.xlu0 %5107
    %v5109 = vlaneseq
    %v5110 = vshrl.u32 %v5109, 7
    %v5111 = vsub.s32 0, %v5110
    %v5112 = vrot.slane %v4783, %v5111
    %5114 = vbcast.lane.b32.xlu0 %v5112, 256
    %v5115 = vpop.permute.xlu0 %5114
    %s5117 = sor.u32 256, 8
    %5118 = vbcast.lane.b32.xlu0 %v5112, %s5117
    %v5119 = vpop.permute.xlu0 %5118
    %v5120 = vmul.f32 %v5038, %v4942
    %v5121 = vmul.f32 %v5042, %v4943
    %v5122 = vmul.f32 %v5049, %v4942
    %v5123 = vmul.f32 %v5053, %v4943
    %v5124 = vmul.f32 %v5060, %v4942
    %v5125 = vmul.f32 %v5064, %v4943
    %v5126 = vmul.f32 %v5071, %v4942
    %v5127 = vmul.f32 %v5075, %v4943
    %v5128 = vmul.f32 %v5082, %v4942
    %v5129 = vmul.f32 %v5086, %v4943
    %v5130 = vmul.f32 %v5093, %v4942
    %v5131 = vmul.f32 %v5097, %v4943
    %v5132 = vmul.f32 %v5104, %v4942
    %v5133 = vmul.f32 %v5108, %v4943
    %v5134 = vmul.f32 %v5115, %v4942
    %v5135 = vmul.f32 %v5119, %v4943
    %v5136 = vadd.f32 %v5120, %v695
    %v5137 = vadd.f32 %v5121, %v695
    %v5138 = vadd.f32 %v5122, %v699
    %v5139 = vadd.f32 %v5123, %v699
    %v5140 = vadd.f32 %v5124, %v703
    %v5141 = vadd.f32 %v5125, %v703
    %v5142 = vadd.f32 %v5126, %v707
    %v5143 = vadd.f32 %v5127, %v707
    %v5144 = vadd.f32 %v5128, %v711
    %v5145 = vadd.f32 %v5129, %v711
    %v5146 = vadd.f32 %v5130, %v715
    %v5147 = vadd.f32 %v5131, %v715
    %v5148 = vadd.f32 %v5132, %v719
    %v5149 = vadd.f32 %v5133, %v719
    %v5150 = vadd.f32 %v5134, %v723
    %v5151 = vadd.f32 %v5135, %v723
    %v5152 = vsel %vm748, %v5136, -inf
    %5153 = vmax.xlane.f32.xlu0 %v5152
    %v5154 = vpop.xlane.xlu0 %5153
    %v5155 = vsel %vm752, %v5137, -inf
    %5156 = vmax.xlane.f32.xlu0 %v5155
    %v5157 = vpop.xlane.xlu0 %5156
    %v5158 = vsel %vm748, %v5138, -inf
    %5159 = vmax.xlane.f32.xlu0 %v5158
    %v5160 = vpop.xlane.xlu0 %5159
    %v5161 = vsel %vm752, %v5139, -inf
    %5162 = vmax.xlane.f32.xlu0 %v5161
    %v5163 = vpop.xlane.xlu0 %5162
    %v5164 = vsel %vm748, %v5140, -inf
    %5165 = vmax.xlane.f32.xlu0 %v5164
    %v5166 = vpop.xlane.xlu0 %5165
    %v5167 = vsel %vm752, %v5141, -inf
    %5168 = vmax.xlane.f32.xlu0 %v5167
    %v5169 = vpop.xlane.xlu0 %5168
    %v5170 = vsel %vm748, %v5142, -inf
    %5171 = vmax.xlane.f32.xlu0 %v5170
    %v5172 = vpop.xlane.xlu0 %5171
    %v5173 = vsel %vm752, %v5143, -inf
    %5174 = vmax.xlane.f32.xlu0 %v5173
    %v5175 = vpop.xlane.xlu0 %5174
    %v5176 = vsel %vm748, %v5144, -inf
    %5177 = vmax.xlane.f32.xlu0 %v5176
    %v5178 = vpop.xlane.xlu0 %5177
    %v5179 = vsel %vm752, %v5145, -inf
    %5180 = vmax.xlane.f32.xlu0 %v5179
    %v5181 = vpop.xlane.xlu0 %5180
    %v5182 = vsel %vm748, %v5146, -inf
    %5183 = vmax.xlane.f32.xlu0 %v5182
    %v5184 = vpop.xlane.xlu0 %5183
    %v5185 = vsel %vm752, %v5147, -inf
    %5186 = vmax.xlane.f32.xlu0 %v5185
    %v5187 = vpop.xlane.xlu0 %5186
    %v5188 = vsel %vm748, %v5148, -inf
    %5189 = vmax.xlane.f32.xlu0 %v5188
    %v5190 = vpop.xlane.xlu0 %5189
    %v5191 = vsel %vm752, %v5149, -inf
    %5192 = vmax.xlane.f32.xlu0 %v5191
    %v5193 = vpop.xlane.xlu0 %5192
    %v5194 = vsel %vm748, %v5150, -inf
    %5195 = vmax.xlane.f32.xlu0 %v5194
    %v5196 = vpop.xlane.xlu0 %5195
    %v5197 = vsel %vm752, %v5151, -inf
    %5198 = vmax.xlane.f32.xlu0 %v5197
    %v5199 = vpop.xlane.xlu0 %5198
    %v5200 = vsub.f32 %v5136, %v5154
    %v5201 = vsub.f32 %v5137, %v5157
    %v5202 = vsub.f32 %v5138, %v5160
    %v5203 = vsub.f32 %v5139, %v5163
    %v5204 = vsub.f32 %v5140, %v5166
    %v5205 = vsub.f32 %v5141, %v5169
    %v5206 = vsub.f32 %v5142, %v5172
    %v5207 = vsub.f32 %v5143, %v5175
    %v5208 = vsub.f32 %v5144, %v5178
    %v5209 = vsub.f32 %v5145, %v5181
    %v5210 = vsub.f32 %v5146, %v5184
    %v5211 = vsub.f32 %v5147, %v5187
    %v5212 = vsub.f32 %v5148, %v5190
    %v5213 = vsub.f32 %v5149, %v5193
    %v5214 = vsub.f32 %v5150, %v5196
    %v5215 = vsub.f32 %v5151, %v5199
    %v5216 = vmul.f32 %v5200, 1.442695
    %v5217 = vpow.pop %v5216
    %v5218 = vmul.f32 %v5201, 1.442695
    %v5219 = vpow.pop %v5218
    %v5220 = vmul.f32 %v5202, 1.442695
    %v5221 = vpow.pop %v5220
    %v5222 = vmul.f32 %v5203, 1.442695
    %v5223 = vpow.pop %v5222
    %v5224 = vmul.f32 %v5204, 1.442695
    %v5225 = vpow.pop %v5224
    %v5226 = vmul.f32 %v5205, 1.442695
    %v5227 = vpow.pop %v5226
    %v5228 = vmul.f32 %v5206, 1.442695
    %v5229 = vpow.pop %v5228
    %v5230 = vmul.f32 %v5207, 1.442695
    %v5231 = vpow.pop %v5230
    %v5232 = vmul.f32 %v5208, 1.442695
    %v5233 = vpow.pop %v5232
    %v5234 = vmul.f32 %v5209, 1.442695
    %v5235 = vpow.pop %v5234
    %v5236 = vmul.f32 %v5210, 1.442695
    %v5237 = vpow.pop %v5236
    %v5238 = vmul.f32 %v5211, 1.442695
    %v5239 = vpow.pop %v5238
    %v5240 = vmul.f32 %v5212, 1.442695
    %v5241 = vpow.pop %v5240
    %v5242 = vmul.f32 %v5213, 1.442695
    %v5243 = vpow.pop %v5242
    %v5244 = vmul.f32 %v5214, 1.442695
    %v5245 = vpow.pop %v5244
    %v5246 = vmul.f32 %v5215, 1.442695
    %v5247 = vpow.pop %v5246
    %v5248 = vsel %vm748, %v5217, 0.0
    %5249 = vadd.xlane.f32.xlu0 %v5248
    %v5250 = vpop.xlane.xlu0 %5249
    %v5251 = vsel %vm752, %v5219, 0.0
    %5252 = vadd.xlane.f32.xlu0 %v5251
    %v5253 = vpop.xlane.xlu0 %5252
    %v5254 = vsel %vm748, %v5221, 0.0
    %5255 = vadd.xlane.f32.xlu0 %v5254
    %v5256 = vpop.xlane.xlu0 %5255
    %v5257 = vsel %vm752, %v5223, 0.0
    %5258 = vadd.xlane.f32.xlu0 %v5257
    %v5259 = vpop.xlane.xlu0 %5258
    %v5260 = vsel %vm748, %v5225, 0.0
    %5261 = vadd.xlane.f32.xlu0 %v5260
    %v5262 = vpop.xlane.xlu0 %5261
    %v5263 = vsel %vm752, %v5227, 0.0
    %5264 = vadd.xlane.f32.xlu0 %v5263
    %v5265 = vpop.xlane.xlu0 %5264
    %v5266 = vsel %vm748, %v5229, 0.0
    %5267 = vadd.xlane.f32.xlu0 %v5266
    %v5268 = vpop.xlane.xlu0 %5267
    %v5269 = vsel %vm752, %v5231, 0.0
    %5270 = vadd.xlane.f32.xlu0 %v5269
    %v5271 = vpop.xlane.xlu0 %5270
    %v5272 = vsel %vm748, %v5233, 0.0
    %5273 = vadd.xlane.f32.xlu0 %v5272
    %v5274 = vpop.xlane.xlu0 %5273
    %v5275 = vsel %vm752, %v5235, 0.0
    %5276 = vadd.xlane.f32.xlu0 %v5275
    %v5277 = vpop.xlane.xlu0 %5276
    %v5278 = vsel %vm748, %v5237, 0.0
    %5279 = vadd.xlane.f32.xlu0 %v5278
    %v5280 = vpop.xlane.xlu0 %5279
    %v5281 = vsel %vm752, %v5239, 0.0
    %5282 = vadd.xlane.f32.xlu0 %v5281
    %v5283 = vpop.xlane.xlu0 %5282
    %v5284 = vsel %vm748, %v5241, 0.0
    %5285 = vadd.xlane.f32.xlu0 %v5284
    %v5286 = vpop.xlane.xlu0 %5285
    %v5287 = vsel %vm752, %v5243, 0.0
    %5288 = vadd.xlane.f32.xlu0 %v5287
    %v5289 = vpop.xlane.xlu0 %5288
    %v5290 = vsel %vm748, %v5245, 0.0
    %5291 = vadd.xlane.f32.xlu0 %v5290
    %v5292 = vpop.xlane.xlu0 %5291
    %v5293 = vsel %vm752, %v5247, 0.0
    %5294 = vadd.xlane.f32.xlu0 %v5293
    %v5295 = vpop.xlane.xlu0 %5294
    %v5296 = vmul.f32 %v5217, %v5016
    %v5297 = vmul.f32 %v5219, %v5017
    %v5298 = vmul.f32 %v5221, %v5016
    %v5299 = vmul.f32 %v5223, %v5017
    %v5300 = vmul.f32 %v5225, %v5016
    %v5301 = vmul.f32 %v5227, %v5017
    %v5302 = vmul.f32 %v5229, %v5016
    %v5303 = vmul.f32 %v5231, %v5017
    %v5304 = vmul.f32 %v5233, %v5016
    %v5305 = vmul.f32 %v5235, %v5017
    %v5306 = vmul.f32 %v5237, %v5016
    %v5307 = vmul.f32 %v5239, %v5017
    %v5308 = vmul.f32 %v5241, %v5016
    %v5309 = vmul.f32 %v5243, %v5017
    %v5310 = vmul.f32 %v5245, %v5016
    %v5311 = vmul.f32 %v5247, %v5017
    %v5312 = vsel %vm748, %v5296, 0.0
    %5313 = vadd.xlane.f32.xlu0 %v5312
    %v5314 = vpop.xlane.xlu0 %5313
    %v5315 = vsel %vm752, %v5297, 0.0
    %5316 = vadd.xlane.f32.xlu0 %v5315
    %v5317 = vpop.xlane.xlu0 %5316
    %v5318 = vsel %vm748, %v5298, 0.0
    %5319 = vadd.xlane.f32.xlu0 %v5318
    %v5320 = vpop.xlane.xlu0 %5319
    %v5321 = vsel %vm752, %v5299, 0.0
    %5322 = vadd.xlane.f32.xlu0 %v5321
    %v5323 = vpop.xlane.xlu0 %5322
    %v5324 = vsel %vm748, %v5300, 0.0
    %5325 = vadd.xlane.f32.xlu0 %v5324
    %v5326 = vpop.xlane.xlu0 %5325
    %v5327 = vsel %vm752, %v5301, 0.0
    %5328 = vadd.xlane.f32.xlu0 %v5327
    %v5329 = vpop.xlane.xlu0 %5328
    %v5330 = vsel %vm748, %v5302, 0.0
    %5331 = vadd.xlane.f32.xlu0 %v5330
    %v5332 = vpop.xlane.xlu0 %5331
    %v5333 = vsel %vm752, %v5303, 0.0
    %5334 = vadd.xlane.f32.xlu0 %v5333
    %v5335 = vpop.xlane.xlu0 %5334
    %v5336 = vsel %vm748, %v5304, 0.0
    %5337 = vadd.xlane.f32.xlu0 %v5336
    %v5338 = vpop.xlane.xlu0 %5337
    %v5339 = vsel %vm752, %v5305, 0.0
    %5340 = vadd.xlane.f32.xlu0 %v5339
    %v5341 = vpop.xlane.xlu0 %5340
    %v5342 = vsel %vm748, %v5306, 0.0
    %5343 = vadd.xlane.f32.xlu0 %v5342
    %v5344 = vpop.xlane.xlu0 %5343
    %v5345 = vsel %vm752, %v5307, 0.0
    %5346 = vadd.xlane.f32.xlu0 %v5345
    %v5347 = vpop.xlane.xlu0 %5346
    %v5348 = vsel %vm748, %v5308, 0.0
    %5349 = vadd.xlane.f32.xlu0 %v5348
    %v5350 = vpop.xlane.xlu0 %5349
    %v5351 = vsel %vm752, %v5309, 0.0
    %5352 = vadd.xlane.f32.xlu0 %v5351
    %v5353 = vpop.xlane.xlu0 %5352
    %v5354 = vsel %vm748, %v5310, 0.0
    %5355 = vadd.xlane.f32.xlu0 %v5354
    %v5356 = vpop.xlane.xlu0 %5355
    %v5357 = vsel %vm752, %v5311, 0.0
    %5358 = vadd.xlane.f32.xlu0 %v5357
    %v5359 = vpop.xlane.xlu0 %5358
    %v5360 = vrcp.pop %v5250
    %v5361 = vrcp.pop %v5253
    %v5362 = vrcp.pop %v5256
    %v5363 = vrcp.pop %v5259
    %v5364 = vrcp.pop %v5262
    %v5365 = vrcp.pop %v5265
    %v5366 = vrcp.pop %v5268
    %v5367 = vrcp.pop %v5271
    %v5368 = vrcp.pop %v5274
    %v5369 = vrcp.pop %v5277
    %v5370 = vrcp.pop %v5280
    %v5371 = vrcp.pop %v5283
    %v5372 = vrcp.pop %v5286
    %v5373 = vrcp.pop %v5289
    %v5374 = vrcp.pop %v5292
    %v5375 = vrcp.pop %v5295
    %v5376 = vmul.f32 %v5314, %v5360
    %v5377 = vmul.f32 %v5317, %v5361
    %v5378 = vmul.f32 %v5320, %v5362
    %v5379 = vmul.f32 %v5323, %v5363
    %v5380 = vmul.f32 %v5326, %v5364
    %v5381 = vmul.f32 %v5329, %v5365
    %v5382 = vmul.f32 %v5332, %v5366
    %v5383 = vmul.f32 %v5335, %v5367
    %v5384 = vmul.f32 %v5338, %v5368
    %v5385 = vmul.f32 %v5341, %v5369
    %v5386 = vmul.f32 %v5344, %v5370
    %v5387 = vmul.f32 %v5347, %v5371
    %v5388 = vmul.f32 %v5350, %v5372
    %v5389 = vmul.f32 %v5353, %v5373
    %v5390 = vmul.f32 %v5356, %v5374
    %v5391 = vmul.f32 %v5359, %v5375
    %v5392 = vlaneseq
    %v5393 = vshrl.u32 %v5392, 7
    %v5394 = vsub.s32 1, %v5393
    %v5395 = vrot.slane %v4811, %v5394
    %v5396 = vlaneseq
    %v5397 = vshrl.u32 %v5396, 7
    %v5398 = vsub.s32 1, %v5397
    %v5399 = vrot.slane %v4819, %v5398
    %v5400 = vlaneseq
    %v5401 = vshrl.u32 %v5400, 7
    %v5402 = vsub.s32 1, %v5401
    %v5403 = vrot.slane %v4818, %v5402
    %v5404 = vlaneseq
    %v5405 = vshrl.u32 %v5404, 7
    %v5406 = vsub.s32 1, %v5405
    %v5407 = vrot.slane %v4820, %v5406
    %v5408 = vlaneseq
    %v5409 = vshrl.u32 %v5408, 7
    %v5410 = vsub.s32 1, %v5409
    %v5411 = vrot.slane %v4828, %v5410
    %v5412 = vlaneseq
    %v5413 = vshrl.u32 %v5412, 7
    %v5414 = vsub.s32 1, %v5413
    %v5415 = vrot.slane %v4836, %v5414
    %v5416 = vlaneseq
    %v5417 = vshrl.u32 %v5416, 7
    %v5418 = vsub.s32 1, %v5417
    %v5419 = vrot.slane %v4835, %v5418
    %v5420 = vlaneseq
    %v5421 = vshrl.u32 %v5420, 7
    %v5422 = vsub.s32 1, %v5421
    %v5423 = vrot.slane %v4837, %v5422
    %v5424 = vsel %vm465, %v5399, %v5395
    %v5425 = vsel %vm467, %v5403, %v5424
    %v5426 = vsel %vm469, %v5407, %v5425
    %v5427 = vsel %vm471, %v5411, %v5426
    %v5428 = vsel %vm473, %v5415, %v5427
    %v5429 = vsel %vm475, %v5419, %v5428
    %v5430 = vsel %vm477, %v5423, %v5429
    %5431 = vrot.lane.b32.xlu0 %v5430, 118
    %v5432 = vpop.permute.xlu0 %5431
    %5434 = vxpose.xlu0.b32.start [1/16] %v5432, 128
    %5435 = vxpose.xlu0.b32.cont [2/16] 0.0, 128
    %5436 = vxpose.xlu0.b32.cont [3/16] 0.0, 128
    %5437 = vxpose.xlu0.b32.cont [4/16] 0.0, 128
    %5438 = vxpose.xlu0.b32.cont [5/16] 0.0, 128
    %5439 = vxpose.xlu0.b32.cont [6/16] 0.0, 128
    %5440 = vxpose.xlu0.b32.cont [7/16] 0.0, 128
    %5441 = vxpose.xlu0.b32.cont [8/16] 0.0, 128
    %5442 = vxpose.xlu0.b32.cont [9/16] 0.0, 128
    %5443 = vxpose.xlu0.b32.cont [10/16] 0.0, 128
    %5444 = vxpose.xlu0.b32.cont [11/16] 0.0, 128
    %5445 = vxpose.xlu0.b32.cont [12/16] 0.0, 128
    %5446 = vxpose.xlu0.b32.cont [13/16] 0.0, 128
    %5447 = vxpose.xlu0.b32.cont [14/16] 0.0, 128
    %5448 = vxpose.xlu0.b32.cont [15/16] 0.0, 128
    %5449 = vxpose.xlu0.b32.end [16/16] 0.0, 128
    %v5450 = vpop.trf.xlu0
    %v5451 = vpop.trf.xlu0
    %v5452 = vpop.trf.xlu0
    %v5453 = vpop.trf.xlu0
    %v5454 = vpop.trf.xlu0
    %v5455 = vpop.trf.xlu0
    %v5456 = vpop.trf.xlu0
    %v5457 = vpop.trf.xlu0
    %v5458 = vpop.trf.xlu0
    %v5459 = vpop.trf.xlu0
    %v5460 = vpop.trf.xlu0
    %v5461 = vpop.trf.xlu0
    %v5462 = vpop.trf.xlu0
    %v5463 = vpop.trf.xlu0
    %v5464 = vpop.trf.xlu0
    %v5465 = vpop.trf.xlu0
    %v5466 = vlaneseq
    %v5467 = vshrl.u32 %v5466, 7
    %v5468 = vsub.s32 1, %v5467
    %v5469 = vrot.slane %v4857, %v5468
    %v5470 = vlaneseq
    %v5471 = vshrl.u32 %v5470, 7
    %v5472 = vsub.s32 1, %v5471
    %v5473 = vrot.slane %v4865, %v5472
    %v5474 = vlaneseq
    %v5475 = vshrl.u32 %v5474, 7
    %v5476 = vsub.s32 1, %v5475
    %v5477 = vrot.slane %v4864, %v5476
    %v5478 = vlaneseq
    %v5479 = vshrl.u32 %v5478, 7
    %v5480 = vsub.s32 1, %v5479
    %v5481 = vrot.slane %v4866, %v5480
    %v5482 = vlaneseq
    %v5483 = vshrl.u32 %v5482, 7
    %v5484 = vsub.s32 1, %v5483
    %v5485 = vrot.slane %v4874, %v5484
    %v5486 = vlaneseq
    %v5487 = vshrl.u32 %v5486, 7
    %v5488 = vsub.s32 1, %v5487
    %v5489 = vrot.slane %v4882, %v5488
    %v5490 = vlaneseq
    %v5491 = vshrl.u32 %v5490, 7
    %v5492 = vsub.s32 1, %v5491
    %v5493 = vrot.slane %v4881, %v5492
    %v5494 = vlaneseq
    %v5495 = vshrl.u32 %v5494, 7
    %v5496 = vsub.s32 1, %v5495
    %v5497 = vrot.slane %v4883, %v5496
    %v5498 = vsel %vm465, %v5473, %v5469
    %v5499 = vsel %vm467, %v5477, %v5498
    %v5500 = vsel %vm469, %v5481, %v5499
    %v5501 = vsel %vm471, %v5485, %v5500
    %v5502 = vsel %vm473, %v5489, %v5501
    %v5503 = vsel %vm475, %v5493, %v5502
    %v5504 = vsel %vm477, %v5497, %v5503
    %5505 = vrot.lane.b32.xlu0 %v5504, 108
    %v5506 = vpop.permute.xlu0 %5505
    %5508 = vxpose.xlu0.b32.start [1/16] %v5506, 128
    %5509 = vxpose.xlu0.b32.cont [2/16] 0.0, 128
    %5510 = vxpose.xlu0.b32.cont [3/16] 0.0, 128
    %5511 = vxpose.xlu0.b32.cont [4/16] 0.0, 128
    %5512 = vxpose.xlu0.b32.cont [5/16] 0.0, 128
    %5513 = vxpose.xlu0.b32.cont [6/16] 0.0, 128
    %5514 = vxpose.xlu0.b32.cont [7/16] 0.0, 128
    %5515 = vxpose.xlu0.b32.cont [8/16] 0.0, 128
    %5516 = vxpose.xlu0.b32.cont [9/16] 0.0, 128
    %5517 = vxpose.xlu0.b32.cont [10/16] 0.0, 128
    %5518 = vxpose.xlu0.b32.cont [11/16] 0.0, 128
    %5519 = vxpose.xlu0.b32.cont [12/16] 0.0, 128
    %5520 = vxpose.xlu0.b32.cont [13/16] 0.0, 128
    %5521 = vxpose.xlu0.b32.cont [14/16] 0.0, 128
    %5522 = vxpose.xlu0.b32.cont [15/16] 0.0, 128
    %5523 = vxpose.xlu0.b32.end [16/16] 0.0, 128
    %v5524 = vpop.trf.xlu0
    %v5525 = vpop.trf.xlu0
    %v5526 = vpop.trf.xlu0
    %v5527 = vpop.trf.xlu0
    %v5528 = vpop.trf.xlu0
    %v5529 = vpop.trf.xlu0
    %v5530 = vpop.trf.xlu0
    %v5531 = vpop.trf.xlu0
    %v5532 = vpop.trf.xlu0
    %v5533 = vpop.trf.xlu0
    %v5534 = vpop.trf.xlu0
    %v5535 = vpop.trf.xlu0
    %v5536 = vpop.trf.xlu0
    %v5537 = vpop.trf.xlu0
    %v5538 = vpop.trf.xlu0
    %v5539 = vpop.trf.xlu0
    %v5540 = vlaneseq
    %v5541 = vshrl.u32 %v5540, 7
    %v5542 = vsub.s32 1, %v5541
    %v5543 = vrot.slane %v4757, %v5542
    %5545 = vbcast.lane.b32.xlu0 %v5543, 256
    %v5546 = vpop.permute.xlu0 %5545
    %s5548 = sor.u32 256, 8
    %5549 = vbcast.lane.b32.xlu0 %v5543, %s5548
    %v5550 = vpop.permute.xlu0 %5549
    %v5551 = vlaneseq
    %v5552 = vshrl.u32 %v5551, 7
    %v5553 = vsub.s32 1, %v5552
    %v5554 = vrot.slane %v4765, %v5553
    %5556 = vbcast.lane.b32.xlu0 %v5554, 256
    %v5557 = vpop.permute.xlu0 %5556
    %s5559 = sor.u32 256, 8
    %5560 = vbcast.lane.b32.xlu0 %v5554, %s5559
    %v5561 = vpop.permute.xlu0 %5560
    %v5562 = vlaneseq
    %v5563 = vshrl.u32 %v5562, 7
    %v5564 = vsub.s32 1, %v5563
    %v5565 = vrot.slane %v4764, %v5564
    %5567 = vbcast.lane.b32.xlu0 %v5565, 256
    %v5568 = vpop.permute.xlu0 %5567
    %s5570 = sor.u32 256, 8
    %5571 = vbcast.lane.b32.xlu0 %v5565, %s5570
    %v5572 = vpop.permute.xlu0 %5571
    %v5573 = vlaneseq
    %v5574 = vshrl.u32 %v5573, 7
    %v5575 = vsub.s32 1, %v5574
    %v5576 = vrot.slane %v4766, %v5575
    %5578 = vbcast.lane.b32.xlu0 %v5576, 256
    %v5579 = vpop.permute.xlu0 %5578
    %s5581 = sor.u32 256, 8
    %5582 = vbcast.lane.b32.xlu0 %v5576, %s5581
    %v5583 = vpop.permute.xlu0 %5582
    %v5584 = vlaneseq
    %v5585 = vshrl.u32 %v5584, 7
    %v5586 = vsub.s32 1, %v5585
    %v5587 = vrot.slane %v4774, %v5586
    %5589 = vbcast.lane.b32.xlu0 %v5587, 256
    %v5590 = vpop.permute.xlu0 %5589
    %s5592 = sor.u32 256, 8
    %5593 = vbcast.lane.b32.xlu0 %v5587, %s5592
    %v5594 = vpop.permute.xlu0 %5593
    %v5595 = vlaneseq
    %v5596 = vshrl.u32 %v5595, 7
    %v5597 = vsub.s32 1, %v5596
    %v5598 = vrot.slane %v4782, %v5597
    %5600 = vbcast.lane.b32.xlu0 %v5598, 256
    %v5601 = vpop.permute.xlu0 %5600
    %s5603 = sor.u32 256, 8
    %5604 = vbcast.lane.b32.xlu0 %v5598, %s5603
    %v5605 = vpop.permute.xlu0 %5604
    %v5606 = vlaneseq
    %v5607 = vshrl.u32 %v5606, 7
    %v5608 = vsub.s32 1, %v5607
    %v5609 = vrot.slane %v4781, %v5608
    %5611 = vbcast.lane.b32.xlu0 %v5609, 256
    %v5612 = vpop.permute.xlu0 %5611
    %s5614 = sor.u32 256, 8
    %5615 = vbcast.lane.b32.xlu0 %v5609, %s5614
    %v5616 = vpop.permute.xlu0 %5615
    %v5617 = vlaneseq
    %v5618 = vshrl.u32 %v5617, 7
    %v5619 = vsub.s32 1, %v5618
    %v5620 = vrot.slane %v4783, %v5619
    %5622 = vbcast.lane.b32.xlu0 %v5620, 256
    %v5623 = vpop.permute.xlu0 %5622
    %s5625 = sor.u32 256, 8
    %5626 = vbcast.lane.b32.xlu0 %v5620, %s5625
    %v5627 = vpop.permute.xlu0 %5626
    %v5628 = vmul.f32 %v5546, %v5450
    %v5629 = vmul.f32 %v5550, %v5451
    %v5630 = vmul.f32 %v5557, %v5450
    %v5631 = vmul.f32 %v5561, %v5451
    %v5632 = vmul.f32 %v5568, %v5450
    %v5633 = vmul.f32 %v5572, %v5451
    %v5634 = vmul.f32 %v5579, %v5450
    %v5635 = vmul.f32 %v5583, %v5451
    %v5636 = vmul.f32 %v5590, %v5450
    %v5637 = vmul.f32 %v5594, %v5451
    %v5638 = vmul.f32 %v5601, %v5450
    %v5639 = vmul.f32 %v5605, %v5451
    %v5640 = vmul.f32 %v5612, %v5450
    %v5641 = vmul.f32 %v5616, %v5451
    %v5642 = vmul.f32 %v5623, %v5450
    %v5643 = vmul.f32 %v5627, %v5451
    %v5644 = vadd.f32 %v5628, %v695
    %v5645 = vadd.f32 %v5629, %v695
    %v5646 = vadd.f32 %v5630, %v699
    %v5647 = vadd.f32 %v5631, %v699
    %v5648 = vadd.f32 %v5632, %v703
    %v5649 = vadd.f32 %v5633, %v703
    %v5650 = vadd.f32 %v5634, %v707
    %v5651 = vadd.f32 %v5635, %v707
    %v5652 = vadd.f32 %v5636, %v711
    %v5653 = vadd.f32 %v5637, %v711
    %v5654 = vadd.f32 %v5638, %v715
    %v5655 = vadd.f32 %v5639, %v715
    %v5656 = vadd.f32 %v5640, %v719
    %v5657 = vadd.f32 %v5641, %v719
    %v5658 = vadd.f32 %v5642, %v723
    %v5659 = vadd.f32 %v5643, %v723
    %v5660 = vsel %vm748, %v5644, -inf
    %5661 = vmax.xlane.f32.xlu0 %v5660
    %v5662 = vpop.xlane.xlu0 %5661
    %v5663 = vsel %vm752, %v5645, -inf
    %5664 = vmax.xlane.f32.xlu0 %v5663
    %v5665 = vpop.xlane.xlu0 %5664
    %v5666 = vsel %vm748, %v5646, -inf
    %5667 = vmax.xlane.f32.xlu0 %v5666
    %v5668 = vpop.xlane.xlu0 %5667
    %v5669 = vsel %vm752, %v5647, -inf
    %5670 = vmax.xlane.f32.xlu0 %v5669
    %v5671 = vpop.xlane.xlu0 %5670
    %v5672 = vsel %vm748, %v5648, -inf
    %5673 = vmax.xlane.f32.xlu0 %v5672
    %v5674 = vpop.xlane.xlu0 %5673
    %v5675 = vsel %vm752, %v5649, -inf
    %5676 = vmax.xlane.f32.xlu0 %v5675
    %v5677 = vpop.xlane.xlu0 %5676
    %v5678 = vsel %vm748, %v5650, -inf
    %5679 = vmax.xlane.f32.xlu0 %v5678
    %v5680 = vpop.xlane.xlu0 %5679
    %v5681 = vsel %vm752, %v5651, -inf
    %5682 = vmax.xlane.f32.xlu0 %v5681
    %v5683 = vpop.xlane.xlu0 %5682
    %v5684 = vsel %vm748, %v5652, -inf
    %5685 = vmax.xlane.f32.xlu0 %v5684
    %v5686 = vpop.xlane.xlu0 %5685
    %v5687 = vsel %vm752, %v5653, -inf
    %5688 = vmax.xlane.f32.xlu0 %v5687
    %v5689 = vpop.xlane.xlu0 %5688
    %v5690 = vsel %vm748, %v5654, -inf
    %5691 = vmax.xlane.f32.xlu0 %v5690
    %v5692 = vpop.xlane.xlu0 %5691
    %v5693 = vsel %vm752, %v5655, -inf
    %5694 = vmax.xlane.f32.xlu0 %v5693
    %v5695 = vpop.xlane.xlu0 %5694
    %v5696 = vsel %vm748, %v5656, -inf
    %5697 = vmax.xlane.f32.xlu0 %v5696
    %v5698 = vpop.xlane.xlu0 %5697
    %v5699 = vsel %vm752, %v5657, -inf
    %5700 = vmax.xlane.f32.xlu0 %v5699
    %v5701 = vpop.xlane.xlu0 %5700
    %v5702 = vsel %vm748, %v5658, -inf
    %5703 = vmax.xlane.f32.xlu0 %v5702
    %v5704 = vpop.xlane.xlu0 %5703
    %v5705 = vsel %vm752, %v5659, -inf
    %5706 = vmax.xlane.f32.xlu0 %v5705
    %v5707 = vpop.xlane.xlu0 %5706
    %v5708 = vsub.f32 %v5644, %v5662
    %v5709 = vsub.f32 %v5645, %v5665
    %v5710 = vsub.f32 %v5646, %v5668
    %v5711 = vsub.f32 %v5647, %v5671
    %v5712 = vsub.f32 %v5648, %v5674
    %v5713 = vsub.f32 %v5649, %v5677
    %v5714 = vsub.f32 %v5650, %v5680
    %v5715 = vsub.f32 %v5651, %v5683
    %v5716 = vsub.f32 %v5652, %v5686
    %v5717 = vsub.f32 %v5653, %v5689
    %v5718 = vsub.f32 %v5654, %v5692
    %v5719 = vsub.f32 %v5655, %v5695
    %v5720 = vsub.f32 %v5656, %v5698
    %v5721 = vsub.f32 %v5657, %v5701
    %v5722 = vsub.f32 %v5658, %v5704
    %v5723 = vsub.f32 %v5659, %v5707
    %v5724 = vmul.f32 %v5708, 1.442695
    %v5725 = vpow.pop %v5724
    %v5726 = vmul.f32 %v5709, 1.442695
    %v5727 = vpow.pop %v5726
    %v5728 = vmul.f32 %v5710, 1.442695
    %v5729 = vpow.pop %v5728
    %v5730 = vmul.f32 %v5711, 1.442695
    %v5731 = vpow.pop %v5730
    %v5732 = vmul.f32 %v5712, 1.442695
    %v5733 = vpow.pop %v5732
    %v5734 = vmul.f32 %v5713, 1.442695
    %v5735 = vpow.pop %v5734
    %v5736 = vmul.f32 %v5714, 1.442695
    %v5737 = vpow.pop %v5736
    %v5738 = vmul.f32 %v5715, 1.442695
    %v5739 = vpow.pop %v5738
    %v5740 = vmul.f32 %v5716, 1.442695
    %v5741 = vpow.pop %v5740
    %v5742 = vmul.f32 %v5717, 1.442695
    %v5743 = vpow.pop %v5742
    %v5744 = vmul.f32 %v5718, 1.442695
    %v5745 = vpow.pop %v5744
    %v5746 = vmul.f32 %v5719, 1.442695
    %v5747 = vpow.pop %v5746
    %v5748 = vmul.f32 %v5720, 1.442695
    %v5749 = vpow.pop %v5748
    %v5750 = vmul.f32 %v5721, 1.442695
    %v5751 = vpow.pop %v5750
    %v5752 = vmul.f32 %v5722, 1.442695
    %v5753 = vpow.pop %v5752
    %v5754 = vmul.f32 %v5723, 1.442695
    %v5755 = vpow.pop %v5754
    %v5756 = vsel %vm748, %v5725, 0.0
    %5757 = vadd.xlane.f32.xlu0 %v5756
    %v5758 = vpop.xlane.xlu0 %5757
    %v5759 = vsel %vm752, %v5727, 0.0
    %5760 = vadd.xlane.f32.xlu0 %v5759
    %v5761 = vpop.xlane.xlu0 %5760
    %v5762 = vsel %vm748, %v5729, 0.0
    %5763 = vadd.xlane.f32.xlu0 %v5762
    %v5764 = vpop.xlane.xlu0 %5763
    %v5765 = vsel %vm752, %v5731, 0.0
    %5766 = vadd.xlane.f32.xlu0 %v5765
    %v5767 = vpop.xlane.xlu0 %5766
    %v5768 = vsel %vm748, %v5733, 0.0
    %5769 = vadd.xlane.f32.xlu0 %v5768
    %v5770 = vpop.xlane.xlu0 %5769
    %v5771 = vsel %vm752, %v5735, 0.0
    %5772 = vadd.xlane.f32.xlu0 %v5771
    %v5773 = vpop.xlane.xlu0 %5772
    %v5774 = vsel %vm748, %v5737, 0.0
    %5775 = vadd.xlane.f32.xlu0 %v5774
    %v5776 = vpop.xlane.xlu0 %5775
    %v5777 = vsel %vm752, %v5739, 0.0
    %5778 = vadd.xlane.f32.xlu0 %v5777
    %v5779 = vpop.xlane.xlu0 %5778
    %v5780 = vsel %vm748, %v5741, 0.0
    %5781 = vadd.xlane.f32.xlu0 %v5780
    %v5782 = vpop.xlane.xlu0 %5781
    %v5783 = vsel %vm752, %v5743, 0.0
    %5784 = vadd.xlane.f32.xlu0 %v5783
    %v5785 = vpop.xlane.xlu0 %5784
    %v5786 = vsel %vm748, %v5745, 0.0
    %5787 = vadd.xlane.f32.xlu0 %v5786
    %v5788 = vpop.xlane.xlu0 %5787
    %v5789 = vsel %vm752, %v5747, 0.0
    %5790 = vadd.xlane.f32.xlu0 %v5789
    %v5791 = vpop.xlane.xlu0 %5790
    %v5792 = vsel %vm748, %v5749, 0.0
    %5793 = vadd.xlane.f32.xlu0 %v5792
    %v5794 = vpop.xlane.xlu0 %5793
    %v5795 = vsel %vm752, %v5751, 0.0
    %5796 = vadd.xlane.f32.xlu0 %v5795
    %v5797 = vpop.xlane.xlu0 %5796
    %v5798 = vsel %vm748, %v5753, 0.0
    %5799 = vadd.xlane.f32.xlu0 %v5798
    %v5800 = vpop.xlane.xlu0 %5799
    %v5801 = vsel %vm752, %v5755, 0.0
    %5802 = vadd.xlane.f32.xlu0 %v5801
    %v5803 = vpop.xlane.xlu0 %5802
    %v5804 = vmul.f32 %v5725, %v5524
    %v5805 = vmul.f32 %v5727, %v5525
    %v5806 = vmul.f32 %v5729, %v5524
    %v5807 = vmul.f32 %v5731, %v5525
    %v5808 = vmul.f32 %v5733, %v5524
    %v5809 = vmul.f32 %v5735, %v5525
    %v5810 = vmul.f32 %v5737, %v5524
    %v5811 = vmul.f32 %v5739, %v5525
    %v5812 = vmul.f32 %v5741, %v5524
    %v5813 = vmul.f32 %v5743, %v5525
    %v5814 = vmul.f32 %v5745, %v5524
    %v5815 = vmul.f32 %v5747, %v5525
    %v5816 = vmul.f32 %v5749, %v5524
    %v5817 = vmul.f32 %v5751, %v5525
    %v5818 = vmul.f32 %v5753, %v5524
    %v5819 = vmul.f32 %v5755, %v5525
    %v5820 = vsel %vm748, %v5804, 0.0
    %5821 = vadd.xlane.f32.xlu0 %v5820
    %v5822 = vpop.xlane.xlu0 %5821
    %v5823 = vsel %vm752, %v5805, 0.0
    %5824 = vadd.xlane.f32.xlu0 %v5823
    %v5825 = vpop.xlane.xlu0 %5824
    %v5826 = vsel %vm748, %v5806, 0.0
    %5827 = vadd.xlane.f32.xlu0 %v5826
    %v5828 = vpop.xlane.xlu0 %5827
    %v5829 = vsel %vm752, %v5807, 0.0
    %5830 = vadd.xlane.f32.xlu0 %v5829
    %v5831 = vpop.xlane.xlu0 %5830
    %v5832 = vsel %vm748, %v5808, 0.0
    %5833 = vadd.xlane.f32.xlu0 %v5832
    %v5834 = vpop.xlane.xlu0 %5833
    %v5835 = vsel %vm752, %v5809, 0.0
    %5836 = vadd.xlane.f32.xlu0 %v5835
    %v5837 = vpop.xlane.xlu0 %5836
    %v5838 = vsel %vm748, %v5810, 0.0
    %5839 = vadd.xlane.f32.xlu0 %v5838
    %v5840 = vpop.xlane.xlu0 %5839
    %v5841 = vsel %vm752, %v5811, 0.0
    %5842 = vadd.xlane.f32.xlu0 %v5841
    %v5843 = vpop.xlane.xlu0 %5842
    %v5844 = vsel %vm748, %v5812, 0.0
    %5845 = vadd.xlane.f32.xlu0 %v5844
    %v5846 = vpop.xlane.xlu0 %5845
    %v5847 = vsel %vm752, %v5813, 0.0
    %5848 = vadd.xlane.f32.xlu0 %v5847
    %v5849 = vpop.xlane.xlu0 %5848
    %v5850 = vsel %vm748, %v5814, 0.0
    %5851 = vadd.xlane.f32.xlu0 %v5850
    %v5852 = vpop.xlane.xlu0 %5851
    %v5853 = vsel %vm752, %v5815, 0.0
    %5854 = vadd.xlane.f32.xlu0 %v5853
    %v5855 = vpop.xlane.xlu0 %5854
    %v5856 = vsel %vm748, %v5816, 0.0
    %5857 = vadd.xlane.f32.xlu0 %v5856
    %v5858 = vpop.xlane.xlu0 %5857
    %v5859 = vsel %vm752, %v5817, 0.0
    %5860 = vadd.xlane.f32.xlu0 %v5859
    %v5861 = vpop.xlane.xlu0 %5860
    %v5862 = vsel %vm748, %v5818, 0.0
    %5863 = vadd.xlane.f32.xlu0 %v5862
    %v5864 = vpop.xlane.xlu0 %5863
    %v5865 = vsel %vm752, %v5819, 0.0
    %5866 = vadd.xlane.f32.xlu0 %v5865
    %v5867 = vpop.xlane.xlu0 %5866
    %v5868 = vrcp.pop %v5758
    %v5869 = vrcp.pop %v5761
    %v5870 = vrcp.pop %v5764
    %v5871 = vrcp.pop %v5767
    %v5872 = vrcp.pop %v5770
    %v5873 = vrcp.pop %v5773
    %v5874 = vrcp.pop %v5776
    %v5875 = vrcp.pop %v5779
    %v5876 = vrcp.pop %v5782
    %v5877 = vrcp.pop %v5785
    %v5878 = vrcp.pop %v5788
    %v5879 = vrcp.pop %v5791
    %v5880 = vrcp.pop %v5794
    %v5881 = vrcp.pop %v5797
    %v5882 = vrcp.pop %v5800
    %v5883 = vrcp.pop %v5803
    %v5884 = vmul.f32 %v5822, %v5868
    %v5885 = vmul.f32 %v5825, %v5869
    %v5886 = vmul.f32 %v5828, %v5870
    %v5887 = vmul.f32 %v5831, %v5871
    %v5888 = vmul.f32 %v5834, %v5872
    %v5889 = vmul.f32 %v5837, %v5873
    %v5890 = vmul.f32 %v5840, %v5874
    %v5891 = vmul.f32 %v5843, %v5875
    %v5892 = vmul.f32 %v5846, %v5876
    %v5893 = vmul.f32 %v5849, %v5877
    %v5894 = vmul.f32 %v5852, %v5878
    %v5895 = vmul.f32 %v5855, %v5879
    %v5896 = vmul.f32 %v5858, %v5880
    %v5897 = vmul.f32 %v5861, %v5881
    %v5898 = vmul.f32 %v5864, %v5882
    %v5899 = vmul.f32 %v5867, %v5883
    %v5916 = vlaneseq
    %v5917 = vshrl.u32 %v5916, 7
    %v5918 = vsub.s32 %v106, %v5917
    %v5919 = vrot.slane %v5376, %v5918
    %v5920 = vlaneseq
    %v5921 = vshrl.u32 %v5920, 7
    %v5922 = vsub.s32 %v1518, %v5921
    %v5923 = vrot.slane %v5377, %v5922
    %v5924 = vsel %vm1523, %v5923, %v5919
    %v5925 = vlaneseq
    %v5926 = vshrl.u32 %v5925, 7
    %v5927 = vsub.s32 %v106, %v5926
    %v5928 = vrot.slane %v5378, %v5927
    %v5929 = vlaneseq
    %v5930 = vshrl.u32 %v5929, 7
    %v5931 = vsub.s32 %v1518, %v5930
    %v5932 = vrot.slane %v5379, %v5931
    %v5933 = vsel %vm1523, %v5932, %v5928
    %v5934 = vlaneseq
    %v5935 = vshrl.u32 %v5934, 7
    %v5936 = vsub.s32 %v106, %v5935
    %v5937 = vrot.slane %v5380, %v5936
    %v5938 = vlaneseq
    %v5939 = vshrl.u32 %v5938, 7
    %v5940 = vsub.s32 %v1518, %v5939
    %v5941 = vrot.slane %v5381, %v5940
    %v5942 = vsel %vm1523, %v5941, %v5937
    %v5943 = vlaneseq
    %v5944 = vshrl.u32 %v5943, 7
    %v5945 = vsub.s32 %v106, %v5944
    %v5946 = vrot.slane %v5382, %v5945
    %v5947 = vlaneseq
    %v5948 = vshrl.u32 %v5947, 7
    %v5949 = vsub.s32 %v1518, %v5948
    %v5950 = vrot.slane %v5383, %v5949
    %v5951 = vsel %vm1523, %v5950, %v5946
    %v5952 = vlaneseq
    %v5953 = vshrl.u32 %v5952, 7
    %v5954 = vsub.s32 %v106, %v5953
    %v5955 = vrot.slane %v5384, %v5954
    %v5956 = vlaneseq
    %v5957 = vshrl.u32 %v5956, 7
    %v5958 = vsub.s32 %v1518, %v5957
    %v5959 = vrot.slane %v5385, %v5958
    %v5960 = vsel %vm1523, %v5959, %v5955
    %v5961 = vlaneseq
    %v5962 = vshrl.u32 %v5961, 7
    %v5963 = vsub.s32 %v106, %v5962
    %v5964 = vrot.slane %v5386, %v5963
    %v5965 = vlaneseq
    %v5966 = vshrl.u32 %v5965, 7
    %v5967 = vsub.s32 %v1518, %v5966
    %v5968 = vrot.slane %v5387, %v5967
    %v5969 = vsel %vm1523, %v5968, %v5964
    %v5970 = vlaneseq
    %v5971 = vshrl.u32 %v5970, 7
    %v5972 = vsub.s32 %v106, %v5971
    %v5973 = vrot.slane %v5388, %v5972
    %v5974 = vlaneseq
    %v5975 = vshrl.u32 %v5974, 7
    %v5976 = vsub.s32 %v1518, %v5975
    %v5977 = vrot.slane %v5389, %v5976
    %v5978 = vsel %vm1523, %v5977, %v5973
    %v5979 = vlaneseq
    %v5980 = vshrl.u32 %v5979, 7
    %v5981 = vsub.s32 %v106, %v5980
    %v5982 = vrot.slane %v5390, %v5981
    %v5983 = vlaneseq
    %v5984 = vshrl.u32 %v5983, 7
    %v5985 = vsub.s32 %v1518, %v5984
    %v5986 = vrot.slane %v5391, %v5985
    %v5987 = vsel %vm1523, %v5986, %v5982
    %v6012 = vlaneseq
    %v6013 = vshrl.u32 %v6012, 7
    %v6014 = vsub.s32 %v106, %v6013
    %v6015 = vrot.slane %v5884, %v6014
    %v6016 = vlaneseq
    %v6017 = vshrl.u32 %v6016, 7
    %v6018 = vsub.s32 %v1518, %v6017
    %v6019 = vrot.slane %v5885, %v6018
    %v6020 = vsel %vm1523, %v6019, %v6015
    %v6021 = vlaneseq
    %v6022 = vshrl.u32 %v6021, 7
    %v6023 = vsub.s32 %v106, %v6022
    %v6024 = vrot.slane %v5886, %v6023
    %v6025 = vlaneseq
    %v6026 = vshrl.u32 %v6025, 7
    %v6027 = vsub.s32 %v1518, %v6026
    %v6028 = vrot.slane %v5887, %v6027
    %v6029 = vsel %vm1523, %v6028, %v6024
    %v6030 = vlaneseq
    %v6031 = vshrl.u32 %v6030, 7
    %v6032 = vsub.s32 %v106, %v6031
    %v6033 = vrot.slane %v5888, %v6032
    %v6034 = vlaneseq
    %v6035 = vshrl.u32 %v6034, 7
    %v6036 = vsub.s32 %v1518, %v6035
    %v6037 = vrot.slane %v5889, %v6036
    %v6038 = vsel %vm1523, %v6037, %v6033
    %v6039 = vlaneseq
    %v6040 = vshrl.u32 %v6039, 7
    %v6041 = vsub.s32 %v106, %v6040
    %v6042 = vrot.slane %v5890, %v6041
    %v6043 = vlaneseq
    %v6044 = vshrl.u32 %v6043, 7
    %v6045 = vsub.s32 %v1518, %v6044
    %v6046 = vrot.slane %v5891, %v6045
    %v6047 = vsel %vm1523, %v6046, %v6042
    %v6048 = vlaneseq
    %v6049 = vshrl.u32 %v6048, 7
    %v6050 = vsub.s32 %v106, %v6049
    %v6051 = vrot.slane %v5892, %v6050
    %v6052 = vlaneseq
    %v6053 = vshrl.u32 %v6052, 7
    %v6054 = vsub.s32 %v1518, %v6053
    %v6055 = vrot.slane %v5893, %v6054
    %v6056 = vsel %vm1523, %v6055, %v6051
    %v6057 = vlaneseq
    %v6058 = vshrl.u32 %v6057, 7
    %v6059 = vsub.s32 %v106, %v6058
    %v6060 = vrot.slane %v5894, %v6059
    %v6061 = vlaneseq
    %v6062 = vshrl.u32 %v6061, 7
    %v6063 = vsub.s32 %v1518, %v6062
    %v6064 = vrot.slane %v5895, %v6063
    %v6065 = vsel %vm1523, %v6064, %v6060
    %v6066 = vlaneseq
    %v6067 = vshrl.u32 %v6066, 7
    %v6068 = vsub.s32 %v106, %v6067
    %v6069 = vrot.slane %v5896, %v6068
    %v6070 = vlaneseq
    %v6071 = vshrl.u32 %v6070, 7
    %v6072 = vsub.s32 %v1518, %v6071
    %v6073 = vrot.slane %v5897, %v6072
    %v6074 = vsel %vm1523, %v6073, %v6069
    %v6075 = vlaneseq
    %v6076 = vshrl.u32 %v6075, 7
    %v6077 = vsub.s32 %v106, %v6076
    %v6078 = vrot.slane %v5898, %v6077
    %v6079 = vlaneseq
    %v6080 = vshrl.u32 %v6079, 7
    %v6081 = vsub.s32 %v1518, %v6080
    %v6082 = vrot.slane %v5899, %v6081
    %v6083 = vsel %vm1523, %v6082, %v6078
    %v6092 = vsel %vm1692, %v5924, %v6020
    %v6093 = vsel %vm1692, %v5933, %v6029
    %v6094 = vsel %vm1692, %v5942, %v6038
    %v6095 = vsel %vm1692, %v5951, %v6047
    %v6096 = vsel %vm1692, %v5960, %v6056
    %v6097 = vsel %vm1692, %v5969, %v6065
    %v6098 = vsel %vm1692, %v5978, %v6074
    %v6099 = vsel %vm1692, %v5987, %v6083
    %v6100 = vlaneseq
    %v6101 = vshrl.u32 %v6100, 7
    %v6102 = vsub.s32 3, %v6101
    %v6103 = vrot.slane %v4613, %v6102
    %v6112 = vcombine.low %v6092, %v6093
    %v6113 = vcombine.low %v6094, %v6095
    %v6115 = vunpack.c.l.s4 1983009808
    %v6116 = vunpack.c.0.s8 %v6115
    %v6117 = vlaneseq
    %v6118 = vshrl.u32 %v6117, 7
    %v6119 = vsub.s32 %v6116, %v6118
    %v6120 = vrot.slane %v6112, %v6119
    %v6122 = vunpack.c.l.s4 1983009808
    %v6123 = vunpack.c.0.s8 %v6122
    %v6124 = vlaneseq
    %v6125 = vshrl.u32 %v6124, 7
    %v6126 = vsub.s32 %v6123, %v6125
    %v6127 = vrot.slane %v6113, %v6126
    %v6128 = vcombine.low %v6120, %v6127
    %v6129 = vcombine.low %v6096, %v6097
    %v6130 = vcombine.low %v6098, %v6099
    %v6132 = vunpack.c.l.s4 1983009808
    %v6133 = vunpack.c.0.s8 %v6132
    %v6134 = vlaneseq
    %v6135 = vshrl.u32 %v6134, 7
    %v6136 = vsub.s32 %v6133, %v6135
    %v6137 = vrot.slane %v6129, %v6136
    %v6139 = vunpack.c.l.s4 1983009808
    %v6140 = vunpack.c.0.s8 %v6139
    %v6141 = vlaneseq
    %v6142 = vshrl.u32 %v6141, 7
    %v6143 = vsub.s32 %v6140, %v6142
    %v6144 = vrot.slane %v6130, %v6143
    %v6145 = vcombine.low %v6137, %v6144
    %6147 = vrot.lane.b32.xlu0 %v4616, 98
    %v6148 = vpop.permute.xlu0 %6147
    %6149 = vrot.lane.b32.xlu0 %v4617, 98
    %v6150 = vpop.permute.xlu0 %6149
    %v6152 = vsel %vm207, %v6128, 0
    %v6154 = vsel %vm207, %v6145, 0
    %v6156 = vsel %vm212, %v6150, 0
    %6158 = vmatprep.subr.mxu0 0.0
    %6159 = vmatpush1.msra.mxu0 %v6148
    %6160 = vmatprep.subr.mxu0 0.0
    %6161 = vmatpush1.msra.mxu0 %v6156
    %6162 = vmatprep.subr.mxu0 0.0
    %6163 = vmatpush1.msra.mxu0 0.0
    %6164 = vmatprep.subr.mxu0 0.0
    %6165 = vmatpush1.msra.mxu0 0.0
    %6166 = vmatprep.subr.mxu0 0.0
    %6167 = vmatpush1.msra.mxu0 0.0
    %6168 = vmatprep.subr.mxu0 0.0
    %6169 = vmatpush1.msra.mxu0 0.0
    %6170 = vmatprep.subr.mxu0 0.0
    %6171 = vmatpush1.msra.mxu0 0.0
    %6172 = vmatprep.subr.mxu0 0.0
    %6173 = vmatpush1.msra.mxu0 0.0
    %6174 = vmatprep.subr.mxu0 0.0
    %6175 = vmatpush1.msra.mxu0 0.0
    %6176 = vmatprep.subr.mxu0 0.0
    %6177 = vmatpush1.msra.mxu0 0.0
    %6178 = vmatprep.subr.mxu0 0.0
    %6179 = vmatpush1.msra.mxu0 0.0
    %6180 = vmatprep.subr.mxu0 0.0
    %6181 = vmatpush1.msra.mxu0 0.0
    %6182 = vmatprep.subr.mxu0 0.0
    %6183 = vmatpush1.msra.mxu0 0.0
    %6184 = vmatprep.subr.mxu0 0.0
    %6185 = vmatpush1.msra.mxu0 0.0
    %6186 = vmatprep.subr.mxu0 0.0
    %6187 = vmatpush1.msra.mxu0 0.0
    %6188 = vmatprep.subr.mxu0 0.0
    %6189 = vmatpush1.msra.mxu0 0.0
    %6190 = vmatprep.subr.mxu0 0.0
    %6191 = vmatpush1.msra.mxu0 0.0
    %6192 = vmatprep.subr.mxu0 0.0
    %6193 = vmatpush1.msra.mxu0 0.0
    %6194 = vmatprep.subr.mxu0 0.0
    %6195 = vmatpush1.msra.mxu0 0.0
    %6196 = vmatprep.subr.mxu0 0.0
    %6197 = vmatpush1.msra.mxu0 0.0
    %6198 = vmatprep.subr.mxu0 0.0
    %6199 = vmatpush1.msra.mxu0 0.0
    %6200 = vmatprep.subr.mxu0 0.0
    %6201 = vmatpush1.msra.mxu0 0.0
    %6202 = vmatprep.subr.mxu0 0.0
    %6203 = vmatpush1.msra.mxu0 0.0
    %6204 = vmatprep.subr.mxu0 0.0
    %6205 = vmatpush1.msra.mxu0 0.0
    %6206 = vmatprep.subr.mxu0 0.0
    %6207 = vmatpush1.msra.mxu0 0.0
    %6208 = vmatprep.subr.mxu0 0.0
    %6209 = vmatpush1.msra.mxu0 0.0
    %6210 = vmatprep.subr.mxu0 0.0
    %6211 = vmatpush1.msra.mxu0 0.0
    %6212 = vmatprep.subr.mxu0 0.0
    %6213 = vmatpush1.msra.mxu0 0.0
    %6214 = vmatprep.subr.mxu0 0.0
    %6215 = vmatpush1.msra.mxu0 0.0
    %6216 = vmatprep.subr.mxu0 0.0
    %6217 = vmatpush1.msra.mxu0 0.0
    %6218 = vmatprep.subr.mxu0 0.0
    %6219 = vmatpush1.msra.mxu0 0.0
    %6220 = vmatprep.subr.mxu0 0.0
    %6221 = vmatpush1.msra.mxu0 0.0
    %6222 = vmatprep.mubr.f32.mxu0 0.0
    %6223 = vmatmul.mubr.f32.gmra.mrb[0].mxu0 %v6152
    %v6224 = vpop.f32.mrb[0].mxu0
    %v6225 = vadd.f32 %v6103, %v6224
    %v6226 = vpop.f32.mrb[0].mxu0
    %6227 = vmatprep.mubr.f32.mxu0 0.0
    %6228 = vmatmul.mubr.f32.gmra.mrb[0].mxu0 %v6154
    %v6229 = vpop.f32.mrb[0].mxu0
    %v6230 = vadd.f32 %v6103, %v6229
    %v6231 = vpop.f32.mrb[0].mxu0
    %6232 = vdwg.mxu0
    %v6235 = vcombine.high %v6225, %v6225
    %v6237 = vunpack.c.l.s4 1983009808
    %v6238 = vunpack.c.0.s8 %v6237
    %v6239 = vlaneseq
    %v6240 = vshrl.u32 %v6239, 7
    %v6241 = vsub.s32 %v6238, %v6240
    %v6242 = vrot.slane %v6225, %v6241
    %v6244 = vunpack.c.l.s4 1983009808
    %v6245 = vunpack.c.0.s8 %v6244
    %v6246 = vlaneseq
    %v6247 = vshrl.u32 %v6246, 7
    %v6248 = vsub.s32 %v6245, %v6247
    %v6249 = vrot.slane %v6235, %v6248
    %v6250 = vcombine.high %v6242, %v6242
    %v6251 = vcombine.high %v6249, %v6249
    %v6252 = vcombine.high %v6230, %v6230
    %v6254 = vunpack.c.l.s4 1983009808
    %v6255 = vunpack.c.0.s8 %v6254
    %v6256 = vlaneseq
    %v6257 = vshrl.u32 %v6256, 7
    %v6258 = vsub.s32 %v6255, %v6257
    %v6259 = vrot.slane %v6230, %v6258
    %v6261 = vunpack.c.l.s4 1983009808
    %v6262 = vunpack.c.0.s8 %v6261
    %v6263 = vlaneseq
    %v6264 = vshrl.u32 %v6263, 7
    %v6265 = vsub.s32 %v6262, %v6264
    %v6266 = vrot.slane %v6252, %v6265
    %v6267 = vcombine.high %v6259, %v6259
    %v6268 = vcombine.high %v6266, %v6266
    %v6277 = vadd.f32 %v4604, %v6242
    %v6278 = vadd.f32 %v4605, %v6250
    %v6279 = vadd.f32 %v4606, %v6249
    %v6280 = vadd.f32 %v4607, %v6251
    %v6281 = vadd.f32 %v4608, %v6259
    %v6282 = vadd.f32 %v4609, %v6267
    %v6283 = vadd.f32 %v4610, %v6266
    %v6284 = vadd.f32 %v4611, %v6268
    %v6293 = vcombine.low %v6277, %v6278
    %v6294 = vcombine.low %v6279, %v6280
    %v6296 = vunpack.c.l.s4 1983009808
    %v6297 = vunpack.c.0.s8 %v6296
    %v6298 = vlaneseq
    %v6299 = vshrl.u32 %v6298, 7
    %v6300 = vsub.s32 %v6297, %v6299
    %v6301 = vrot.slane %v6293, %v6300
    %v6303 = vunpack.c.l.s4 1983009808
    %v6304 = vunpack.c.0.s8 %v6303
    %v6305 = vlaneseq
    %v6306 = vshrl.u32 %v6305, 7
    %v6307 = vsub.s32 %v6304, %v6306
    %v6308 = vrot.slane %v6294, %v6307
    %v6309 = vcombine.low %v6301, %v6308
    %v6310 = vcombine.low %v6281, %v6282
    %v6311 = vcombine.low %v6283, %v6284
    %v6313 = vunpack.c.l.s4 1983009808
    %v6314 = vunpack.c.0.s8 %v6313
    %v6315 = vlaneseq
    %v6316 = vshrl.u32 %v6315, 7
    %v6317 = vsub.s32 %v6314, %v6316
    %v6318 = vrot.slane %v6310, %v6317
    %v6320 = vunpack.c.l.s4 1983009808
    %v6321 = vunpack.c.0.s8 %v6320
    %v6322 = vlaneseq
    %v6323 = vshrl.u32 %v6322, 7
    %v6324 = vsub.s32 %v6321, %v6323
    %v6325 = vrot.slane %v6311, %v6324
    %v6326 = vcombine.low %v6318, %v6325
    %v6329 = vsel %vm207, %v6309, 0.0
    %6330 = vadd.xlane.f32.xlu0 %v6329
    %v6331 = vpop.xlane.xlu0 %6330
    %v6332 = vsel %vm207, %v6326, 0.0
    %6333 = vadd.xlane.f32.xlu0 %v6332
    %v6334 = vpop.xlane.xlu0 %6333
    %v6335 = vmul.f32 %v6331, %v1936
    %v6336 = vmul.f32 %v6334, %v1936
    %v6340 = vunpack.c.l.s4 269488144
    %v6341 = vunpack.c.0.s8 %v6340
    %v6342 = vlaneseq
    %v6343 = vshrl.u32 %v6342, 7
    %v6344 = vsub.s32 %v6341, %v6343
    %v6345 = vrot.slane %v6335, %v6344
    %v6347 = vunpack.c.l.s4 842150450
    %v6348 = vunpack.c.0.s8 %v6347
    %v6349 = vlaneseq
    %v6350 = vshrl.u32 %v6349, 7
    %v6351 = vsub.s32 %v6348, %v6350
    %v6352 = vrot.slane %v6335, %v6351
    %v6354 = vunpack.c.l.s4 1414812756
    %v6355 = vunpack.c.0.s8 %v6354
    %v6356 = vlaneseq
    %v6357 = vshrl.u32 %v6356, 7
    %v6358 = vsub.s32 %v6355, %v6357
    %v6359 = vrot.slane %v6335, %v6358
    %v6361 = vunpack.c.l.s4 1987475062
    %v6362 = vunpack.c.0.s8 %v6361
    %v6363 = vlaneseq
    %v6364 = vshrl.u32 %v6363, 7
    %v6365 = vsub.s32 %v6362, %v6364
    %v6366 = vrot.slane %v6335, %v6365
    %v6368 = vunpack.c.l.s4 269488144
    %v6369 = vunpack.c.0.s8 %v6368
    %v6370 = vlaneseq
    %v6371 = vshrl.u32 %v6370, 7
    %v6372 = vsub.s32 %v6369, %v6371
    %v6373 = vrot.slane %v6336, %v6372
    %v6375 = vunpack.c.l.s4 842150450
    %v6376 = vunpack.c.0.s8 %v6375
    %v6377 = vlaneseq
    %v6378 = vshrl.u32 %v6377, 7
    %v6379 = vsub.s32 %v6376, %v6378
    %v6380 = vrot.slane %v6336, %v6379
    %v6382 = vunpack.c.l.s4 1414812756
    %v6383 = vunpack.c.0.s8 %v6382
    %v6384 = vlaneseq
    %v6385 = vshrl.u32 %v6384, 7
    %v6386 = vsub.s32 %v6383, %v6385
    %v6387 = vrot.slane %v6336, %v6386
    %v6389 = vunpack.c.l.s4 1987475062
    %v6390 = vunpack.c.0.s8 %v6389
    %v6391 = vlaneseq
    %v6392 = vshrl.u32 %v6391, 7
    %v6393 = vsub.s32 %v6390, %v6392
    %v6394 = vrot.slane %v6336, %v6393
    %v6403 = vsub.f32 %v6277, %v6345
    %v6404 = vsub.f32 %v6278, %v6352
    %v6405 = vsub.f32 %v6279, %v6359
    %v6406 = vsub.f32 %v6280, %v6366
    %v6407 = vsub.f32 %v6281, %v6373
    %v6408 = vsub.f32 %v6282, %v6380
    %v6409 = vsub.f32 %v6283, %v6387
    %v6410 = vsub.f32 %v6284, %v6394
    %v6411 = vmul.f32 %v6403, %v6403
    %v6412 = vmul.f32 %v6404, %v6404
    %v6413 = vmul.f32 %v6405, %v6405
    %v6414 = vmul.f32 %v6406, %v6406
    %v6415 = vmul.f32 %v6407, %v6407
    %v6416 = vmul.f32 %v6408, %v6408
    %v6417 = vmul.f32 %v6409, %v6409
    %v6418 = vmul.f32 %v6410, %v6410
    %v6427 = vcombine.low %v6411, %v6412
    %v6428 = vcombine.low %v6413, %v6414
    %v6430 = vunpack.c.l.s4 1983009808
    %v6431 = vunpack.c.0.s8 %v6430
    %v6432 = vlaneseq
    %v6433 = vshrl.u32 %v6432, 7
    %v6434 = vsub.s32 %v6431, %v6433
    %v6435 = vrot.slane %v6427, %v6434
    %v6437 = vunpack.c.l.s4 1983009808
    %v6438 = vunpack.c.0.s8 %v6437
    %v6439 = vlaneseq
    %v6440 = vshrl.u32 %v6439, 7
    %v6441 = vsub.s32 %v6438, %v6440
    %v6442 = vrot.slane %v6428, %v6441
    %v6443 = vcombine.low %v6435, %v6442
    %v6444 = vcombine.low %v6415, %v6416
    %v6445 = vcombine.low %v6417, %v6418
    %v6447 = vunpack.c.l.s4 1983009808
    %v6448 = vunpack.c.0.s8 %v6447
    %v6449 = vlaneseq
    %v6450 = vshrl.u32 %v6449, 7
    %v6451 = vsub.s32 %v6448, %v6450
    %v6452 = vrot.slane %v6444, %v6451
    %v6454 = vunpack.c.l.s4 1983009808
    %v6455 = vunpack.c.0.s8 %v6454
    %v6456 = vlaneseq
    %v6457 = vshrl.u32 %v6456, 7
    %v6458 = vsub.s32 %v6455, %v6457
    %v6459 = vrot.slane %v6445, %v6458
    %v6460 = vcombine.low %v6452, %v6459
    %v6463 = vsel %vm207, %v6443, 0.0
    %6464 = vadd.xlane.f32.xlu0 %v6463
    %v6465 = vpop.xlane.xlu0 %6464
    %v6466 = vsel %vm207, %v6460, 0.0
    %6467 = vadd.xlane.f32.xlu0 %v6466
    %v6468 = vpop.xlane.xlu0 %6467
    %v6469 = vmul.f32 %v6465, %v1936
    %v6470 = vmul.f32 %v6468, %v1936
    %v6471 = vadd.f32 %v6469, 1e-05
    %v6472 = vadd.f32 %v6470, 1e-05
    %v6473 = vrsqrt.pop %v6471
    %v6474 = vrsqrt.pop %v6472
    %v6478 = vunpack.c.l.s4 269488144
    %v6479 = vunpack.c.0.s8 %v6478
    %v6480 = vlaneseq
    %v6481 = vshrl.u32 %v6480, 7
    %v6482 = vsub.s32 %v6479, %v6481
    %v6483 = vrot.slane %v6473, %v6482
    %v6485 = vunpack.c.l.s4 842150450
    %v6486 = vunpack.c.0.s8 %v6485
    %v6487 = vlaneseq
    %v6488 = vshrl.u32 %v6487, 7
    %v6489 = vsub.s32 %v6486, %v6488
    %v6490 = vrot.slane %v6473, %v6489
    %v6492 = vunpack.c.l.s4 1414812756
    %v6493 = vunpack.c.0.s8 %v6492
    %v6494 = vlaneseq
    %v6495 = vshrl.u32 %v6494, 7
    %v6496 = vsub.s32 %v6493, %v6495
    %v6497 = vrot.slane %v6473, %v6496
    %v6499 = vunpack.c.l.s4 1987475062
    %v6500 = vunpack.c.0.s8 %v6499
    %v6501 = vlaneseq
    %v6502 = vshrl.u32 %v6501, 7
    %v6503 = vsub.s32 %v6500, %v6502
    %v6504 = vrot.slane %v6473, %v6503
    %v6506 = vunpack.c.l.s4 269488144
    %v6507 = vunpack.c.0.s8 %v6506
    %v6508 = vlaneseq
    %v6509 = vshrl.u32 %v6508, 7
    %v6510 = vsub.s32 %v6507, %v6509
    %v6511 = vrot.slane %v6474, %v6510
    %v6513 = vunpack.c.l.s4 842150450
    %v6514 = vunpack.c.0.s8 %v6513
    %v6515 = vlaneseq
    %v6516 = vshrl.u32 %v6515, 7
    %v6517 = vsub.s32 %v6514, %v6516
    %v6518 = vrot.slane %v6474, %v6517
    %v6520 = vunpack.c.l.s4 1414812756
    %v6521 = vunpack.c.0.s8 %v6520
    %v6522 = vlaneseq
    %v6523 = vshrl.u32 %v6522, 7
    %v6524 = vsub.s32 %v6521, %v6523
    %v6525 = vrot.slane %v6474, %v6524
    %v6527 = vunpack.c.l.s4 1987475062
    %v6528 = vunpack.c.0.s8 %v6527
    %v6529 = vlaneseq
    %v6530 = vshrl.u32 %v6529, 7
    %v6531 = vsub.s32 %v6528, %v6530
    %v6532 = vrot.slane %v6474, %v6531
    %v6541 = vmul.f32 %v6403, %v6483
    %v6542 = vmul.f32 %v6404, %v6490
    %v6543 = vmul.f32 %v6405, %v6497
    %v6544 = vmul.f32 %v6406, %v6504
    %v6545 = vmul.f32 %v6407, %v6511
    %v6546 = vmul.f32 %v6408, %v6518
    %v6547 = vmul.f32 %v6409, %v6525
    %v6548 = vmul.f32 %v6410, %v6532
    %v6549 = vlaneseq
    %v6550 = vshrl.u32 %v6549, 7
    %v6551 = vsub.s32 4, %v6550
    %v6552 = vrot.slane %v4613, %v6551
    %v6554 = vcombine.high %v6552, %v6552
    %v6556 = vunpack.c.l.s4 1983009808
    %v6557 = vunpack.c.0.s8 %v6556
    %v6558 = vlaneseq
    %v6559 = vshrl.u32 %v6558, 7
    %v6560 = vsub.s32 %v6557, %v6559
    %v6561 = vrot.slane %v6552, %v6560
    %v6563 = vunpack.c.l.s4 1983009808
    %v6564 = vunpack.c.0.s8 %v6563
    %v6565 = vlaneseq
    %v6566 = vshrl.u32 %v6565, 7
    %v6567 = vsub.s32 %v6564, %v6566
    %v6568 = vrot.slane %v6554, %v6567
    %v6569 = vcombine.high %v6561, %v6561
    %v6570 = vcombine.high %v6568, %v6568
    %v6575 = vmul.f32 %v6541, %v6561
    %v6576 = vmul.f32 %v6542, %v6569
    %v6577 = vmul.f32 %v6543, %v6568
    %v6578 = vmul.f32 %v6544, %v6570
    %v6579 = vmul.f32 %v6545, %v6561
    %v6580 = vmul.f32 %v6546, %v6569
    %v6581 = vmul.f32 %v6547, %v6568
    %v6582 = vmul.f32 %v6548, %v6570
    %v6583 = vlaneseq
    %v6584 = vshrl.u32 %v6583, 7
    %v6585 = vsub.s32 5, %v6584
    %v6586 = vrot.slane %v4613, %v6585
    %v6588 = vcombine.high %v6586, %v6586
    %v6590 = vunpack.c.l.s4 1983009808
    %v6591 = vunpack.c.0.s8 %v6590
    %v6592 = vlaneseq
    %v6593 = vshrl.u32 %v6592, 7
    %v6594 = vsub.s32 %v6591, %v6593
    %v6595 = vrot.slane %v6586, %v6594
    %v6597 = vunpack.c.l.s4 1983009808
    %v6598 = vunpack.c.0.s8 %v6597
    %v6599 = vlaneseq
    %v6600 = vshrl.u32 %v6599, 7
    %v6601 = vsub.s32 %v6598, %v6600
    %v6602 = vrot.slane %v6588, %v6601
    %v6603 = vcombine.high %v6595, %v6595
    %v6604 = vcombine.high %v6602, %v6602
    %v6609 = vadd.f32 %v6575, %v6595
    %v6610 = vadd.f32 %v6576, %v6603
    %v6611 = vadd.f32 %v6577, %v6602
    %v6612 = vadd.f32 %v6578, %v6604
    %v6613 = vadd.f32 %v6579, %v6595
    %v6614 = vadd.f32 %v6580, %v6603
    %v6615 = vadd.f32 %v6581, %v6602
    %v6616 = vadd.f32 %v6582, %v6604
    %v6625 = vcombine.low %v6609, %v6610
    %v6626 = vcombine.low %v6611, %v6612
    %v6628 = vunpack.c.l.s4 1983009808
    %v6629 = vunpack.c.0.s8 %v6628
    %v6630 = vlaneseq
    %v6631 = vshrl.u32 %v6630, 7
    %v6632 = vsub.s32 %v6629, %v6631
    %v6633 = vrot.slane %v6625, %v6632
    %v6635 = vunpack.c.l.s4 1983009808
    %v6636 = vunpack.c.0.s8 %v6635
    %v6637 = vlaneseq
    %v6638 = vshrl.u32 %v6637, 7
    %v6639 = vsub.s32 %v6636, %v6638
    %v6640 = vrot.slane %v6626, %v6639
    %v6641 = vcombine.low %v6633, %v6640
    %v6642 = vcombine.low %v6613, %v6614
    %v6643 = vcombine.low %v6615, %v6616
    %v6645 = vunpack.c.l.s4 1983009808
    %v6646 = vunpack.c.0.s8 %v6645
    %v6647 = vlaneseq
    %v6648 = vshrl.u32 %v6647, 7
    %v6649 = vsub.s32 %v6646, %v6648
    %v6650 = vrot.slane %v6642, %v6649
    %v6652 = vunpack.c.l.s4 1983009808
    %v6653 = vunpack.c.0.s8 %v6652
    %v6654 = vlaneseq
    %v6655 = vshrl.u32 %v6654, 7
    %v6656 = vsub.s32 %v6653, %v6655
    %v6657 = vrot.slane %v6643, %v6656
    %v6658 = vcombine.low %v6650, %v6657
    %v6661 = vpack.c.bf16 %v6658, %v6641
    %s6662 = scalar_lea.vmem %s4, 128
    %v6663 = vld [vmem:[%s6662] sm:$0xff]
    %v6664 = vld [vmem:[%s6662 + $0x8] sm:$0xff]
    %v6665 = vld [vmem:[%s6662 + $0x10] sm:$0xff]
    %v6666 = vld [vmem:[%s6662 + $0x18] sm:$0xff]
    %v6667 = vld [vmem:[%s6662 + $0x20] sm:$0xff]
    %v6668 = vld [vmem:[%s6662 + $0x28] sm:$0xff]
    %v6669 = vld [vmem:[%s6662 + $0x30] sm:$0xff]
    %v6670 = vld [vmem:[%s6662 + $0x38] sm:$0xff]
    %v6671 = vld [vmem:[%s6662 + $0x40] sm:$0x11]
    %v6672 = vld [vmem:[%s6662 + $0x48] sm:$0x11]
    %v6673 = vld [vmem:[%s6662 + $0x50] sm:$0x11]
    %v6674 = vld [vmem:[%s6662 + $0x58] sm:$0x11]
    %v6675 = vld [vmem:[%s6662 + $0x60] sm:$0x11]
    %v6676 = vld [vmem:[%s6662 + $0x68] sm:$0x11]
    %v6677 = vld [vmem:[%s6662 + $0x70] sm:$0x11]
    %v6678 = vld [vmem:[%s6662 + $0x78] sm:$0x11]
    %s6679 = scalar_lea.vmem %s5, 16
    %v6680 = vld [vmem:[%s6679] sm:$0xff]
    %v6681 = vld [vmem:[%s6679 + $0x8] sm:$0xff]
    %v6684 = vlaneseq
    %v6685 = vshrl.u32 %v6684, 7
    %v6686 = vsub.s32 0, %v6685
    %v6687 = vrot.slane %v6680, %v6686
    %v6688 = vlaneseq
    %v6689 = vshrl.u32 %v6688, 7
    %v6690 = vsub.s32 1, %v6689
    %v6691 = vrot.slane %v6680, %v6690
    %v6692 = vlaneseq
    %v6693 = vshrl.u32 %v6692, 7
    %v6694 = vsub.s32 2, %v6693
    %v6695 = vrot.slane %v6680, %v6694
    %v6696 = vlaneseq
    %v6697 = vshrl.u32 %v6696, 7
    %v6698 = vsub.s32 3, %v6697
    %v6699 = vrot.slane %v6680, %v6698
    %v6700 = vlaneseq
    %v6701 = vshrl.u32 %v6700, 7
    %v6702 = vsub.s32 4, %v6701
    %v6703 = vrot.slane %v6680, %v6702
    %v6704 = vlaneseq
    %v6705 = vshrl.u32 %v6704, 7
    %v6706 = vsub.s32 5, %v6705
    %v6707 = vrot.slane %v6680, %v6706
    %v6708 = vlaneseq
    %v6709 = vshrl.u32 %v6708, 7
    %v6710 = vsub.s32 6, %v6709
    %v6711 = vrot.slane %v6680, %v6710
    %v6712 = vlaneseq
    %v6713 = vshrl.u32 %v6712, 7
    %v6714 = vsub.s32 7, %v6713
    %v6715 = vrot.slane %v6680, %v6714
    %v6716 = vlaneseq
    %v6717 = vshrl.u32 %v6716, 7
    %v6718 = vsub.s32 0, %v6717
    %v6719 = vrot.slane %v6681, %v6718
    %v6720 = vlaneseq
    %v6721 = vshrl.u32 %v6720, 7
    %v6722 = vsub.s32 1, %v6721
    %v6723 = vrot.slane %v6681, %v6722
    %v6724 = vlaneseq
    %v6725 = vshrl.u32 %v6724, 7
    %v6726 = vsub.s32 2, %v6725
    %v6727 = vrot.slane %v6681, %v6726
    %v6728 = vlaneseq
    %v6729 = vshrl.u32 %v6728, 7
    %v6730 = vsub.s32 3, %v6729
    %v6731 = vrot.slane %v6681, %v6730
    %v6732 = vlaneseq
    %v6733 = vshrl.u32 %v6732, 7
    %v6734 = vsub.s32 4, %v6733
    %v6735 = vrot.slane %v6681, %v6734
    %v6736 = vlaneseq
    %v6737 = vshrl.u32 %v6736, 7
    %v6738 = vsub.s32 5, %v6737
    %v6739 = vrot.slane %v6681, %v6738
    %v6740 = vlaneseq
    %v6741 = vshrl.u32 %v6740, 7
    %v6742 = vsub.s32 6, %v6741
    %v6743 = vrot.slane %v6681, %v6742
    %v6744 = vlaneseq
    %v6745 = vshrl.u32 %v6744, 7
    %v6746 = vsub.s32 7, %v6745
    %v6747 = vrot.slane %v6681, %v6746
    %v6780 = vunpack.c.l.b16 %v6663
    %v6781 = vunpack.c.h.b16 %v6663
    %v6782 = vunpack.c.l.b16 %v6664
    %v6783 = vunpack.c.h.b16 %v6664
    %v6784 = vunpack.c.l.b16 %v6665
    %v6785 = vunpack.c.h.b16 %v6665
    %v6786 = vunpack.c.l.b16 %v6666
    %v6787 = vunpack.c.h.b16 %v6666
    %v6788 = vunpack.c.l.b16 %v6667
    %v6789 = vunpack.c.h.b16 %v6667
    %v6790 = vunpack.c.l.b16 %v6668
    %v6791 = vunpack.c.h.b16 %v6668
    %v6792 = vunpack.c.l.b16 %v6669
    %v6793 = vunpack.c.h.b16 %v6669
    %v6794 = vunpack.c.l.b16 %v6670
    %v6795 = vunpack.c.h.b16 %v6670
    %v6796 = vunpack.c.l.b16 %v6671
    %v6797 = vunpack.c.h.b16 %v6671
    %v6798 = vunpack.c.l.b16 %v6672
    %v6799 = vunpack.c.h.b16 %v6672
    %v6800 = vunpack.c.l.b16 %v6673
    %v6801 = vunpack.c.h.b16 %v6673
    %v6802 = vunpack.c.l.b16 %v6674
    %v6803 = vunpack.c.h.b16 %v6674
    %v6804 = vunpack.c.l.b16 %v6675
    %v6805 = vunpack.c.h.b16 %v6675
    %v6806 = vunpack.c.l.b16 %v6676
    %v6807 = vunpack.c.h.b16 %v6676
    %v6808 = vunpack.c.l.b16 %v6677
    %v6809 = vunpack.c.h.b16 %v6677
    %v6810 = vunpack.c.l.b16 %v6678
    %v6811 = vunpack.c.h.b16 %v6678
    %v6812 = vpack.c.b16 %v6796, %v6780
    %v6813 = vpack.c.b16 %v6797, %v6781
    %v6814 = vpack.c.b16 %v6798, %v6782
    %v6815 = vpack.c.b16 %v6799, %v6783
    %v6816 = vpack.c.b16 %v6800, %v6784
    %v6817 = vpack.c.b16 %v6801, %v6785
    %v6818 = vpack.c.b16 %v6802, %v6786
    %v6819 = vpack.c.b16 %v6803, %v6787
    %v6820 = vpack.c.b16 %v6804, %v6788
    %v6821 = vpack.c.b16 %v6805, %v6789
    %v6822 = vpack.c.b16 %v6806, %v6790
    %v6823 = vpack.c.b16 %v6807, %v6791
    %v6824 = vpack.c.b16 %v6808, %v6792
    %v6825 = vpack.c.b16 %v6809, %v6793
    %v6826 = vpack.c.b16 %v6810, %v6794
    %v6827 = vpack.c.b16 %v6811, %v6795
    %v6829 = vsel %vm207, %v6661, 0
    %v6832 = vsel %vm2431, %v6812, 0
    %v6835 = vsel %vm2431, %v6813, 0
    %v6838 = vsel %vm2431, %v6814, 0
    %v6841 = vsel %vm2431, %v6815, 0
    %v6844 = vsel %vm2431, %v6816, 0
    %v6847 = vsel %vm2431, %v6817, 0
    %v6850 = vsel %vm2431, %v6818, 0
    %v6853 = vsel %vm2431, %v6819, 0
    %v6856 = vsel %vm2431, %v6820, 0
    %v6859 = vsel %vm2431, %v6821, 0
    %v6862 = vsel %vm2431, %v6822, 0
    %v6865 = vsel %vm2431, %v6823, 0
    %v6868 = vsel %vm2431, %v6824, 0
    %v6871 = vsel %vm2431, %v6825, 0
    %v6874 = vsel %vm2431, %v6826, 0
    %v6877 = vsel %vm2431, %v6827, 0
    %6879 = vmatprep.subr.bf16.mxu0 %v6835
    %6880 = vmatpush1.bf16.msra.mxu0 %v6832
    %6881 = vmatprep.subr.bf16.mxu0 0
    %6882 = vmatpush1.bf16.msra.mxu0 0
    %6883 = vmatprep.subr.bf16.mxu0 0
    %6884 = vmatpush1.bf16.msra.mxu0 0
    %6885 = vmatprep.subr.bf16.mxu0 0
    %6886 = vmatpush1.bf16.msra.mxu0 0
    %6887 = vmatprep.subr.bf16.mxu0 0
    %6888 = vmatpush1.bf16.msra.mxu0 0
    %6889 = vmatprep.subr.bf16.mxu0 0
    %6890 = vmatpush1.bf16.msra.mxu0 0
    %6891 = vmatprep.subr.bf16.mxu0 0
    %6892 = vmatpush1.bf16.msra.mxu0 0
    %6893 = vmatprep.subr.bf16.mxu0 0
    %6894 = vmatpush1.bf16.msra.mxu0 0
    %6895 = vmatprep.subr.bf16.mxu0 0
    %6896 = vmatpush1.bf16.msra.mxu0 0
    %6897 = vmatprep.subr.bf16.mxu0 0
    %6898 = vmatpush1.bf16.msra.mxu0 0
    %6899 = vmatprep.subr.bf16.mxu0 0
    %6900 = vmatpush1.bf16.msra.mxu0 0
    %6901 = vmatprep.subr.bf16.mxu0 0
    %6902 = vmatpush1.bf16.msra.mxu0 0
    %6903 = vmatprep.subr.bf16.mxu0 0
    %6904 = vmatpush1.bf16.msra.mxu0 0
    %6905 = vmatprep.subr.bf16.mxu0 0
    %6906 = vmatpush1.bf16.msra.mxu0 0
    %6907 = vmatprep.subr.bf16.mxu0 0
    %6908 = vmatpush1.bf16.msra.mxu0 0
    %6909 = vmatprep.subr.bf16.mxu0 0
    %6910 = vmatpush1.bf16.msra.mxu0 0
    %6911 = vmatprep.mubr.bf16.mxu0 0
    %6912 = vmatmul.mubr.bf16.gmra.mrb[0].mxu0 %v6829
    %v6913 = vpop.f32.mrb[0].mxu0
    %v6914 = vadd.f32 %v6687, %v6913
    %v6915 = vpop.f32.mrb[0].mxu0
    %v6916 = vadd.f32 %v6691, %v6915
    %v6917 = vpop.f32.mrb[0].mxu0
    %v6918 = vadd.f32 %v6687, %v6917
    %v6919 = vpop.f32.mrb[0].mxu0
    %v6920 = vadd.f32 %v6691, %v6919
    %6921 = vdwg.mxu0
    %6922 = vmatprep.subr.bf16.mxu0 %v6841
    %6923 = vmatpush1.bf16.msra.mxu0 %v6838
    %6924 = vmatprep.subr.bf16.mxu0 0
    %6925 = vmatpush1.bf16.msra.mxu0 0
    %6926 = vmatprep.subr.bf16.mxu0 0
    %6927 = vmatpush1.bf16.msra.mxu0 0
    %6928 = vmatprep.subr.bf16.mxu0 0
    %6929 = vmatpush1.bf16.msra.mxu0 0
    %6930 = vmatprep.subr.bf16.mxu0 0
    %6931 = vmatpush1.bf16.msra.mxu0 0
    %6932 = vmatprep.subr.bf16.mxu0 0
    %6933 = vmatpush1.bf16.msra.mxu0 0
    %6934 = vmatprep.subr.bf16.mxu0 0
    %6935 = vmatpush1.bf16.msra.mxu0 0
    %6936 = vmatprep.subr.bf16.mxu0 0
    %6937 = vmatpush1.bf16.msra.mxu0 0
    %6938 = vmatprep.subr.bf16.mxu0 0
    %6939 = vmatpush1.bf16.msra.mxu0 0
    %6940 = vmatprep.subr.bf16.mxu0 0
    %6941 = vmatpush1.bf16.msra.mxu0 0
    %6942 = vmatprep.subr.bf16.mxu0 0
    %6943 = vmatpush1.bf16.msra.mxu0 0
    %6944 = vmatprep.subr.bf16.mxu0 0
    %6945 = vmatpush1.bf16.msra.mxu0 0
    %6946 = vmatprep.subr.bf16.mxu0 0
    %6947 = vmatpush1.bf16.msra.mxu0 0
    %6948 = vmatprep.subr.bf16.mxu0 0
    %6949 = vmatpush1.bf16.msra.mxu0 0
    %6950 = vmatprep.subr.bf16.mxu0 0
    %6951 = vmatpush1.bf16.msra.mxu0 0
    %6952 = vmatprep.subr.bf16.mxu0 0
    %6953 = vmatpush1.bf16.msra.mxu0 0
    %6954 = vmatprep.mubr.bf16.mxu0 0
    %6955 = vmatmul.mubr.bf16.gmra.mrb[0].mxu0 %v6829
    %v6956 = vpop.f32.mrb[0].mxu0
    %v6957 = vadd.f32 %v6695, %v6956
    %v6958 = vpop.f32.mrb[0].mxu0
    %v6959 = vadd.f32 %v6699, %v6958
    %v6960 = vpop.f32.mrb[0].mxu0
    %v6961 = vadd.f32 %v6695, %v6960
    %v6962 = vpop.f32.mrb[0].mxu0
    %v6963 = vadd.f32 %v6699, %v6962
    %6964 = vdwg.mxu0
    %6965 = vmatprep.subr.bf16.mxu0 %v6847
    %6966 = vmatpush1.bf16.msra.mxu0 %v6844
    %6967 = vmatprep.subr.bf16.mxu0 0
    %6968 = vmatpush1.bf16.msra.mxu0 0
    %6969 = vmatprep.subr.bf16.mxu0 0
    %6970 = vmatpush1.bf16.msra.mxu0 0
    %6971 = vmatprep.subr.bf16.mxu0 0
    %6972 = vmatpush1.bf16.msra.mxu0 0
    %6973 = vmatprep.subr.bf16.mxu0 0
    %6974 = vmatpush1.bf16.msra.mxu0 0
    %6975 = vmatprep.subr.bf16.mxu0 0
    %6976 = vmatpush1.bf16.msra.mxu0 0
    %6977 = vmatprep.subr.bf16.mxu0 0
    %6978 = vmatpush1.bf16.msra.mxu0 0
    %6979 = vmatprep.subr.bf16.mxu0 0
    %6980 = vmatpush1.bf16.msra.mxu0 0
    %6981 = vmatprep.subr.bf16.mxu0 0
    %6982 = vmatpush1.bf16.msra.mxu0 0
    %6983 = vmatprep.subr.bf16.mxu0 0
    %6984 = vmatpush1.bf16.msra.mxu0 0
    %6985 = vmatprep.subr.bf16.mxu0 0
    %6986 = vmatpush1.bf16.msra.mxu0 0
    %6987 = vmatprep.subr.bf16.mxu0 0
    %6988 = vmatpush1.bf16.msra.mxu0 0
    %6989 = vmatprep.subr.bf16.mxu0 0
    %6990 = vmatpush1.bf16.msra.mxu0 0
    %6991 = vmatprep.subr.bf16.mxu0 0
    %6992 = vmatpush1.bf16.msra.mxu0 0
    %6993 = vmatprep.subr.bf16.mxu0 0
    %6994 = vmatpush1.bf16.msra.mxu0 0
    %6995 = vmatprep.subr.bf16.mxu0 0
    %6996 = vmatpush1.bf16.msra.mxu0 0
    %6997 = vmatprep.mubr.bf16.mxu0 0
    %6998 = vmatmul.mubr.bf16.gmra.mrb[0].mxu0 %v6829
    %v6999 = vpop.f32.mrb[0].mxu0
    %v7000 = vadd.f32 %v6703, %v6999
    %v7001 = vpop.f32.mrb[0].mxu0
    %v7002 = vadd.f32 %v6707, %v7001
    %v7003 = vpop.f32.mrb[0].mxu0
    %v7004 = vadd.f32 %v6703, %v7003
    %v7005 = vpop.f32.mrb[0].mxu0
    %v7006 = vadd.f32 %v6707, %v7005
    %7007 = vdwg.mxu0
    %7008 = vmatprep.subr.bf16.mxu0 %v6853
    %7009 = vmatpush1.bf16.msra.mxu0 %v6850
    %7010 = vmatprep.subr.bf16.mxu0 0
    %7011 = vmatpush1.bf16.msra.mxu0 0
    %7012 = vmatprep.subr.bf16.mxu0 0
    %7013 = vmatpush1.bf16.msra.mxu0 0
    %7014 = vmatprep.subr.bf16.mxu0 0
    %7015 = vmatpush1.bf16.msra.mxu0 0
    %7016 = vmatprep.subr.bf16.mxu0 0
    %7017 = vmatpush1.bf16.msra.mxu0 0
    %7018 = vmatprep.subr.bf16.mxu0 0
    %7019 = vmatpush1.bf16.msra.mxu0 0
    %7020 = vmatprep.subr.bf16.mxu0 0
    %7021 = vmatpush1.bf16.msra.mxu0 0
    %7022 = vmatprep.subr.bf16.mxu0 0
    %7023 = vmatpush1.bf16.msra.mxu0 0
    %7024 = vmatprep.subr.bf16.mxu0 0
    %7025 = vmatpush1.bf16.msra.mxu0 0
    %7026 = vmatprep.subr.bf16.mxu0 0
    %7027 = vmatpush1.bf16.msra.mxu0 0
    %7028 = vmatprep.subr.bf16.mxu0 0
    %7029 = vmatpush1.bf16.msra.mxu0 0
    %7030 = vmatprep.subr.bf16.mxu0 0
    %7031 = vmatpush1.bf16.msra.mxu0 0
    %7032 = vmatprep.subr.bf16.mxu0 0
    %7033 = vmatpush1.bf16.msra.mxu0 0
    %7034 = vmatprep.subr.bf16.mxu0 0
    %7035 = vmatpush1.bf16.msra.mxu0 0
    %7036 = vmatprep.subr.bf16.mxu0 0
    %7037 = vmatpush1.bf16.msra.mxu0 0
    %7038 = vmatprep.subr.bf16.mxu0 0
    %7039 = vmatpush1.bf16.msra.mxu0 0
    %7040 = vmatprep.mubr.bf16.mxu0 0
    %7041 = vmatmul.mubr.bf16.gmra.mrb[0].mxu0 %v6829
    %v7042 = vpop.f32.mrb[0].mxu0
    %v7043 = vadd.f32 %v6711, %v7042
    %v7044 = vpop.f32.mrb[0].mxu0
    %v7045 = vadd.f32 %v6715, %v7044
    %v7046 = vpop.f32.mrb[0].mxu0
    %v7047 = vadd.f32 %v6711, %v7046
    %v7048 = vpop.f32.mrb[0].mxu0
    %v7049 = vadd.f32 %v6715, %v7048
    %7050 = vdwg.mxu0
    %7051 = vmatprep.subr.bf16.mxu0 %v6859
    %7052 = vmatpush1.bf16.msra.mxu0 %v6856
    %7053 = vmatprep.subr.bf16.mxu0 0
    %7054 = vmatpush1.bf16.msra.mxu0 0
    %7055 = vmatprep.subr.bf16.mxu0 0
    %7056 = vmatpush1.bf16.msra.mxu0 0
    %7057 = vmatprep.subr.bf16.mxu0 0
    %7058 = vmatpush1.bf16.msra.mxu0 0
    %7059 = vmatprep.subr.bf16.mxu0 0
    %7060 = vmatpush1.bf16.msra.mxu0 0
    %7061 = vmatprep.subr.bf16.mxu0 0
    %7062 = vmatpush1.bf16.msra.mxu0 0
    %7063 = vmatprep.subr.bf16.mxu0 0
    %7064 = vmatpush1.bf16.msra.mxu0 0
    %7065 = vmatprep.subr.bf16.mxu0 0
    %7066 = vmatpush1.bf16.msra.mxu0 0
    %7067 = vmatprep.subr.bf16.mxu0 0
    %7068 = vmatpush1.bf16.msra.mxu0 0
    %7069 = vmatprep.subr.bf16.mxu0 0
    %7070 = vmatpush1.bf16.msra.mxu0 0
    %7071 = vmatprep.subr.bf16.mxu0 0
    %7072 = vmatpush1.bf16.msra.mxu0 0
    %7073 = vmatprep.subr.bf16.mxu0 0
    %7074 = vmatpush1.bf16.msra.mxu0 0
    %7075 = vmatprep.subr.bf16.mxu0 0
    %7076 = vmatpush1.bf16.msra.mxu0 0
    %7077 = vmatprep.subr.bf16.mxu0 0
    %7078 = vmatpush1.bf16.msra.mxu0 0
    %7079 = vmatprep.subr.bf16.mxu0 0
    %7080 = vmatpush1.bf16.msra.mxu0 0
    %7081 = vmatprep.subr.bf16.mxu0 0
    %7082 = vmatpush1.bf16.msra.mxu0 0
    %7083 = vmatprep.mubr.bf16.mxu0 0
    %7084 = vmatmul.mubr.bf16.gmra.mrb[0].mxu0 %v6829
    %v7085 = vpop.f32.mrb[0].mxu0
    %v7086 = vadd.f32 %v6719, %v7085
    %v7087 = vpop.f32.mrb[0].mxu0
    %v7088 = vadd.f32 %v6723, %v7087
    %v7089 = vpop.f32.mrb[0].mxu0
    %v7090 = vadd.f32 %v6719, %v7089
    %v7091 = vpop.f32.mrb[0].mxu0
    %v7092 = vadd.f32 %v6723, %v7091
    %7093 = vdwg.mxu0
    %7094 = vmatprep.subr.bf16.mxu0 %v6865
    %7095 = vmatpush1.bf16.msra.mxu0 %v6862
    %7096 = vmatprep.subr.bf16.mxu0 0
    %7097 = vmatpush1.bf16.msra.mxu0 0
    %7098 = vmatprep.subr.bf16.mxu0 0
    %7099 = vmatpush1.bf16.msra.mxu0 0
    %7100 = vmatprep.subr.bf16.mxu0 0
    %7101 = vmatpush1.bf16.msra.mxu0 0
    %7102 = vmatprep.subr.bf16.mxu0 0
    %7103 = vmatpush1.bf16.msra.mxu0 0
    %7104 = vmatprep.subr.bf16.mxu0 0
    %7105 = vmatpush1.bf16.msra.mxu0 0
    %7106 = vmatprep.subr.bf16.mxu0 0
    %7107 = vmatpush1.bf16.msra.mxu0 0
    %7108 = vmatprep.subr.bf16.mxu0 0
    %7109 = vmatpush1.bf16.msra.mxu0 0
    %7110 = vmatprep.subr.bf16.mxu0 0
    %7111 = vmatpush1.bf16.msra.mxu0 0
    %7112 = vmatprep.subr.bf16.mxu0 0
    %7113 = vmatpush1.bf16.msra.mxu0 0
    %7114 = vmatprep.subr.bf16.mxu0 0
    %7115 = vmatpush1.bf16.msra.mxu0 0
    %7116 = vmatprep.subr.bf16.mxu0 0
    %7117 = vmatpush1.bf16.msra.mxu0 0
    %7118 = vmatprep.subr.bf16.mxu0 0
    %7119 = vmatpush1.bf16.msra.mxu0 0
    %7120 = vmatprep.subr.bf16.mxu0 0
    %7121 = vmatpush1.bf16.msra.mxu0 0
    %7122 = vmatprep.subr.bf16.mxu0 0
    %7123 = vmatpush1.bf16.msra.mxu0 0
    %7124 = vmatprep.subr.bf16.mxu0 0
    %7125 = vmatpush1.bf16.msra.mxu0 0
    %7126 = vmatprep.mubr.bf16.mxu0 0
    %7127 = vmatmul.mubr.bf16.gmra.mrb[0].mxu0 %v6829
    %v7128 = vpop.f32.mrb[0].mxu0
    %v7129 = vadd.f32 %v6727, %v7128
    %v7130 = vpop.f32.mrb[0].mxu0
    %v7131 = vadd.f32 %v6731, %v7130
    %v7132 = vpop.f32.mrb[0].mxu0
    %v7133 = vadd.f32 %v6727, %v7132
    %v7134 = vpop.f32.mrb[0].mxu0
    %v7135 = vadd.f32 %v6731, %v7134
    %7136 = vdwg.mxu0
    %7137 = vmatprep.subr.bf16.mxu0 %v6871
    %7138 = vmatpush1.bf16.msra.mxu0 %v6868
    %7139 = vmatprep.subr.bf16.mxu0 0
    %7140 = vmatpush1.bf16.msra.mxu0 0
    %7141 = vmatprep.subr.bf16.mxu0 0
    %7142 = vmatpush1.bf16.msra.mxu0 0
    %7143 = vmatprep.subr.bf16.mxu0 0
    %7144 = vmatpush1.bf16.msra.mxu0 0
    %7145 = vmatprep.subr.bf16.mxu0 0
    %7146 = vmatpush1.bf16.msra.mxu0 0
    %7147 = vmatprep.subr.bf16.mxu0 0
    %7148 = vmatpush1.bf16.msra.mxu0 0
    %7149 = vmatprep.subr.bf16.mxu0 0
    %7150 = vmatpush1.bf16.msra.mxu0 0
    %7151 = vmatprep.subr.bf16.mxu0 0
    %7152 = vmatpush1.bf16.msra.mxu0 0
    %7153 = vmatprep.subr.bf16.mxu0 0
    %7154 = vmatpush1.bf16.msra.mxu0 0
    %7155 = vmatprep.subr.bf16.mxu0 0
    %7156 = vmatpush1.bf16.msra.mxu0 0
    %7157 = vmatprep.subr.bf16.mxu0 0
    %7158 = vmatpush1.bf16.msra.mxu0 0
    %7159 = vmatprep.subr.bf16.mxu0 0
    %7160 = vmatpush1.bf16.msra.mxu0 0
    %7161 = vmatprep.subr.bf16.mxu0 0
    %7162 = vmatpush1.bf16.msra.mxu0 0
    %7163 = vmatprep.subr.bf16.mxu0 0
    %7164 = vmatpush1.bf16.msra.mxu0 0
    %7165 = vmatprep.subr.bf16.mxu0 0
    %7166 = vmatpush1.bf16.msra.mxu0 0
    %7167 = vmatprep.subr.bf16.mxu0 0
    %7168 = vmatpush1.bf16.msra.mxu0 0
    %7169 = vmatprep.mubr.bf16.mxu0 0
    %7170 = vmatmul.mubr.bf16.gmra.mrb[0].mxu0 %v6829
    %v7171 = vpop.f32.mrb[0].mxu0
    %v7172 = vadd.f32 %v6735, %v7171
    %v7173 = vpop.f32.mrb[0].mxu0
    %v7174 = vadd.f32 %v6739, %v7173
    %v7175 = vpop.f32.mrb[0].mxu0
    %v7176 = vadd.f32 %v6735, %v7175
    %v7177 = vpop.f32.mrb[0].mxu0
    %v7178 = vadd.f32 %v6739, %v7177
    %7179 = vdwg.mxu0
    %7180 = vmatprep.subr.bf16.mxu0 %v6877
    %7181 = vmatpush1.bf16.msra.mxu0 %v6874
    %7182 = vmatprep.subr.bf16.mxu0 0
    %7183 = vmatpush1.bf16.msra.mxu0 0
    %7184 = vmatprep.subr.bf16.mxu0 0
    %7185 = vmatpush1.bf16.msra.mxu0 0
    %7186 = vmatprep.subr.bf16.mxu0 0
    %7187 = vmatpush1.bf16.msra.mxu0 0
    %7188 = vmatprep.subr.bf16.mxu0 0
    %7189 = vmatpush1.bf16.msra.mxu0 0
    %7190 = vmatprep.subr.bf16.mxu0 0
    %7191 = vmatpush1.bf16.msra.mxu0 0
    %7192 = vmatprep.subr.bf16.mxu0 0
    %7193 = vmatpush1.bf16.msra.mxu0 0
    %7194 = vmatprep.subr.bf16.mxu0 0
    %7195 = vmatpush1.bf16.msra.mxu0 0
    %7196 = vmatprep.subr.bf16.mxu0 0
    %7197 = vmatpush1.bf16.msra.mxu0 0
    %7198 = vmatprep.subr.bf16.mxu0 0
    %7199 = vmatpush1.bf16.msra.mxu0 0
    %7200 = vmatprep.subr.bf16.mxu0 0
    %7201 = vmatpush1.bf16.msra.mxu0 0
    %7202 = vmatprep.subr.bf16.mxu0 0
    %7203 = vmatpush1.bf16.msra.mxu0 0
    %7204 = vmatprep.subr.bf16.mxu0 0
    %7205 = vmatpush1.bf16.msra.mxu0 0
    %7206 = vmatprep.subr.bf16.mxu0 0
    %7207 = vmatpush1.bf16.msra.mxu0 0
    %7208 = vmatprep.subr.bf16.mxu0 0
    %7209 = vmatpush1.bf16.msra.mxu0 0
    %7210 = vmatprep.subr.bf16.mxu0 0
    %7211 = vmatpush1.bf16.msra.mxu0 0
    %7212 = vmatprep.mubr.bf16.mxu0 0
    %7213 = vmatmul.mubr.bf16.gmra.mrb[0].mxu0 %v6829
    %v7214 = vpop.f32.mrb[0].mxu0
    %v7215 = vadd.f32 %v6743, %v7214
    %v7216 = vpop.f32.mrb[0].mxu0
    %v7217 = vadd.f32 %v6747, %v7216
    %v7218 = vpop.f32.mrb[0].mxu0
    %v7219 = vadd.f32 %v6743, %v7218
    %v7220 = vpop.f32.mrb[0].mxu0
    %v7221 = vadd.f32 %v6747, %v7220
    %7222 = vdwg.mxu0
    %v7223 = vmax.f32 %v6914, 0.0
    %v7224 = vmax.f32 %v6916, 0.0
    %v7225 = vmax.f32 %v6957, 0.0
    %v7226 = vmax.f32 %v6959, 0.0
    %v7227 = vmax.f32 %v7000, 0.0
    %v7228 = vmax.f32 %v7002, 0.0
    %v7229 = vmax.f32 %v7043, 0.0
    %v7230 = vmax.f32 %v7045, 0.0
    %v7231 = vmax.f32 %v7086, 0.0
    %v7232 = vmax.f32 %v7088, 0.0
    %v7233 = vmax.f32 %v7129, 0.0
    %v7234 = vmax.f32 %v7131, 0.0
    %v7235 = vmax.f32 %v7172, 0.0
    %v7236 = vmax.f32 %v7174, 0.0
    %v7237 = vmax.f32 %v7215, 0.0
    %v7238 = vmax.f32 %v7217, 0.0
    %v7239 = vmax.f32 %v6918, 0.0
    %v7240 = vmax.f32 %v6920, 0.0
    %v7241 = vmax.f32 %v6961, 0.0
    %v7242 = vmax.f32 %v6963, 0.0
    %v7243 = vmax.f32 %v7004, 0.0
    %v7244 = vmax.f32 %v7006, 0.0
    %v7245 = vmax.f32 %v7047, 0.0
    %v7246 = vmax.f32 %v7049, 0.0
    %v7247 = vmax.f32 %v7090, 0.0
    %v7248 = vmax.f32 %v7092, 0.0
    %v7249 = vmax.f32 %v7133, 0.0
    %v7250 = vmax.f32 %v7135, 0.0
    %v7251 = vmax.f32 %v7176, 0.0
    %v7252 = vmax.f32 %v7178, 0.0
    %v7253 = vmax.f32 %v7219, 0.0
    %v7254 = vmax.f32 %v7221, 0.0
    %v7255 = vpack.c.bf16 %v7239, %v7223
    %v7256 = vpack.c.bf16 %v7240, %v7224
    %v7257 = vpack.c.bf16 %v7241, %v7225
    %v7258 = vpack.c.bf16 %v7242, %v7226
    %v7259 = vpack.c.bf16 %v7243, %v7227
    %v7260 = vpack.c.bf16 %v7244, %v7228
    %v7261 = vpack.c.bf16 %v7245, %v7229
    %v7262 = vpack.c.bf16 %v7246, %v7230
    %v7263 = vpack.c.bf16 %v7247, %v7231
    %v7264 = vpack.c.bf16 %v7248, %v7232
    %v7265 = vpack.c.bf16 %v7249, %v7233
    %v7266 = vpack.c.bf16 %v7250, %v7234
    %v7267 = vpack.c.bf16 %v7251, %v7235
    %v7268 = vpack.c.bf16 %v7252, %v7236
    %v7269 = vpack.c.bf16 %v7253, %v7237
    %v7270 = vpack.c.bf16 %v7254, %v7238
    %s7271 = scalar_lea.vmem %s6, 1024
    %v7272 = vld [vmem:[%s7271] sm:$0xf]
    %v7273 = vld [vmem:[%s7271 + $0x4] sm:$0xf]
    %v7274 = vld [vmem:[%s7271 + $0x8] sm:$0xf]
    %v7275 = vld [vmem:[%s7271 + $0xc] sm:$0xf]
    %v7276 = vld [vmem:[%s7271 + $0x10] sm:$0xf]
    %v7277 = vld [vmem:[%s7271 + $0x14] sm:$0xf]
    %v7278 = vld [vmem:[%s7271 + $0x18] sm:$0xf]
    %v7279 = vld [vmem:[%s7271 + $0x1c] sm:$0xf]
    %v7280 = vld [vmem:[%s7271 + $0x20] sm:$0xf]
    %v7281 = vld [vmem:[%s7271 + $0x24] sm:$0xf]
    %v7282 = vld [vmem:[%s7271 + $0x28] sm:$0xf]
    %v7283 = vld [vmem:[%s7271 + $0x2c] sm:$0xf]
    %v7284 = vld [vmem:[%s7271 + $0x30] sm:$0xf]
    %v7285 = vld [vmem:[%s7271 + $0x34] sm:$0xf]
    %v7286 = vld [vmem:[%s7271 + $0x38] sm:$0xf]
    %v7287 = vld [vmem:[%s7271 + $0x3c] sm:$0xf]
    %v7288 = vld [vmem:[%s7271 + $0x40] sm:$0xf]
    %v7289 = vld [vmem:[%s7271 + $0x44] sm:$0xf]
    %v7290 = vld [vmem:[%s7271 + $0x48] sm:$0xf]
    %v7291 = vld [vmem:[%s7271 + $0x4c] sm:$0xf]
    %v7292 = vld [vmem:[%s7271 + $0x50] sm:$0xf]
    %v7293 = vld [vmem:[%s7271 + $0x54] sm:$0xf]
    %v7294 = vld [vmem:[%s7271 + $0x58] sm:$0xf]
    %v7295 = vld [vmem:[%s7271 + $0x5c] sm:$0xf]
    %v7296 = vld [vmem:[%s7271 + $0x60] sm:$0xf]
    %v7297 = vld [vmem:[%s7271 + $0x64] sm:$0xf]
    %v7298 = vld [vmem:[%s7271 + $0x68] sm:$0xf]
    %v7299 = vld [vmem:[%s7271 + $0x6c] sm:$0xf]
    %v7300 = vld [vmem:[%s7271 + $0x70] sm:$0xf]
    %v7301 = vld [vmem:[%s7271 + $0x74] sm:$0xf]
    %v7302 = vld [vmem:[%s7271 + $0x78] sm:$0xf]
    %v7303 = vld [vmem:[%s7271 + $0x7c] sm:$0xf]
    %v7304 = vld [vmem:[%s7271 + $0x80] sm:$0xf]
    %v7305 = vld [vmem:[%s7271 + $0x84] sm:$0xf]
    %v7306 = vld [vmem:[%s7271 + $0x88] sm:$0xf]
    %v7307 = vld [vmem:[%s7271 + $0x8c] sm:$0xf]
    %v7308 = vld [vmem:[%s7271 + $0x90] sm:$0xf]
    %v7309 = vld [vmem:[%s7271 + $0x94] sm:$0xf]
    %v7310 = vld [vmem:[%s7271 + $0x98] sm:$0xf]
    %v7311 = vld [vmem:[%s7271 + $0x9c] sm:$0xf]
    %v7312 = vld [vmem:[%s7271 + $0xa0] sm:$0xf]
    %v7313 = vld [vmem:[%s7271 + $0xa4] sm:$0xf]
    %v7314 = vld [vmem:[%s7271 + $0xa8] sm:$0xf]
    %v7315 = vld [vmem:[%s7271 + $0xac] sm:$0xf]
    %v7316 = vld [vmem:[%s7271 + $0xb0] sm:$0xf]
    %v7317 = vld [vmem:[%s7271 + $0xb4] sm:$0xf]
    %v7318 = vld [vmem:[%s7271 + $0xb8] sm:$0xf]
    %v7319 = vld [vmem:[%s7271 + $0xbc] sm:$0xf]
    %v7320 = vld [vmem:[%s7271 + $0xc0] sm:$0xf]
    %v7321 = vld [vmem:[%s7271 + $0xc4] sm:$0xf]
    %v7322 = vld [vmem:[%s7271 + $0xc8] sm:$0xf]
    %v7323 = vld [vmem:[%s7271 + $0xcc] sm:$0xf]
    %v7324 = vld [vmem:[%s7271 + $0xd0] sm:$0xf]
    %v7325 = vld [vmem:[%s7271 + $0xd4] sm:$0xf]
    %v7326 = vld [vmem:[%s7271 + $0xd8] sm:$0xf]
    %v7327 = vld [vmem:[%s7271 + $0xdc] sm:$0xf]
    %v7328 = vld [vmem:[%s7271 + $0xe0] sm:$0xf]
    %v7329 = vld [vmem:[%s7271 + $0xe4] sm:$0xf]
    %v7330 = vld [vmem:[%s7271 + $0xe8] sm:$0xf]
    %v7331 = vld [vmem:[%s7271 + $0xec] sm:$0xf]
    %v7332 = vld [vmem:[%s7271 + $0xf0] sm:$0xf]
    %v7333 = vld [vmem:[%s7271 + $0xf4] sm:$0xf]
    %v7334 = vld [vmem:[%s7271 + $0xf8] sm:$0xf]
    %v7335 = vld [vmem:[%s7271 + $0xfc] sm:$0xf]
    %v7336 = vld [vmem:[%s7271 + $0x100] sm:$0xf]
    %v7337 = vld [vmem:[%s7271 + $0x104] sm:$0xf]
    %v7338 = vld [vmem:[%s7271 + $0x108] sm:$0xf]
    %v7339 = vld [vmem:[%s7271 + $0x10c] sm:$0xf]
    %v7340 = vld [vmem:[%s7271 + $0x110] sm:$0xf]
    %v7341 = vld [vmem:[%s7271 + $0x114] sm:$0xf]
    %v7342 = vld [vmem:[%s7271 + $0x118] sm:$0xf]
    %v7343 = vld [vmem:[%s7271 + $0x11c] sm:$0xf]
    %v7344 = vld [vmem:[%s7271 + $0x120] sm:$0xf]
    %v7345 = vld [vmem:[%s7271 + $0x124] sm:$0xf]
    %v7346 = vld [vmem:[%s7271 + $0x128] sm:$0xf]
    %v7347 = vld [vmem:[%s7271 + $0x12c] sm:$0xf]
    %v7348 = vld [vmem:[%s7271 + $0x130] sm:$0xf]
    %v7349 = vld [vmem:[%s7271 + $0x134] sm:$0xf]
    %v7350 = vld [vmem:[%s7271 + $0x138] sm:$0xf]
    %v7351 = vld [vmem:[%s7271 + $0x13c] sm:$0xf]
    %v7352 = vld [vmem:[%s7271 + $0x140] sm:$0xf]
    %v7353 = vld [vmem:[%s7271 + $0x144] sm:$0xf]
    %v7354 = vld [vmem:[%s7271 + $0x148] sm:$0xf]
    %v7355 = vld [vmem:[%s7271 + $0x14c] sm:$0xf]
    %v7356 = vld [vmem:[%s7271 + $0x150] sm:$0xf]
    %v7357 = vld [vmem:[%s7271 + $0x154] sm:$0xf]
    %v7358 = vld [vmem:[%s7271 + $0x158] sm:$0xf]
    %v7359 = vld [vmem:[%s7271 + $0x15c] sm:$0xf]
    %v7360 = vld [vmem:[%s7271 + $0x160] sm:$0xf]
    %v7361 = vld [vmem:[%s7271 + $0x164] sm:$0xf]
    %v7362 = vld [vmem:[%s7271 + $0x168] sm:$0xf]
    %v7363 = vld [vmem:[%s7271 + $0x16c] sm:$0xf]
    %v7364 = vld [vmem:[%s7271 + $0x170] sm:$0xf]
    %v7365 = vld [vmem:[%s7271 + $0x174] sm:$0xf]
    %v7366 = vld [vmem:[%s7271 + $0x178] sm:$0xf]
    %v7367 = vld [vmem:[%s7271 + $0x17c] sm:$0xf]
    %v7368 = vld [vmem:[%s7271 + $0x180] sm:$0xf]
    %v7369 = vld [vmem:[%s7271 + $0x184] sm:$0xf]
    %v7370 = vld [vmem:[%s7271 + $0x188] sm:$0xf]
    %v7371 = vld [vmem:[%s7271 + $0x18c] sm:$0xf]
    %v7372 = vld [vmem:[%s7271 + $0x190] sm:$0xf]
    %v7373 = vld [vmem:[%s7271 + $0x194] sm:$0xf]
    %v7374 = vld [vmem:[%s7271 + $0x198] sm:$0xf]
    %v7375 = vld [vmem:[%s7271 + $0x19c] sm:$0xf]
    %v7376 = vld [vmem:[%s7271 + $0x1a0] sm:$0xf]
    %v7377 = vld [vmem:[%s7271 + $0x1a4] sm:$0xf]
    %v7378 = vld [vmem:[%s7271 + $0x1a8] sm:$0xf]
    %v7379 = vld [vmem:[%s7271 + $0x1ac] sm:$0xf]
    %v7380 = vld [vmem:[%s7271 + $0x1b0] sm:$0xf]
    %v7381 = vld [vmem:[%s7271 + $0x1b4] sm:$0xf]
    %v7382 = vld [vmem:[%s7271 + $0x1b8] sm:$0xf]
    %v7383 = vld [vmem:[%s7271 + $0x1bc] sm:$0xf]
    %v7384 = vld [vmem:[%s7271 + $0x1c0] sm:$0xf]
    %v7385 = vld [vmem:[%s7271 + $0x1c4] sm:$0xf]
    %v7386 = vld [vmem:[%s7271 + $0x1c8] sm:$0xf]
    %v7387 = vld [vmem:[%s7271 + $0x1cc] sm:$0xf]
    %v7388 = vld [vmem:[%s7271 + $0x1d0] sm:$0xf]
    %v7389 = vld [vmem:[%s7271 + $0x1d4] sm:$0xf]
    %v7390 = vld [vmem:[%s7271 + $0x1d8] sm:$0xf]
    %v7391 = vld [vmem:[%s7271 + $0x1dc] sm:$0xf]
    %v7392 = vld [vmem:[%s7271 + $0x1e0] sm:$0xf]
    %v7393 = vld [vmem:[%s7271 + $0x1e4] sm:$0xf]
    %v7394 = vld [vmem:[%s7271 + $0x1e8] sm:$0xf]
    %v7395 = vld [vmem:[%s7271 + $0x1ec] sm:$0xf]
    %v7396 = vld [vmem:[%s7271 + $0x1f0] sm:$0xf]
    %v7397 = vld [vmem:[%s7271 + $0x1f4] sm:$0xf]
    %v7398 = vld [vmem:[%s7271 + $0x1f8] sm:$0xf]
    %v7399 = vld [vmem:[%s7271 + $0x1fc] sm:$0xf]
    %v7400 = vld [vmem:[%s7271 + $0x200] sm:$0xf]
    %v7401 = vld [vmem:[%s7271 + $0x204] sm:$0xf]
    %v7402 = vld [vmem:[%s7271 + $0x208] sm:$0xf]
    %v7403 = vld [vmem:[%s7271 + $0x20c] sm:$0xf]
    %v7404 = vld [vmem:[%s7271 + $0x210] sm:$0xf]
    %v7405 = vld [vmem:[%s7271 + $0x214] sm:$0xf]
    %v7406 = vld [vmem:[%s7271 + $0x218] sm:$0xf]
    %v7407 = vld [vmem:[%s7271 + $0x21c] sm:$0xf]
    %v7408 = vld [vmem:[%s7271 + $0x220] sm:$0xf]
    %v7409 = vld [vmem:[%s7271 + $0x224] sm:$0xf]
    %v7410 = vld [vmem:[%s7271 + $0x228] sm:$0xf]
    %v7411 = vld [vmem:[%s7271 + $0x22c] sm:$0xf]
    %v7412 = vld [vmem:[%s7271 + $0x230] sm:$0xf]
    %v7413 = vld [vmem:[%s7271 + $0x234] sm:$0xf]
    %v7414 = vld [vmem:[%s7271 + $0x238] sm:$0xf]
    %v7415 = vld [vmem:[%s7271 + $0x23c] sm:$0xf]
    %v7416 = vld [vmem:[%s7271 + $0x240] sm:$0xf]
    %v7417 = vld [vmem:[%s7271 + $0x244] sm:$0xf]
    %v7418 = vld [vmem:[%s7271 + $0x248] sm:$0xf]
    %v7419 = vld [vmem:[%s7271 + $0x24c] sm:$0xf]
    %v7420 = vld [vmem:[%s7271 + $0x250] sm:$0xf]
    %v7421 = vld [vmem:[%s7271 + $0x254] sm:$0xf]
    %v7422 = vld [vmem:[%s7271 + $0x258] sm:$0xf]
    %v7423 = vld [vmem:[%s7271 + $0x25c] sm:$0xf]
    %v7424 = vld [vmem:[%s7271 + $0x260] sm:$0xf]
    %v7425 = vld [vmem:[%s7271 + $0x264] sm:$0xf]
    %v7426 = vld [vmem:[%s7271 + $0x268] sm:$0xf]
    %v7427 = vld [vmem:[%s7271 + $0x26c] sm:$0xf]
    %v7428 = vld [vmem:[%s7271 + $0x270] sm:$0xf]
    %v7429 = vld [vmem:[%s7271 + $0x274] sm:$0xf]
    %v7430 = vld [vmem:[%s7271 + $0x278] sm:$0xf]
    %v7431 = vld [vmem:[%s7271 + $0x27c] sm:$0xf]
    %v7432 = vld [vmem:[%s7271 + $0x280] sm:$0xf]
    %v7433 = vld [vmem:[%s7271 + $0x284] sm:$0xf]
    %v7434 = vld [vmem:[%s7271 + $0x288] sm:$0xf]
    %v7435 = vld [vmem:[%s7271 + $0x28c] sm:$0xf]
    %v7436 = vld [vmem:[%s7271 + $0x290] sm:$0xf]
    %v7437 = vld [vmem:[%s7271 + $0x294] sm:$0xf]
    %v7438 = vld [vmem:[%s7271 + $0x298] sm:$0xf]
    %v7439 = vld [vmem:[%s7271 + $0x29c] sm:$0xf]
    %v7440 = vld [vmem:[%s7271 + $0x2a0] sm:$0xf]
    %v7441 = vld [vmem:[%s7271 + $0x2a4] sm:$0xf]
    %v7442 = vld [vmem:[%s7271 + $0x2a8] sm:$0xf]
    %v7443 = vld [vmem:[%s7271 + $0x2ac] sm:$0xf]
    %v7444 = vld [vmem:[%s7271 + $0x2b0] sm:$0xf]
    %v7445 = vld [vmem:[%s7271 + $0x2b4] sm:$0xf]
    %v7446 = vld [vmem:[%s7271 + $0x2b8] sm:$0xf]
    %v7447 = vld [vmem:[%s7271 + $0x2bc] sm:$0xf]
    %v7448 = vld [vmem:[%s7271 + $0x2c0] sm:$0xf]
    %v7449 = vld [vmem:[%s7271 + $0x2c4] sm:$0xf]
    %v7450 = vld [vmem:[%s7271 + $0x2c8] sm:$0xf]
    %v7451 = vld [vmem:[%s7271 + $0x2cc] sm:$0xf]
    %v7452 = vld [vmem:[%s7271 + $0x2d0] sm:$0xf]
    %v7453 = vld [vmem:[%s7271 + $0x2d4] sm:$0xf]
    %v7454 = vld [vmem:[%s7271 + $0x2d8] sm:$0xf]
    %v7455 = vld [vmem:[%s7271 + $0x2dc] sm:$0xf]
    %v7456 = vld [vmem:[%s7271 + $0x2e0] sm:$0xf]
    %v7457 = vld [vmem:[%s7271 + $0x2e4] sm:$0xf]
    %v7458 = vld [vmem:[%s7271 + $0x2e8] sm:$0xf]
    %v7459 = vld [vmem:[%s7271 + $0x2ec] sm:$0xf]
    %v7460 = vld [vmem:[%s7271 + $0x2f0] sm:$0xf]
    %v7461 = vld [vmem:[%s7271 + $0x2f4] sm:$0xf]
    %v7462 = vld [vmem:[%s7271 + $0x2f8] sm:$0xf]
    %v7463 = vld [vmem:[%s7271 + $0x2fc] sm:$0xf]
    %v7464 = vld [vmem:[%s7271 + $0x300] sm:$0xf]
    %v7465 = vld [vmem:[%s7271 + $0x304] sm:$0xf]
    %v7466 = vld [vmem:[%s7271 + $0x308] sm:$0xf]
    %v7467 = vld [vmem:[%s7271 + $0x30c] sm:$0xf]
    %v7468 = vld [vmem:[%s7271 + $0x310] sm:$0xf]
    %v7469 = vld [vmem:[%s7271 + $0x314] sm:$0xf]
    %v7470 = vld [vmem:[%s7271 + $0x318] sm:$0xf]
    %v7471 = vld [vmem:[%s7271 + $0x31c] sm:$0xf]
    %v7472 = vld [vmem:[%s7271 + $0x320] sm:$0xf]
    %v7473 = vld [vmem:[%s7271 + $0x324] sm:$0xf]
    %v7474 = vld [vmem:[%s7271 + $0x328] sm:$0xf]
    %v7475 = vld [vmem:[%s7271 + $0x32c] sm:$0xf]
    %v7476 = vld [vmem:[%s7271 + $0x330] sm:$0xf]
    %v7477 = vld [vmem:[%s7271 + $0x334] sm:$0xf]
    %v7478 = vld [vmem:[%s7271 + $0x338] sm:$0xf]
    %v7479 = vld [vmem:[%s7271 + $0x33c] sm:$0xf]
    %v7480 = vld [vmem:[%s7271 + $0x340] sm:$0xf]
    %v7481 = vld [vmem:[%s7271 + $0x344] sm:$0xf]
    %v7482 = vld [vmem:[%s7271 + $0x348] sm:$0xf]
    %v7483 = vld [vmem:[%s7271 + $0x34c] sm:$0xf]
    %v7484 = vld [vmem:[%s7271 + $0x350] sm:$0xf]
    %v7485 = vld [vmem:[%s7271 + $0x354] sm:$0xf]
    %v7486 = vld [vmem:[%s7271 + $0x358] sm:$0xf]
    %v7487 = vld [vmem:[%s7271 + $0x35c] sm:$0xf]
    %v7488 = vld [vmem:[%s7271 + $0x360] sm:$0xf]
    %v7489 = vld [vmem:[%s7271 + $0x364] sm:$0xf]
    %v7490 = vld [vmem:[%s7271 + $0x368] sm:$0xf]
    %v7491 = vld [vmem:[%s7271 + $0x36c] sm:$0xf]
    %v7492 = vld [vmem:[%s7271 + $0x370] sm:$0xf]
    %v7493 = vld [vmem:[%s7271 + $0x374] sm:$0xf]
    %v7494 = vld [vmem:[%s7271 + $0x378] sm:$0xf]
    %v7495 = vld [vmem:[%s7271 + $0x37c] sm:$0xf]
    %v7496 = vld [vmem:[%s7271 + $0x380] sm:$0xf]
    %v7497 = vld [vmem:[%s7271 + $0x384] sm:$0xf]
    %v7498 = vld [vmem:[%s7271 + $0x388] sm:$0xf]
    %v7499 = vld [vmem:[%s7271 + $0x38c] sm:$0xf]
    %v7500 = vld [vmem:[%s7271 + $0x390] sm:$0xf]
    %v7501 = vld [vmem:[%s7271 + $0x394] sm:$0xf]
    %v7502 = vld [vmem:[%s7271 + $0x398] sm:$0xf]
    %v7503 = vld [vmem:[%s7271 + $0x39c] sm:$0xf]
    %v7504 = vld [vmem:[%s7271 + $0x3a0] sm:$0xf]
    %v7505 = vld [vmem:[%s7271 + $0x3a4] sm:$0xf]
    %v7506 = vld [vmem:[%s7271 + $0x3a8] sm:$0xf]
    %v7507 = vld [vmem:[%s7271 + $0x3ac] sm:$0xf]
    %v7508 = vld [vmem:[%s7271 + $0x3b0] sm:$0xf]
    %v7509 = vld [vmem:[%s7271 + $0x3b4] sm:$0xf]
    %v7510 = vld [vmem:[%s7271 + $0x3b8] sm:$0xf]
    %v7511 = vld [vmem:[%s7271 + $0x3bc] sm:$0xf]
    %v7512 = vld [vmem:[%s7271 + $0x3c0] sm:$0xf]
    %v7513 = vld [vmem:[%s7271 + $0x3c4] sm:$0xf]
    %v7514 = vld [vmem:[%s7271 + $0x3c8] sm:$0xf]
    %v7515 = vld [vmem:[%s7271 + $0x3cc] sm:$0xf]
    %v7516 = vld [vmem:[%s7271 + $0x3d0] sm:$0xf]
    %v7517 = vld [vmem:[%s7271 + $0x3d4] sm:$0xf]
    %v7518 = vld [vmem:[%s7271 + $0x3d8] sm:$0xf]
    %v7519 = vld [vmem:[%s7271 + $0x3dc] sm:$0xf]
    %v7520 = vld [vmem:[%s7271 + $0x3e0] sm:$0xf]
    %v7521 = vld [vmem:[%s7271 + $0x3e4] sm:$0xf]
    %v7522 = vld [vmem:[%s7271 + $0x3e8] sm:$0xf]
    %v7523 = vld [vmem:[%s7271 + $0x3ec] sm:$0xf]
    %v7524 = vld [vmem:[%s7271 + $0x3f0] sm:$0xf]
    %v7525 = vld [vmem:[%s7271 + $0x3f4] sm:$0xf]
    %v7526 = vld [vmem:[%s7271 + $0x3f8] sm:$0xf]
    %v7527 = vld [vmem:[%s7271 + $0x3fc] sm:$0xf]
    %v7528 = vlaneseq
    %v7529 = vshrl.u32 %v7528, 7
    %v7530 = vsub.s32 6, %v7529
    %v7531 = vrot.slane %v4613, %v7530
    %v7788 = vunpack.c.l.b16 %v7272
    %v7789 = vunpack.c.l.b16 %v7273
    %v7790 = vunpack.c.l.b16 %v7274
    %v7791 = vunpack.c.l.b16 %v7275
    %v7792 = vunpack.c.l.b16 %v7276
    %v7793 = vunpack.c.l.b16 %v7277
    %v7794 = vunpack.c.l.b16 %v7278
    %v7795 = vunpack.c.l.b16 %v7279
    %v7796 = vunpack.c.l.b16 %v7280
    %v7797 = vunpack.c.l.b16 %v7281
    %v7798 = vunpack.c.l.b16 %v7282
    %v7799 = vunpack.c.l.b16 %v7283
    %v7800 = vunpack.c.l.b16 %v7284
    %v7801 = vunpack.c.l.b16 %v7285
    %v7802 = vunpack.c.l.b16 %v7286
    %v7803 = vunpack.c.l.b16 %v7287
    %v7804 = vunpack.c.l.b16 %v7288
    %v7805 = vunpack.c.l.b16 %v7289
    %v7806 = vunpack.c.l.b16 %v7290
    %v7807 = vunpack.c.l.b16 %v7291
    %v7808 = vunpack.c.l.b16 %v7292
    %v7809 = vunpack.c.l.b16 %v7293
    %v7810 = vunpack.c.l.b16 %v7294
    %v7811 = vunpack.c.l.b16 %v7295
    %v7812 = vunpack.c.l.b16 %v7296
    %v7813 = vunpack.c.l.b16 %v7297
    %v7814 = vunpack.c.l.b16 %v7298
    %v7815 = vunpack.c.l.b16 %v7299
    %v7816 = vunpack.c.l.b16 %v7300
    %v7817 = vunpack.c.l.b16 %v7301
    %v7818 = vunpack.c.l.b16 %v7302
    %v7819 = vunpack.c.l.b16 %v7303
    %v7820 = vunpack.c.l.b16 %v7304
    %v7821 = vunpack.c.l.b16 %v7305
    %v7822 = vunpack.c.l.b16 %v7306
    %v7823 = vunpack.c.l.b16 %v7307
    %v7824 = vunpack.c.l.b16 %v7308
    %v7825 = vunpack.c.l.b16 %v7309
    %v7826 = vunpack.c.l.b16 %v7310
    %v7827 = vunpack.c.l.b16 %v7311
    %v7828 = vunpack.c.l.b16 %v7312
    %v7829 = vunpack.c.l.b16 %v7313
    %v7830 = vunpack.c.l.b16 %v7314
    %v7831 = vunpack.c.l.b16 %v7315
    %v7832 = vunpack.c.l.b16 %v7316
    %v7833 = vunpack.c.l.b16 %v7317
    %v7834 = vunpack.c.l.b16 %v7318
    %v7835 = vunpack.c.l.b16 %v7319
    %v7836 = vunpack.c.l.b16 %v7320
    %v7837 = vunpack.c.l.b16 %v7321
    %v7838 = vunpack.c.l.b16 %v7322
    %v7839 = vunpack.c.l.b16 %v7323
    %v7840 = vunpack.c.l.b16 %v7324
    %v7841 = vunpack.c.l.b16 %v7325
    %v7842 = vunpack.c.l.b16 %v7326
    %v7843 = vunpack.c.l.b16 %v7327
    %v7844 = vunpack.c.l.b16 %v7328
    %v7845 = vunpack.c.l.b16 %v7329
    %v7846 = vunpack.c.l.b16 %v7330
    %v7847 = vunpack.c.l.b16 %v7331
    %v7848 = vunpack.c.l.b16 %v7332
    %v7849 = vunpack.c.l.b16 %v7333
    %v7850 = vunpack.c.l.b16 %v7334
    %v7851 = vunpack.c.l.b16 %v7335
    %v7852 = vunpack.c.l.b16 %v7336
    %v7853 = vunpack.c.l.b16 %v7337
    %v7854 = vunpack.c.l.b16 %v7338
    %v7855 = vunpack.c.l.b16 %v7339
    %v7856 = vunpack.c.l.b16 %v7340
    %v7857 = vunpack.c.l.b16 %v7341
    %v7858 = vunpack.c.l.b16 %v7342
    %v7859 = vunpack.c.l.b16 %v7343
    %v7860 = vunpack.c.l.b16 %v7344
    %v7861 = vunpack.c.l.b16 %v7345
    %v7862 = vunpack.c.l.b16 %v7346
    %v7863 = vunpack.c.l.b16 %v7347
    %v7864 = vunpack.c.l.b16 %v7348
    %v7865 = vunpack.c.l.b16 %v7349
    %v7866 = vunpack.c.l.b16 %v7350
    %v7867 = vunpack.c.l.b16 %v7351
    %v7868 = vunpack.c.l.b16 %v7352
    %v7869 = vunpack.c.l.b16 %v7353
    %v7870 = vunpack.c.l.b16 %v7354
    %v7871 = vunpack.c.l.b16 %v7355
    %v7872 = vunpack.c.l.b16 %v7356
    %v7873 = vunpack.c.l.b16 %v7357
    %v7874 = vunpack.c.l.b16 %v7358
    %v7875 = vunpack.c.l.b16 %v7359
    %v7876 = vunpack.c.l.b16 %v7360
    %v7877 = vunpack.c.l.b16 %v7361
    %v7878 = vunpack.c.l.b16 %v7362
    %v7879 = vunpack.c.l.b16 %v7363
    %v7880 = vunpack.c.l.b16 %v7364
    %v7881 = vunpack.c.l.b16 %v7365
    %v7882 = vunpack.c.l.b16 %v7366
    %v7883 = vunpack.c.l.b16 %v7367
    %v7884 = vunpack.c.l.b16 %v7368
    %v7885 = vunpack.c.l.b16 %v7369
    %v7886 = vunpack.c.l.b16 %v7370
    %v7887 = vunpack.c.l.b16 %v7371
    %v7888 = vunpack.c.l.b16 %v7372
    %v7889 = vunpack.c.l.b16 %v7373
    %v7890 = vunpack.c.l.b16 %v7374
    %v7891 = vunpack.c.l.b16 %v7375
    %v7892 = vunpack.c.l.b16 %v7376
    %v7893 = vunpack.c.l.b16 %v7377
    %v7894 = vunpack.c.l.b16 %v7378
    %v7895 = vunpack.c.l.b16 %v7379
    %v7896 = vunpack.c.l.b16 %v7380
    %v7897 = vunpack.c.l.b16 %v7381
    %v7898 = vunpack.c.l.b16 %v7382
    %v7899 = vunpack.c.l.b16 %v7383
    %v7900 = vunpack.c.l.b16 %v7384
    %v7901 = vunpack.c.l.b16 %v7385
    %v7902 = vunpack.c.l.b16 %v7386
    %v7903 = vunpack.c.l.b16 %v7387
    %v7904 = vunpack.c.l.b16 %v7388
    %v7905 = vunpack.c.l.b16 %v7389
    %v7906 = vunpack.c.l.b16 %v7390
    %v7907 = vunpack.c.l.b16 %v7391
    %v7908 = vunpack.c.l.b16 %v7392
    %v7909 = vunpack.c.l.b16 %v7393
    %v7910 = vunpack.c.l.b16 %v7394
    %v7911 = vunpack.c.l.b16 %v7395
    %v7912 = vunpack.c.l.b16 %v7396
    %v7913 = vunpack.c.l.b16 %v7397
    %v7914 = vunpack.c.l.b16 %v7398
    %v7915 = vunpack.c.l.b16 %v7399
    %v7916 = vunpack.c.l.b16 %v7400
    %v7917 = vunpack.c.l.b16 %v7401
    %v7918 = vunpack.c.l.b16 %v7402
    %v7919 = vunpack.c.l.b16 %v7403
    %v7920 = vunpack.c.l.b16 %v7404
    %v7921 = vunpack.c.l.b16 %v7405
    %v7922 = vunpack.c.l.b16 %v7406
    %v7923 = vunpack.c.l.b16 %v7407
    %v7924 = vunpack.c.l.b16 %v7408
    %v7925 = vunpack.c.l.b16 %v7409
    %v7926 = vunpack.c.l.b16 %v7410
    %v7927 = vunpack.c.l.b16 %v7411
    %v7928 = vunpack.c.l.b16 %v7412
    %v7929 = vunpack.c.l.b16 %v7413
    %v7930 = vunpack.c.l.b16 %v7414
    %v7931 = vunpack.c.l.b16 %v7415
    %v7932 = vunpack.c.l.b16 %v7416
    %v7933 = vunpack.c.l.b16 %v7417
    %v7934 = vunpack.c.l.b16 %v7418
    %v7935 = vunpack.c.l.b16 %v7419
    %v7936 = vunpack.c.l.b16 %v7420
    %v7937 = vunpack.c.l.b16 %v7421
    %v7938 = vunpack.c.l.b16 %v7422
    %v7939 = vunpack.c.l.b16 %v7423
    %v7940 = vunpack.c.l.b16 %v7424
    %v7941 = vunpack.c.l.b16 %v7425
    %v7942 = vunpack.c.l.b16 %v7426
    %v7943 = vunpack.c.l.b16 %v7427
    %v7944 = vunpack.c.l.b16 %v7428
    %v7945 = vunpack.c.l.b16 %v7429
    %v7946 = vunpack.c.l.b16 %v7430
    %v7947 = vunpack.c.l.b16 %v7431
    %v7948 = vunpack.c.l.b16 %v7432
    %v7949 = vunpack.c.l.b16 %v7433
    %v7950 = vunpack.c.l.b16 %v7434
    %v7951 = vunpack.c.l.b16 %v7435
    %v7952 = vunpack.c.l.b16 %v7436
    %v7953 = vunpack.c.l.b16 %v7437
    %v7954 = vunpack.c.l.b16 %v7438
    %v7955 = vunpack.c.l.b16 %v7439
    %v7956 = vunpack.c.l.b16 %v7440
    %v7957 = vunpack.c.l.b16 %v7441
    %v7958 = vunpack.c.l.b16 %v7442
    %v7959 = vunpack.c.l.b16 %v7443
    %v7960 = vunpack.c.l.b16 %v7444
    %v7961 = vunpack.c.l.b16 %v7445
    %v7962 = vunpack.c.l.b16 %v7446
    %v7963 = vunpack.c.l.b16 %v7447
    %v7964 = vunpack.c.l.b16 %v7448
    %v7965 = vunpack.c.l.b16 %v7449
    %v7966 = vunpack.c.l.b16 %v7450
    %v7967 = vunpack.c.l.b16 %v7451
    %v7968 = vunpack.c.l.b16 %v7452
    %v7969 = vunpack.c.l.b16 %v7453
    %v7970 = vunpack.c.l.b16 %v7454
    %v7971 = vunpack.c.l.b16 %v7455
    %v7972 = vunpack.c.l.b16 %v7456
    %v7973 = vunpack.c.l.b16 %v7457
    %v7974 = vunpack.c.l.b16 %v7458
    %v7975 = vunpack.c.l.b16 %v7459
    %v7976 = vunpack.c.l.b16 %v7460
    %v7977 = vunpack.c.l.b16 %v7461
    %v7978 = vunpack.c.l.b16 %v7462
    %v7979 = vunpack.c.l.b16 %v7463
    %v7980 = vunpack.c.l.b16 %v7464
    %v7981 = vunpack.c.l.b16 %v7465
    %v7982 = vunpack.c.l.b16 %v7466
    %v7983 = vunpack.c.l.b16 %v7467
    %v7984 = vunpack.c.l.b16 %v7468
    %v7985 = vunpack.c.l.b16 %v7469
    %v7986 = vunpack.c.l.b16 %v7470
    %v7987 = vunpack.c.l.b16 %v7471
    %v7988 = vunpack.c.l.b16 %v7472
    %v7989 = vunpack.c.l.b16 %v7473
    %v7990 = vunpack.c.l.b16 %v7474
    %v7991 = vunpack.c.l.b16 %v7475
    %v7992 = vunpack.c.l.b16 %v7476
    %v7993 = vunpack.c.l.b16 %v7477
    %v7994 = vunpack.c.l.b16 %v7478
    %v7995 = vunpack.c.l.b16 %v7479
    %v7996 = vunpack.c.l.b16 %v7480
    %v7997 = vunpack.c.l.b16 %v7481
    %v7998 = vunpack.c.l.b16 %v7482
    %v7999 = vunpack.c.l.b16 %v7483
    %v8000 = vunpack.c.l.b16 %v7484
    %v8001 = vunpack.c.l.b16 %v7485
    %v8002 = vunpack.c.l.b16 %v7486
    %v8003 = vunpack.c.l.b16 %v7487
    %v8004 = vunpack.c.l.b16 %v7488
    %v8005 = vunpack.c.l.b16 %v7489
    %v8006 = vunpack.c.l.b16 %v7490
    %v8007 = vunpack.c.l.b16 %v7491
    %v8008 = vunpack.c.l.b16 %v7492
    %v8009 = vunpack.c.l.b16 %v7493
    %v8010 = vunpack.c.l.b16 %v7494
    %v8011 = vunpack.c.l.b16 %v7495
    %v8012 = vunpack.c.l.b16 %v7496
    %v8013 = vunpack.c.l.b16 %v7497
    %v8014 = vunpack.c.l.b16 %v7498
    %v8015 = vunpack.c.l.b16 %v7499
    %v8016 = vunpack.c.l.b16 %v7500
    %v8017 = vunpack.c.l.b16 %v7501
    %v8018 = vunpack.c.l.b16 %v7502
    %v8019 = vunpack.c.l.b16 %v7503
    %v8020 = vunpack.c.l.b16 %v7504
    %v8021 = vunpack.c.l.b16 %v7505
    %v8022 = vunpack.c.l.b16 %v7506
    %v8023 = vunpack.c.l.b16 %v7507
    %v8024 = vunpack.c.l.b16 %v7508
    %v8025 = vunpack.c.l.b16 %v7509
    %v8026 = vunpack.c.l.b16 %v7510
    %v8027 = vunpack.c.l.b16 %v7511
    %v8028 = vunpack.c.l.b16 %v7512
    %v8029 = vunpack.c.l.b16 %v7513
    %v8030 = vunpack.c.l.b16 %v7514
    %v8031 = vunpack.c.l.b16 %v7515
    %v8032 = vunpack.c.l.b16 %v7516
    %v8033 = vunpack.c.l.b16 %v7517
    %v8034 = vunpack.c.l.b16 %v7518
    %v8035 = vunpack.c.l.b16 %v7519
    %v8036 = vunpack.c.l.b16 %v7520
    %v8037 = vunpack.c.l.b16 %v7521
    %v8038 = vunpack.c.l.b16 %v7522
    %v8039 = vunpack.c.l.b16 %v7523
    %v8040 = vunpack.c.l.b16 %v7524
    %v8041 = vunpack.c.l.b16 %v7525
    %v8042 = vunpack.c.l.b16 %v7526
    %v8043 = vunpack.c.l.b16 %v7527
    %v8044 = vpack.c.b16 %v7789, %v7788
    %v8045 = vpack.c.b16 %v7791, %v7790
    %v8046 = vpack.c.b16 %v7793, %v7792
    %v8047 = vpack.c.b16 %v7795, %v7794
    %v8048 = vpack.c.b16 %v7797, %v7796
    %v8049 = vpack.c.b16 %v7799, %v7798
    %v8050 = vpack.c.b16 %v7801, %v7800
    %v8051 = vpack.c.b16 %v7803, %v7802
    %v8052 = vpack.c.b16 %v7805, %v7804
    %v8053 = vpack.c.b16 %v7807, %v7806
    %v8054 = vpack.c.b16 %v7809, %v7808
    %v8055 = vpack.c.b16 %v7811, %v7810
    %v8056 = vpack.c.b16 %v7813, %v7812
    %v8057 = vpack.c.b16 %v7815, %v7814
    %v8058 = vpack.c.b16 %v7817, %v7816
    %v8059 = vpack.c.b16 %v7819, %v7818
    %v8060 = vpack.c.b16 %v7821, %v7820
    %v8061 = vpack.c.b16 %v7823, %v7822
    %v8062 = vpack.c.b16 %v7825, %v7824
    %v8063 = vpack.c.b16 %v7827, %v7826
    %v8064 = vpack.c.b16 %v7829, %v7828
    %v8065 = vpack.c.b16 %v7831, %v7830
    %v8066 = vpack.c.b16 %v7833, %v7832
    %v8067 = vpack.c.b16 %v7835, %v7834
    %v8068 = vpack.c.b16 %v7837, %v7836
    %v8069 = vpack.c.b16 %v7839, %v7838
    %v8070 = vpack.c.b16 %v7841, %v7840
    %v8071 = vpack.c.b16 %v7843, %v7842
    %v8072 = vpack.c.b16 %v7845, %v7844
    %v8073 = vpack.c.b16 %v7847, %v7846
    %v8074 = vpack.c.b16 %v7849, %v7848
    %v8075 = vpack.c.b16 %v7851, %v7850
    %v8076 = vpack.c.b16 %v7853, %v7852
    %v8077 = vpack.c.b16 %v7855, %v7854
    %v8078 = vpack.c.b16 %v7857, %v7856
    %v8079 = vpack.c.b16 %v7859, %v7858
    %v8080 = vpack.c.b16 %v7861, %v7860
    %v8081 = vpack.c.b16 %v7863, %v7862
    %v8082 = vpack.c.b16 %v7865, %v7864
    %v8083 = vpack.c.b16 %v7867, %v7866
    %v8084 = vpack.c.b16 %v7869, %v7868
    %v8085 = vpack.c.b16 %v7871, %v7870
    %v8086 = vpack.c.b16 %v7873, %v7872
    %v8087 = vpack.c.b16 %v7875, %v7874
    %v8088 = vpack.c.b16 %v7877, %v7876
    %v8089 = vpack.c.b16 %v7879, %v7878
    %v8090 = vpack.c.b16 %v7881, %v7880
    %v8091 = vpack.c.b16 %v7883, %v7882
    %v8092 = vpack.c.b16 %v7885, %v7884
    %v8093 = vpack.c.b16 %v7887, %v7886
    %v8094 = vpack.c.b16 %v7889, %v7888
    %v8095 = vpack.c.b16 %v7891, %v7890
    %v8096 = vpack.c.b16 %v7893, %v7892
    %v8097 = vpack.c.b16 %v7895, %v7894
    %v8098 = vpack.c.b16 %v7897, %v7896
    %v8099 = vpack.c.b16 %v7899, %v7898
    %v8100 = vpack.c.b16 %v7901, %v7900
    %v8101 = vpack.c.b16 %v7903, %v7902
    %v8102 = vpack.c.b16 %v7905, %v7904
    %v8103 = vpack.c.b16 %v7907, %v7906
    %v8104 = vpack.c.b16 %v7909, %v7908
    %v8105 = vpack.c.b16 %v7911, %v7910
    %v8106 = vpack.c.b16 %v7913, %v7912
    %v8107 = vpack.c.b16 %v7915, %v7914
    %v8108 = vpack.c.b16 %v7917, %v7916
    %v8109 = vpack.c.b16 %v7919, %v7918
    %v8110 = vpack.c.b16 %v7921, %v7920
    %v8111 = vpack.c.b16 %v7923, %v7922
    %v8112 = vpack.c.b16 %v7925, %v7924
    %v8113 = vpack.c.b16 %v7927, %v7926
    %v8114 = vpack.c.b16 %v7929, %v7928
    %v8115 = vpack.c.b16 %v7931, %v7930
    %v8116 = vpack.c.b16 %v7933, %v7932
    %v8117 = vpack.c.b16 %v7935, %v7934
    %v8118 = vpack.c.b16 %v7937, %v7936
    %v8119 = vpack.c.b16 %v7939, %v7938
    %v8120 = vpack.c.b16 %v7941, %v7940
    %v8121 = vpack.c.b16 %v7943, %v7942
    %v8122 = vpack.c.b16 %v7945, %v7944
    %v8123 = vpack.c.b16 %v7947, %v7946
    %v8124 = vpack.c.b16 %v7949, %v7948
    %v8125 = vpack.c.b16 %v7951, %v7950
    %v8126 = vpack.c.b16 %v7953, %v7952
    %v8127 = vpack.c.b16 %v7955, %v7954
    %v8128 = vpack.c.b16 %v7957, %v7956
    %v8129 = vpack.c.b16 %v7959, %v7958
    %v8130 = vpack.c.b16 %v7961, %v7960
    %v8131 = vpack.c.b16 %v7963, %v7962
    %v8132 = vpack.c.b16 %v7965, %v7964
    %v8133 = vpack.c.b16 %v7967, %v7966
    %v8134 = vpack.c.b16 %v7969, %v7968
    %v8135 = vpack.c.b16 %v7971, %v7970
    %v8136 = vpack.c.b16 %v7973, %v7972
    %v8137 = vpack.c.b16 %v7975, %v7974
    %v8138 = vpack.c.b16 %v7977, %v7976
    %v8139 = vpack.c.b16 %v7979, %v7978
    %v8140 = vpack.c.b16 %v7981, %v7980
    %v8141 = vpack.c.b16 %v7983, %v7982
    %v8142 = vpack.c.b16 %v7985, %v7984
    %v8143 = vpack.c.b16 %v7987, %v7986
    %v8144 = vpack.c.b16 %v7989, %v7988
    %v8145 = vpack.c.b16 %v7991, %v7990
    %v8146 = vpack.c.b16 %v7993, %v7992
    %v8147 = vpack.c.b16 %v7995, %v7994
    %v8148 = vpack.c.b16 %v7997, %v7996
    %v8149 = vpack.c.b16 %v7999, %v7998
    %v8150 = vpack.c.b16 %v8001, %v8000
    %v8151 = vpack.c.b16 %v8003, %v8002
    %v8152 = vpack.c.b16 %v8005, %v8004
    %v8153 = vpack.c.b16 %v8007, %v8006
    %v8154 = vpack.c.b16 %v8009, %v8008
    %v8155 = vpack.c.b16 %v8011, %v8010
    %v8156 = vpack.c.b16 %v8013, %v8012
    %v8157 = vpack.c.b16 %v8015, %v8014
    %v8158 = vpack.c.b16 %v8017, %v8016
    %v8159 = vpack.c.b16 %v8019, %v8018
    %v8160 = vpack.c.b16 %v8021, %v8020
    %v8161 = vpack.c.b16 %v8023, %v8022
    %v8162 = vpack.c.b16 %v8025, %v8024
    %v8163 = vpack.c.b16 %v8027, %v8026
    %v8164 = vpack.c.b16 %v8029, %v8028
    %v8165 = vpack.c.b16 %v8031, %v8030
    %v8166 = vpack.c.b16 %v8033, %v8032
    %v8167 = vpack.c.b16 %v8035, %v8034
    %v8168 = vpack.c.b16 %v8037, %v8036
    %v8169 = vpack.c.b16 %v8039, %v8038
    %v8170 = vpack.c.b16 %v8041, %v8040
    %v8171 = vpack.c.b16 %v8043, %v8042
    %8300 = vmatprep.subr.bf16.mxu0 0
    %8301 = vmatpush1.bf16.msra.mxu0 %v8044
    %8302 = vmatprep.subr.bf16.mxu0 0
    %8303 = vmatpush1.bf16.msra.mxu0 %v8045
    %8304 = vmatprep.subr.bf16.mxu0 0
    %8305 = vmatpush1.bf16.msra.mxu0 %v8046
    %8306 = vmatprep.subr.bf16.mxu0 0
    %8307 = vmatpush1.bf16.msra.mxu0 %v8047
    %8308 = vmatprep.subr.bf16.mxu0 0
    %8309 = vmatpush1.bf16.msra.mxu0 %v8048
    %8310 = vmatprep.subr.bf16.mxu0 0
    %8311 = vmatpush1.bf16.msra.mxu0 %v8049
    %8312 = vmatprep.subr.bf16.mxu0 0
    %8313 = vmatpush1.bf16.msra.mxu0 %v8050
    %8314 = vmatprep.subr.bf16.mxu0 0
    %8315 = vmatpush1.bf16.msra.mxu0 %v8051
    %8316 = vmatprep.subr.bf16.mxu0 0
    %8317 = vmatpush1.bf16.msra.mxu0 %v8052
    %8318 = vmatprep.subr.bf16.mxu0 0
    %8319 = vmatpush1.bf16.msra.mxu0 %v8053
    %8320 = vmatprep.subr.bf16.mxu0 0
    %8321 = vmatpush1.bf16.msra.mxu0 %v8054
    %8322 = vmatprep.subr.bf16.mxu0 0
    %8323 = vmatpush1.bf16.msra.mxu0 %v8055
    %8324 = vmatprep.subr.bf16.mxu0 0
    %8325 = vmatpush1.bf16.msra.mxu0 %v8056
    %8326 = vmatprep.subr.bf16.mxu0 0
    %8327 = vmatpush1.bf16.msra.mxu0 %v8057
    %8328 = vmatprep.subr.bf16.mxu0 0
    %8329 = vmatpush1.bf16.msra.mxu0 %v8058
    %8330 = vmatprep.subr.bf16.mxu0 0
    %8331 = vmatpush1.bf16.msra.mxu0 %v8059
    %8332 = vmatprep.mubr.bf16.mxu0 %v7256
    %8333 = vmatmul.mubr.bf16.gmra.mrb[0].mxu0 %v7255
    %v8334 = vpop.f32.mrb[0].mxu0
    %v8335 = vadd.f32 %v7531, %v8334
    %v8336 = vpop.f32.mrb[0].mxu0
    %v8337 = vpop.f32.mrb[0].mxu0
    %v8338 = vadd.f32 %v7531, %v8337
    %v8339 = vpop.f32.mrb[0].mxu0
    %8340 = vdwg.mxu0
    %8341 = vmatprep.subr.bf16.mxu0 0
    %8342 = vmatpush1.bf16.msra.mxu0 %v8060
    %8343 = vmatprep.subr.bf16.mxu0 0
    %8344 = vmatpush1.bf16.msra.mxu0 %v8061
    %8345 = vmatprep.subr.bf16.mxu0 0
    %8346 = vmatpush1.bf16.msra.mxu0 %v8062
    %8347 = vmatprep.subr.bf16.mxu0 0
    %8348 = vmatpush1.bf16.msra.mxu0 %v8063
    %8349 = vmatprep.subr.bf16.mxu0 0
    %8350 = vmatpush1.bf16.msra.mxu0 %v8064
    %8351 = vmatprep.subr.bf16.mxu0 0
    %8352 = vmatpush1.bf16.msra.mxu0 %v8065
    %8353 = vmatprep.subr.bf16.mxu0 0
    %8354 = vmatpush1.bf16.msra.mxu0 %v8066
    %8355 = vmatprep.subr.bf16.mxu0 0
    %8356 = vmatpush1.bf16.msra.mxu0 %v8067
    %8357 = vmatprep.subr.bf16.mxu0 0
    %8358 = vmatpush1.bf16.msra.mxu0 %v8068
    %8359 = vmatprep.subr.bf16.mxu0 0
    %8360 = vmatpush1.bf16.msra.mxu0 %v8069
    %8361 = vmatprep.subr.bf16.mxu0 0
    %8362 = vmatpush1.bf16.msra.mxu0 %v8070
    %8363 = vmatprep.subr.bf16.mxu0 0
    %8364 = vmatpush1.bf16.msra.mxu0 %v8071
    %8365 = vmatprep.subr.bf16.mxu0 0
    %8366 = vmatpush1.bf16.msra.mxu0 %v8072
    %8367 = vmatprep.subr.bf16.mxu0 0
    %8368 = vmatpush1.bf16.msra.mxu0 %v8073
    %8369 = vmatprep.subr.bf16.mxu0 0
    %8370 = vmatpush1.bf16.msra.mxu0 %v8074
    %8371 = vmatprep.subr.bf16.mxu0 0
    %8372 = vmatpush1.bf16.msra.mxu0 %v8075
    %8373 = vmatprep.mubr.bf16.mxu0 %v7258
    %8374 = vmatmul.mubr.bf16.gmra.mrb[0].mxu0 %v7257
    %v8375 = vpop.f32.mrb[0].mxu0
    %v8376 = vadd.f32 %v8335, %v8375
    %v8377 = vpop.f32.mrb[0].mxu0
    %v8378 = vpop.f32.mrb[0].mxu0
    %v8379 = vadd.f32 %v8338, %v8378
    %v8380 = vpop.f32.mrb[0].mxu0
    %8381 = vdwg.mxu0
    %8382 = vmatprep.subr.bf16.mxu0 0
    %8383 = vmatpush1.bf16.msra.mxu0 %v8076
    %8384 = vmatprep.subr.bf16.mxu0 0
    %8385 = vmatpush1.bf16.msra.mxu0 %v8077
    %8386 = vmatprep.subr.bf16.mxu0 0
    %8387 = vmatpush1.bf16.msra.mxu0 %v8078
    %8388 = vmatprep.subr.bf16.mxu0 0
    %8389 = vmatpush1.bf16.msra.mxu0 %v8079
    %8390 = vmatprep.subr.bf16.mxu0 0
    %8391 = vmatpush1.bf16.msra.mxu0 %v8080
    %8392 = vmatprep.subr.bf16.mxu0 0
    %8393 = vmatpush1.bf16.msra.mxu0 %v8081
    %8394 = vmatprep.subr.bf16.mxu0 0
    %8395 = vmatpush1.bf16.msra.mxu0 %v8082
    %8396 = vmatprep.subr.bf16.mxu0 0
    %8397 = vmatpush1.bf16.msra.mxu0 %v8083
    %8398 = vmatprep.subr.bf16.mxu0 0
    %8399 = vmatpush1.bf16.msra.mxu0 %v8084
    %8400 = vmatprep.subr.bf16.mxu0 0
    %8401 = vmatpush1.bf16.msra.mxu0 %v8085
    %8402 = vmatprep.subr.bf16.mxu0 0
    %8403 = vmatpush1.bf16.msra.mxu0 %v8086
    %8404 = vmatprep.subr.bf16.mxu0 0
    %8405 = vmatpush1.bf16.msra.mxu0 %v8087
    %8406 = vmatprep.subr.bf16.mxu0 0
    %8407 = vmatpush1.bf16.msra.mxu0 %v8088
    %8408 = vmatprep.subr.bf16.mxu0 0
    %8409 = vmatpush1.bf16.msra.mxu0 %v8089
    %8410 = vmatprep.subr.bf16.mxu0 0
    %8411 = vmatpush1.bf16.msra.mxu0 %v8090
    %8412 = vmatprep.subr.bf16.mxu0 0
    %8413 = vmatpush1.bf16.msra.mxu0 %v8091
    %8414 = vmatprep.mubr.bf16.mxu0 %v7260
    %8415 = vmatmul.mubr.bf16.gmra.mrb[0].mxu0 %v7259
    %v8416 = vpop.f32.mrb[0].mxu0
    %v8417 = vadd.f32 %v8376, %v8416
    %v8418 = vpop.f32.mrb[0].mxu0
    %v8419 = vpop.f32.mrb[0].mxu0
    %v8420 = vadd.f32 %v8379, %v8419
    %v8421 = vpop.f32.mrb[0].mxu0
    %8422 = vdwg.mxu0
    %8423 = vmatprep.subr.bf16.mxu0 0
    %8424 = vmatpush1.bf16.msra.mxu0 %v8092
    %8425 = vmatprep.subr.bf16.mxu0 0
    %8426 = vmatpush1.bf16.msra.mxu0 %v8093
    %8427 = vmatprep.subr.bf16.mxu0 0
    %8428 = vmatpush1.bf16.msra.mxu0 %v8094
    %8429 = vmatprep.subr.bf16.mxu0 0
    %8430 = vmatpush1.bf16.msra.mxu0 %v8095
    %8431 = vmatprep.subr.bf16.mxu0 0
    %8432 = vmatpush1.bf16.msra.mxu0 %v8096
    %8433 = vmatprep.subr.bf16.mxu0 0
    %8434 = vmatpush1.bf16.msra.mxu0 %v8097
    %8435 = vmatprep.subr.bf16.mxu0 0
    %8436 = vmatpush1.bf16.msra.mxu0 %v8098
    %8437 = vmatprep.subr.bf16.mxu0 0
    %8438 = vmatpush1.bf16.msra.mxu0 %v8099
    %8439 = vmatprep.subr.bf16.mxu0 0
    %8440 = vmatpush1.bf16.msra.mxu0 %v8100
    %8441 = vmatprep.subr.bf16.mxu0 0
    %8442 = vmatpush1.bf16.msra.mxu0 %v8101
    %8443 = vmatprep.subr.bf16.mxu0 0
    %8444 = vmatpush1.bf16.msra.mxu0 %v8102
    %8445 = vmatprep.subr.bf16.mxu0 0
    %8446 = vmatpush1.bf16.msra.mxu0 %v8103
    %8447 = vmatprep.subr.bf16.mxu0 0
    %8448 = vmatpush1.bf16.msra.mxu0 %v8104
    %8449 = vmatprep.subr.bf16.mxu0 0
    %8450 = vmatpush1.bf16.msra.mxu0 %v8105
    %8451 = vmatprep.subr.bf16.mxu0 0
    %8452 = vmatpush1.bf16.msra.mxu0 %v8106
    %8453 = vmatprep.subr.bf16.mxu0 0
    %8454 = vmatpush1.bf16.msra.mxu0 %v8107
    %8455 = vmatprep.mubr.bf16.mxu0 %v7262
    %8456 = vmatmul.mubr.bf16.gmra.mrb[0].mxu0 %v7261
    %v8457 = vpop.f32.mrb[0].mxu0
    %v8458 = vadd.f32 %v8417, %v8457
    %v8459 = vpop.f32.mrb[0].mxu0
    %v8460 = vpop.f32.mrb[0].mxu0
    %v8461 = vadd.f32 %v8420, %v8460
    %v8462 = vpop.f32.mrb[0].mxu0
    %8463 = vdwg.mxu0
    %8464 = vmatprep.subr.bf16.mxu0 0
    %8465 = vmatpush1.bf16.msra.mxu0 %v8108
    %8466 = vmatprep.subr.bf16.mxu0 0
    %8467 = vmatpush1.bf16.msra.mxu0 %v8109
    %8468 = vmatprep.subr.bf16.mxu0 0
    %8469 = vmatpush1.bf16.msra.mxu0 %v8110
    %8470 = vmatprep.subr.bf16.mxu0 0
    %8471 = vmatpush1.bf16.msra.mxu0 %v8111
    %8472 = vmatprep.subr.bf16.mxu0 0
    %8473 = vmatpush1.bf16.msra.mxu0 %v8112
    %8474 = vmatprep.subr.bf16.mxu0 0
    %8475 = vmatpush1.bf16.msra.mxu0 %v8113
    %8476 = vmatprep.subr.bf16.mxu0 0
    %8477 = vmatpush1.bf16.msra.mxu0 %v8114
    %8478 = vmatprep.subr.bf16.mxu0 0
    %8479 = vmatpush1.bf16.msra.mxu0 %v8115
    %8480 = vmatprep.subr.bf16.mxu0 0
    %8481 = vmatpush1.bf16.msra.mxu0 %v8116
    %8482 = vmatprep.subr.bf16.mxu0 0
    %8483 = vmatpush1.bf16.msra.mxu0 %v8117
    %8484 = vmatprep.subr.bf16.mxu0 0
    %8485 = vmatpush1.bf16.msra.mxu0 %v8118
    %8486 = vmatprep.subr.bf16.mxu0 0
    %8487 = vmatpush1.bf16.msra.mxu0 %v8119
    %8488 = vmatprep.subr.bf16.mxu0 0
    %8489 = vmatpush1.bf16.msra.mxu0 %v8120
    %8490 = vmatprep.subr.bf16.mxu0 0
    %8491 = vmatpush1.bf16.msra.mxu0 %v8121
    %8492 = vmatprep.subr.bf16.mxu0 0
    %8493 = vmatpush1.bf16.msra.mxu0 %v8122
    %8494 = vmatprep.subr.bf16.mxu0 0
    %8495 = vmatpush1.bf16.msra.mxu0 %v8123
    %8496 = vmatprep.mubr.bf16.mxu0 %v7264
    %8497 = vmatmul.mubr.bf16.gmra.mrb[0].mxu0 %v7263
    %v8498 = vpop.f32.mrb[0].mxu0
    %v8499 = vadd.f32 %v8458, %v8498
    %v8500 = vpop.f32.mrb[0].mxu0
    %v8501 = vpop.f32.mrb[0].mxu0
    %v8502 = vadd.f32 %v8461, %v8501
    %v8503 = vpop.f32.mrb[0].mxu0
    %8504 = vdwg.mxu0
    %8505 = vmatprep.subr.bf16.mxu0 0
    %8506 = vmatpush1.bf16.msra.mxu0 %v8124
    %8507 = vmatprep.subr.bf16.mxu0 0
    %8508 = vmatpush1.bf16.msra.mxu0 %v8125
    %8509 = vmatprep.subr.bf16.mxu0 0
    %8510 = vmatpush1.bf16.msra.mxu0 %v8126
    %8511 = vmatprep.subr.bf16.mxu0 0
    %8512 = vmatpush1.bf16.msra.mxu0 %v8127
    %8513 = vmatprep.subr.bf16.mxu0 0
    %8514 = vmatpush1.bf16.msra.mxu0 %v8128
    %8515 = vmatprep.subr.bf16.mxu0 0
    %8516 = vmatpush1.bf16.msra.mxu0 %v8129
    %8517 = vmatprep.subr.bf16.mxu0 0
    %8518 = vmatpush1.bf16.msra.mxu0 %v8130
    %8519 = vmatprep.subr.bf16.mxu0 0
    %8520 = vmatpush1.bf16.msra.mxu0 %v8131
    %8521 = vmatprep.subr.bf16.mxu0 0
    %8522 = vmatpush1.bf16.msra.mxu0 %v8132
    %8523 = vmatprep.subr.bf16.mxu0 0
    %8524 = vmatpush1.bf16.msra.mxu0 %v8133
    %8525 = vmatprep.subr.bf16.mxu0 0
    %8526 = vmatpush1.bf16.msra.mxu0 %v8134
    %8527 = vmatprep.subr.bf16.mxu0 0
    %8528 = vmatpush1.bf16.msra.mxu0 %v8135
    %8529 = vmatprep.subr.bf16.mxu0 0
    %8530 = vmatpush1.bf16.msra.mxu0 %v8136
    %8531 = vmatprep.subr.bf16.mxu0 0
    %8532 = vmatpush1.bf16.msra.mxu0 %v8137
    %8533 = vmatprep.subr.bf16.mxu0 0
    %8534 = vmatpush1.bf16.msra.mxu0 %v8138
    %8535 = vmatprep.subr.bf16.mxu0 0
    %8536 = vmatpush1.bf16.msra.mxu0 %v8139
    %8537 = vmatprep.mubr.bf16.mxu0 %v7266
    %8538 = vmatmul.mubr.bf16.gmra.mrb[0].mxu0 %v7265
    %v8539 = vpop.f32.mrb[0].mxu0
    %v8540 = vadd.f32 %v8499, %v8539
    %v8541 = vpop.f32.mrb[0].mxu0
    %v8542 = vpop.f32.mrb[0].mxu0
    %v8543 = vadd.f32 %v8502, %v8542
    %v8544 = vpop.f32.mrb[0].mxu0
    %8545 = vdwg.mxu0
    %8546 = vmatprep.subr.bf16.mxu0 0
    %8547 = vmatpush1.bf16.msra.mxu0 %v8140
    %8548 = vmatprep.subr.bf16.mxu0 0
    %8549 = vmatpush1.bf16.msra.mxu0 %v8141
    %8550 = vmatprep.subr.bf16.mxu0 0
    %8551 = vmatpush1.bf16.msra.mxu0 %v8142
    %8552 = vmatprep.subr.bf16.mxu0 0
    %8553 = vmatpush1.bf16.msra.mxu0 %v8143
    %8554 = vmatprep.subr.bf16.mxu0 0
    %8555 = vmatpush1.bf16.msra.mxu0 %v8144
    %8556 = vmatprep.subr.bf16.mxu0 0
    %8557 = vmatpush1.bf16.msra.mxu0 %v8145
    %8558 = vmatprep.subr.bf16.mxu0 0
    %8559 = vmatpush1.bf16.msra.mxu0 %v8146
    %8560 = vmatprep.subr.bf16.mxu0 0
    %8561 = vmatpush1.bf16.msra.mxu0 %v8147
    %8562 = vmatprep.subr.bf16.mxu0 0
    %8563 = vmatpush1.bf16.msra.mxu0 %v8148
    %8564 = vmatprep.subr.bf16.mxu0 0
    %8565 = vmatpush1.bf16.msra.mxu0 %v8149
    %8566 = vmatprep.subr.bf16.mxu0 0
    %8567 = vmatpush1.bf16.msra.mxu0 %v8150
    %8568 = vmatprep.subr.bf16.mxu0 0
    %8569 = vmatpush1.bf16.msra.mxu0 %v8151
    %8570 = vmatprep.subr.bf16.mxu0 0
    %8571 = vmatpush1.bf16.msra.mxu0 %v8152
    %8572 = vmatprep.subr.bf16.mxu0 0
    %8573 = vmatpush1.bf16.msra.mxu0 %v8153
    %8574 = vmatprep.subr.bf16.mxu0 0
    %8575 = vmatpush1.bf16.msra.mxu0 %v8154
    %8576 = vmatprep.subr.bf16.mxu0 0
    %8577 = vmatpush1.bf16.msra.mxu0 %v8155
    %8578 = vmatprep.mubr.bf16.mxu0 %v7268
    %8579 = vmatmul.mubr.bf16.gmra.mrb[0].mxu0 %v7267
    %v8580 = vpop.f32.mrb[0].mxu0
    %v8581 = vadd.f32 %v8540, %v8580
    %v8582 = vpop.f32.mrb[0].mxu0
    %v8583 = vpop.f32.mrb[0].mxu0
    %v8584 = vadd.f32 %v8543, %v8583
    %v8585 = vpop.f32.mrb[0].mxu0
    %8586 = vdwg.mxu0
    %8587 = vmatprep.subr.bf16.mxu0 0
    %8588 = vmatpush1.bf16.msra.mxu0 %v8156
    %8589 = vmatprep.subr.bf16.mxu0 0
    %8590 = vmatpush1.bf16.msra.mxu0 %v8157
    %8591 = vmatprep.subr.bf16.mxu0 0
    %8592 = vmatpush1.bf16.msra.mxu0 %v8158
    %8593 = vmatprep.subr.bf16.mxu0 0
    %8594 = vmatpush1.bf16.msra.mxu0 %v8159
    %8595 = vmatprep.subr.bf16.mxu0 0
    %8596 = vmatpush1.bf16.msra.mxu0 %v8160
    %8597 = vmatprep.subr.bf16.mxu0 0
    %8598 = vmatpush1.bf16.msra.mxu0 %v8161
    %8599 = vmatprep.subr.bf16.mxu0 0
    %8600 = vmatpush1.bf16.msra.mxu0 %v8162
    %8601 = vmatprep.subr.bf16.mxu0 0
    %8602 = vmatpush1.bf16.msra.mxu0 %v8163
    %8603 = vmatprep.subr.bf16.mxu0 0
    %8604 = vmatpush1.bf16.msra.mxu0 %v8164
    %8605 = vmatprep.subr.bf16.mxu0 0
    %8606 = vmatpush1.bf16.msra.mxu0 %v8165
    %8607 = vmatprep.subr.bf16.mxu0 0
    %8608 = vmatpush1.bf16.msra.mxu0 %v8166
    %8609 = vmatprep.subr.bf16.mxu0 0
    %8610 = vmatpush1.bf16.msra.mxu0 %v8167
    %8611 = vmatprep.subr.bf16.mxu0 0
    %8612 = vmatpush1.bf16.msra.mxu0 %v8168
    %8613 = vmatprep.subr.bf16.mxu0 0
    %8614 = vmatpush1.bf16.msra.mxu0 %v8169
    %8615 = vmatprep.subr.bf16.mxu0 0
    %8616 = vmatpush1.bf16.msra.mxu0 %v8170
    %8617 = vmatprep.subr.bf16.mxu0 0
    %8618 = vmatpush1.bf16.msra.mxu0 %v8171
    %8619 = vmatprep.mubr.bf16.mxu0 %v7270
    %8620 = vmatmul.mubr.bf16.gmra.mrb[0].mxu0 %v7269
    %v8621 = vpop.f32.mrb[0].mxu0
    %v8622 = vadd.f32 %v8581, %v8621
    %v8623 = vpop.f32.mrb[0].mxu0
    %v8624 = vpop.f32.mrb[0].mxu0
    %v8625 = vadd.f32 %v8584, %v8624
    %v8626 = vpop.f32.mrb[0].mxu0
    %8627 = vdwg.mxu0
    %v8630 = vcombine.high %v8622, %v8622
    %v8632 = vunpack.c.l.s4 1983009808
    %v8633 = vunpack.c.0.s8 %v8632
    %v8634 = vlaneseq
    %v8635 = vshrl.u32 %v8634, 7
    %v8636 = vsub.s32 %v8633, %v8635
    %v8637 = vrot.slane %v8622, %v8636
    %v8639 = vunpack.c.l.s4 1983009808
    %v8640 = vunpack.c.0.s8 %v8639
    %v8641 = vlaneseq
    %v8642 = vshrl.u32 %v8641, 7
    %v8643 = vsub.s32 %v8640, %v8642
    %v8644 = vrot.slane %v8630, %v8643
    %v8645 = vcombine.high %v8637, %v8637
    %v8646 = vcombine.high %v8644, %v8644
    %v8647 = vcombine.high %v8625, %v8625
    %v8649 = vunpack.c.l.s4 1983009808
    %v8650 = vunpack.c.0.s8 %v8649
    %v8651 = vlaneseq
    %v8652 = vshrl.u32 %v8651, 7
    %v8653 = vsub.s32 %v8650, %v8652
    %v8654 = vrot.slane %v8625, %v8653
    %v8656 = vunpack.c.l.s4 1983009808
    %v8657 = vunpack.c.0.s8 %v8656
    %v8658 = vlaneseq
    %v8659 = vshrl.u32 %v8658, 7
    %v8660 = vsub.s32 %v8657, %v8659
    %v8661 = vrot.slane %v8647, %v8660
    %v8662 = vcombine.high %v8654, %v8654
    %v8663 = vcombine.high %v8661, %v8661
    %v8672 = vadd.f32 %v6609, %v8637
    %v8673 = vadd.f32 %v6610, %v8645
    %v8674 = vadd.f32 %v6611, %v8644
    %v8675 = vadd.f32 %v6612, %v8646
    %v8676 = vadd.f32 %v6613, %v8654
    %v8677 = vadd.f32 %v6614, %v8662
    %v8678 = vadd.f32 %v6615, %v8661
    %v8679 = vadd.f32 %v6616, %v8663
    %v8688 = vcombine.low %v8672, %v8673
    %v8689 = vcombine.low %v8674, %v8675
    %v8691 = vunpack.c.l.s4 1983009808
    %v8692 = vunpack.c.0.s8 %v8691
    %v8693 = vlaneseq
    %v8694 = vshrl.u32 %v8693, 7
    %v8695 = vsub.s32 %v8692, %v8694
    %v8696 = vrot.slane %v8688, %v8695
    %v8698 = vunpack.c.l.s4 1983009808
    %v8699 = vunpack.c.0.s8 %v8698
    %v8700 = vlaneseq
    %v8701 = vshrl.u32 %v8700, 7
    %v8702 = vsub.s32 %v8699, %v8701
    %v8703 = vrot.slane %v8689, %v8702
    %v8704 = vcombine.low %v8696, %v8703
    %v8705 = vcombine.low %v8676, %v8677
    %v8706 = vcombine.low %v8678, %v8679
    %v8708 = vunpack.c.l.s4 1983009808
    %v8709 = vunpack.c.0.s8 %v8708
    %v8710 = vlaneseq
    %v8711 = vshrl.u32 %v8710, 7
    %v8712 = vsub.s32 %v8709, %v8711
    %v8713 = vrot.slane %v8705, %v8712
    %v8715 = vunpack.c.l.s4 1983009808
    %v8716 = vunpack.c.0.s8 %v8715
    %v8717 = vlaneseq
    %v8718 = vshrl.u32 %v8717, 7
    %v8719 = vsub.s32 %v8716, %v8718
    %v8720 = vrot.slane %v8706, %v8719
    %v8721 = vcombine.low %v8713, %v8720
    %v8724 = vsel %vm207, %v8704, 0.0
    %8725 = vadd.xlane.f32.xlu0 %v8724
    %v8726 = vpop.xlane.xlu0 %8725
    %v8727 = vsel %vm207, %v8721, 0.0
    %8728 = vadd.xlane.f32.xlu0 %v8727
    %v8729 = vpop.xlane.xlu0 %8728
    %v8730 = vmul.f32 %v8726, %v1936
    %v8731 = vmul.f32 %v8729, %v1936
    %v8735 = vunpack.c.l.s4 269488144
    %v8736 = vunpack.c.0.s8 %v8735
    %v8737 = vlaneseq
    %v8738 = vshrl.u32 %v8737, 7
    %v8739 = vsub.s32 %v8736, %v8738
    %v8740 = vrot.slane %v8730, %v8739
    %v8742 = vunpack.c.l.s4 842150450
    %v8743 = vunpack.c.0.s8 %v8742
    %v8744 = vlaneseq
    %v8745 = vshrl.u32 %v8744, 7
    %v8746 = vsub.s32 %v8743, %v8745
    %v8747 = vrot.slane %v8730, %v8746
    %v8749 = vunpack.c.l.s4 1414812756
    %v8750 = vunpack.c.0.s8 %v8749
    %v8751 = vlaneseq
    %v8752 = vshrl.u32 %v8751, 7
    %v8753 = vsub.s32 %v8750, %v8752
    %v8754 = vrot.slane %v8730, %v8753
    %v8756 = vunpack.c.l.s4 1987475062
    %v8757 = vunpack.c.0.s8 %v8756
    %v8758 = vlaneseq
    %v8759 = vshrl.u32 %v8758, 7
    %v8760 = vsub.s32 %v8757, %v8759
    %v8761 = vrot.slane %v8730, %v8760
    %v8763 = vunpack.c.l.s4 269488144
    %v8764 = vunpack.c.0.s8 %v8763
    %v8765 = vlaneseq
    %v8766 = vshrl.u32 %v8765, 7
    %v8767 = vsub.s32 %v8764, %v8766
    %v8768 = vrot.slane %v8731, %v8767
    %v8770 = vunpack.c.l.s4 842150450
    %v8771 = vunpack.c.0.s8 %v8770
    %v8772 = vlaneseq
    %v8773 = vshrl.u32 %v8772, 7
    %v8774 = vsub.s32 %v8771, %v8773
    %v8775 = vrot.slane %v8731, %v8774
    %v8777 = vunpack.c.l.s4 1414812756
    %v8778 = vunpack.c.0.s8 %v8777
    %v8779 = vlaneseq
    %v8780 = vshrl.u32 %v8779, 7
    %v8781 = vsub.s32 %v8778, %v8780
    %v8782 = vrot.slane %v8731, %v8781
    %v8784 = vunpack.c.l.s4 1987475062
    %v8785 = vunpack.c.0.s8 %v8784
    %v8786 = vlaneseq
    %v8787 = vshrl.u32 %v8786, 7
    %v8788 = vsub.s32 %v8785, %v8787
    %v8789 = vrot.slane %v8731, %v8788
    %v8798 = vsub.f32 %v8672, %v8740
    %v8799 = vsub.f32 %v8673, %v8747
    %v8800 = vsub.f32 %v8674, %v8754
    %v8801 = vsub.f32 %v8675, %v8761
    %v8802 = vsub.f32 %v8676, %v8768
    %v8803 = vsub.f32 %v8677, %v8775
    %v8804 = vsub.f32 %v8678, %v8782
    %v8805 = vsub.f32 %v8679, %v8789
    %v8806 = vmul.f32 %v8798, %v8798
    %v8807 = vmul.f32 %v8799, %v8799
    %v8808 = vmul.f32 %v8800, %v8800
    %v8809 = vmul.f32 %v8801, %v8801
    %v8810 = vmul.f32 %v8802, %v8802
    %v8811 = vmul.f32 %v8803, %v8803
    %v8812 = vmul.f32 %v8804, %v8804
    %v8813 = vmul.f32 %v8805, %v8805
    %v8822 = vcombine.low %v8806, %v8807
    %v8823 = vcombine.low %v8808, %v8809
    %v8825 = vunpack.c.l.s4 1983009808
    %v8826 = vunpack.c.0.s8 %v8825
    %v8827 = vlaneseq
    %v8828 = vshrl.u32 %v8827, 7
    %v8829 = vsub.s32 %v8826, %v8828
    %v8830 = vrot.slane %v8822, %v8829
    %v8832 = vunpack.c.l.s4 1983009808
    %v8833 = vunpack.c.0.s8 %v8832
    %v8834 = vlaneseq
    %v8835 = vshrl.u32 %v8834, 7
    %v8836 = vsub.s32 %v8833, %v8835
    %v8837 = vrot.slane %v8823, %v8836
    %v8838 = vcombine.low %v8830, %v8837
    %v8839 = vcombine.low %v8810, %v8811
    %v8840 = vcombine.low %v8812, %v8813
    %v8842 = vunpack.c.l.s4 1983009808
    %v8843 = vunpack.c.0.s8 %v8842
    %v8844 = vlaneseq
    %v8845 = vshrl.u32 %v8844, 7
    %v8846 = vsub.s32 %v8843, %v8845
    %v8847 = vrot.slane %v8839, %v8846
    %v8849 = vunpack.c.l.s4 1983009808
    %v8850 = vunpack.c.0.s8 %v8849
    %v8851 = vlaneseq
    %v8852 = vshrl.u32 %v8851, 7
    %v8853 = vsub.s32 %v8850, %v8852
    %v8854 = vrot.slane %v8840, %v8853
    %v8855 = vcombine.low %v8847, %v8854
    %v8858 = vsel %vm207, %v8838, 0.0
    %8859 = vadd.xlane.f32.xlu0 %v8858
    %v8860 = vpop.xlane.xlu0 %8859
    %v8861 = vsel %vm207, %v8855, 0.0
    %8862 = vadd.xlane.f32.xlu0 %v8861
    %v8863 = vpop.xlane.xlu0 %8862
    %v8864 = vmul.f32 %v8860, %v1936
    %v8865 = vmul.f32 %v8863, %v1936
    %v8866 = vadd.f32 %v8864, 1e-05
    %v8867 = vadd.f32 %v8865, 1e-05
    %v8868 = vrsqrt.pop %v8866
    %v8869 = vrsqrt.pop %v8867
    %v8873 = vunpack.c.l.s4 269488144
    %v8874 = vunpack.c.0.s8 %v8873
    %v8875 = vlaneseq
    %v8876 = vshrl.u32 %v8875, 7
    %v8877 = vsub.s32 %v8874, %v8876
    %v8878 = vrot.slane %v8868, %v8877
    %v8880 = vunpack.c.l.s4 842150450
    %v8881 = vunpack.c.0.s8 %v8880
    %v8882 = vlaneseq
    %v8883 = vshrl.u32 %v8882, 7
    %v8884 = vsub.s32 %v8881, %v8883
    %v8885 = vrot.slane %v8868, %v8884
    %v8887 = vunpack.c.l.s4 1414812756
    %v8888 = vunpack.c.0.s8 %v8887
    %v8889 = vlaneseq
    %v8890 = vshrl.u32 %v8889, 7
    %v8891 = vsub.s32 %v8888, %v8890
    %v8892 = vrot.slane %v8868, %v8891
    %v8894 = vunpack.c.l.s4 1987475062
    %v8895 = vunpack.c.0.s8 %v8894
    %v8896 = vlaneseq
    %v8897 = vshrl.u32 %v8896, 7
    %v8898 = vsub.s32 %v8895, %v8897
    %v8899 = vrot.slane %v8868, %v8898
    %v8901 = vunpack.c.l.s4 269488144
    %v8902 = vunpack.c.0.s8 %v8901
    %v8903 = vlaneseq
    %v8904 = vshrl.u32 %v8903, 7
    %v8905 = vsub.s32 %v8902, %v8904
    %v8906 = vrot.slane %v8869, %v8905
    %v8908 = vunpack.c.l.s4 842150450
    %v8909 = vunpack.c.0.s8 %v8908
    %v8910 = vlaneseq
    %v8911 = vshrl.u32 %v8910, 7
    %v8912 = vsub.s32 %v8909, %v8911
    %v8913 = vrot.slane %v8869, %v8912
    %v8915 = vunpack.c.l.s4 1414812756
    %v8916 = vunpack.c.0.s8 %v8915
    %v8917 = vlaneseq
    %v8918 = vshrl.u32 %v8917, 7
    %v8919 = vsub.s32 %v8916, %v8918
    %v8920 = vrot.slane %v8869, %v8919
    %v8922 = vunpack.c.l.s4 1987475062
    %v8923 = vunpack.c.0.s8 %v8922
    %v8924 = vlaneseq
    %v8925 = vshrl.u32 %v8924, 7
    %v8926 = vsub.s32 %v8923, %v8925
    %v8927 = vrot.slane %v8869, %v8926
    %v8936 = vmul.f32 %v8798, %v8878
    %v8937 = vmul.f32 %v8799, %v8885
    %v8938 = vmul.f32 %v8800, %v8892
    %v8939 = vmul.f32 %v8801, %v8899
    %v8940 = vmul.f32 %v8802, %v8906
    %v8941 = vmul.f32 %v8803, %v8913
    %v8942 = vmul.f32 %v8804, %v8920
    %v8943 = vmul.f32 %v8805, %v8927
    %v8944 = vlaneseq
    %v8945 = vshrl.u32 %v8944, 7
    %v8946 = vsub.s32 7, %v8945
    %v8947 = vrot.slane %v4613, %v8946
    %v8949 = vcombine.high %v8947, %v8947
    %v8951 = vunpack.c.l.s4 1983009808
    %v8952 = vunpack.c.0.s8 %v8951
    %v8953 = vlaneseq
    %v8954 = vshrl.u32 %v8953, 7
    %v8955 = vsub.s32 %v8952, %v8954
    %v8956 = vrot.slane %v8947, %v8955
    %v8958 = vunpack.c.l.s4 1983009808
    %v8959 = vunpack.c.0.s8 %v8958
    %v8960 = vlaneseq
    %v8961 = vshrl.u32 %v8960, 7
    %v8962 = vsub.s32 %v8959, %v8961
    %v8963 = vrot.slane %v8949, %v8962
    %v8964 = vcombine.high %v8956, %v8956
    %v8965 = vcombine.high %v8963, %v8963
    %v8970 = vmul.f32 %v8936, %v8956
    %v8971 = vmul.f32 %v8937, %v8964
    %v8972 = vmul.f32 %v8938, %v8963
    %v8973 = vmul.f32 %v8939, %v8965
    %v8974 = vmul.f32 %v8940, %v8956
    %v8975 = vmul.f32 %v8941, %v8964
    %v8976 = vmul.f32 %v8942, %v8963
    %v8977 = vmul.f32 %v8943, %v8965
    %v8978 = vlaneseq
    %v8979 = vshrl.u32 %v8978, 7
    %v8980 = vsub.s32 0, %v8979
    %v8981 = vrot.slane %v4614, %v8980
    %v8983 = vcombine.high %v8981, %v8981
    %v8985 = vunpack.c.l.s4 1983009808
    %v8986 = vunpack.c.0.s8 %v8985
    %v8987 = vlaneseq
    %v8988 = vshrl.u32 %v8987, 7
    %v8989 = vsub.s32 %v8986, %v8988
    %v8990 = vrot.slane %v8981, %v8989
    %v8992 = vunpack.c.l.s4 1983009808
    %v8993 = vunpack.c.0.s8 %v8992
    %v8994 = vlaneseq
    %v8995 = vshrl.u32 %v8994, 7
    %v8996 = vsub.s32 %v8993, %v8995
    %v8997 = vrot.slane %v8983, %v8996
    %v8998 = vcombine.high %v8990, %v8990
    %v8999 = vcombine.high %v8997, %v8997
    %v9004 = vadd.f32 %v8970, %v8990
    %v9005 = vadd.f32 %v8971, %v8998
    %v9006 = vadd.f32 %v8972, %v8997
    %v9007 = vadd.f32 %v8973, %v8999
    %v9008 = vadd.f32 %v8974, %v8990
    %v9009 = vadd.f32 %v8975, %v8998
    %v9010 = vadd.f32 %v8976, %v8997
    %v9011 = vadd.f32 %v8977, %v8999
    %s9012 = scalar_lea.vmem %s3, 32
    %v9013 = vld [vmem:[%s9012] sm:$0xff]
    %v9014 = vld [vmem:[%s9012 + $0x8] sm:$0x1]
    %s9015 = scalar_lea.vmem %s2, 32
    %v9016 = vld [vmem:[%s9015] sm:$0xff]
    %v9017 = vld [vmem:[%s9015 + $0x8] sm:$0x3]
    %v9026 = vcombine.low %v9004, %v9005
    %v9027 = vcombine.low %v9006, %v9007
    %v9029 = vunpack.c.l.s4 1983009808
    %v9030 = vunpack.c.0.s8 %v9029
    %v9031 = vlaneseq
    %v9032 = vshrl.u32 %v9031, 7
    %v9033 = vsub.s32 %v9030, %v9032
    %v9034 = vrot.slane %v9026, %v9033
    %v9036 = vunpack.c.l.s4 1983009808
    %v9037 = vunpack.c.0.s8 %v9036
    %v9038 = vlaneseq
    %v9039 = vshrl.u32 %v9038, 7
    %v9040 = vsub.s32 %v9037, %v9039
    %v9041 = vrot.slane %v9027, %v9040
    %v9042 = vcombine.low %v9034, %v9041
    %v9043 = vcombine.low %v9008, %v9009
    %v9044 = vcombine.low %v9010, %v9011
    %v9046 = vunpack.c.l.s4 1983009808
    %v9047 = vunpack.c.0.s8 %v9046
    %v9048 = vlaneseq
    %v9049 = vshrl.u32 %v9048, 7
    %v9050 = vsub.s32 %v9047, %v9049
    %v9051 = vrot.slane %v9043, %v9050
    %v9053 = vunpack.c.l.s4 1983009808
    %v9054 = vunpack.c.0.s8 %v9053
    %v9055 = vlaneseq
    %v9056 = vshrl.u32 %v9055, 7
    %v9057 = vsub.s32 %v9054, %v9056
    %v9058 = vrot.slane %v9044, %v9057
    %v9059 = vcombine.low %v9051, %v9058
    %v9060 = vsel %vm207, %v9042, 0
    %v9062 = vsel %vm207, %v9059, 0
    %v9065 = vsel %vm212, %v9017, 0
    %9067 = vmatprep.subr.mxu0 0.0
    %9068 = vmatpush1.msra.mxu0 %v9016
    %9069 = vmatprep.subr.mxu0 0.0
    %9070 = vmatpush1.msra.mxu0 %v9065
    %9071 = vmatprep.subr.mxu0 0.0
    %9072 = vmatpush1.msra.mxu0 0.0
    %9073 = vmatprep.subr.mxu0 0.0
    %9074 = vmatpush1.msra.mxu0 0.0
    %9075 = vmatprep.subr.mxu0 0.0
    %9076 = vmatpush1.msra.mxu0 0.0
    %9077 = vmatprep.subr.mxu0 0.0
    %9078 = vmatpush1.msra.mxu0 0.0
    %9079 = vmatprep.subr.mxu0 0.0
    %9080 = vmatpush1.msra.mxu0 0.0
    %9081 = vmatprep.subr.mxu0 0.0
    %9082 = vmatpush1.msra.mxu0 0.0
    %9083 = vmatprep.subr.mxu0 0.0
    %9084 = vmatpush1.msra.mxu0 0.0
    %9085 = vmatprep.subr.mxu0 0.0
    %9086 = vmatpush1.msra.mxu0 0.0
    %9087 = vmatprep.subr.mxu0 0.0
    %9088 = vmatpush1.msra.mxu0 0.0
    %9089 = vmatprep.subr.mxu0 0.0
    %9090 = vmatpush1.msra.mxu0 0.0
    %9091 = vmatprep.subr.mxu0 0.0
    %9092 = vmatpush1.msra.mxu0 0.0
    %9093 = vmatprep.subr.mxu0 0.0
    %9094 = vmatpush1.msra.mxu0 0.0
    %9095 = vmatprep.subr.mxu0 0.0
    %9096 = vmatpush1.msra.mxu0 0.0
    %9097 = vmatprep.subr.mxu0 0.0
    %9098 = vmatpush1.msra.mxu0 0.0
    %9099 = vmatprep.subr.mxu0 0.0
    %9100 = vmatpush1.msra.mxu0 0.0
    %9101 = vmatprep.subr.mxu0 0.0
    %9102 = vmatpush1.msra.mxu0 0.0
    %9103 = vmatprep.subr.mxu0 0.0
    %9104 = vmatpush1.msra.mxu0 0.0
    %9105 = vmatprep.subr.mxu0 0.0
    %9106 = vmatpush1.msra.mxu0 0.0
    %9107 = vmatprep.subr.mxu0 0.0
    %9108 = vmatpush1.msra.mxu0 0.0
    %9109 = vmatprep.subr.mxu0 0.0
    %9110 = vmatpush1.msra.mxu0 0.0
    %9111 = vmatprep.subr.mxu0 0.0
    %9112 = vmatpush1.msra.mxu0 0.0
    %9113 = vmatprep.subr.mxu0 0.0
    %9114 = vmatpush1.msra.mxu0 0.0
    %9115 = vmatprep.subr.mxu0 0.0
    %9116 = vmatpush1.msra.mxu0 0.0
    %9117 = vmatprep.subr.mxu0 0.0
    %9118 = vmatpush1.msra.mxu0 0.0
    %9119 = vmatprep.subr.mxu0 0.0
    %9120 = vmatpush1.msra.mxu0 0.0
    %9121 = vmatprep.subr.mxu0 0.0
    %9122 = vmatpush1.msra.mxu0 0.0
    %9123 = vmatprep.subr.mxu0 0.0
    %9124 = vmatpush1.msra.mxu0 0.0
    %9125 = vmatprep.subr.mxu0 0.0
    %9126 = vmatpush1.msra.mxu0 0.0
    %9127 = vmatprep.subr.mxu0 0.0
    %9128 = vmatpush1.msra.mxu0 0.0
    %9129 = vmatprep.subr.mxu0 0.0
    %9130 = vmatpush1.msra.mxu0 0.0
    %9131 = vmatprep.mubr.f32.mxu0 0.0
    %9132 = vmatmul.mubr.f32.gmra.mrb[0].mxu0 %v9060
    %v9133 = vpop.f32.mrb[0].mxu0
    %v9134 = vadd.f32 0.0, %v9133
    %v9135 = vpop.f32.mrb[0].mxu0
    %9136 = vmatprep.mubr.f32.mxu0 0.0
    %9137 = vmatmul.mubr.f32.gmra.mrb[0].mxu0 %v9062
    %v9138 = vpop.f32.mrb[0].mxu0
    %v9139 = vadd.f32 0.0, %v9138
    %v9140 = vpop.f32.mrb[0].mxu0
    %9141 = vdwg.mxu0
    %v9142 = vlaneseq
    %v9143 = vshrl.u32 %v9142, 7
    %v9144 = vsub.s32 0, %v9143
    %v9145 = vrot.slane %v9013, %v9144
    %v9146 = vadd.f32 %v9134, %v9145
    %v9147 = vadd.f32 %v9139, %v9145
    %v9150 = vcombine.high %v9146, %v9146
    %v9152 = vunpack.c.l.s4 1983009808
    %v9153 = vunpack.c.0.s8 %v9152
    %v9154 = vlaneseq
    %v9155 = vshrl.u32 %v9154, 7
    %v9156 = vsub.s32 %v9153, %v9155
    %v9157 = vrot.slane %v9146, %v9156
    %v9159 = vunpack.c.l.s4 1983009808
    %v9160 = vunpack.c.0.s8 %v9159
    %v9161 = vlaneseq
    %v9162 = vshrl.u32 %v9161, 7
    %v9163 = vsub.s32 %v9160, %v9162
    %v9164 = vrot.slane %v9150, %v9163
    %v9165 = vcombine.high %v9157, %v9157
    %v9166 = vcombine.high %v9164, %v9164
    %v9167 = vcombine.high %v9147, %v9147
    %v9169 = vunpack.c.l.s4 1983009808
    %v9170 = vunpack.c.0.s8 %v9169
    %v9171 = vlaneseq
    %v9172 = vshrl.u32 %v9171, 7
    %v9173 = vsub.s32 %v9170, %v9172
    %v9174 = vrot.slane %v9147, %v9173
    %v9176 = vunpack.c.l.s4 1983009808
    %v9177 = vunpack.c.0.s8 %v9176
    %v9178 = vlaneseq
    %v9179 = vshrl.u32 %v9178, 7
    %v9180 = vsub.s32 %v9177, %v9179
    %v9181 = vrot.slane %v9167, %v9180
    %v9182 = vcombine.high %v9174, %v9174
    %v9183 = vcombine.high %v9181, %v9181
    %v9192 = vlaneseq
    %v9193 = vshrl.u32 %v9192, 7
    %v9194 = vsub.s32 1, %v9193
    %v9195 = vrot.slane %v9013, %v9194
    %9197 = vrot.lane.b32.xlu0 %v9195, 10
    %v9198 = vpop.permute.xlu0 %9197
    %v9200 = vadd.f32 %v9134, %v9198
    %v9201 = vadd.f32 %v9139, %v9198
    %v9204 = vcombine.high %v9200, %v9200
    %v9206 = vunpack.c.l.s4 1983009808
    %v9207 = vunpack.c.0.s8 %v9206
    %v9208 = vlaneseq
    %v9209 = vshrl.u32 %v9208, 7
    %v9210 = vsub.s32 %v9207, %v9209
    %v9211 = vrot.slane %v9200, %v9210
    %v9213 = vunpack.c.l.s4 1983009808
    %v9214 = vunpack.c.0.s8 %v9213
    %v9215 = vlaneseq
    %v9216 = vshrl.u32 %v9215, 7
    %v9217 = vsub.s32 %v9214, %v9216
    %v9218 = vrot.slane %v9204, %v9217
    %v9219 = vcombine.high %v9211, %v9211
    %v9220 = vcombine.high %v9218, %v9218
    %v9221 = vcombine.high %v9201, %v9201
    %v9223 = vunpack.c.l.s4 1983009808
    %v9224 = vunpack.c.0.s8 %v9223
    %v9225 = vlaneseq
    %v9226 = vshrl.u32 %v9225, 7
    %v9227 = vsub.s32 %v9224, %v9226
    %v9228 = vrot.slane %v9201, %v9227
    %v9230 = vunpack.c.l.s4 1983009808
    %v9231 = vunpack.c.0.s8 %v9230
    %v9232 = vlaneseq
    %v9233 = vshrl.u32 %v9232, 7
    %v9234 = vsub.s32 %v9231, %v9233
    %v9235 = vrot.slane %v9221, %v9234
    %v9236 = vcombine.high %v9228, %v9228
    %v9237 = vcombine.high %v9235, %v9235
    %v9238 = vlaneseq
    %v9239 = vshrl.u32 %v9238, 7
    %v9240 = vsub.s32 2, %v9239
    %v9241 = vrot.slane %v9013, %v9240
    %9243 = vrot.lane.b32.xlu0 %v9241, 20
    %v9244 = vpop.permute.xlu0 %9243
    %v9246 = vadd.f32 %v9134, %v9244
    %v9247 = vadd.f32 %v9139, %v9244
    %v9250 = vcombine.high %v9246, %v9246
    %v9252 = vunpack.c.l.s4 1983009808
    %v9253 = vunpack.c.0.s8 %v9252
    %v9254 = vlaneseq
    %v9255 = vshrl.u32 %v9254, 7
    %v9256 = vsub.s32 %v9253, %v9255
    %v9257 = vrot.slane %v9246, %v9256
    %v9259 = vunpack.c.l.s4 1983009808
    %v9260 = vunpack.c.0.s8 %v9259
    %v9261 = vlaneseq
    %v9262 = vshrl.u32 %v9261, 7
    %v9263 = vsub.s32 %v9260, %v9262
    %v9264 = vrot.slane %v9250, %v9263
    %v9265 = vcombine.high %v9257, %v9257
    %v9266 = vcombine.high %v9264, %v9264
    %v9267 = vcombine.high %v9247, %v9247
    %v9269 = vunpack.c.l.s4 1983009808
    %v9270 = vunpack.c.0.s8 %v9269
    %v9271 = vlaneseq
    %v9272 = vshrl.u32 %v9271, 7
    %v9273 = vsub.s32 %v9270, %v9272
    %v9274 = vrot.slane %v9247, %v9273
    %v9276 = vunpack.c.l.s4 1983009808
    %v9277 = vunpack.c.0.s8 %v9276
    %v9278 = vlaneseq
    %v9279 = vshrl.u32 %v9278, 7
    %v9280 = vsub.s32 %v9277, %v9279
    %v9281 = vrot.slane %v9267, %v9280
    %v9282 = vcombine.high %v9274, %v9274
    %v9283 = vcombine.high %v9281, %v9281
    %v9284 = vlaneseq
    %v9285 = vshrl.u32 %v9284, 7
    %v9286 = vsub.s32 0, %v9285
    %v9287 = vrot.slane %v9211, %v9286
    %v9288 = vlaneseq
    %v9289 = vshrl.u32 %v9288, 7
    %v9290 = vsub.s32 0, %v9289
    %v9291 = vrot.slane %v9219, %v9290
    %v9292 = vlaneseq
    %v9293 = vshrl.u32 %v9292, 7
    %v9294 = vsub.s32 0, %v9293
    %v9295 = vrot.slane %v9218, %v9294
    %v9296 = vlaneseq
    %v9297 = vshrl.u32 %v9296, 7
    %v9298 = vsub.s32 0, %v9297
    %v9299 = vrot.slane %v9220, %v9298
    %v9300 = vlaneseq
    %v9301 = vshrl.u32 %v9300, 7
    %v9302 = vsub.s32 0, %v9301
    %v9303 = vrot.slane %v9228, %v9302
    %v9304 = vlaneseq
    %v9305 = vshrl.u32 %v9304, 7
    %v9306 = vsub.s32 0, %v9305
    %v9307 = vrot.slane %v9236, %v9306
    %v9308 = vlaneseq
    %v9309 = vshrl.u32 %v9308, 7
    %v9310 = vsub.s32 0, %v9309
    %v9311 = vrot.slane %v9235, %v9310
    %v9312 = vlaneseq
    %v9313 = vshrl.u32 %v9312, 7
    %v9314 = vsub.s32 0, %v9313
    %v9315 = vrot.slane %v9237, %v9314
    %v9316 = vsel %vm465, %v9291, %v9287
    %v9317 = vsel %vm467, %v9295, %v9316
    %v9318 = vsel %vm469, %v9299, %v9317
    %v9319 = vsel %vm471, %v9303, %v9318
    %v9320 = vsel %vm473, %v9307, %v9319
    %v9321 = vsel %vm475, %v9311, %v9320
    %v9322 = vsel %vm477, %v9315, %v9321
    %9323 = vrot.lane.b32.xlu0 %v9322, 118
    %v9324 = vpop.permute.xlu0 %9323
    %9326 = vxpose.xlu0.b32.start [1/16] %v9324, 128
    %9327 = vxpose.xlu0.b32.cont [2/16] 0.0, 128
    %9328 = vxpose.xlu0.b32.cont [3/16] 0.0, 128
    %9329 = vxpose.xlu0.b32.cont [4/16] 0.0, 128
    %9330 = vxpose.xlu0.b32.cont [5/16] 0.0, 128
    %9331 = vxpose.xlu0.b32.cont [6/16] 0.0, 128
    %9332 = vxpose.xlu0.b32.cont [7/16] 0.0, 128
    %9333 = vxpose.xlu0.b32.cont [8/16] 0.0, 128
    %9334 = vxpose.xlu0.b32.cont [9/16] 0.0, 128
    %9335 = vxpose.xlu0.b32.cont [10/16] 0.0, 128
    %9336 = vxpose.xlu0.b32.cont [11/16] 0.0, 128
    %9337 = vxpose.xlu0.b32.cont [12/16] 0.0, 128
    %9338 = vxpose.xlu0.b32.cont [13/16] 0.0, 128
    %9339 = vxpose.xlu0.b32.cont [14/16] 0.0, 128
    %9340 = vxpose.xlu0.b32.cont [15/16] 0.0, 128
    %9341 = vxpose.xlu0.b32.end [16/16] 0.0, 128
    %v9342 = vpop.trf.xlu0
    %v9343 = vpop.trf.xlu0
    %v9344 = vpop.trf.xlu0
    %v9345 = vpop.trf.xlu0
    %v9346 = vpop.trf.xlu0
    %v9347 = vpop.trf.xlu0
    %v9348 = vpop.trf.xlu0
    %v9349 = vpop.trf.xlu0
    %v9350 = vpop.trf.xlu0
    %v9351 = vpop.trf.xlu0
    %v9352 = vpop.trf.xlu0
    %v9353 = vpop.trf.xlu0
    %v9354 = vpop.trf.xlu0
    %v9355 = vpop.trf.xlu0
    %v9356 = vpop.trf.xlu0
    %v9357 = vpop.trf.xlu0
    %v9358 = vlaneseq
    %v9359 = vshrl.u32 %v9358, 7
    %v9360 = vsub.s32 0, %v9359
    %v9361 = vrot.slane %v9257, %v9360
    %v9362 = vlaneseq
    %v9363 = vshrl.u32 %v9362, 7
    %v9364 = vsub.s32 0, %v9363
    %v9365 = vrot.slane %v9265, %v9364
    %v9366 = vlaneseq
    %v9367 = vshrl.u32 %v9366, 7
    %v9368 = vsub.s32 0, %v9367
    %v9369 = vrot.slane %v9264, %v9368
    %v9370 = vlaneseq
    %v9371 = vshrl.u32 %v9370, 7
    %v9372 = vsub.s32 0, %v9371
    %v9373 = vrot.slane %v9266, %v9372
    %v9374 = vlaneseq
    %v9375 = vshrl.u32 %v9374, 7
    %v9376 = vsub.s32 0, %v9375
    %v9377 = vrot.slane %v9274, %v9376
    %v9378 = vlaneseq
    %v9379 = vshrl.u32 %v9378, 7
    %v9380 = vsub.s32 0, %v9379
    %v9381 = vrot.slane %v9282, %v9380
    %v9382 = vlaneseq
    %v9383 = vshrl.u32 %v9382, 7
    %v9384 = vsub.s32 0, %v9383
    %v9385 = vrot.slane %v9281, %v9384
    %v9386 = vlaneseq
    %v9387 = vshrl.u32 %v9386, 7
    %v9388 = vsub.s32 0, %v9387
    %v9389 = vrot.slane %v9283, %v9388
    %v9390 = vsel %vm465, %v9365, %v9361
    %v9391 = vsel %vm467, %v9369, %v9390
    %v9392 = vsel %vm469, %v9373, %v9391
    %v9393 = vsel %vm471, %v9377, %v9392
    %v9394 = vsel %vm473, %v9381, %v9393
    %v9395 = vsel %vm475, %v9385, %v9394
    %v9396 = vsel %vm477, %v9389, %v9395
    %9397 = vrot.lane.b32.xlu0 %v9396, 108
    %v9398 = vpop.permute.xlu0 %9397
    %9400 = vxpose.xlu0.b32.start [1/16] %v9398, 128
    %9401 = vxpose.xlu0.b32.cont [2/16] 0.0, 128
    %9402 = vxpose.xlu0.b32.cont [3/16] 0.0, 128
    %9403 = vxpose.xlu0.b32.cont [4/16] 0.0, 128
    %9404 = vxpose.xlu0.b32.cont [5/16] 0.0, 128
    %9405 = vxpose.xlu0.b32.cont [6/16] 0.0, 128
    %9406 = vxpose.xlu0.b32.cont [7/16] 0.0, 128
    %9407 = vxpose.xlu0.b32.cont [8/16] 0.0, 128
    %9408 = vxpose.xlu0.b32.cont [9/16] 0.0, 128
    %9409 = vxpose.xlu0.b32.cont [10/16] 0.0, 128
    %9410 = vxpose.xlu0.b32.cont [11/16] 0.0, 128
    %9411 = vxpose.xlu0.b32.cont [12/16] 0.0, 128
    %9412 = vxpose.xlu0.b32.cont [13/16] 0.0, 128
    %9413 = vxpose.xlu0.b32.cont [14/16] 0.0, 128
    %9414 = vxpose.xlu0.b32.cont [15/16] 0.0, 128
    %9415 = vxpose.xlu0.b32.end [16/16] 0.0, 128
    %v9416 = vpop.trf.xlu0
    %v9417 = vpop.trf.xlu0
    %v9418 = vpop.trf.xlu0
    %v9419 = vpop.trf.xlu0
    %v9420 = vpop.trf.xlu0
    %v9421 = vpop.trf.xlu0
    %v9422 = vpop.trf.xlu0
    %v9423 = vpop.trf.xlu0
    %v9424 = vpop.trf.xlu0
    %v9425 = vpop.trf.xlu0
    %v9426 = vpop.trf.xlu0
    %v9427 = vpop.trf.xlu0
    %v9428 = vpop.trf.xlu0
    %v9429 = vpop.trf.xlu0
    %v9430 = vpop.trf.xlu0
    %v9431 = vpop.trf.xlu0
    %v9432 = vlaneseq
    %v9433 = vshrl.u32 %v9432, 7
    %v9434 = vsub.s32 0, %v9433
    %v9435 = vrot.slane %v9157, %v9434
    %9437 = vbcast.lane.b32.xlu0 %v9435, 256
    %v9438 = vpop.permute.xlu0 %9437
    %s9440 = sor.u32 256, 8
    %9441 = vbcast.lane.b32.xlu0 %v9435, %s9440
    %v9442 = vpop.permute.xlu0 %9441
    %v9443 = vlaneseq
    %v9444 = vshrl.u32 %v9443, 7
    %v9445 = vsub.s32 0, %v9444
    %v9446 = vrot.slane %v9165, %v9445
    %9448 = vbcast.lane.b32.xlu0 %v9446, 256
    %v9449 = vpop.permute.xlu0 %9448
    %s9451 = sor.u32 256, 8
    %9452 = vbcast.lane.b32.xlu0 %v9446, %s9451
    %v9453 = vpop.permute.xlu0 %9452
    %v9454 = vlaneseq
    %v9455 = vshrl.u32 %v9454, 7
    %v9456 = vsub.s32 0, %v9455
    %v9457 = vrot.slane %v9164, %v9456
    %9459 = vbcast.lane.b32.xlu0 %v9457, 256
    %v9460 = vpop.permute.xlu0 %9459
    %s9462 = sor.u32 256, 8
    %9463 = vbcast.lane.b32.xlu0 %v9457, %s9462
    %v9464 = vpop.permute.xlu0 %9463
    %v9465 = vlaneseq
    %v9466 = vshrl.u32 %v9465, 7
    %v9467 = vsub.s32 0, %v9466
    %v9468 = vrot.slane %v9166, %v9467
    %9470 = vbcast.lane.b32.xlu0 %v9468, 256
    %v9471 = vpop.permute.xlu0 %9470
    %s9473 = sor.u32 256, 8
    %9474 = vbcast.lane.b32.xlu0 %v9468, %s9473
    %v9475 = vpop.permute.xlu0 %9474
    %v9476 = vlaneseq
    %v9477 = vshrl.u32 %v9476, 7
    %v9478 = vsub.s32 0, %v9477
    %v9479 = vrot.slane %v9174, %v9478
    %9481 = vbcast.lane.b32.xlu0 %v9479, 256
    %v9482 = vpop.permute.xlu0 %9481
    %s9484 = sor.u32 256, 8
    %9485 = vbcast.lane.b32.xlu0 %v9479, %s9484
    %v9486 = vpop.permute.xlu0 %9485
    %v9487 = vlaneseq
    %v9488 = vshrl.u32 %v9487, 7
    %v9489 = vsub.s32 0, %v9488
    %v9490 = vrot.slane %v9182, %v9489
    %9492 = vbcast.lane.b32.xlu0 %v9490, 256
    %v9493 = vpop.permute.xlu0 %9492
    %s9495 = sor.u32 256, 8
    %9496 = vbcast.lane.b32.xlu0 %v9490, %s9495
    %v9497 = vpop.permute.xlu0 %9496
    %v9498 = vlaneseq
    %v9499 = vshrl.u32 %v9498, 7
    %v9500 = vsub.s32 0, %v9499
    %v9501 = vrot.slane %v9181, %v9500
    %9503 = vbcast.lane.b32.xlu0 %v9501, 256
    %v9504 = vpop.permute.xlu0 %9503
    %s9506 = sor.u32 256, 8
    %9507 = vbcast.lane.b32.xlu0 %v9501, %s9506
    %v9508 = vpop.permute.xlu0 %9507
    %v9509 = vlaneseq
    %v9510 = vshrl.u32 %v9509, 7
    %v9511 = vsub.s32 0, %v9510
    %v9512 = vrot.slane %v9183, %v9511
    %9514 = vbcast.lane.b32.xlu0 %v9512, 256
    %v9515 = vpop.permute.xlu0 %9514
    %s9517 = sor.u32 256, 8
    %9518 = vbcast.lane.b32.xlu0 %v9512, %s9517
    %v9519 = vpop.permute.xlu0 %9518
    %v9520 = vmul.f32 %v9438, %v9342
    %v9521 = vmul.f32 %v9442, %v9343
    %v9522 = vmul.f32 %v9449, %v9342
    %v9523 = vmul.f32 %v9453, %v9343
    %v9524 = vmul.f32 %v9460, %v9342
    %v9525 = vmul.f32 %v9464, %v9343
    %v9526 = vmul.f32 %v9471, %v9342
    %v9527 = vmul.f32 %v9475, %v9343
    %v9528 = vmul.f32 %v9482, %v9342
    %v9529 = vmul.f32 %v9486, %v9343
    %v9530 = vmul.f32 %v9493, %v9342
    %v9531 = vmul.f32 %v9497, %v9343
    %v9532 = vmul.f32 %v9504, %v9342
    %v9533 = vmul.f32 %v9508, %v9343
    %v9534 = vmul.f32 %v9515, %v9342
    %v9535 = vmul.f32 %v9519, %v9343
    %v9536 = vadd.f32 %v9520, %v695
    %v9537 = vadd.f32 %v9521, %v695
    %v9538 = vadd.f32 %v9522, %v699
    %v9539 = vadd.f32 %v9523, %v699
    %v9540 = vadd.f32 %v9524, %v703
    %v9541 = vadd.f32 %v9525, %v703
    %v9542 = vadd.f32 %v9526, %v707
    %v9543 = vadd.f32 %v9527, %v707
    %v9544 = vadd.f32 %v9528, %v711
    %v9545 = vadd.f32 %v9529, %v711
    %v9546 = vadd.f32 %v9530, %v715
    %v9547 = vadd.f32 %v9531, %v715
    %v9548 = vadd.f32 %v9532, %v719
    %v9549 = vadd.f32 %v9533, %v719
    %v9550 = vadd.f32 %v9534, %v723
    %v9551 = vadd.f32 %v9535, %v723
    %v9552 = vsel %vm748, %v9536, -inf
    %9553 = vmax.xlane.f32.xlu0 %v9552
    %v9554 = vpop.xlane.xlu0 %9553
    %v9555 = vsel %vm752, %v9537, -inf
    %9556 = vmax.xlane.f32.xlu0 %v9555
    %v9557 = vpop.xlane.xlu0 %9556
    %v9558 = vsel %vm748, %v9538, -inf
    %9559 = vmax.xlane.f32.xlu0 %v9558
    %v9560 = vpop.xlane.xlu0 %9559
    %v9561 = vsel %vm752, %v9539, -inf
    %9562 = vmax.xlane.f32.xlu0 %v9561
    %v9563 = vpop.xlane.xlu0 %9562
    %v9564 = vsel %vm748, %v9540, -inf
    %9565 = vmax.xlane.f32.xlu0 %v9564
    %v9566 = vpop.xlane.xlu0 %9565
    %v9567 = vsel %vm752, %v9541, -inf
    %9568 = vmax.xlane.f32.xlu0 %v9567
    %v9569 = vpop.xlane.xlu0 %9568
    %v9570 = vsel %vm748, %v9542, -inf
    %9571 = vmax.xlane.f32.xlu0 %v9570
    %v9572 = vpop.xlane.xlu0 %9571
    %v9573 = vsel %vm752, %v9543, -inf
    %9574 = vmax.xlane.f32.xlu0 %v9573
    %v9575 = vpop.xlane.xlu0 %9574
    %v9576 = vsel %vm748, %v9544, -inf
    %9577 = vmax.xlane.f32.xlu0 %v9576
    %v9578 = vpop.xlane.xlu0 %9577
    %v9579 = vsel %vm752, %v9545, -inf
    %9580 = vmax.xlane.f32.xlu0 %v9579
    %v9581 = vpop.xlane.xlu0 %9580
    %v9582 = vsel %vm748, %v9546, -inf
    %9583 = vmax.xlane.f32.xlu0 %v9582
    %v9584 = vpop.xlane.xlu0 %9583
    %v9585 = vsel %vm752, %v9547, -inf
    %9586 = vmax.xlane.f32.xlu0 %v9585
    %v9587 = vpop.xlane.xlu0 %9586
    %v9588 = vsel %vm748, %v9548, -inf
    %9589 = vmax.xlane.f32.xlu0 %v9588
    %v9590 = vpop.xlane.xlu0 %9589
    %v9591 = vsel %vm752, %v9549, -inf
    %9592 = vmax.xlane.f32.xlu0 %v9591
    %v9593 = vpop.xlane.xlu0 %9592
    %v9594 = vsel %vm748, %v9550, -inf
    %9595 = vmax.xlane.f32.xlu0 %v9594
    %v9596 = vpop.xlane.xlu0 %9595
    %v9597 = vsel %vm752, %v9551, -inf
    %9598 = vmax.xlane.f32.xlu0 %v9597
    %v9599 = vpop.xlane.xlu0 %9598
    %v9600 = vsub.f32 %v9536, %v9554
    %v9601 = vsub.f32 %v9537, %v9557
    %v9602 = vsub.f32 %v9538, %v9560
    %v9603 = vsub.f32 %v9539, %v9563
    %v9604 = vsub.f32 %v9540, %v9566
    %v9605 = vsub.f32 %v9541, %v9569
    %v9606 = vsub.f32 %v9542, %v9572
    %v9607 = vsub.f32 %v9543, %v9575
    %v9608 = vsub.f32 %v9544, %v9578
    %v9609 = vsub.f32 %v9545, %v9581
    %v9610 = vsub.f32 %v9546, %v9584
    %v9611 = vsub.f32 %v9547, %v9587
    %v9612 = vsub.f32 %v9548, %v9590
    %v9613 = vsub.f32 %v9549, %v9593
    %v9614 = vsub.f32 %v9550, %v9596
    %v9615 = vsub.f32 %v9551, %v9599
    %v9616 = vmul.f32 %v9600, 1.442695
    %v9617 = vpow.pop %v9616
    %v9618 = vmul.f32 %v9601, 1.442695
    %v9619 = vpow.pop %v9618
    %v9620 = vmul.f32 %v9602, 1.442695
    %v9621 = vpow.pop %v9620
    %v9622 = vmul.f32 %v9603, 1.442695
    %v9623 = vpow.pop %v9622
    %v9624 = vmul.f32 %v9604, 1.442695
    %v9625 = vpow.pop %v9624
    %v9626 = vmul.f32 %v9605, 1.442695
    %v9627 = vpow.pop %v9626
    %v9628 = vmul.f32 %v9606, 1.442695
    %v9629 = vpow.pop %v9628
    %v9630 = vmul.f32 %v9607, 1.442695
    %v9631 = vpow.pop %v9630
    %v9632 = vmul.f32 %v9608, 1.442695
    %v9633 = vpow.pop %v9632
    %v9634 = vmul.f32 %v9609, 1.442695
    %v9635 = vpow.pop %v9634
    %v9636 = vmul.f32 %v9610, 1.442695
    %v9637 = vpow.pop %v9636
    %v9638 = vmul.f32 %v9611, 1.442695
    %v9639 = vpow.pop %v9638
    %v9640 = vmul.f32 %v9612, 1.442695
    %v9641 = vpow.pop %v9640
    %v9642 = vmul.f32 %v9613, 1.442695
    %v9643 = vpow.pop %v9642
    %v9644 = vmul.f32 %v9614, 1.442695
    %v9645 = vpow.pop %v9644
    %v9646 = vmul.f32 %v9615, 1.442695
    %v9647 = vpow.pop %v9646
    %v9648 = vsel %vm748, %v9617, 0.0
    %9649 = vadd.xlane.f32.xlu0 %v9648
    %v9650 = vpop.xlane.xlu0 %9649
    %v9651 = vsel %vm752, %v9619, 0.0
    %9652 = vadd.xlane.f32.xlu0 %v9651
    %v9653 = vpop.xlane.xlu0 %9652
    %v9654 = vsel %vm748, %v9621, 0.0
    %9655 = vadd.xlane.f32.xlu0 %v9654
    %v9656 = vpop.xlane.xlu0 %9655
    %v9657 = vsel %vm752, %v9623, 0.0
    %9658 = vadd.xlane.f32.xlu0 %v9657
    %v9659 = vpop.xlane.xlu0 %9658
    %v9660 = vsel %vm748, %v9625, 0.0
    %9661 = vadd.xlane.f32.xlu0 %v9660
    %v9662 = vpop.xlane.xlu0 %9661
    %v9663 = vsel %vm752, %v9627, 0.0
    %9664 = vadd.xlane.f32.xlu0 %v9663
    %v9665 = vpop.xlane.xlu0 %9664
    %v9666 = vsel %vm748, %v9629, 0.0
    %9667 = vadd.xlane.f32.xlu0 %v9666
    %v9668 = vpop.xlane.xlu0 %9667
    %v9669 = vsel %vm752, %v9631, 0.0
    %9670 = vadd.xlane.f32.xlu0 %v9669
    %v9671 = vpop.xlane.xlu0 %9670
    %v9672 = vsel %vm748, %v9633, 0.0
    %9673 = vadd.xlane.f32.xlu0 %v9672
    %v9674 = vpop.xlane.xlu0 %9673
    %v9675 = vsel %vm752, %v9635, 0.0
    %9676 = vadd.xlane.f32.xlu0 %v9675
    %v9677 = vpop.xlane.xlu0 %9676
    %v9678 = vsel %vm748, %v9637, 0.0
    %9679 = vadd.xlane.f32.xlu0 %v9678
    %v9680 = vpop.xlane.xlu0 %9679
    %v9681 = vsel %vm752, %v9639, 0.0
    %9682 = vadd.xlane.f32.xlu0 %v9681
    %v9683 = vpop.xlane.xlu0 %9682
    %v9684 = vsel %vm748, %v9641, 0.0
    %9685 = vadd.xlane.f32.xlu0 %v9684
    %v9686 = vpop.xlane.xlu0 %9685
    %v9687 = vsel %vm752, %v9643, 0.0
    %9688 = vadd.xlane.f32.xlu0 %v9687
    %v9689 = vpop.xlane.xlu0 %9688
    %v9690 = vsel %vm748, %v9645, 0.0
    %9691 = vadd.xlane.f32.xlu0 %v9690
    %v9692 = vpop.xlane.xlu0 %9691
    %v9693 = vsel %vm752, %v9647, 0.0
    %9694 = vadd.xlane.f32.xlu0 %v9693
    %v9695 = vpop.xlane.xlu0 %9694
    %v9696 = vmul.f32 %v9617, %v9416
    %v9697 = vmul.f32 %v9619, %v9417
    %v9698 = vmul.f32 %v9621, %v9416
    %v9699 = vmul.f32 %v9623, %v9417
    %v9700 = vmul.f32 %v9625, %v9416
    %v9701 = vmul.f32 %v9627, %v9417
    %v9702 = vmul.f32 %v9629, %v9416
    %v9703 = vmul.f32 %v9631, %v9417
    %v9704 = vmul.f32 %v9633, %v9416
    %v9705 = vmul.f32 %v9635, %v9417
    %v9706 = vmul.f32 %v9637, %v9416
    %v9707 = vmul.f32 %v9639, %v9417
    %v9708 = vmul.f32 %v9641, %v9416
    %v9709 = vmul.f32 %v9643, %v9417
    %v9710 = vmul.f32 %v9645, %v9416
    %v9711 = vmul.f32 %v9647, %v9417
    %v9712 = vsel %vm748, %v9696, 0.0
    %9713 = vadd.xlane.f32.xlu0 %v9712
    %v9714 = vpop.xlane.xlu0 %9713
    %v9715 = vsel %vm752, %v9697, 0.0
    %9716 = vadd.xlane.f32.xlu0 %v9715
    %v9717 = vpop.xlane.xlu0 %9716
    %v9718 = vsel %vm748, %v9698, 0.0
    %9719 = vadd.xlane.f32.xlu0 %v9718
    %v9720 = vpop.xlane.xlu0 %9719
    %v9721 = vsel %vm752, %v9699, 0.0
    %9722 = vadd.xlane.f32.xlu0 %v9721
    %v9723 = vpop.xlane.xlu0 %9722
    %v9724 = vsel %vm748, %v9700, 0.0
    %9725 = vadd.xlane.f32.xlu0 %v9724
    %v9726 = vpop.xlane.xlu0 %9725
    %v9727 = vsel %vm752, %v9701, 0.0
    %9728 = vadd.xlane.f32.xlu0 %v9727
    %v9729 = vpop.xlane.xlu0 %9728
    %v9730 = vsel %vm748, %v9702, 0.0
    %9731 = vadd.xlane.f32.xlu0 %v9730
    %v9732 = vpop.xlane.xlu0 %9731
    %v9733 = vsel %vm752, %v9703, 0.0
    %9734 = vadd.xlane.f32.xlu0 %v9733
    %v9735 = vpop.xlane.xlu0 %9734
    %v9736 = vsel %vm748, %v9704, 0.0
    %9737 = vadd.xlane.f32.xlu0 %v9736
    %v9738 = vpop.xlane.xlu0 %9737
    %v9739 = vsel %vm752, %v9705, 0.0
    %9740 = vadd.xlane.f32.xlu0 %v9739
    %v9741 = vpop.xlane.xlu0 %9740
    %v9742 = vsel %vm748, %v9706, 0.0
    %9743 = vadd.xlane.f32.xlu0 %v9742
    %v9744 = vpop.xlane.xlu0 %9743
    %v9745 = vsel %vm752, %v9707, 0.0
    %9746 = vadd.xlane.f32.xlu0 %v9745
    %v9747 = vpop.xlane.xlu0 %9746
    %v9748 = vsel %vm748, %v9708, 0.0
    %9749 = vadd.xlane.f32.xlu0 %v9748
    %v9750 = vpop.xlane.xlu0 %9749
    %v9751 = vsel %vm752, %v9709, 0.0
    %9752 = vadd.xlane.f32.xlu0 %v9751
    %v9753 = vpop.xlane.xlu0 %9752
    %v9754 = vsel %vm748, %v9710, 0.0
    %9755 = vadd.xlane.f32.xlu0 %v9754
    %v9756 = vpop.xlane.xlu0 %9755
    %v9757 = vsel %vm752, %v9711, 0.0
    %9758 = vadd.xlane.f32.xlu0 %v9757
    %v9759 = vpop.xlane.xlu0 %9758
    %v9760 = vrcp.pop %v9650
    %v9761 = vrcp.pop %v9653
    %v9762 = vrcp.pop %v9656
    %v9763 = vrcp.pop %v9659
    %v9764 = vrcp.pop %v9662
    %v9765 = vrcp.pop %v9665
    %v9766 = vrcp.pop %v9668
    %v9767 = vrcp.pop %v9671
    %v9768 = vrcp.pop %v9674
    %v9769 = vrcp.pop %v9677
    %v9770 = vrcp.pop %v9680
    %v9771 = vrcp.pop %v9683
    %v9772 = vrcp.pop %v9686
    %v9773 = vrcp.pop %v9689
    %v9774 = vrcp.pop %v9692
    %v9775 = vrcp.pop %v9695
    %v9776 = vmul.f32 %v9714, %v9760
    %v9777 = vmul.f32 %v9717, %v9761
    %v9778 = vmul.f32 %v9720, %v9762
    %v9779 = vmul.f32 %v9723, %v9763
    %v9780 = vmul.f32 %v9726, %v9764
    %v9781 = vmul.f32 %v9729, %v9765
    %v9782 = vmul.f32 %v9732, %v9766
    %v9783 = vmul.f32 %v9735, %v9767
    %v9784 = vmul.f32 %v9738, %v9768
    %v9785 = vmul.f32 %v9741, %v9769
    %v9786 = vmul.f32 %v9744, %v9770
    %v9787 = vmul.f32 %v9747, %v9771
    %v9788 = vmul.f32 %v9750, %v9772
    %v9789 = vmul.f32 %v9753, %v9773
    %v9790 = vmul.f32 %v9756, %v9774
    %v9791 = vmul.f32 %v9759, %v9775
    %v9792 = vlaneseq
    %v9793 = vshrl.u32 %v9792, 7
    %v9794 = vsub.s32 1, %v9793
    %v9795 = vrot.slane %v9211, %v9794
    %v9796 = vlaneseq
    %v9797 = vshrl.u32 %v9796, 7
    %v9798 = vsub.s32 1, %v9797
    %v9799 = vrot.slane %v9219, %v9798
    %v9800 = vlaneseq
    %v9801 = vshrl.u32 %v9800, 7
    %v9802 = vsub.s32 1, %v9801
    %v9803 = vrot.slane %v9218, %v9802
    %v9804 = vlaneseq
    %v9805 = vshrl.u32 %v9804, 7
    %v9806 = vsub.s32 1, %v9805
    %v9807 = vrot.slane %v9220, %v9806
    %v9808 = vlaneseq
    %v9809 = vshrl.u32 %v9808, 7
    %v9810 = vsub.s32 1, %v9809
    %v9811 = vrot.slane %v9228, %v9810
    %v9812 = vlaneseq
    %v9813 = vshrl.u32 %v9812, 7
    %v9814 = vsub.s32 1, %v9813
    %v9815 = vrot.slane %v9236, %v9814
    %v9816 = vlaneseq
    %v9817 = vshrl.u32 %v9816, 7
    %v9818 = vsub.s32 1, %v9817
    %v9819 = vrot.slane %v9235, %v9818
    %v9820 = vlaneseq
    %v9821 = vshrl.u32 %v9820, 7
    %v9822 = vsub.s32 1, %v9821
    %v9823 = vrot.slane %v9237, %v9822
    %v9824 = vsel %vm465, %v9799, %v9795
    %v9825 = vsel %vm467, %v9803, %v9824
    %v9826 = vsel %vm469, %v9807, %v9825
    %v9827 = vsel %vm471, %v9811, %v9826
    %v9828 = vsel %vm473, %v9815, %v9827
    %v9829 = vsel %vm475, %v9819, %v9828
    %v9830 = vsel %vm477, %v9823, %v9829
    %9831 = vrot.lane.b32.xlu0 %v9830, 118
    %v9832 = vpop.permute.xlu0 %9831
    %9834 = vxpose.xlu0.b32.start [1/16] %v9832, 128
    %9835 = vxpose.xlu0.b32.cont [2/16] 0.0, 128
    %9836 = vxpose.xlu0.b32.cont [3/16] 0.0, 128
    %9837 = vxpose.xlu0.b32.cont [4/16] 0.0, 128
    %9838 = vxpose.xlu0.b32.cont [5/16] 0.0, 128
    %9839 = vxpose.xlu0.b32.cont [6/16] 0.0, 128
    %9840 = vxpose.xlu0.b32.cont [7/16] 0.0, 128
    %9841 = vxpose.xlu0.b32.cont [8/16] 0.0, 128
    %9842 = vxpose.xlu0.b32.cont [9/16] 0.0, 128
    %9843 = vxpose.xlu0.b32.cont [10/16] 0.0, 128
    %9844 = vxpose.xlu0.b32.cont [11/16] 0.0, 128
    %9845 = vxpose.xlu0.b32.cont [12/16] 0.0, 128
    %9846 = vxpose.xlu0.b32.cont [13/16] 0.0, 128
    %9847 = vxpose.xlu0.b32.cont [14/16] 0.0, 128
    %9848 = vxpose.xlu0.b32.cont [15/16] 0.0, 128
    %9849 = vxpose.xlu0.b32.end [16/16] 0.0, 128
    %v9850 = vpop.trf.xlu0
    %v9851 = vpop.trf.xlu0
    %v9852 = vpop.trf.xlu0
    %v9853 = vpop.trf.xlu0
    %v9854 = vpop.trf.xlu0
    %v9855 = vpop.trf.xlu0
    %v9856 = vpop.trf.xlu0
    %v9857 = vpop.trf.xlu0
    %v9858 = vpop.trf.xlu0
    %v9859 = vpop.trf.xlu0
    %v9860 = vpop.trf.xlu0
    %v9861 = vpop.trf.xlu0
    %v9862 = vpop.trf.xlu0
    %v9863 = vpop.trf.xlu0
    %v9864 = vpop.trf.xlu0
    %v9865 = vpop.trf.xlu0
    %v9866 = vlaneseq
    %v9867 = vshrl.u32 %v9866, 7
    %v9868 = vsub.s32 1, %v9867
    %v9869 = vrot.slane %v9257, %v9868
    %v9870 = vlaneseq
    %v9871 = vshrl.u32 %v9870, 7
    %v9872 = vsub.s32 1, %v9871
    %v9873 = vrot.slane %v9265, %v9872
    %v9874 = vlaneseq
    %v9875 = vshrl.u32 %v9874, 7
    %v9876 = vsub.s32 1, %v9875
    %v9877 = vrot.slane %v9264, %v9876
    %v9878 = vlaneseq
    %v9879 = vshrl.u32 %v9878, 7
    %v9880 = vsub.s32 1, %v9879
    %v9881 = vrot.slane %v9266, %v9880
    %v9882 = vlaneseq
    %v9883 = vshrl.u32 %v9882, 7
    %v9884 = vsub.s32 1, %v9883
    %v9885 = vrot.slane %v9274, %v9884
    %v9886 = vlaneseq
    %v9887 = vshrl.u32 %v9886, 7
    %v9888 = vsub.s32 1, %v9887
    %v9889 = vrot.slane %v9282, %v9888
    %v9890 = vlaneseq
    %v9891 = vshrl.u32 %v9890, 7
    %v9892 = vsub.s32 1, %v9891
    %v9893 = vrot.slane %v9281, %v9892
    %v9894 = vlaneseq
    %v9895 = vshrl.u32 %v9894, 7
    %v9896 = vsub.s32 1, %v9895
    %v9897 = vrot.slane %v9283, %v9896
    %v9898 = vsel %vm465, %v9873, %v9869
    %v9899 = vsel %vm467, %v9877, %v9898
    %v9900 = vsel %vm469, %v9881, %v9899
    %v9901 = vsel %vm471, %v9885, %v9900
    %v9902 = vsel %vm473, %v9889, %v9901
    %v9903 = vsel %vm475, %v9893, %v9902
    %v9904 = vsel %vm477, %v9897, %v9903
    %9905 = vrot.lane.b32.xlu0 %v9904, 108
    %v9906 = vpop.permute.xlu0 %9905
    %9908 = vxpose.xlu0.b32.start [1/16] %v9906, 128
    %9909 = vxpose.xlu0.b32.cont [2/16] 0.0, 128
    %9910 = vxpose.xlu0.b32.cont [3/16] 0.0, 128
    %9911 = vxpose.xlu0.b32.cont [4/16] 0.0, 128
    %9912 = vxpose.xlu0.b32.cont [5/16] 0.0, 128
    %9913 = vxpose.xlu0.b32.cont [6/16] 0.0, 128
    %9914 = vxpose.xlu0.b32.cont [7/16] 0.0, 128
    %9915 = vxpose.xlu0.b32.cont [8/16] 0.0, 128
    %9916 = vxpose.xlu0.b32.cont [9/16] 0.0, 128
    %9917 = vxpose.xlu0.b32.cont [10/16] 0.0, 128
    %9918 = vxpose.xlu0.b32.cont [11/16] 0.0, 128
    %9919 = vxpose.xlu0.b32.cont [12/16] 0.0, 128
    %9920 = vxpose.xlu0.b32.cont [13/16] 0.0, 128
    %9921 = vxpose.xlu0.b32.cont [14/16] 0.0, 128
    %9922 = vxpose.xlu0.b32.cont [15/16] 0.0, 128
    %9923 = vxpose.xlu0.b32.end [16/16] 0.0, 128
    %v9924 = vpop.trf.xlu0
    %v9925 = vpop.trf.xlu0
    %v9926 = vpop.trf.xlu0
    %v9927 = vpop.trf.xlu0
    %v9928 = vpop.trf.xlu0
    %v9929 = vpop.trf.xlu0
    %v9930 = vpop.trf.xlu0
    %v9931 = vpop.trf.xlu0
    %v9932 = vpop.trf.xlu0
    %v9933 = vpop.trf.xlu0
    %v9934 = vpop.trf.xlu0
    %v9935 = vpop.trf.xlu0
    %v9936 = vpop.trf.xlu0
    %v9937 = vpop.trf.xlu0
    %v9938 = vpop.trf.xlu0
    %v9939 = vpop.trf.xlu0
    %v9940 = vlaneseq
    %v9941 = vshrl.u32 %v9940, 7
    %v9942 = vsub.s32 1, %v9941
    %v9943 = vrot.slane %v9157, %v9942
    %9945 = vbcast.lane.b32.xlu0 %v9943, 256
    %v9946 = vpop.permute.xlu0 %9945
    %s9948 = sor.u32 256, 8
    %9949 = vbcast.lane.b32.xlu0 %v9943, %s9948
    %v9950 = vpop.permute.xlu0 %9949
    %v9951 = vlaneseq
    %v9952 = vshrl.u32 %v9951, 7
    %v9953 = vsub.s32 1, %v9952
    %v9954 = vrot.slane %v9165, %v9953
    %9956 = vbcast.lane.b32.xlu0 %v9954, 256
    %v9957 = vpop.permute.xlu0 %9956
    %s9959 = sor.u32 256, 8
    %9960 = vbcast.lane.b32.xlu0 %v9954, %s9959
    %v9961 = vpop.permute.xlu0 %9960
    %v9962 = vlaneseq
    %v9963 = vshrl.u32 %v9962, 7
    %v9964 = vsub.s32 1, %v9963
    %v9965 = vrot.slane %v9164, %v9964
    %9967 = vbcast.lane.b32.xlu0 %v9965, 256
    %v9968 = vpop.permute.xlu0 %9967
    %s9970 = sor.u32 256, 8
    %9971 = vbcast.lane.b32.xlu0 %v9965, %s9970
    %v9972 = vpop.permute.xlu0 %9971
    %v9973 = vlaneseq
    %v9974 = vshrl.u32 %v9973, 7
    %v9975 = vsub.s32 1, %v9974
    %v9976 = vrot.slane %v9166, %v9975
    %9978 = vbcast.lane.b32.xlu0 %v9976, 256
    %v9979 = vpop.permute.xlu0 %9978
    %s9981 = sor.u32 256, 8
    %9982 = vbcast.lane.b32.xlu0 %v9976, %s9981
    %v9983 = vpop.permute.xlu0 %9982
    %v9984 = vlaneseq
    %v9985 = vshrl.u32 %v9984, 7
    %v9986 = vsub.s32 1, %v9985
    %v9987 = vrot.slane %v9174, %v9986
    %9989 = vbcast.lane.b32.xlu0 %v9987, 256
    %v9990 = vpop.permute.xlu0 %9989
    %s9992 = sor.u32 256, 8
    %9993 = vbcast.lane.b32.xlu0 %v9987, %s9992
    %v9994 = vpop.permute.xlu0 %9993
    %v9995 = vlaneseq
    %v9996 = vshrl.u32 %v9995, 7
    %v9997 = vsub.s32 1, %v9996
    %v9998 = vrot.slane %v9182, %v9997
    %10000 = vbcast.lane.b32.xlu0 %v9998, 256
    %v10001 = vpop.permute.xlu0 %10000
    %s10003 = sor.u32 256, 8
    %10004 = vbcast.lane.b32.xlu0 %v9998, %s10003
    %v10005 = vpop.permute.xlu0 %10004
    %v10006 = vlaneseq
    %v10007 = vshrl.u32 %v10006, 7
    %v10008 = vsub.s32 1, %v10007
    %v10009 = vrot.slane %v9181, %v10008
    %10011 = vbcast.lane.b32.xlu0 %v10009, 256
    %v10012 = vpop.permute.xlu0 %10011
    %s10014 = sor.u32 256, 8
    %10015 = vbcast.lane.b32.xlu0 %v10009, %s10014
    %v10016 = vpop.permute.xlu0 %10015
    %v10017 = vlaneseq
    %v10018 = vshrl.u32 %v10017, 7
    %v10019 = vsub.s32 1, %v10018
    %v10020 = vrot.slane %v9183, %v10019
    %10022 = vbcast.lane.b32.xlu0 %v10020, 256
    %v10023 = vpop.permute.xlu0 %10022
    %s10025 = sor.u32 256, 8
    %10026 = vbcast.lane.b32.xlu0 %v10020, %s10025
    %v10027 = vpop.permute.xlu0 %10026
    %v10028 = vmul.f32 %v9946, %v9850
    %v10029 = vmul.f32 %v9950, %v9851
    %v10030 = vmul.f32 %v9957, %v9850
    %v10031 = vmul.f32 %v9961, %v9851
    %v10032 = vmul.f32 %v9968, %v9850
    %v10033 = vmul.f32 %v9972, %v9851
    %v10034 = vmul.f32 %v9979, %v9850
    %v10035 = vmul.f32 %v9983, %v9851
    %v10036 = vmul.f32 %v9990, %v9850
    %v10037 = vmul.f32 %v9994, %v9851
    %v10038 = vmul.f32 %v10001, %v9850
    %v10039 = vmul.f32 %v10005, %v9851
    %v10040 = vmul.f32 %v10012, %v9850
    %v10041 = vmul.f32 %v10016, %v9851
    %v10042 = vmul.f32 %v10023, %v9850
    %v10043 = vmul.f32 %v10027, %v9851
    %v10044 = vadd.f32 %v10028, %v695
    %v10045 = vadd.f32 %v10029, %v695
    %v10046 = vadd.f32 %v10030, %v699
    %v10047 = vadd.f32 %v10031, %v699
    %v10048 = vadd.f32 %v10032, %v703
    %v10049 = vadd.f32 %v10033, %v703
    %v10050 = vadd.f32 %v10034, %v707
    %v10051 = vadd.f32 %v10035, %v707
    %v10052 = vadd.f32 %v10036, %v711
    %v10053 = vadd.f32 %v10037, %v711
    %v10054 = vadd.f32 %v10038, %v715
    %v10055 = vadd.f32 %v10039, %v715
    %v10056 = vadd.f32 %v10040, %v719
    %v10057 = vadd.f32 %v10041, %v719
    %v10058 = vadd.f32 %v10042, %v723
    %v10059 = vadd.f32 %v10043, %v723
    %v10060 = vsel %vm748, %v10044, -inf
    %10061 = vmax.xlane.f32.xlu0 %v10060
    %v10062 = vpop.xlane.xlu0 %10061
    %v10063 = vsel %vm752, %v10045, -inf
    %10064 = vmax.xlane.f32.xlu0 %v10063
    %v10065 = vpop.xlane.xlu0 %10064
    %v10066 = vsel %vm748, %v10046, -inf
    %10067 = vmax.xlane.f32.xlu0 %v10066
    %v10068 = vpop.xlane.xlu0 %10067
    %v10069 = vsel %vm752, %v10047, -inf
    %10070 = vmax.xlane.f32.xlu0 %v10069
    %v10071 = vpop.xlane.xlu0 %10070
    %v10072 = vsel %vm748, %v10048, -inf
    %10073 = vmax.xlane.f32.xlu0 %v10072
    %v10074 = vpop.xlane.xlu0 %10073
    %v10075 = vsel %vm752, %v10049, -inf
    %10076 = vmax.xlane.f32.xlu0 %v10075
    %v10077 = vpop.xlane.xlu0 %10076
    %v10078 = vsel %vm748, %v10050, -inf
    %10079 = vmax.xlane.f32.xlu0 %v10078
    %v10080 = vpop.xlane.xlu0 %10079
    %v10081 = vsel %vm752, %v10051, -inf
    %10082 = vmax.xlane.f32.xlu0 %v10081
    %v10083 = vpop.xlane.xlu0 %10082
    %v10084 = vsel %vm748, %v10052, -inf
    %10085 = vmax.xlane.f32.xlu0 %v10084
    %v10086 = vpop.xlane.xlu0 %10085
    %v10087 = vsel %vm752, %v10053, -inf
    %10088 = vmax.xlane.f32.xlu0 %v10087
    %v10089 = vpop.xlane.xlu0 %10088
    %v10090 = vsel %vm748, %v10054, -inf
    %10091 = vmax.xlane.f32.xlu0 %v10090
    %v10092 = vpop.xlane.xlu0 %10091
    %v10093 = vsel %vm752, %v10055, -inf
    %10094 = vmax.xlane.f32.xlu0 %v10093
    %v10095 = vpop.xlane.xlu0 %10094
    %v10096 = vsel %vm748, %v10056, -inf
    %10097 = vmax.xlane.f32.xlu0 %v10096
    %v10098 = vpop.xlane.xlu0 %10097
    %v10099 = vsel %vm752, %v10057, -inf
    %10100 = vmax.xlane.f32.xlu0 %v10099
    %v10101 = vpop.xlane.xlu0 %10100
    %v10102 = vsel %vm748, %v10058, -inf
    %10103 = vmax.xlane.f32.xlu0 %v10102
    %v10104 = vpop.xlane.xlu0 %10103
    %v10105 = vsel %vm752, %v10059, -inf
    %10106 = vmax.xlane.f32.xlu0 %v10105
    %v10107 = vpop.xlane.xlu0 %10106
    %v10108 = vsub.f32 %v10044, %v10062
    %v10109 = vsub.f32 %v10045, %v10065
    %v10110 = vsub.f32 %v10046, %v10068
    %v10111 = vsub.f32 %v10047, %v10071
    %v10112 = vsub.f32 %v10048, %v10074
    %v10113 = vsub.f32 %v10049, %v10077
    %v10114 = vsub.f32 %v10050, %v10080
    %v10115 = vsub.f32 %v10051, %v10083
    %v10116 = vsub.f32 %v10052, %v10086
    %v10117 = vsub.f32 %v10053, %v10089
    %v10118 = vsub.f32 %v10054, %v10092
    %v10119 = vsub.f32 %v10055, %v10095
    %v10120 = vsub.f32 %v10056, %v10098
    %v10121 = vsub.f32 %v10057, %v10101
    %v10122 = vsub.f32 %v10058, %v10104
    %v10123 = vsub.f32 %v10059, %v10107
    %v10124 = vmul.f32 %v10108, 1.442695
    %v10125 = vpow.pop %v10124
    %v10126 = vmul.f32 %v10109, 1.442695
    %v10127 = vpow.pop %v10126
    %v10128 = vmul.f32 %v10110, 1.442695
    %v10129 = vpow.pop %v10128
    %v10130 = vmul.f32 %v10111, 1.442695
    %v10131 = vpow.pop %v10130
    %v10132 = vmul.f32 %v10112, 1.442695
    %v10133 = vpow.pop %v10132
    %v10134 = vmul.f32 %v10113, 1.442695
    %v10135 = vpow.pop %v10134
    %v10136 = vmul.f32 %v10114, 1.442695
    %v10137 = vpow.pop %v10136
    %v10138 = vmul.f32 %v10115, 1.442695
    %v10139 = vpow.pop %v10138
    %v10140 = vmul.f32 %v10116, 1.442695
    %v10141 = vpow.pop %v10140
    %v10142 = vmul.f32 %v10117, 1.442695
    %v10143 = vpow.pop %v10142
    %v10144 = vmul.f32 %v10118, 1.442695
    %v10145 = vpow.pop %v10144
    %v10146 = vmul.f32 %v10119, 1.442695
    %v10147 = vpow.pop %v10146
    %v10148 = vmul.f32 %v10120, 1.442695
    %v10149 = vpow.pop %v10148
    %v10150 = vmul.f32 %v10121, 1.442695
    %v10151 = vpow.pop %v10150
    %v10152 = vmul.f32 %v10122, 1.442695
    %v10153 = vpow.pop %v10152
    %v10154 = vmul.f32 %v10123, 1.442695
    %v10155 = vpow.pop %v10154
    %v10156 = vsel %vm748, %v10125, 0.0
    %10157 = vadd.xlane.f32.xlu0 %v10156
    %v10158 = vpop.xlane.xlu0 %10157
    %v10159 = vsel %vm752, %v10127, 0.0
    %10160 = vadd.xlane.f32.xlu0 %v10159
    %v10161 = vpop.xlane.xlu0 %10160
    %v10162 = vsel %vm748, %v10129, 0.0
    %10163 = vadd.xlane.f32.xlu0 %v10162
    %v10164 = vpop.xlane.xlu0 %10163
    %v10165 = vsel %vm752, %v10131, 0.0
    %10166 = vadd.xlane.f32.xlu0 %v10165
    %v10167 = vpop.xlane.xlu0 %10166
    %v10168 = vsel %vm748, %v10133, 0.0
    %10169 = vadd.xlane.f32.xlu0 %v10168
    %v10170 = vpop.xlane.xlu0 %10169
    %v10171 = vsel %vm752, %v10135, 0.0
    %10172 = vadd.xlane.f32.xlu0 %v10171
    %v10173 = vpop.xlane.xlu0 %10172
    %v10174 = vsel %vm748, %v10137, 0.0
    %10175 = vadd.xlane.f32.xlu0 %v10174
    %v10176 = vpop.xlane.xlu0 %10175
    %v10177 = vsel %vm752, %v10139, 0.0
    %10178 = vadd.xlane.f32.xlu0 %v10177
    %v10179 = vpop.xlane.xlu0 %10178
    %v10180 = vsel %vm748, %v10141, 0.0
    %10181 = vadd.xlane.f32.xlu0 %v10180
    %v10182 = vpop.xlane.xlu0 %10181
    %v10183 = vsel %vm752, %v10143, 0.0
    %10184 = vadd.xlane.f32.xlu0 %v10183
    %v10185 = vpop.xlane.xlu0 %10184
    %v10186 = vsel %vm748, %v10145, 0.0
    %10187 = vadd.xlane.f32.xlu0 %v10186
    %v10188 = vpop.xlane.xlu0 %10187
    %v10189 = vsel %vm752, %v10147, 0.0
    %10190 = vadd.xlane.f32.xlu0 %v10189
    %v10191 = vpop.xlane.xlu0 %10190
    %v10192 = vsel %vm748, %v10149, 0.0
    %10193 = vadd.xlane.f32.xlu0 %v10192
    %v10194 = vpop.xlane.xlu0 %10193
    %v10195 = vsel %vm752, %v10151, 0.0
    %10196 = vadd.xlane.f32.xlu0 %v10195
    %v10197 = vpop.xlane.xlu0 %10196
    %v10198 = vsel %vm748, %v10153, 0.0
    %10199 = vadd.xlane.f32.xlu0 %v10198
    %v10200 = vpop.xlane.xlu0 %10199
    %v10201 = vsel %vm752, %v10155, 0.0
    %10202 = vadd.xlane.f32.xlu0 %v10201
    %v10203 = vpop.xlane.xlu0 %10202
    %v10204 = vmul.f32 %v10125, %v9924
    %v10205 = vmul.f32 %v10127, %v9925
    %v10206 = vmul.f32 %v10129, %v9924
    %v10207 = vmul.f32 %v10131, %v9925
    %v10208 = vmul.f32 %v10133, %v9924
    %v10209 = vmul.f32 %v10135, %v9925
    %v10210 = vmul.f32 %v10137, %v9924
    %v10211 = vmul.f32 %v10139, %v9925
    %v10212 = vmul.f32 %v10141, %v9924
    %v10213 = vmul.f32 %v10143, %v9925
    %v10214 = vmul.f32 %v10145, %v9924
    %v10215 = vmul.f32 %v10147, %v9925
    %v10216 = vmul.f32 %v10149, %v9924
    %v10217 = vmul.f32 %v10151, %v9925
    %v10218 = vmul.f32 %v10153, %v9924
    %v10219 = vmul.f32 %v10155, %v9925
    %v10220 = vsel %vm748, %v10204, 0.0
    %10221 = vadd.xlane.f32.xlu0 %v10220
    %v10222 = vpop.xlane.xlu0 %10221
    %v10223 = vsel %vm752, %v10205, 0.0
    %10224 = vadd.xlane.f32.xlu0 %v10223
    %v10225 = vpop.xlane.xlu0 %10224
    %v10226 = vsel %vm748, %v10206, 0.0
    %10227 = vadd.xlane.f32.xlu0 %v10226
    %v10228 = vpop.xlane.xlu0 %10227
    %v10229 = vsel %vm752, %v10207, 0.0
    %10230 = vadd.xlane.f32.xlu0 %v10229
    %v10231 = vpop.xlane.xlu0 %10230
    %v10232 = vsel %vm748, %v10208, 0.0
    %10233 = vadd.xlane.f32.xlu0 %v10232
    %v10234 = vpop.xlane.xlu0 %10233
    %v10235 = vsel %vm752, %v10209, 0.0
    %10236 = vadd.xlane.f32.xlu0 %v10235
    %v10237 = vpop.xlane.xlu0 %10236
    %v10238 = vsel %vm748, %v10210, 0.0
    %10239 = vadd.xlane.f32.xlu0 %v10238
    %v10240 = vpop.xlane.xlu0 %10239
    %v10241 = vsel %vm752, %v10211, 0.0
    %10242 = vadd.xlane.f32.xlu0 %v10241
    %v10243 = vpop.xlane.xlu0 %10242
    %v10244 = vsel %vm748, %v10212, 0.0
    %10245 = vadd.xlane.f32.xlu0 %v10244
    %v10246 = vpop.xlane.xlu0 %10245
    %v10247 = vsel %vm752, %v10213, 0.0
    %10248 = vadd.xlane.f32.xlu0 %v10247
    %v10249 = vpop.xlane.xlu0 %10248
    %v10250 = vsel %vm748, %v10214, 0.0
    %10251 = vadd.xlane.f32.xlu0 %v10250
    %v10252 = vpop.xlane.xlu0 %10251
    %v10253 = vsel %vm752, %v10215, 0.0
    %10254 = vadd.xlane.f32.xlu0 %v10253
    %v10255 = vpop.xlane.xlu0 %10254
    %v10256 = vsel %vm748, %v10216, 0.0
    %10257 = vadd.xlane.f32.xlu0 %v10256
    %v10258 = vpop.xlane.xlu0 %10257
    %v10259 = vsel %vm752, %v10217, 0.0
    %10260 = vadd.xlane.f32.xlu0 %v10259
    %v10261 = vpop.xlane.xlu0 %10260
    %v10262 = vsel %vm748, %v10218, 0.0
    %10263 = vadd.xlane.f32.xlu0 %v10262
    %v10264 = vpop.xlane.xlu0 %10263
    %v10265 = vsel %vm752, %v10219, 0.0
    %10266 = vadd.xlane.f32.xlu0 %v10265
    %v10267 = vpop.xlane.xlu0 %10266
    %v10268 = vrcp.pop %v10158
    %v10269 = vrcp.pop %v10161
    %v10270 = vrcp.pop %v10164
    %v10271 = vrcp.pop %v10167
    %v10272 = vrcp.pop %v10170
    %v10273 = vrcp.pop %v10173
    %v10274 = vrcp.pop %v10176
    %v10275 = vrcp.pop %v10179
    %v10276 = vrcp.pop %v10182
    %v10277 = vrcp.pop %v10185
    %v10278 = vrcp.pop %v10188
    %v10279 = vrcp.pop %v10191
    %v10280 = vrcp.pop %v10194
    %v10281 = vrcp.pop %v10197
    %v10282 = vrcp.pop %v10200
    %v10283 = vrcp.pop %v10203
    %v10284 = vmul.f32 %v10222, %v10268
    %v10285 = vmul.f32 %v10225, %v10269
    %v10286 = vmul.f32 %v10228, %v10270
    %v10287 = vmul.f32 %v10231, %v10271
    %v10288 = vmul.f32 %v10234, %v10272
    %v10289 = vmul.f32 %v10237, %v10273
    %v10290 = vmul.f32 %v10240, %v10274
    %v10291 = vmul.f32 %v10243, %v10275
    %v10292 = vmul.f32 %v10246, %v10276
    %v10293 = vmul.f32 %v10249, %v10277
    %v10294 = vmul.f32 %v10252, %v10278
    %v10295 = vmul.f32 %v10255, %v10279
    %v10296 = vmul.f32 %v10258, %v10280
    %v10297 = vmul.f32 %v10261, %v10281
    %v10298 = vmul.f32 %v10264, %v10282
    %v10299 = vmul.f32 %v10267, %v10283
    %v10316 = vlaneseq
    %v10317 = vshrl.u32 %v10316, 7
    %v10318 = vsub.s32 %v106, %v10317
    %v10319 = vrot.slane %v9776, %v10318
    %v10320 = vlaneseq
    %v10321 = vshrl.u32 %v10320, 7
    %v10322 = vsub.s32 %v1518, %v10321
    %v10323 = vrot.slane %v9777, %v10322
    %v10324 = vsel %vm1523, %v10323, %v10319
    %v10325 = vlaneseq
    %v10326 = vshrl.u32 %v10325, 7
    %v10327 = vsub.s32 %v106, %v10326
    %v10328 = vrot.slane %v9778, %v10327
    %v10329 = vlaneseq
    %v10330 = vshrl.u32 %v10329, 7
    %v10331 = vsub.s32 %v1518, %v10330
    %v10332 = vrot.slane %v9779, %v10331
    %v10333 = vsel %vm1523, %v10332, %v10328
    %v10334 = vlaneseq
    %v10335 = vshrl.u32 %v10334, 7
    %v10336 = vsub.s32 %v106, %v10335
    %v10337 = vrot.slane %v9780, %v10336
    %v10338 = vlaneseq
    %v10339 = vshrl.u32 %v10338, 7
    %v10340 = vsub.s32 %v1518, %v10339
    %v10341 = vrot.slane %v9781, %v10340
    %v10342 = vsel %vm1523, %v10341, %v10337
    %v10343 = vlaneseq
    %v10344 = vshrl.u32 %v10343, 7
    %v10345 = vsub.s32 %v106, %v10344
    %v10346 = vrot.slane %v9782, %v10345
    %v10347 = vlaneseq
    %v10348 = vshrl.u32 %v10347, 7
    %v10349 = vsub.s32 %v1518, %v10348
    %v10350 = vrot.slane %v9783, %v10349
    %v10351 = vsel %vm1523, %v10350, %v10346
    %v10352 = vlaneseq
    %v10353 = vshrl.u32 %v10352, 7
    %v10354 = vsub.s32 %v106, %v10353
    %v10355 = vrot.slane %v9784, %v10354
    %v10356 = vlaneseq
    %v10357 = vshrl.u32 %v10356, 7
    %v10358 = vsub.s32 %v1518, %v10357
    %v10359 = vrot.slane %v9785, %v10358
    %v10360 = vsel %vm1523, %v10359, %v10355
    %v10361 = vlaneseq
    %v10362 = vshrl.u32 %v10361, 7
    %v10363 = vsub.s32 %v106, %v10362
    %v10364 = vrot.slane %v9786, %v10363
    %v10365 = vlaneseq
    %v10366 = vshrl.u32 %v10365, 7
    %v10367 = vsub.s32 %v1518, %v10366
    %v10368 = vrot.slane %v9787, %v10367
    %v10369 = vsel %vm1523, %v10368, %v10364
    %v10370 = vlaneseq
    %v10371 = vshrl.u32 %v10370, 7
    %v10372 = vsub.s32 %v106, %v10371
    %v10373 = vrot.slane %v9788, %v10372
    %v10374 = vlaneseq
    %v10375 = vshrl.u32 %v10374, 7
    %v10376 = vsub.s32 %v1518, %v10375
    %v10377 = vrot.slane %v9789, %v10376
    %v10378 = vsel %vm1523, %v10377, %v10373
    %v10379 = vlaneseq
    %v10380 = vshrl.u32 %v10379, 7
    %v10381 = vsub.s32 %v106, %v10380
    %v10382 = vrot.slane %v9790, %v10381
    %v10383 = vlaneseq
    %v10384 = vshrl.u32 %v10383, 7
    %v10385 = vsub.s32 %v1518, %v10384
    %v10386 = vrot.slane %v9791, %v10385
    %v10387 = vsel %vm1523, %v10386, %v10382
    %v10412 = vlaneseq
    %v10413 = vshrl.u32 %v10412, 7
    %v10414 = vsub.s32 %v106, %v10413
    %v10415 = vrot.slane %v10284, %v10414
    %v10416 = vlaneseq
    %v10417 = vshrl.u32 %v10416, 7
    %v10418 = vsub.s32 %v1518, %v10417
    %v10419 = vrot.slane %v10285, %v10418
    %v10420 = vsel %vm1523, %v10419, %v10415
    %v10421 = vlaneseq
    %v10422 = vshrl.u32 %v10421, 7
    %v10423 = vsub.s32 %v106, %v10422
    %v10424 = vrot.slane %v10286, %v10423
    %v10425 = vlaneseq
    %v10426 = vshrl.u32 %v10425, 7
    %v10427 = vsub.s32 %v1518, %v10426
    %v10428 = vrot.slane %v10287, %v10427
    %v10429 = vsel %vm1523, %v10428, %v10424
    %v10430 = vlaneseq
    %v10431 = vshrl.u32 %v10430, 7
    %v10432 = vsub.s32 %v106, %v10431
    %v10433 = vrot.slane %v10288, %v10432
    %v10434 = vlaneseq
    %v10435 = vshrl.u32 %v10434, 7
    %v10436 = vsub.s32 %v1518, %v10435
    %v10437 = vrot.slane %v10289, %v10436
    %v10438 = vsel %vm1523, %v10437, %v10433
    %v10439 = vlaneseq
    %v10440 = vshrl.u32 %v10439, 7
    %v10441 = vsub.s32 %v106, %v10440
    %v10442 = vrot.slane %v10290, %v10441
    %v10443 = vlaneseq
    %v10444 = vshrl.u32 %v10443, 7
    %v10445 = vsub.s32 %v1518, %v10444
    %v10446 = vrot.slane %v10291, %v10445
    %v10447 = vsel %vm1523, %v10446, %v10442
    %v10448 = vlaneseq
    %v10449 = vshrl.u32 %v10448, 7
    %v10450 = vsub.s32 %v106, %v10449
    %v10451 = vrot.slane %v10292, %v10450
    %v10452 = vlaneseq
    %v10453 = vshrl.u32 %v10452, 7
    %v10454 = vsub.s32 %v1518, %v10453
    %v10455 = vrot.slane %v10293, %v10454
    %v10456 = vsel %vm1523, %v10455, %v10451
    %v10457 = vlaneseq
    %v10458 = vshrl.u32 %v10457, 7
    %v10459 = vsub.s32 %v106, %v10458
    %v10460 = vrot.slane %v10294, %v10459
    %v10461 = vlaneseq
    %v10462 = vshrl.u32 %v10461, 7
    %v10463 = vsub.s32 %v1518, %v10462
    %v10464 = vrot.slane %v10295, %v10463
    %v10465 = vsel %vm1523, %v10464, %v10460
    %v10466 = vlaneseq
    %v10467 = vshrl.u32 %v10466, 7
    %v10468 = vsub.s32 %v106, %v10467
    %v10469 = vrot.slane %v10296, %v10468
    %v10470 = vlaneseq
    %v10471 = vshrl.u32 %v10470, 7
    %v10472 = vsub.s32 %v1518, %v10471
    %v10473 = vrot.slane %v10297, %v10472
    %v10474 = vsel %vm1523, %v10473, %v10469
    %v10475 = vlaneseq
    %v10476 = vshrl.u32 %v10475, 7
    %v10477 = vsub.s32 %v106, %v10476
    %v10478 = vrot.slane %v10298, %v10477
    %v10479 = vlaneseq
    %v10480 = vshrl.u32 %v10479, 7
    %v10481 = vsub.s32 %v1518, %v10480
    %v10482 = vrot.slane %v10299, %v10481
    %v10483 = vsel %vm1523, %v10482, %v10478
    %v10492 = vsel %vm1692, %v10324, %v10420
    %v10493 = vsel %vm1692, %v10333, %v10429
    %v10494 = vsel %vm1692, %v10342, %v10438
    %v10495 = vsel %vm1692, %v10351, %v10447
    %v10496 = vsel %vm1692, %v10360, %v10456
    %v10497 = vsel %vm1692, %v10369, %v10465
    %v10498 = vsel %vm1692, %v10378, %v10474
    %v10499 = vsel %vm1692, %v10387, %v10483
    %v10500 = vlaneseq
    %v10501 = vshrl.u32 %v10500, 7
    %v10502 = vsub.s32 3, %v10501
    %v10503 = vrot.slane %v9013, %v10502
    %v10512 = vcombine.low %v10492, %v10493
    %v10513 = vcombine.low %v10494, %v10495
    %v10515 = vunpack.c.l.s4 1983009808
    %v10516 = vunpack.c.0.s8 %v10515
    %v10517 = vlaneseq
    %v10518 = vshrl.u32 %v10517, 7
    %v10519 = vsub.s32 %v10516, %v10518
    %v10520 = vrot.slane %v10512, %v10519
    %v10522 = vunpack.c.l.s4 1983009808
    %v10523 = vunpack.c.0.s8 %v10522
    %v10524 = vlaneseq
    %v10525 = vshrl.u32 %v10524, 7
    %v10526 = vsub.s32 %v10523, %v10525
    %v10527 = vrot.slane %v10513, %v10526
    %v10528 = vcombine.low %v10520, %v10527
    %v10529 = vcombine.low %v10496, %v10497
    %v10530 = vcombine.low %v10498, %v10499
    %v10532 = vunpack.c.l.s4 1983009808
    %v10533 = vunpack.c.0.s8 %v10532
    %v10534 = vlaneseq
    %v10535 = vshrl.u32 %v10534, 7
    %v10536 = vsub.s32 %v10533, %v10535
    %v10537 = vrot.slane %v10529, %v10536
    %v10539 = vunpack.c.l.s4 1983009808
    %v10540 = vunpack.c.0.s8 %v10539
    %v10541 = vlaneseq
    %v10542 = vshrl.u32 %v10541, 7
    %v10543 = vsub.s32 %v10540, %v10542
    %v10544 = vrot.slane %v10530, %v10543
    %v10545 = vcombine.low %v10537, %v10544
    %10547 = vrot.lane.b32.xlu0 %v9016, 98
    %v10548 = vpop.permute.xlu0 %10547
    %10549 = vrot.lane.b32.xlu0 %v9017, 98
    %v10550 = vpop.permute.xlu0 %10549
    %v10552 = vsel %vm207, %v10528, 0
    %v10554 = vsel %vm207, %v10545, 0
    %v10556 = vsel %vm212, %v10550, 0
    %10558 = vmatprep.subr.mxu0 0.0
    %10559 = vmatpush1.msra.mxu0 %v10548
    %10560 = vmatprep.subr.mxu0 0.0
    %10561 = vmatpush1.msra.mxu0 %v10556
    %10562 = vmatprep.subr.mxu0 0.0
    %10563 = vmatpush1.msra.mxu0 0.0
    %10564 = vmatprep.subr.mxu0 0.0
    %10565 = vmatpush1.msra.mxu0 0.0
    %10566 = vmatprep.subr.mxu0 0.0
    %10567 = vmatpush1.msra.mxu0 0.0
    %10568 = vmatprep.subr.mxu0 0.0
    %10569 = vmatpush1.msra.mxu0 0.0
    %10570 = vmatprep.subr.mxu0 0.0
    %10571 = vmatpush1.msra.mxu0 0.0
    %10572 = vmatprep.subr.mxu0 0.0
    %10573 = vmatpush1.msra.mxu0 0.0
    %10574 = vmatprep.subr.mxu0 0.0
    %10575 = vmatpush1.msra.mxu0 0.0
    %10576 = vmatprep.subr.mxu0 0.0
    %10577 = vmatpush1.msra.mxu0 0.0
    %10578 = vmatprep.subr.mxu0 0.0
    %10579 = vmatpush1.msra.mxu0 0.0
    %10580 = vmatprep.subr.mxu0 0.0
    %10581 = vmatpush1.msra.mxu0 0.0
    %10582 = vmatprep.subr.mxu0 0.0
    %10583 = vmatpush1.msra.mxu0 0.0
    %10584 = vmatprep.subr.mxu0 0.0
    %10585 = vmatpush1.msra.mxu0 0.0
    %10586 = vmatprep.subr.mxu0 0.0
    %10587 = vmatpush1.msra.mxu0 0.0
    %10588 = vmatprep.subr.mxu0 0.0
    %10589 = vmatpush1.msra.mxu0 0.0
    %10590 = vmatprep.subr.mxu0 0.0
    %10591 = vmatpush1.msra.mxu0 0.0
    %10592 = vmatprep.subr.mxu0 0.0
    %10593 = vmatpush1.msra.mxu0 0.0
    %10594 = vmatprep.subr.mxu0 0.0
    %10595 = vmatpush1.msra.mxu0 0.0
    %10596 = vmatprep.subr.mxu0 0.0
    %10597 = vmatpush1.msra.mxu0 0.0
    %10598 = vmatprep.subr.mxu0 0.0
    %10599 = vmatpush1.msra.mxu0 0.0
    %10600 = vmatprep.subr.mxu0 0.0
    %10601 = vmatpush1.msra.mxu0 0.0
    %10602 = vmatprep.subr.mxu0 0.0
    %10603 = vmatpush1.msra.mxu0 0.0
    %10604 = vmatprep.subr.mxu0 0.0
    %10605 = vmatpush1.msra.mxu0 0.0
    %10606 = vmatprep.subr.mxu0 0.0
    %10607 = vmatpush1.msra.mxu0 0.0
    %10608 = vmatprep.subr.mxu0 0.0
    %10609 = vmatpush1.msra.mxu0 0.0
    %10610 = vmatprep.subr.mxu0 0.0
    %10611 = vmatpush1.msra.mxu0 0.0
    %10612 = vmatprep.subr.mxu0 0.0
    %10613 = vmatpush1.msra.mxu0 0.0
    %10614 = vmatprep.subr.mxu0 0.0
    %10615 = vmatpush1.msra.mxu0 0.0
    %10616 = vmatprep.subr.mxu0 0.0
    %10617 = vmatpush1.msra.mxu0 0.0
    %10618 = vmatprep.subr.mxu0 0.0
    %10619 = vmatpush1.msra.mxu0 0.0
    %10620 = vmatprep.subr.mxu0 0.0
    %10621 = vmatpush1.msra.mxu0 0.0
    %10622 = vmatprep.mubr.f32.mxu0 0.0
    %10623 = vmatmul.mubr.f32.gmra.mrb[0].mxu0 %v10552
    %v10624 = vpop.f32.mrb[0].mxu0
    %v10625 = vadd.f32 %v10503, %v10624
    %v10626 = vpop.f32.mrb[0].mxu0
    %10627 = vmatprep.mubr.f32.mxu0 0.0
    %10628 = vmatmul.mubr.f32.gmra.mrb[0].mxu0 %v10554
    %v10629 = vpop.f32.mrb[0].mxu0
    %v10630 = vadd.f32 %v10503, %v10629
    %v10631 = vpop.f32.mrb[0].mxu0
    %10632 = vdwg.mxu0
    %v10635 = vcombine.high %v10625, %v10625
    %v10637 = vunpack.c.l.s4 1983009808
    %v10638 = vunpack.c.0.s8 %v10637
    %v10639 = vlaneseq
    %v10640 = vshrl.u32 %v10639, 7
    %v10641 = vsub.s32 %v10638, %v10640
    %v10642 = vrot.slane %v10625, %v10641
    %v10644 = vunpack.c.l.s4 1983009808
    %v10645 = vunpack.c.0.s8 %v10644
    %v10646 = vlaneseq
    %v10647 = vshrl.u32 %v10646, 7
    %v10648 = vsub.s32 %v10645, %v10647
    %v10649 = vrot.slane %v10635, %v10648
    %v10650 = vcombine.high %v10642, %v10642
    %v10651 = vcombine.high %v10649, %v10649
    %v10652 = vcombine.high %v10630, %v10630
    %v10654 = vunpack.c.l.s4 1983009808
    %v10655 = vunpack.c.0.s8 %v10654
    %v10656 = vlaneseq
    %v10657 = vshrl.u32 %v10656, 7
    %v10658 = vsub.s32 %v10655, %v10657
    %v10659 = vrot.slane %v10630, %v10658
    %v10661 = vunpack.c.l.s4 1983009808
    %v10662 = vunpack.c.0.s8 %v10661
    %v10663 = vlaneseq
    %v10664 = vshrl.u32 %v10663, 7
    %v10665 = vsub.s32 %v10662, %v10664
    %v10666 = vrot.slane %v10652, %v10665
    %v10667 = vcombine.high %v10659, %v10659
    %v10668 = vcombine.high %v10666, %v10666
    %v10677 = vadd.f32 %v9004, %v10642
    %v10678 = vadd.f32 %v9005, %v10650
    %v10679 = vadd.f32 %v9006, %v10649
    %v10680 = vadd.f32 %v9007, %v10651
    %v10681 = vadd.f32 %v9008, %v10659
    %v10682 = vadd.f32 %v9009, %v10667
    %v10683 = vadd.f32 %v9010, %v10666
    %v10684 = vadd.f32 %v9011, %v10668
    %v10693 = vcombine.low %v10677, %v10678
    %v10694 = vcombine.low %v10679, %v10680
    %v10696 = vunpack.c.l.s4 1983009808
    %v10697 = vunpack.c.0.s8 %v10696
    %v10698 = vlaneseq
    %v10699 = vshrl.u32 %v10698, 7
    %v10700 = vsub.s32 %v10697, %v10699
    %v10701 = vrot.slane %v10693, %v10700
    %v10703 = vunpack.c.l.s4 1983009808
    %v10704 = vunpack.c.0.s8 %v10703
    %v10705 = vlaneseq
    %v10706 = vshrl.u32 %v10705, 7
    %v10707 = vsub.s32 %v10704, %v10706
    %v10708 = vrot.slane %v10694, %v10707
    %v10709 = vcombine.low %v10701, %v10708
    %v10710 = vcombine.low %v10681, %v10682
    %v10711 = vcombine.low %v10683, %v10684
    %v10713 = vunpack.c.l.s4 1983009808
    %v10714 = vunpack.c.0.s8 %v10713
    %v10715 = vlaneseq
    %v10716 = vshrl.u32 %v10715, 7
    %v10717 = vsub.s32 %v10714, %v10716
    %v10718 = vrot.slane %v10710, %v10717
    %v10720 = vunpack.c.l.s4 1983009808
    %v10721 = vunpack.c.0.s8 %v10720
    %v10722 = vlaneseq
    %v10723 = vshrl.u32 %v10722, 7
    %v10724 = vsub.s32 %v10721, %v10723
    %v10725 = vrot.slane %v10711, %v10724
    %v10726 = vcombine.low %v10718, %v10725
    %v10729 = vsel %vm207, %v10709, 0.0
    %10730 = vadd.xlane.f32.xlu0 %v10729
    %v10731 = vpop.xlane.xlu0 %10730
    %v10732 = vsel %vm207, %v10726, 0.0
    %10733 = vadd.xlane.f32.xlu0 %v10732
    %v10734 = vpop.xlane.xlu0 %10733
    %v10735 = vmul.f32 %v10731, %v1936
    %v10736 = vmul.f32 %v10734, %v1936
    %v10740 = vunpack.c.l.s4 269488144
    %v10741 = vunpack.c.0.s8 %v10740
    %v10742 = vlaneseq
    %v10743 = vshrl.u32 %v10742, 7
    %v10744 = vsub.s32 %v10741, %v10743
    %v10745 = vrot.slane %v10735, %v10744
    %v10747 = vunpack.c.l.s4 842150450
    %v10748 = vunpack.c.0.s8 %v10747
    %v10749 = vlaneseq
    %v10750 = vshrl.u32 %v10749, 7
    %v10751 = vsub.s32 %v10748, %v10750
    %v10752 = vrot.slane %v10735, %v10751
    %v10754 = vunpack.c.l.s4 1414812756
    %v10755 = vunpack.c.0.s8 %v10754
    %v10756 = vlaneseq
    %v10757 = vshrl.u32 %v10756, 7
    %v10758 = vsub.s32 %v10755, %v10757
    %v10759 = vrot.slane %v10735, %v10758
    %v10761 = vunpack.c.l.s4 1987475062
    %v10762 = vunpack.c.0.s8 %v10761
    %v10763 = vlaneseq
    %v10764 = vshrl.u32 %v10763, 7
    %v10765 = vsub.s32 %v10762, %v10764
    %v10766 = vrot.slane %v10735, %v10765
    %v10768 = vunpack.c.l.s4 269488144
    %v10769 = vunpack.c.0.s8 %v10768
    %v10770 = vlaneseq
    %v10771 = vshrl.u32 %v10770, 7
    %v10772 = vsub.s32 %v10769, %v10771
    %v10773 = vrot.slane %v10736, %v10772
    %v10775 = vunpack.c.l.s4 842150450
    %v10776 = vunpack.c.0.s8 %v10775
    %v10777 = vlaneseq
    %v10778 = vshrl.u32 %v10777, 7
    %v10779 = vsub.s32 %v10776, %v10778
    %v10780 = vrot.slane %v10736, %v10779
    %v10782 = vunpack.c.l.s4 1414812756
    %v10783 = vunpack.c.0.s8 %v10782
    %v10784 = vlaneseq
    %v10785 = vshrl.u32 %v10784, 7
    %v10786 = vsub.s32 %v10783, %v10785
    %v10787 = vrot.slane %v10736, %v10786
    %v10789 = vunpack.c.l.s4 1987475062
    %v10790 = vunpack.c.0.s8 %v10789
    %v10791 = vlaneseq
    %v10792 = vshrl.u32 %v10791, 7
    %v10793 = vsub.s32 %v10790, %v10792
    %v10794 = vrot.slane %v10736, %v10793
    %v10803 = vsub.f32 %v10677, %v10745
    %v10804 = vsub.f32 %v10678, %v10752
    %v10805 = vsub.f32 %v10679, %v10759
    %v10806 = vsub.f32 %v10680, %v10766
    %v10807 = vsub.f32 %v10681, %v10773
    %v10808 = vsub.f32 %v10682, %v10780
    %v10809 = vsub.f32 %v10683, %v10787
    %v10810 = vsub.f32 %v10684, %v10794
    %v10811 = vmul.f32 %v10803, %v10803
    %v10812 = vmul.f32 %v10804, %v10804
    %v10813 = vmul.f32 %v10805, %v10805
    %v10814 = vmul.f32 %v10806, %v10806
    %v10815 = vmul.f32 %v10807, %v10807
    %v10816 = vmul.f32 %v10808, %v10808
    %v10817 = vmul.f32 %v10809, %v10809
    %v10818 = vmul.f32 %v10810, %v10810
    %v10827 = vcombine.low %v10811, %v10812
    %v10828 = vcombine.low %v10813, %v10814
    %v10830 = vunpack.c.l.s4 1983009808
    %v10831 = vunpack.c.0.s8 %v10830
    %v10832 = vlaneseq
    %v10833 = vshrl.u32 %v10832, 7
    %v10834 = vsub.s32 %v10831, %v10833
    %v10835 = vrot.slane %v10827, %v10834
    %v10837 = vunpack.c.l.s4 1983009808
    %v10838 = vunpack.c.0.s8 %v10837
    %v10839 = vlaneseq
    %v10840 = vshrl.u32 %v10839, 7
    %v10841 = vsub.s32 %v10838, %v10840
    %v10842 = vrot.slane %v10828, %v10841
    %v10843 = vcombine.low %v10835, %v10842
    %v10844 = vcombine.low %v10815, %v10816
    %v10845 = vcombine.low %v10817, %v10818
    %v10847 = vunpack.c.l.s4 1983009808
    %v10848 = vunpack.c.0.s8 %v10847
    %v10849 = vlaneseq
    %v10850 = vshrl.u32 %v10849, 7
    %v10851 = vsub.s32 %v10848, %v10850
    %v10852 = vrot.slane %v10844, %v10851
    %v10854 = vunpack.c.l.s4 1983009808
    %v10855 = vunpack.c.0.s8 %v10854
    %v10856 = vlaneseq
    %v10857 = vshrl.u32 %v10856, 7
    %v10858 = vsub.s32 %v10855, %v10857
    %v10859 = vrot.slane %v10845, %v10858
    %v10860 = vcombine.low %v10852, %v10859
    %v10863 = vsel %vm207, %v10843, 0.0
    %10864 = vadd.xlane.f32.xlu0 %v10863
    %v10865 = vpop.xlane.xlu0 %10864
    %v10866 = vsel %vm207, %v10860, 0.0
    %10867 = vadd.xlane.f32.xlu0 %v10866
    %v10868 = vpop.xlane.xlu0 %10867
    %v10869 = vmul.f32 %v10865, %v1936
    %v10870 = vmul.f32 %v10868, %v1936
    %v10871 = vadd.f32 %v10869, 1e-05
    %v10872 = vadd.f32 %v10870, 1e-05
    %v10873 = vrsqrt.pop %v10871
    %v10874 = vrsqrt.pop %v10872
    %v10878 = vunpack.c.l.s4 269488144
    %v10879 = vunpack.c.0.s8 %v10878
    %v10880 = vlaneseq
    %v10881 = vshrl.u32 %v10880, 7
    %v10882 = vsub.s32 %v10879, %v10881
    %v10883 = vrot.slane %v10873, %v10882
    %v10885 = vunpack.c.l.s4 842150450
    %v10886 = vunpack.c.0.s8 %v10885
    %v10887 = vlaneseq
    %v10888 = vshrl.u32 %v10887, 7
    %v10889 = vsub.s32 %v10886, %v10888
    %v10890 = vrot.slane %v10873, %v10889
    %v10892 = vunpack.c.l.s4 1414812756
    %v10893 = vunpack.c.0.s8 %v10892
    %v10894 = vlaneseq
    %v10895 = vshrl.u32 %v10894, 7
    %v10896 = vsub.s32 %v10893, %v10895
    %v10897 = vrot.slane %v10873, %v10896
    %v10899 = vunpack.c.l.s4 1987475062
    %v10900 = vunpack.c.0.s8 %v10899
    %v10901 = vlaneseq
    %v10902 = vshrl.u32 %v10901, 7
    %v10903 = vsub.s32 %v10900, %v10902
    %v10904 = vrot.slane %v10873, %v10903
    %v10906 = vunpack.c.l.s4 269488144
    %v10907 = vunpack.c.0.s8 %v10906
    %v10908 = vlaneseq
    %v10909 = vshrl.u32 %v10908, 7
    %v10910 = vsub.s32 %v10907, %v10909
    %v10911 = vrot.slane %v10874, %v10910
    %v10913 = vunpack.c.l.s4 842150450
    %v10914 = vunpack.c.0.s8 %v10913
    %v10915 = vlaneseq
    %v10916 = vshrl.u32 %v10915, 7
    %v10917 = vsub.s32 %v10914, %v10916
    %v10918 = vrot.slane %v10874, %v10917
    %v10920 = vunpack.c.l.s4 1414812756
    %v10921 = vunpack.c.0.s8 %v10920
    %v10922 = vlaneseq
    %v10923 = vshrl.u32 %v10922, 7
    %v10924 = vsub.s32 %v10921, %v10923
    %v10925 = vrot.slane %v10874, %v10924
    %v10927 = vunpack.c.l.s4 1987475062
    %v10928 = vunpack.c.0.s8 %v10927
    %v10929 = vlaneseq
    %v10930 = vshrl.u32 %v10929, 7
    %v10931 = vsub.s32 %v10928, %v10930
    %v10932 = vrot.slane %v10874, %v10931
    %v10941 = vmul.f32 %v10803, %v10883
    %v10942 = vmul.f32 %v10804, %v10890
    %v10943 = vmul.f32 %v10805, %v10897
    %v10944 = vmul.f32 %v10806, %v10904
    %v10945 = vmul.f32 %v10807, %v10911
    %v10946 = vmul.f32 %v10808, %v10918
    %v10947 = vmul.f32 %v10809, %v10925
    %v10948 = vmul.f32 %v10810, %v10932
    %v10949 = vlaneseq
    %v10950 = vshrl.u32 %v10949, 7
    %v10951 = vsub.s32 4, %v10950
    %v10952 = vrot.slane %v9013, %v10951
    %v10954 = vcombine.high %v10952, %v10952
    %v10956 = vunpack.c.l.s4 1983009808
    %v10957 = vunpack.c.0.s8 %v10956
    %v10958 = vlaneseq
    %v10959 = vshrl.u32 %v10958, 7
    %v10960 = vsub.s32 %v10957, %v10959
    %v10961 = vrot.slane %v10952, %v10960
    %v10963 = vunpack.c.l.s4 1983009808
    %v10964 = vunpack.c.0.s8 %v10963
    %v10965 = vlaneseq
    %v10966 = vshrl.u32 %v10965, 7
    %v10967 = vsub.s32 %v10964, %v10966
    %v10968 = vrot.slane %v10954, %v10967
    %v10969 = vcombine.high %v10961, %v10961
    %v10970 = vcombine.high %v10968, %v10968
    %v10975 = vmul.f32 %v10941, %v10961
    %v10976 = vmul.f32 %v10942, %v10969
    %v10977 = vmul.f32 %v10943, %v10968
    %v10978 = vmul.f32 %v10944, %v10970
    %v10979 = vmul.f32 %v10945, %v10961
    %v10980 = vmul.f32 %v10946, %v10969
    %v10981 = vmul.f32 %v10947, %v10968
    %v10982 = vmul.f32 %v10948, %v10970
    %v10983 = vlaneseq
    %v10984 = vshrl.u32 %v10983, 7
    %v10985 = vsub.s32 5, %v10984
    %v10986 = vrot.slane %v9013, %v10985
    %v10988 = vcombine.high %v10986, %v10986
    %v10990 = vunpack.c.l.s4 1983009808
    %v10991 = vunpack.c.0.s8 %v10990
    %v10992 = vlaneseq
    %v10993 = vshrl.u32 %v10992, 7
    %v10994 = vsub.s32 %v10991, %v10993
    %v10995 = vrot.slane %v10986, %v10994
    %v10997 = vunpack.c.l.s4 1983009808
    %v10998 = vunpack.c.0.s8 %v10997
    %v10999 = vlaneseq
    %v11000 = vshrl.u32 %v10999, 7
    %v11001 = vsub.s32 %v10998, %v11000
    %v11002 = vrot.slane %v10988, %v11001
    %v11003 = vcombine.high %v10995, %v10995
    %v11004 = vcombine.high %v11002, %v11002
    %v11009 = vadd.f32 %v10975, %v10995
    %v11010 = vadd.f32 %v10976, %v11003
    %v11011 = vadd.f32 %v10977, %v11002
    %v11012 = vadd.f32 %v10978, %v11004
    %v11013 = vadd.f32 %v10979, %v10995
    %v11014 = vadd.f32 %v10980, %v11003
    %v11015 = vadd.f32 %v10981, %v11002
    %v11016 = vadd.f32 %v10982, %v11004
    %v11025 = vcombine.low %v11009, %v11010
    %v11026 = vcombine.low %v11011, %v11012
    %v11028 = vunpack.c.l.s4 1983009808
    %v11029 = vunpack.c.0.s8 %v11028
    %v11030 = vlaneseq
    %v11031 = vshrl.u32 %v11030, 7
    %v11032 = vsub.s32 %v11029, %v11031
    %v11033 = vrot.slane %v11025, %v11032
    %v11035 = vunpack.c.l.s4 1983009808
    %v11036 = vunpack.c.0.s8 %v11035
    %v11037 = vlaneseq
    %v11038 = vshrl.u32 %v11037, 7
    %v11039 = vsub.s32 %v11036, %v11038
    %v11040 = vrot.slane %v11026, %v11039
    %v11041 = vcombine.low %v11033, %v11040
    %v11042 = vcombine.low %v11013, %v11014
    %v11043 = vcombine.low %v11015, %v11016
    %v11045 = vunpack.c.l.s4 1983009808
    %v11046 = vunpack.c.0.s8 %v11045
    %v11047 = vlaneseq
    %v11048 = vshrl.u32 %v11047, 7
    %v11049 = vsub.s32 %v11046, %v11048
    %v11050 = vrot.slane %v11042, %v11049
    %v11052 = vunpack.c.l.s4 1983009808
    %v11053 = vunpack.c.0.s8 %v11052
    %v11054 = vlaneseq
    %v11055 = vshrl.u32 %v11054, 7
    %v11056 = vsub.s32 %v11053, %v11055
    %v11057 = vrot.slane %v11043, %v11056
    %v11058 = vcombine.low %v11050, %v11057
    %v11061 = vpack.c.bf16 %v11058, %v11041
    %s11062 = scalar_lea.vmem %s4, 256
    %v11063 = vld [vmem:[%s11062] sm:$0xff]
    %v11064 = vld [vmem:[%s11062 + $0x8] sm:$0xff]
    %v11065 = vld [vmem:[%s11062 + $0x10] sm:$0xff]
    %v11066 = vld [vmem:[%s11062 + $0x18] sm:$0xff]
    %v11067 = vld [vmem:[%s11062 + $0x20] sm:$0xff]
    %v11068 = vld [vmem:[%s11062 + $0x28] sm:$0xff]
    %v11069 = vld [vmem:[%s11062 + $0x30] sm:$0xff]
    %v11070 = vld [vmem:[%s11062 + $0x38] sm:$0xff]
    %v11071 = vld [vmem:[%s11062 + $0x40] sm:$0x11]
    %v11072 = vld [vmem:[%s11062 + $0x48] sm:$0x11]
    %v11073 = vld [vmem:[%s11062 + $0x50] sm:$0x11]
    %v11074 = vld [vmem:[%s11062 + $0x58] sm:$0x11]
    %v11075 = vld [vmem:[%s11062 + $0x60] sm:$0x11]
    %v11076 = vld [vmem:[%s11062 + $0x68] sm:$0x11]
    %v11077 = vld [vmem:[%s11062 + $0x70] sm:$0x11]
    %v11078 = vld [vmem:[%s11062 + $0x78] sm:$0x11]
    %s11079 = scalar_lea.vmem %s5, 32
    %v11080 = vld [vmem:[%s11079] sm:$0xff]
    %v11081 = vld [vmem:[%s11079 + $0x8] sm:$0xff]
    %v11084 = vlaneseq
    %v11085 = vshrl.u32 %v11084, 7
    %v11086 = vsub.s32 0, %v11085
    %v11087 = vrot.slane %v11080, %v11086
    %v11088 = vlaneseq
    %v11089 = vshrl.u32 %v11088, 7
    %v11090 = vsub.s32 1, %v11089
    %v11091 = vrot.slane %v11080, %v11090
    %v11092 = vlaneseq
    %v11093 = vshrl.u32 %v11092, 7
    %v11094 = vsub.s32 2, %v11093
    %v11095 = vrot.slane %v11080, %v11094
    %v11096 = vlaneseq
    %v11097 = vshrl.u32 %v11096, 7
    %v11098 = vsub.s32 3, %v11097
    %v11099 = vrot.slane %v11080, %v11098
    %v11100 = vlaneseq
    %v11101 = vshrl.u32 %v11100, 7
    %v11102 = vsub.s32 4, %v11101
    %v11103 = vrot.slane %v11080, %v11102
    %v11104 = vlaneseq
    %v11105 = vshrl.u32 %v11104, 7
    %v11106 = vsub.s32 5, %v11105
    %v11107 = vrot.slane %v11080, %v11106
    %v11108 = vlaneseq
    %v11109 = vshrl.u32 %v11108, 7
    %v11110 = vsub.s32 6, %v11109
    %v11111 = vrot.slane %v11080, %v11110
    %v11112 = vlaneseq
    %v11113 = vshrl.u32 %v11112, 7
    %v11114 = vsub.s32 7, %v11113
    %v11115 = vrot.slane %v11080, %v11114
    %v11116 = vlaneseq
    %v11117 = vshrl.u32 %v11116, 7
    %v11118 = vsub.s32 0, %v11117
    %v11119 = vrot.slane %v11081, %v11118
    %v11120 = vlaneseq
    %v11121 = vshrl.u32 %v11120, 7
    %v11122 = vsub.s32 1, %v11121
    %v11123 = vrot.slane %v11081, %v11122
    %v11124 = vlaneseq
    %v11125 = vshrl.u32 %v11124, 7
    %v11126 = vsub.s32 2, %v11125
    %v11127 = vrot.slane %v11081, %v11126
    %v11128 = vlaneseq
    %v11129 = vshrl.u32 %v11128, 7
    %v11130 = vsub.s32 3, %v11129
    %v11131 = vrot.slane %v11081, %v11130
    %v11132 = vlaneseq
    %v11133 = vshrl.u32 %v11132, 7
    %v11134 = vsub.s32 4, %v11133
    %v11135 = vrot.slane %v11081, %v11134
    %v11136 = vlaneseq
    %v11137 = vshrl.u32 %v11136, 7
    %v11138 = vsub.s32 5, %v11137
    %v11139 = vrot.slane %v11081, %v11138
    %v11140 = vlaneseq
    %v11141 = vshrl.u32 %v11140, 7
    %v11142 = vsub.s32 6, %v11141
    %v11143 = vrot.slane %v11081, %v11142
    %v11144 = vlaneseq
    %v11145 = vshrl.u32 %v11144, 7
    %v11146 = vsub.s32 7, %v11145
    %v11147 = vrot.slane %v11081, %v11146
    %v11180 = vunpack.c.l.b16 %v11063
    %v11181 = vunpack.c.h.b16 %v11063
    %v11182 = vunpack.c.l.b16 %v11064
    %v11183 = vunpack.c.h.b16 %v11064
    %v11184 = vunpack.c.l.b16 %v11065
    %v11185 = vunpack.c.h.b16 %v11065
    %v11186 = vunpack.c.l.b16 %v11066
    %v11187 = vunpack.c.h.b16 %v11066
    %v11188 = vunpack.c.l.b16 %v11067
    %v11189 = vunpack.c.h.b16 %v11067
    %v11190 = vunpack.c.l.b16 %v11068
    %v11191 = vunpack.c.h.b16 %v11068
    %v11192 = vunpack.c.l.b16 %v11069
    %v11193 = vunpack.c.h.b16 %v11069
    %v11194 = vunpack.c.l.b16 %v11070
    %v11195 = vunpack.c.h.b16 %v11070
    %v11196 = vunpack.c.l.b16 %v11071
    %v11197 = vunpack.c.h.b16 %v11071
    %v11198 = vunpack.c.l.b16 %v11072
    %v11199 = vunpack.c.h.b16 %v11072
    %v11200 = vunpack.c.l.b16 %v11073
    %v11201 = vunpack.c.h.b16 %v11073
    %v11202 = vunpack.c.l.b16 %v11074
    %v11203 = vunpack.c.h.b16 %v11074
    %v11204 = vunpack.c.l.b16 %v11075
    %v11205 = vunpack.c.h.b16 %v11075
    %v11206 = vunpack.c.l.b16 %v11076
    %v11207 = vunpack.c.h.b16 %v11076
    %v11208 = vunpack.c.l.b16 %v11077
    %v11209 = vunpack.c.h.b16 %v11077
    %v11210 = vunpack.c.l.b16 %v11078
    %v11211 = vunpack.c.h.b16 %v11078
    %v11212 = vpack.c.b16 %v11196, %v11180
    %v11213 = vpack.c.b16 %v11197, %v11181
    %v11214 = vpack.c.b16 %v11198, %v11182
    %v11215 = vpack.c.b16 %v11199, %v11183
    %v11216 = vpack.c.b16 %v11200, %v11184
    %v11217 = vpack.c.b16 %v11201, %v11185
    %v11218 = vpack.c.b16 %v11202, %v11186
    %v11219 = vpack.c.b16 %v11203, %v11187
    %v11220 = vpack.c.b16 %v11204, %v11188
    %v11221 = vpack.c.b16 %v11205, %v11189
    %v11222 = vpack.c.b16 %v11206, %v11190
    %v11223 = vpack.c.b16 %v11207, %v11191
    %v11224 = vpack.c.b16 %v11208, %v11192
    %v11225 = vpack.c.b16 %v11209, %v11193
    %v11226 = vpack.c.b16 %v11210, %v11194
    %v11227 = vpack.c.b16 %v11211, %v11195
    %v11229 = vsel %vm207, %v11061, 0
    %v11232 = vsel %vm2431, %v11212, 0
    %v11235 = vsel %vm2431, %v11213, 0
    %v11238 = vsel %vm2431, %v11214, 0
    %v11241 = vsel %vm2431, %v11215, 0
    %v11244 = vsel %vm2431, %v11216, 0
    %v11247 = vsel %vm2431, %v11217, 0
    %v11250 = vsel %vm2431, %v11218, 0
    %v11253 = vsel %vm2431, %v11219, 0
    %v11256 = vsel %vm2431, %v11220, 0
    %v11259 = vsel %vm2431, %v11221, 0
    %v11262 = vsel %vm2431, %v11222, 0
    %v11265 = vsel %vm2431, %v11223, 0
    %v11268 = vsel %vm2431, %v11224, 0
    %v11271 = vsel %vm2431, %v11225, 0
    %v11274 = vsel %vm2431, %v11226, 0
    %v11277 = vsel %vm2431, %v11227, 0
    %11279 = vmatprep.subr.bf16.mxu0 %v11235
    %11280 = vmatpush1.bf16.msra.mxu0 %v11232
    %11281 = vmatprep.subr.bf16.mxu0 0
    %11282 = vmatpush1.bf16.msra.mxu0 0
    %11283 = vmatprep.subr.bf16.mxu0 0
    %11284 = vmatpush1.bf16.msra.mxu0 0
    %11285 = vmatprep.subr.bf16.mxu0 0
    %11286 = vmatpush1.bf16.msra.mxu0 0
    %11287 = vmatprep.subr.bf16.mxu0 0
    %11288 = vmatpush1.bf16.msra.mxu0 0
    %11289 = vmatprep.subr.bf16.mxu0 0
    %11290 = vmatpush1.bf16.msra.mxu0 0
    %11291 = vmatprep.subr.bf16.mxu0 0
    %11292 = vmatpush1.bf16.msra.mxu0 0
    %11293 = vmatprep.subr.bf16.mxu0 0
    %11294 = vmatpush1.bf16.msra.mxu0 0
    %11295 = vmatprep.subr.bf16.mxu0 0
    %11296 = vmatpush1.bf16.msra.mxu0 0
    %11297 = vmatprep.subr.bf16.mxu0 0
    %11298 = vmatpush1.bf16.msra.mxu0 0
    %11299 = vmatprep.subr.bf16.mxu0 0
    %11300 = vmatpush1.bf16.msra.mxu0 0
    %11301 = vmatprep.subr.bf16.mxu0 0
    %11302 = vmatpush1.bf16.msra.mxu0 0
    %11303 = vmatprep.subr.bf16.mxu0 0
    %11304 = vmatpush1.bf16.msra.mxu0 0
    %11305 = vmatprep.subr.bf16.mxu0 0
    %11306 = vmatpush1.bf16.msra.mxu0 0
    %11307 = vmatprep.subr.bf16.mxu0 0
    %11308 = vmatpush1.bf16.msra.mxu0 0
    %11309 = vmatprep.subr.bf16.mxu0 0
    %11310 = vmatpush1.bf16.msra.mxu0 0
    %11311 = vmatprep.mubr.bf16.mxu0 0
    %11312 = vmatmul.mubr.bf16.gmra.mrb[0].mxu0 %v11229
    %v11313 = vpop.f32.mrb[0].mxu0
    %v11314 = vadd.f32 %v11087, %v11313
    %v11315 = vpop.f32.mrb[0].mxu0
    %v11316 = vadd.f32 %v11091, %v11315
    %v11317 = vpop.f32.mrb[0].mxu0
    %v11318 = vadd.f32 %v11087, %v11317
    %v11319 = vpop.f32.mrb[0].mxu0
    %v11320 = vadd.f32 %v11091, %v11319
    %11321 = vdwg.mxu0
    %11322 = vmatprep.subr.bf16.mxu0 %v11241
    %11323 = vmatpush1.bf16.msra.mxu0 %v11238
    %11324 = vmatprep.subr.bf16.mxu0 0
    %11325 = vmatpush1.bf16.msra.mxu0 0
    %11326 = vmatprep.subr.bf16.mxu0 0
    %11327 = vmatpush1.bf16.msra.mxu0 0
    %11328 = vmatprep.subr.bf16.mxu0 0
    %11329 = vmatpush1.bf16.msra.mxu0 0
    %11330 = vmatprep.subr.bf16.mxu0 0
    %11331 = vmatpush1.bf16.msra.mxu0 0
    %11332 = vmatprep.subr.bf16.mxu0 0
    %11333 = vmatpush1.bf16.msra.mxu0 0
    %11334 = vmatprep.subr.bf16.mxu0 0
    %11335 = vmatpush1.bf16.msra.mxu0 0
    %11336 = vmatprep.subr.bf16.mxu0 0
    %11337 = vmatpush1.bf16.msra.mxu0 0
    %11338 = vmatprep.subr.bf16.mxu0 0
    %11339 = vmatpush1.bf16.msra.mxu0 0
    %11340 = vmatprep.subr.bf16.mxu0 0
    %11341 = vmatpush1.bf16.msra.mxu0 0
    %11342 = vmatprep.subr.bf16.mxu0 0
    %11343 = vmatpush1.bf16.msra.mxu0 0
    %11344 = vmatprep.subr.bf16.mxu0 0
    %11345 = vmatpush1.bf16.msra.mxu0 0
    %11346 = vmatprep.subr.bf16.mxu0 0
    %11347 = vmatpush1.bf16.msra.mxu0 0
    %11348 = vmatprep.subr.bf16.mxu0 0
    %11349 = vmatpush1.bf16.msra.mxu0 0
    %11350 = vmatprep.subr.bf16.mxu0 0
    %11351 = vmatpush1.bf16.msra.mxu0 0
    %11352 = vmatprep.subr.bf16.mxu0 0
    %11353 = vmatpush1.bf16.msra.mxu0 0
    %11354 = vmatprep.mubr.bf16.mxu0 0
    %11355 = vmatmul.mubr.bf16.gmra.mrb[0].mxu0 %v11229
    %v11356 = vpop.f32.mrb[0].mxu0
    %v11357 = vadd.f32 %v11095, %v11356
    %v11358 = vpop.f32.mrb[0].mxu0
    %v11359 = vadd.f32 %v11099, %v11358
    %v11360 = vpop.f32.mrb[0].mxu0
    %v11361 = vadd.f32 %v11095, %v11360
    %v11362 = vpop.f32.mrb[0].mxu0
    %v11363 = vadd.f32 %v11099, %v11362
    %11364 = vdwg.mxu0
    %11365 = vmatprep.subr.bf16.mxu0 %v11247
    %11366 = vmatpush1.bf16.msra.mxu0 %v11244
    %11367 = vmatprep.subr.bf16.mxu0 0
    %11368 = vmatpush1.bf16.msra.mxu0 0
    %11369 = vmatprep.subr.bf16.mxu0 0
    %11370 = vmatpush1.bf16.msra.mxu0 0
    %11371 = vmatprep.subr.bf16.mxu0 0
    %11372 = vmatpush1.bf16.msra.mxu0 0
    %11373 = vmatprep.subr.bf16.mxu0 0
    %11374 = vmatpush1.bf16.msra.mxu0 0
    %11375 = vmatprep.subr.bf16.mxu0 0
    %11376 = vmatpush1.bf16.msra.mxu0 0
    %11377 = vmatprep.subr.bf16.mxu0 0
    %11378 = vmatpush1.bf16.msra.mxu0 0
    %11379 = vmatprep.subr.bf16.mxu0 0
    %11380 = vmatpush1.bf16.msra.mxu0 0
    %11381 = vmatprep.subr.bf16.mxu0 0
    %11382 = vmatpush1.bf16.msra.mxu0 0
    %11383 = vmatprep.subr.bf16.mxu0 0
    %11384 = vmatpush1.bf16.msra.mxu0 0
    %11385 = vmatprep.subr.bf16.mxu0 0
    %11386 = vmatpush1.bf16.msra.mxu0 0
    %11387 = vmatprep.subr.bf16.mxu0 0
    %11388 = vmatpush1.bf16.msra.mxu0 0
    %11389 = vmatprep.subr.bf16.mxu0 0
    %11390 = vmatpush1.bf16.msra.mxu0 0
    %11391 = vmatprep.subr.bf16.mxu0 0
    %11392 = vmatpush1.bf16.msra.mxu0 0
    %11393 = vmatprep.subr.bf16.mxu0 0
    %11394 = vmatpush1.bf16.msra.mxu0 0
    %11395 = vmatprep.subr.bf16.mxu0 0
    %11396 = vmatpush1.bf16.msra.mxu0 0
    %11397 = vmatprep.mubr.bf16.mxu0 0
    %11398 = vmatmul.mubr.bf16.gmra.mrb[0].mxu0 %v11229
    %v11399 = vpop.f32.mrb[0].mxu0
    %v11400 = vadd.f32 %v11103, %v11399
    %v11401 = vpop.f32.mrb[0].mxu0
    %v11402 = vadd.f32 %v11107, %v11401
    %v11403 = vpop.f32.mrb[0].mxu0
    %v11404 = vadd.f32 %v11103, %v11403
    %v11405 = vpop.f32.mrb[0].mxu0
    %v11406 = vadd.f32 %v11107, %v11405
    %11407 = vdwg.mxu0
    %11408 = vmatprep.subr.bf16.mxu0 %v11253
    %11409 = vmatpush1.bf16.msra.mxu0 %v11250
    %11410 = vmatprep.subr.bf16.mxu0 0
    %11411 = vmatpush1.bf16.msra.mxu0 0
    %11412 = vmatprep.subr.bf16.mxu0 0
    %11413 = vmatpush1.bf16.msra.mxu0 0
    %11414 = vmatprep.subr.bf16.mxu0 0
    %11415 = vmatpush1.bf16.msra.mxu0 0
    %11416 = vmatprep.subr.bf16.mxu0 0
    %11417 = vmatpush1.bf16.msra.mxu0 0
    %11418 = vmatprep.subr.bf16.mxu0 0
    %11419 = vmatpush1.bf16.msra.mxu0 0
    %11420 = vmatprep.subr.bf16.mxu0 0
    %11421 = vmatpush1.bf16.msra.mxu0 0
    %11422 = vmatprep.subr.bf16.mxu0 0
    %11423 = vmatpush1.bf16.msra.mxu0 0
    %11424 = vmatprep.subr.bf16.mxu0 0
    %11425 = vmatpush1.bf16.msra.mxu0 0
    %11426 = vmatprep.subr.bf16.mxu0 0
    %11427 = vmatpush1.bf16.msra.mxu0 0
    %11428 = vmatprep.subr.bf16.mxu0 0
    %11429 = vmatpush1.bf16.msra.mxu0 0
    %11430 = vmatprep.subr.bf16.mxu0 0
    %11431 = vmatpush1.bf16.msra.mxu0 0
    %11432 = vmatprep.subr.bf16.mxu0 0
    %11433 = vmatpush1.bf16.msra.mxu0 0
    %11434 = vmatprep.subr.bf16.mxu0 0
    %11435 = vmatpush1.bf16.msra.mxu0 0
    %11436 = vmatprep.subr.bf16.mxu0 0
    %11437 = vmatpush1.bf16.msra.mxu0 0
    %11438 = vmatprep.subr.bf16.mxu0 0
    %11439 = vmatpush1.bf16.msra.mxu0 0
    %11440 = vmatprep.mubr.bf16.mxu0 0
    %11441 = vmatmul.mubr.bf16.gmra.mrb[0].mxu0 %v11229
    %v11442 = vpop.f32.mrb[0].mxu0
    %v11443 = vadd.f32 %v11111, %v11442
    %v11444 = vpop.f32.mrb[0].mxu0
    %v11445 = vadd.f32 %v11115, %v11444
    %v11446 = vpop.f32.mrb[0].mxu0
    %v11447 = vadd.f32 %v11111, %v11446
    %v11448 = vpop.f32.mrb[0].mxu0
    %v11449 = vadd.f32 %v11115, %v11448
    %11450 = vdwg.mxu0
    %11451 = vmatprep.subr.bf16.mxu0 %v11259
    %11452 = vmatpush1.bf16.msra.mxu0 %v11256
    %11453 = vmatprep.subr.bf16.mxu0 0
    %11454 = vmatpush1.bf16.msra.mxu0 0
    %11455 = vmatprep.subr.bf16.mxu0 0
    %11456 = vmatpush1.bf16.msra.mxu0 0
    %11457 = vmatprep.subr.bf16.mxu0 0
    %11458 = vmatpush1.bf16.msra.mxu0 0
    %11459 = vmatprep.subr.bf16.mxu0 0
    %11460 = vmatpush1.bf16.msra.mxu0 0
    %11461 = vmatprep.subr.bf16.mxu0 0
    %11462 = vmatpush1.bf16.msra.mxu0 0
    %11463 = vmatprep.subr.bf16.mxu0 0
    %11464 = vmatpush1.bf16.msra.mxu0 0
    %11465 = vmatprep.subr.bf16.mxu0 0
    %11466 = vmatpush1.bf16.msra.mxu0 0
    %11467 = vmatprep.subr.bf16.mxu0 0
    %11468 = vmatpush1.bf16.msra.mxu0 0
    %11469 = vmatprep.subr.bf16.mxu0 0
    %11470 = vmatpush1.bf16.msra.mxu0 0
    %11471 = vmatprep.subr.bf16.mxu0 0
    %11472 = vmatpush1.bf16.msra.mxu0 0
    %11473 = vmatprep.subr.bf16.mxu0 0
    %11474 = vmatpush1.bf16.msra.mxu0 0
    %11475 = vmatprep.subr.bf16.mxu0 0
    %11476 = vmatpush1.bf16.msra.mxu0 0
    %11477 = vmatprep.subr.bf16.mxu0 0
    %11478 = vmatpush1.bf16.msra.mxu0 0
    %11479 = vmatprep.subr.bf16.mxu0 0
    %11480 = vmatpush1.bf16.msra.mxu0 0
    %11481 = vmatprep.subr.bf16.mxu0 0
    %11482 = vmatpush1.bf16.msra.mxu0 0
    %11483 = vmatprep.mubr.bf16.mxu0 0
    %11484 = vmatmul.mubr.bf16.gmra.mrb[0].mxu0 %v11229
    %v11485 = vpop.f32.mrb[0].mxu0
    %v11486 = vadd.f32 %v11119, %v11485
    %v11487 = vpop.f32.mrb[0].mxu0
    %v11488 = vadd.f32 %v11123, %v11487
    %v11489 = vpop.f32.mrb[0].mxu0
    %v11490 = vadd.f32 %v11119, %v11489
    %v11491 = vpop.f32.mrb[0].mxu0
    %v11492 = vadd.f32 %v11123, %v11491
    %11493 = vdwg.mxu0
    %11494 = vmatprep.subr.bf16.mxu0 %v11265
    %11495 = vmatpush1.bf16.msra.mxu0 %v11262
    %11496 = vmatprep.subr.bf16.mxu0 0
    %11497 = vmatpush1.bf16.msra.mxu0 0
    %11498 = vmatprep.subr.bf16.mxu0 0
    %11499 = vmatpush1.bf16.msra.mxu0 0
    %11500 = vmatprep.subr.bf16.mxu0 0
    %11501 = vmatpush1.bf16.msra.mxu0 0
    %11502 = vmatprep.subr.bf16.mxu0 0
    %11503 = vmatpush1.bf16.msra.mxu0 0
    %11504 = vmatprep.subr.bf16.mxu0 0
    %11505 = vmatpush1.bf16.msra.mxu0 0
    %11506 = vmatprep.subr.bf16.mxu0 0
    %11507 = vmatpush1.bf16.msra.mxu0 0
    %11508 = vmatprep.subr.bf16.mxu0 0
    %11509 = vmatpush1.bf16.msra.mxu0 0
    %11510 = vmatprep.subr.bf16.mxu0 0
    %11511 = vmatpush1.bf16.msra.mxu0 0
    %11512 = vmatprep.subr.bf16.mxu0 0
    %11513 = vmatpush1.bf16.msra.mxu0 0
    %11514 = vmatprep.subr.bf16.mxu0 0
    %11515 = vmatpush1.bf16.msra.mxu0 0
    %11516 = vmatprep.subr.bf16.mxu0 0
    %11517 = vmatpush1.bf16.msra.mxu0 0
    %11518 = vmatprep.subr.bf16.mxu0 0
    %11519 = vmatpush1.bf16.msra.mxu0 0
    %11520 = vmatprep.subr.bf16.mxu0 0
    %11521 = vmatpush1.bf16.msra.mxu0 0
    %11522 = vmatprep.subr.bf16.mxu0 0
    %11523 = vmatpush1.bf16.msra.mxu0 0
    %11524 = vmatprep.subr.bf16.mxu0 0
    %11525 = vmatpush1.bf16.msra.mxu0 0
    %11526 = vmatprep.mubr.bf16.mxu0 0
    %11527 = vmatmul.mubr.bf16.gmra.mrb[0].mxu0 %v11229
    %v11528 = vpop.f32.mrb[0].mxu0
    %v11529 = vadd.f32 %v11127, %v11528
    %v11530 = vpop.f32.mrb[0].mxu0
    %v11531 = vadd.f32 %v11131, %v11530
    %v11532 = vpop.f32.mrb[0].mxu0
    %v11533 = vadd.f32 %v11127, %v11532
    %v11534 = vpop.f32.mrb[0].mxu0
    %v11535 = vadd.f32 %v11131, %v11534
    %11536 = vdwg.mxu0
    %11537 = vmatprep.subr.bf16.mxu0 %v11271
    %11538 = vmatpush1.bf16.msra.mxu0 %v11268
    %11539 = vmatprep.subr.bf16.mxu0 0
    %11540 = vmatpush1.bf16.msra.mxu0 0
    %11541 = vmatprep.subr.bf16.mxu0 0
    %11542 = vmatpush1.bf16.msra.mxu0 0
    %11543 = vmatprep.subr.bf16.mxu0 0
    %11544 = vmatpush1.bf16.msra.mxu0 0
    %11545 = vmatprep.subr.bf16.mxu0 0
    %11546 = vmatpush1.bf16.msra.mxu0 0
    %11547 = vmatprep.subr.bf16.mxu0 0
    %11548 = vmatpush1.bf16.msra.mxu0 0
    %11549 = vmatprep.subr.bf16.mxu0 0
    %11550 = vmatpush1.bf16.msra.mxu0 0
    %11551 = vmatprep.subr.bf16.mxu0 0
    %11552 = vmatpush1.bf16.msra.mxu0 0
    %11553 = vmatprep.subr.bf16.mxu0 0
    %11554 = vmatpush1.bf16.msra.mxu0 0
    %11555 = vmatprep.subr.bf16.mxu0 0
    %11556 = vmatpush1.bf16.msra.mxu0 0
    %11557 = vmatprep.subr.bf16.mxu0 0
    %11558 = vmatpush1.bf16.msra.mxu0 0
    %11559 = vmatprep.subr.bf16.mxu0 0
    %11560 = vmatpush1.bf16.msra.mxu0 0
    %11561 = vmatprep.subr.bf16.mxu0 0
    %11562 = vmatpush1.bf16.msra.mxu0 0
    %11563 = vmatprep.subr.bf16.mxu0 0
    %11564 = vmatpush1.bf16.msra.mxu0 0
    %11565 = vmatprep.subr.bf16.mxu0 0
    %11566 = vmatpush1.bf16.msra.mxu0 0
    %11567 = vmatprep.subr.bf16.mxu0 0
    %11568 = vmatpush1.bf16.msra.mxu0 0
    %11569 = vmatprep.mubr.bf16.mxu0 0
    %11570 = vmatmul.mubr.bf16.gmra.mrb[0].mxu0 %v11229
    %v11571 = vpop.f32.mrb[0].mxu0
    %v11572 = vadd.f32 %v11135, %v11571
    %v11573 = vpop.f32.mrb[0].mxu0
    %v11574 = vadd.f32 %v11139, %v11573
    %v11575 = vpop.f32.mrb[0].mxu0
    %v11576 = vadd.f32 %v11135, %v11575
    %v11577 = vpop.f32.mrb[0].mxu0
    %v11578 = vadd.f32 %v11139, %v11577
    %11579 = vdwg.mxu0
    %11580 = vmatprep.subr.bf16.mxu0 %v11277
    %11581 = vmatpush1.bf16.msra.mxu0 %v11274
    %11582 = vmatprep.subr.bf16.mxu0 0
    %11583 = vmatpush1.bf16.msra.mxu0 0
    %11584 = vmatprep.subr.bf16.mxu0 0
    %11585 = vmatpush1.bf16.msra.mxu0 0
    %11586 = vmatprep.subr.bf16.mxu0 0
    %11587 = vmatpush1.bf16.msra.mxu0 0
    %11588 = vmatprep.subr.bf16.mxu0 0
    %11589 = vmatpush1.bf16.msra.mxu0 0
    %11590 = vmatprep.subr.bf16.mxu0 0
    %11591 = vmatpush1.bf16.msra.mxu0 0
    %11592 = vmatprep.subr.bf16.mxu0 0
    %11593 = vmatpush1.bf16.msra.mxu0 0
    %11594 = vmatprep.subr.bf16.mxu0 0
    %11595 = vmatpush1.bf16.msra.mxu0 0
    %11596 = vmatprep.subr.bf16.mxu0 0
    %11597 = vmatpush1.bf16.msra.mxu0 0
    %11598 = vmatprep.subr.bf16.mxu0 0
    %11599 = vmatpush1.bf16.msra.mxu0 0
    %11600 = vmatprep.subr.bf16.mxu0 0
    %11601 = vmatpush1.bf16.msra.mxu0 0
    %11602 = vmatprep.subr.bf16.mxu0 0
    %11603 = vmatpush1.bf16.msra.mxu0 0
    %11604 = vmatprep.subr.bf16.mxu0 0
    %11605 = vmatpush1.bf16.msra.mxu0 0
    %11606 = vmatprep.subr.bf16.mxu0 0
    %11607 = vmatpush1.bf16.msra.mxu0 0
    %11608 = vmatprep.subr.bf16.mxu0 0
    %11609 = vmatpush1.bf16.msra.mxu0 0
    %11610 = vmatprep.subr.bf16.mxu0 0
    %11611 = vmatpush1.bf16.msra.mxu0 0
    %11612 = vmatprep.mubr.bf16.mxu0 0
    %11613 = vmatmul.mubr.bf16.gmra.mrb[0].mxu0 %v11229
    %v11614 = vpop.f32.mrb[0].mxu0
    %v11615 = vadd.f32 %v11143, %v11614
    %v11616 = vpop.f32.mrb[0].mxu0
    %v11617 = vadd.f32 %v11147, %v11616
    %v11618 = vpop.f32.mrb[0].mxu0
    %v11619 = vadd.f32 %v11143, %v11618
    %v11620 = vpop.f32.mrb[0].mxu0
    %v11621 = vadd.f32 %v11147, %v11620
    %11622 = vdwg.mxu0
    %v11623 = vmax.f32 %v11314, 0.0
    %v11624 = vmax.f32 %v11316, 0.0
    %v11625 = vmax.f32 %v11357, 0.0
    %v11626 = vmax.f32 %v11359, 0.0
    %v11627 = vmax.f32 %v11400, 0.0
    %v11628 = vmax.f32 %v11402, 0.0
    %v11629 = vmax.f32 %v11443, 0.0
    %v11630 = vmax.f32 %v11445, 0.0
    %v11631 = vmax.f32 %v11486, 0.0
    %v11632 = vmax.f32 %v11488, 0.0
    %v11633 = vmax.f32 %v11529, 0.0
    %v11634 = vmax.f32 %v11531, 0.0
    %v11635 = vmax.f32 %v11572, 0.0
    %v11636 = vmax.f32 %v11574, 0.0
    %v11637 = vmax.f32 %v11615, 0.0
    %v11638 = vmax.f32 %v11617, 0.0
    %v11639 = vmax.f32 %v11318, 0.0
    %v11640 = vmax.f32 %v11320, 0.0
    %v11641 = vmax.f32 %v11361, 0.0
    %v11642 = vmax.f32 %v11363, 0.0
    %v11643 = vmax.f32 %v11404, 0.0
    %v11644 = vmax.f32 %v11406, 0.0
    %v11645 = vmax.f32 %v11447, 0.0
    %v11646 = vmax.f32 %v11449, 0.0
    %v11647 = vmax.f32 %v11490, 0.0
    %v11648 = vmax.f32 %v11492, 0.0
    %v11649 = vmax.f32 %v11533, 0.0
    %v11650 = vmax.f32 %v11535, 0.0
    %v11651 = vmax.f32 %v11576, 0.0
    %v11652 = vmax.f32 %v11578, 0.0
    %v11653 = vmax.f32 %v11619, 0.0
    %v11654 = vmax.f32 %v11621, 0.0
    %v11655 = vpack.c.bf16 %v11639, %v11623
    %v11656 = vpack.c.bf16 %v11640, %v11624
    %v11657 = vpack.c.bf16 %v11641, %v11625
    %v11658 = vpack.c.bf16 %v11642, %v11626
    %v11659 = vpack.c.bf16 %v11643, %v11627
    %v11660 = vpack.c.bf16 %v11644, %v11628
    %v11661 = vpack.c.bf16 %v11645, %v11629
    %v11662 = vpack.c.bf16 %v11646, %v11630
    %v11663 = vpack.c.bf16 %v11647, %v11631
    %v11664 = vpack.c.bf16 %v11648, %v11632
    %v11665 = vpack.c.bf16 %v11649, %v11633
    %v11666 = vpack.c.bf16 %v11650, %v11634
    %v11667 = vpack.c.bf16 %v11651, %v11635
    %v11668 = vpack.c.bf16 %v11652, %v11636
    %v11669 = vpack.c.bf16 %v11653, %v11637
    %v11670 = vpack.c.bf16 %v11654, %v11638
    %s11671 = scalar_lea.vmem %s6, 2048
    %v11672 = vld [vmem:[%s11671] sm:$0xf]
    %v11673 = vld [vmem:[%s11671 + $0x4] sm:$0xf]
    %v11674 = vld [vmem:[%s11671 + $0x8] sm:$0xf]
    %v11675 = vld [vmem:[%s11671 + $0xc] sm:$0xf]
    %v11676 = vld [vmem:[%s11671 + $0x10] sm:$0xf]
    %v11677 = vld [vmem:[%s11671 + $0x14] sm:$0xf]
    %v11678 = vld [vmem:[%s11671 + $0x18] sm:$0xf]
    %v11679 = vld [vmem:[%s11671 + $0x1c] sm:$0xf]
    %v11680 = vld [vmem:[%s11671 + $0x20] sm:$0xf]
    %v11681 = vld [vmem:[%s11671 + $0x24] sm:$0xf]
    %v11682 = vld [vmem:[%s11671 + $0x28] sm:$0xf]
    %v11683 = vld [vmem:[%s11671 + $0x2c] sm:$0xf]
    %v11684 = vld [vmem:[%s11671 + $0x30] sm:$0xf]
    %v11685 = vld [vmem:[%s11671 + $0x34] sm:$0xf]
    %v11686 = vld [vmem:[%s11671 + $0x38] sm:$0xf]
    %v11687 = vld [vmem:[%s11671 + $0x3c] sm:$0xf]
    %v11688 = vld [vmem:[%s11671 + $0x40] sm:$0xf]
    %v11689 = vld [vmem:[%s11671 + $0x44] sm:$0xf]
    %v11690 = vld [vmem:[%s11671 + $0x48] sm:$0xf]
    %v11691 = vld [vmem:[%s11671 + $0x4c] sm:$0xf]
    %v11692 = vld [vmem:[%s11671 + $0x50] sm:$0xf]
    %v11693 = vld [vmem:[%s11671 + $0x54] sm:$0xf]
    %v11694 = vld [vmem:[%s11671 + $0x58] sm:$0xf]
    %v11695 = vld [vmem:[%s11671 + $0x5c] sm:$0xf]
    %v11696 = vld [vmem:[%s11671 + $0x60] sm:$0xf]
    %v11697 = vld [vmem:[%s11671 + $0x64] sm:$0xf]
    %v11698 = vld [vmem:[%s11671 + $0x68] sm:$0xf]
    %v11699 = vld [vmem:[%s11671 + $0x6c] sm:$0xf]
    %v11700 = vld [vmem:[%s11671 + $0x70] sm:$0xf]
    %v11701 = vld [vmem:[%s11671 + $0x74] sm:$0xf]
    %v11702 = vld [vmem:[%s11671 + $0x78] sm:$0xf]
    %v11703 = vld [vmem:[%s11671 + $0x7c] sm:$0xf]
    %v11704 = vld [vmem:[%s11671 + $0x80] sm:$0xf]
    %v11705 = vld [vmem:[%s11671 + $0x84] sm:$0xf]
    %v11706 = vld [vmem:[%s11671 + $0x88] sm:$0xf]
    %v11707 = vld [vmem:[%s11671 + $0x8c] sm:$0xf]
    %v11708 = vld [vmem:[%s11671 + $0x90] sm:$0xf]
    %v11709 = vld [vmem:[%s11671 + $0x94] sm:$0xf]
    %v11710 = vld [vmem:[%s11671 + $0x98] sm:$0xf]
    %v11711 = vld [vmem:[%s11671 + $0x9c] sm:$0xf]
    %v11712 = vld [vmem:[%s11671 + $0xa0] sm:$0xf]
    %v11713 = vld [vmem:[%s11671 + $0xa4] sm:$0xf]
    %v11714 = vld [vmem:[%s11671 + $0xa8] sm:$0xf]
    %v11715 = vld [vmem:[%s11671 + $0xac] sm:$0xf]
    %v11716 = vld [vmem:[%s11671 + $0xb0] sm:$0xf]
    %v11717 = vld [vmem:[%s11671 + $0xb4] sm:$0xf]
    %v11718 = vld [vmem:[%s11671 + $0xb8] sm:$0xf]
    %v11719 = vld [vmem:[%s11671 + $0xbc] sm:$0xf]
    %v11720 = vld [vmem:[%s11671 + $0xc0] sm:$0xf]
    %v11721 = vld [vmem:[%s11671 + $0xc4] sm:$0xf]
    %v11722 = vld [vmem:[%s11671 + $0xc8] sm:$0xf]
    %v11723 = vld [vmem:[%s11671 + $0xcc] sm:$0xf]
    %v11724 = vld [vmem:[%s11671 + $0xd0] sm:$0xf]
    %v11725 = vld [vmem:[%s11671 + $0xd4] sm:$0xf]
    %v11726 = vld [vmem:[%s11671 + $0xd8] sm:$0xf]
    %v11727 = vld [vmem:[%s11671 + $0xdc] sm:$0xf]
    %v11728 = vld [vmem:[%s11671 + $0xe0] sm:$0xf]
    %v11729 = vld [vmem:[%s11671 + $0xe4] sm:$0xf]
    %v11730 = vld [vmem:[%s11671 + $0xe8] sm:$0xf]
    %v11731 = vld [vmem:[%s11671 + $0xec] sm:$0xf]
    %v11732 = vld [vmem:[%s11671 + $0xf0] sm:$0xf]
    %v11733 = vld [vmem:[%s11671 + $0xf4] sm:$0xf]
    %v11734 = vld [vmem:[%s11671 + $0xf8] sm:$0xf]
    %v11735 = vld [vmem:[%s11671 + $0xfc] sm:$0xf]
    %v11736 = vld [vmem:[%s11671 + $0x100] sm:$0xf]
    %v11737 = vld [vmem:[%s11671 + $0x104] sm:$0xf]
    %v11738 = vld [vmem:[%s11671 + $0x108] sm:$0xf]
    %v11739 = vld [vmem:[%s11671 + $0x10c] sm:$0xf]
    %v11740 = vld [vmem:[%s11671 + $0x110] sm:$0xf]
    %v11741 = vld [vmem:[%s11671 + $0x114] sm:$0xf]
    %v11742 = vld [vmem:[%s11671 + $0x118] sm:$0xf]
    %v11743 = vld [vmem:[%s11671 + $0x11c] sm:$0xf]
    %v11744 = vld [vmem:[%s11671 + $0x120] sm:$0xf]
    %v11745 = vld [vmem:[%s11671 + $0x124] sm:$0xf]
    %v11746 = vld [vmem:[%s11671 + $0x128] sm:$0xf]
    %v11747 = vld [vmem:[%s11671 + $0x12c] sm:$0xf]
    %v11748 = vld [vmem:[%s11671 + $0x130] sm:$0xf]
    %v11749 = vld [vmem:[%s11671 + $0x134] sm:$0xf]
    %v11750 = vld [vmem:[%s11671 + $0x138] sm:$0xf]
    %v11751 = vld [vmem:[%s11671 + $0x13c] sm:$0xf]
    %v11752 = vld [vmem:[%s11671 + $0x140] sm:$0xf]
    %v11753 = vld [vmem:[%s11671 + $0x144] sm:$0xf]
    %v11754 = vld [vmem:[%s11671 + $0x148] sm:$0xf]
    %v11755 = vld [vmem:[%s11671 + $0x14c] sm:$0xf]
    %v11756 = vld [vmem:[%s11671 + $0x150] sm:$0xf]
    %v11757 = vld [vmem:[%s11671 + $0x154] sm:$0xf]
    %v11758 = vld [vmem:[%s11671 + $0x158] sm:$0xf]
    %v11759 = vld [vmem:[%s11671 + $0x15c] sm:$0xf]
    %v11760 = vld [vmem:[%s11671 + $0x160] sm:$0xf]
    %v11761 = vld [vmem:[%s11671 + $0x164] sm:$0xf]
    %v11762 = vld [vmem:[%s11671 + $0x168] sm:$0xf]
    %v11763 = vld [vmem:[%s11671 + $0x16c] sm:$0xf]
    %v11764 = vld [vmem:[%s11671 + $0x170] sm:$0xf]
    %v11765 = vld [vmem:[%s11671 + $0x174] sm:$0xf]
    %v11766 = vld [vmem:[%s11671 + $0x178] sm:$0xf]
    %v11767 = vld [vmem:[%s11671 + $0x17c] sm:$0xf]
    %v11768 = vld [vmem:[%s11671 + $0x180] sm:$0xf]
    %v11769 = vld [vmem:[%s11671 + $0x184] sm:$0xf]
    %v11770 = vld [vmem:[%s11671 + $0x188] sm:$0xf]
    %v11771 = vld [vmem:[%s11671 + $0x18c] sm:$0xf]
    %v11772 = vld [vmem:[%s11671 + $0x190] sm:$0xf]
    %v11773 = vld [vmem:[%s11671 + $0x194] sm:$0xf]
    %v11774 = vld [vmem:[%s11671 + $0x198] sm:$0xf]
    %v11775 = vld [vmem:[%s11671 + $0x19c] sm:$0xf]
    %v11776 = vld [vmem:[%s11671 + $0x1a0] sm:$0xf]
    %v11777 = vld [vmem:[%s11671 + $0x1a4] sm:$0xf]
    %v11778 = vld [vmem:[%s11671 + $0x1a8] sm:$0xf]
    %v11779 = vld [vmem:[%s11671 + $0x1ac] sm:$0xf]
    %v11780 = vld [vmem:[%s11671 + $0x1b0] sm:$0xf]
    %v11781 = vld [vmem:[%s11671 + $0x1b4] sm:$0xf]
    %v11782 = vld [vmem:[%s11671 + $0x1b8] sm:$0xf]
    %v11783 = vld [vmem:[%s11671 + $0x1bc] sm:$0xf]
    %v11784 = vld [vmem:[%s11671 + $0x1c0] sm:$0xf]
    %v11785 = vld [vmem:[%s11671 + $0x1c4] sm:$0xf]
    %v11786 = vld [vmem:[%s11671 + $0x1c8] sm:$0xf]
    %v11787 = vld [vmem:[%s11671 + $0x1cc] sm:$0xf]
    %v11788 = vld [vmem:[%s11671 + $0x1d0] sm:$0xf]
    %v11789 = vld [vmem:[%s11671 + $0x1d4] sm:$0xf]
    %v11790 = vld [vmem:[%s11671 + $0x1d8] sm:$0xf]
    %v11791 = vld [vmem:[%s11671 + $0x1dc] sm:$0xf]
    %v11792 = vld [vmem:[%s11671 + $0x1e0] sm:$0xf]
    %v11793 = vld [vmem:[%s11671 + $0x1e4] sm:$0xf]
    %v11794 = vld [vmem:[%s11671 + $0x1e8] sm:$0xf]
    %v11795 = vld [vmem:[%s11671 + $0x1ec] sm:$0xf]
    %v11796 = vld [vmem:[%s11671 + $0x1f0] sm:$0xf]
    %v11797 = vld [vmem:[%s11671 + $0x1f4] sm:$0xf]
    %v11798 = vld [vmem:[%s11671 + $0x1f8] sm:$0xf]
    %v11799 = vld [vmem:[%s11671 + $0x1fc] sm:$0xf]
    %v11800 = vld [vmem:[%s11671 + $0x200] sm:$0xf]
    %v11801 = vld [vmem:[%s11671 + $0x204] sm:$0xf]
    %v11802 = vld [vmem:[%s11671 + $0x208] sm:$0xf]
    %v11803 = vld [vmem:[%s11671 + $0x20c] sm:$0xf]
    %v11804 = vld [vmem:[%s11671 + $0x210] sm:$0xf]
    %v11805 = vld [vmem:[%s11671 + $0x214] sm:$0xf]
    %v11806 = vld [vmem:[%s11671 + $0x218] sm:$0xf]
    %v11807 = vld [vmem:[%s11671 + $0x21c] sm:$0xf]
    %v11808 = vld [vmem:[%s11671 + $0x220] sm:$0xf]
    %v11809 = vld [vmem:[%s11671 + $0x224] sm:$0xf]
    %v11810 = vld [vmem:[%s11671 + $0x228] sm:$0xf]
    %v11811 = vld [vmem:[%s11671 + $0x22c] sm:$0xf]
    %v11812 = vld [vmem:[%s11671 + $0x230] sm:$0xf]
    %v11813 = vld [vmem:[%s11671 + $0x234] sm:$0xf]
    %v11814 = vld [vmem:[%s11671 + $0x238] sm:$0xf]
    %v11815 = vld [vmem:[%s11671 + $0x23c] sm:$0xf]
    %v11816 = vld [vmem:[%s11671 + $0x240] sm:$0xf]
    %v11817 = vld [vmem:[%s11671 + $0x244] sm:$0xf]
    %v11818 = vld [vmem:[%s11671 + $0x248] sm:$0xf]
    %v11819 = vld [vmem:[%s11671 + $0x24c] sm:$0xf]
    %v11820 = vld [vmem:[%s11671 + $0x250] sm:$0xf]
    %v11821 = vld [vmem:[%s11671 + $0x254] sm:$0xf]
    %v11822 = vld [vmem:[%s11671 + $0x258] sm:$0xf]
    %v11823 = vld [vmem:[%s11671 + $0x25c] sm:$0xf]
    %v11824 = vld [vmem:[%s11671 + $0x260] sm:$0xf]
    %v11825 = vld [vmem:[%s11671 + $0x264] sm:$0xf]
    %v11826 = vld [vmem:[%s11671 + $0x268] sm:$0xf]
    %v11827 = vld [vmem:[%s11671 + $0x26c] sm:$0xf]
    %v11828 = vld [vmem:[%s11671 + $0x270] sm:$0xf]
    %v11829 = vld [vmem:[%s11671 + $0x274] sm:$0xf]
    %v11830 = vld [vmem:[%s11671 + $0x278] sm:$0xf]
    %v11831 = vld [vmem:[%s11671 + $0x27c] sm:$0xf]
    %v11832 = vld [vmem:[%s11671 + $0x280] sm:$0xf]
    %v11833 = vld [vmem:[%s11671 + $0x284] sm:$0xf]
    %v11834 = vld [vmem:[%s11671 + $0x288] sm:$0xf]
    %v11835 = vld [vmem:[%s11671 + $0x28c] sm:$0xf]
    %v11836 = vld [vmem:[%s11671 + $0x290] sm:$0xf]
    %v11837 = vld [vmem:[%s11671 + $0x294] sm:$0xf]
    %v11838 = vld [vmem:[%s11671 + $0x298] sm:$0xf]
    %v11839 = vld [vmem:[%s11671 + $0x29c] sm:$0xf]
    %v11840 = vld [vmem:[%s11671 + $0x2a0] sm:$0xf]
    %v11841 = vld [vmem:[%s11671 + $0x2a4] sm:$0xf]
    %v11842 = vld [vmem:[%s11671 + $0x2a8] sm:$0xf]
    %v11843 = vld [vmem:[%s11671 + $0x2ac] sm:$0xf]
    %v11844 = vld [vmem:[%s11671 + $0x2b0] sm:$0xf]
    %v11845 = vld [vmem:[%s11671 + $0x2b4] sm:$0xf]
    %v11846 = vld [vmem:[%s11671 + $0x2b8] sm:$0xf]
    %v11847 = vld [vmem:[%s11671 + $0x2bc] sm:$0xf]
    %v11848 = vld [vmem:[%s11671 + $0x2c0] sm:$0xf]
    %v11849 = vld [vmem:[%s11671 + $0x2c4] sm:$0xf]
    %v11850 = vld [vmem:[%s11671 + $0x2c8] sm:$0xf]
    %v11851 = vld [vmem:[%s11671 + $0x2cc] sm:$0xf]
    %v11852 = vld [vmem:[%s11671 + $0x2d0] sm:$0xf]
    %v11853 = vld [vmem:[%s11671 + $0x2d4] sm:$0xf]
    %v11854 = vld [vmem:[%s11671 + $0x2d8] sm:$0xf]
    %v11855 = vld [vmem:[%s11671 + $0x2dc] sm:$0xf]
    %v11856 = vld [vmem:[%s11671 + $0x2e0] sm:$0xf]
    %v11857 = vld [vmem:[%s11671 + $0x2e4] sm:$0xf]
    %v11858 = vld [vmem:[%s11671 + $0x2e8] sm:$0xf]
    %v11859 = vld [vmem:[%s11671 + $0x2ec] sm:$0xf]
    %v11860 = vld [vmem:[%s11671 + $0x2f0] sm:$0xf]
    %v11861 = vld [vmem:[%s11671 + $0x2f4] sm:$0xf]
    %v11862 = vld [vmem:[%s11671 + $0x2f8] sm:$0xf]
    %v11863 = vld [vmem:[%s11671 + $0x2fc] sm:$0xf]
    %v11864 = vld [vmem:[%s11671 + $0x300] sm:$0xf]
    %v11865 = vld [vmem:[%s11671 + $0x304] sm:$0xf]
    %v11866 = vld [vmem:[%s11671 + $0x308] sm:$0xf]
    %v11867 = vld [vmem:[%s11671 + $0x30c] sm:$0xf]
    %v11868 = vld [vmem:[%s11671 + $0x310] sm:$0xf]
    %v11869 = vld [vmem:[%s11671 + $0x314] sm:$0xf]
    %v11870 = vld [vmem:[%s11671 + $0x318] sm:$0xf]
    %v11871 = vld [vmem:[%s11671 + $0x31c] sm:$0xf]
    %v11872 = vld [vmem:[%s11671 + $0x320] sm:$0xf]
    %v11873 = vld [vmem:[%s11671 + $0x324] sm:$0xf]
    %v11874 = vld [vmem:[%s11671 + $0x328] sm:$0xf]
    %v11875 = vld [vmem:[%s11671 + $0x32c] sm:$0xf]
    %v11876 = vld [vmem:[%s11671 + $0x330] sm:$0xf]
    %v11877 = vld [vmem:[%s11671 + $0x334] sm:$0xf]
    %v11878 = vld [vmem:[%s11671 + $0x338] sm:$0xf]
    %v11879 = vld [vmem:[%s11671 + $0x33c] sm:$0xf]
    %v11880 = vld [vmem:[%s11671 + $0x340] sm:$0xf]
    %v11881 = vld [vmem:[%s11671 + $0x344] sm:$0xf]
    %v11882 = vld [vmem:[%s11671 + $0x348] sm:$0xf]
    %v11883 = vld [vmem:[%s11671 + $0x34c] sm:$0xf]
    %v11884 = vld [vmem:[%s11671 + $0x350] sm:$0xf]
    %v11885 = vld [vmem:[%s11671 + $0x354] sm:$0xf]
    %v11886 = vld [vmem:[%s11671 + $0x358] sm:$0xf]
    %v11887 = vld [vmem:[%s11671 + $0x35c] sm:$0xf]
    %v11888 = vld [vmem:[%s11671 + $0x360] sm:$0xf]
    %v11889 = vld [vmem:[%s11671 + $0x364] sm:$0xf]
    %v11890 = vld [vmem:[%s11671 + $0x368] sm:$0xf]
    %v11891 = vld [vmem:[%s11671 + $0x36c] sm:$0xf]
    %v11892 = vld [vmem:[%s11671 + $0x370] sm:$0xf]
    %v11893 = vld [vmem:[%s11671 + $0x374] sm:$0xf]
    %v11894 = vld [vmem:[%s11671 + $0x378] sm:$0xf]
    %v11895 = vld [vmem:[%s11671 + $0x37c] sm:$0xf]
    %v11896 = vld [vmem:[%s11671 + $0x380] sm:$0xf]
    %v11897 = vld [vmem:[%s11671 + $0x384] sm:$0xf]
    %v11898 = vld [vmem:[%s11671 + $0x388] sm:$0xf]
    %v11899 = vld [vmem:[%s11671 + $0x38c] sm:$0xf]
    %v11900 = vld [vmem:[%s11671 + $0x390] sm:$0xf]
    %v11901 = vld [vmem:[%s11671 + $0x394] sm:$0xf]
    %v11902 = vld [vmem:[%s11671 + $0x398] sm:$0xf]
    %v11903 = vld [vmem:[%s11671 + $0x39c] sm:$0xf]
    %v11904 = vld [vmem:[%s11671 + $0x3a0] sm:$0xf]
    %v11905 = vld [vmem:[%s11671 + $0x3a4] sm:$0xf]
    %v11906 = vld [vmem:[%s11671 + $0x3a8] sm:$0xf]
    %v11907 = vld [vmem:[%s11671 + $0x3ac] sm:$0xf]
    %v11908 = vld [vmem:[%s11671 + $0x3b0] sm:$0xf]
    %v11909 = vld [vmem:[%s11671 + $0x3b4] sm:$0xf]
    %v11910 = vld [vmem:[%s11671 + $0x3b8] sm:$0xf]
    %v11911 = vld [vmem:[%s11671 + $0x3bc] sm:$0xf]
    %v11912 = vld [vmem:[%s11671 + $0x3c0] sm:$0xf]
    %v11913 = vld [vmem:[%s11671 + $0x3c4] sm:$0xf]
    %v11914 = vld [vmem:[%s11671 + $0x3c8] sm:$0xf]
    %v11915 = vld [vmem:[%s11671 + $0x3cc] sm:$0xf]
    %v11916 = vld [vmem:[%s11671 + $0x3d0] sm:$0xf]
    %v11917 = vld [vmem:[%s11671 + $0x3d4] sm:$0xf]
    %v11918 = vld [vmem:[%s11671 + $0x3d8] sm:$0xf]
    %v11919 = vld [vmem:[%s11671 + $0x3dc] sm:$0xf]
    %v11920 = vld [vmem:[%s11671 + $0x3e0] sm:$0xf]
    %v11921 = vld [vmem:[%s11671 + $0x3e4] sm:$0xf]
    %v11922 = vld [vmem:[%s11671 + $0x3e8] sm:$0xf]
    %v11923 = vld [vmem:[%s11671 + $0x3ec] sm:$0xf]
    %v11924 = vld [vmem:[%s11671 + $0x3f0] sm:$0xf]
    %v11925 = vld [vmem:[%s11671 + $0x3f4] sm:$0xf]
    %v11926 = vld [vmem:[%s11671 + $0x3f8] sm:$0xf]
    %v11927 = vld [vmem:[%s11671 + $0x3fc] sm:$0xf]
    %v11928 = vlaneseq
    %v11929 = vshrl.u32 %v11928, 7
    %v11930 = vsub.s32 6, %v11929
    %v11931 = vrot.slane %v9013, %v11930
    %v12188 = vunpack.c.l.b16 %v11672
    %v12189 = vunpack.c.l.b16 %v11673
    %v12190 = vunpack.c.l.b16 %v11674
    %v12191 = vunpack.c.l.b16 %v11675
    %v12192 = vunpack.c.l.b16 %v11676
    %v12193 = vunpack.c.l.b16 %v11677
    %v12194 = vunpack.c.l.b16 %v11678
    %v12195 = vunpack.c.l.b16 %v11679
    %v12196 = vunpack.c.l.b16 %v11680
    %v12197 = vunpack.c.l.b16 %v11681
    %v12198 = vunpack.c.l.b16 %v11682
    %v12199 = vunpack.c.l.b16 %v11683
    %v12200 = vunpack.c.l.b16 %v11684
    %v12201 = vunpack.c.l.b16 %v11685
    %v12202 = vunpack.c.l.b16 %v11686
    %v12203 = vunpack.c.l.b16 %v11687
    %v12204 = vunpack.c.l.b16 %v11688
    %v12205 = vunpack.c.l.b16 %v11689
    %v12206 = vunpack.c.l.b16 %v11690
    %v12207 = vunpack.c.l.b16 %v11691
    %v12208 = vunpack.c.l.b16 %v11692
    %v12209 = vunpack.c.l.b16 %v11693
    %v12210 = vunpack.c.l.b16 %v11694
    %v12211 = vunpack.c.l.b16 %v11695
    %v12212 = vunpack.c.l.b16 %v11696
    %v12213 = vunpack.c.l.b16 %v11697
    %v12214 = vunpack.c.l.b16 %v11698
    %v12215 = vunpack.c.l.b16 %v11699
    %v12216 = vunpack.c.l.b16 %v11700
    %v12217 = vunpack.c.l.b16 %v11701
    %v12218 = vunpack.c.l.b16 %v11702
    %v12219 = vunpack.c.l.b16 %v11703
    %v12220 = vunpack.c.l.b16 %v11704
    %v12221 = vunpack.c.l.b16 %v11705
    %v12222 = vunpack.c.l.b16 %v11706
    %v12223 = vunpack.c.l.b16 %v11707
    %v12224 = vunpack.c.l.b16 %v11708
    %v12225 = vunpack.c.l.b16 %v11709
    %v12226 = vunpack.c.l.b16 %v11710
    %v12227 = vunpack.c.l.b16 %v11711
    %v12228 = vunpack.c.l.b16 %v11712
    %v12229 = vunpack.c.l.b16 %v11713
    %v12230 = vunpack.c.l.b16 %v11714
    %v12231 = vunpack.c.l.b16 %v11715
    %v12232 = vunpack.c.l.b16 %v11716
    %v12233 = vunpack.c.l.b16 %v11717
    %v12234 = vunpack.c.l.b16 %v11718
    %v12235 = vunpack.c.l.b16 %v11719
    %v12236 = vunpack.c.l.b16 %v11720
    %v12237 = vunpack.c.l.b16 %v11721
    %v12238 = vunpack.c.l.b16 %v11722
    %v12239 = vunpack.c.l.b16 %v11723
    %v12240 = vunpack.c.l.b16 %v11724
    %v12241 = vunpack.c.l.b16 %v11725
    %v12242 = vunpack.c.l.b16 %v11726
    %v12243 = vunpack.c.l.b16 %v11727
    %v12244 = vunpack.c.l.b16 %v11728
    %v12245 = vunpack.c.l.b16 %v11729
    %v12246 = vunpack.c.l.b16 %v11730
    %v12247 = vunpack.c.l.b16 %v11731
    %v12248 = vunpack.c.l.b16 %v11732
    %v12249 = vunpack.c.l.b16 %v11733
    %v12250 = vunpack.c.l.b16 %v11734
    %v12251 = vunpack.c.l.b16 %v11735
    %v12252 = vunpack.c.l.b16 %v11736
    %v12253 = vunpack.c.l.b16 %v11737
    %v12254 = vunpack.c.l.b16 %v11738
    %v12255 = vunpack.c.l.b16 %v11739
    %v12256 = vunpack.c.l.b16 %v11740
    %v12257 = vunpack.c.l.b16 %v11741
    %v12258 = vunpack.c.l.b16 %v11742
    %v12259 = vunpack.c.l.b16 %v11743
    %v12260 = vunpack.c.l.b16 %v11744
    %v12261 = vunpack.c.l.b16 %v11745
    %v12262 = vunpack.c.l.b16 %v11746
    %v12263 = vunpack.c.l.b16 %v11747
    %v12264 = vunpack.c.l.b16 %v11748
    %v12265 = vunpack.c.l.b16 %v11749
    %v12266 = vunpack.c.l.b16 %v11750
    %v12267 = vunpack.c.l.b16 %v11751
    %v12268 = vunpack.c.l.b16 %v11752
    %v12269 = vunpack.c.l.b16 %v11753
    %v12270 = vunpack.c.l.b16 %v11754
    %v12271 = vunpack.c.l.b16 %v11755
    %v12272 = vunpack.c.l.b16 %v11756
    %v12273 = vunpack.c.l.b16 %v11757
    %v12274 = vunpack.c.l.b16 %v11758
    %v12275 = vunpack.c.l.b16 %v11759
    %v12276 = vunpack.c.l.b16 %v11760
    %v12277 = vunpack.c.l.b16 %v11761
    %v12278 = vunpack.c.l.b16 %v11762
    %v12279 = vunpack.c.l.b16 %v11763
    %v12280 = vunpack.c.l.b16 %v11764
    %v12281 = vunpack.c.l.b16 %v11765
    %v12282 = vunpack.c.l.b16 %v11766
    %v12283 = vunpack.c.l.b16 %v11767
    %v12284 = vunpack.c.l.b16 %v11768
    %v12285 = vunpack.c.l.b16 %v11769
    %v12286 = vunpack.c.l.b16 %v11770
    %v12287 = vunpack.c.l.b16 %v11771
    %v12288 = vunpack.c.l.b16 %v11772
    %v12289 = vunpack.c.l.b16 %v11773
    %v12290 = vunpack.c.l.b16 %v11774
    %v12291 = vunpack.c.l.b16 %v11775
    %v12292 = vunpack.c.l.b16 %v11776
    %v12293 = vunpack.c.l.b16 %v11777
    %v12294 = vunpack.c.l.b16 %v11778
    %v12295 = vunpack.c.l.b16 %v11779
    %v12296 = vunpack.c.l.b16 %v11780
    %v12297 = vunpack.c.l.b16 %v11781
    %v12298 = vunpack.c.l.b16 %v11782
    %v12299 = vunpack.c.l.b16 %v11783
    %v12300 = vunpack.c.l.b16 %v11784
    %v12301 = vunpack.c.l.b16 %v11785
    %v12302 = vunpack.c.l.b16 %v11786
    %v12303 = vunpack.c.l.b16 %v11787
    %v12304 = vunpack.c.l.b16 %v11788
    %v12305 = vunpack.c.l.b16 %v11789
    %v12306 = vunpack.c.l.b16 %v11790
    %v12307 = vunpack.c.l.b16 %v11791
    %v12308 = vunpack.c.l.b16 %v11792
    %v12309 = vunpack.c.l.b16 %v11793
    %v12310 = vunpack.c.l.b16 %v11794
    %v12311 = vunpack.c.l.b16 %v11795
    %v12312 = vunpack.c.l.b16 %v11796
    %v12313 = vunpack.c.l.b16 %v11797
    %v12314 = vunpack.c.l.b16 %v11798
    %v12315 = vunpack.c.l.b16 %v11799
    %v12316 = vunpack.c.l.b16 %v11800
    %v12317 = vunpack.c.l.b16 %v11801
    %v12318 = vunpack.c.l.b16 %v11802
    %v12319 = vunpack.c.l.b16 %v11803
    %v12320 = vunpack.c.l.b16 %v11804
    %v12321 = vunpack.c.l.b16 %v11805
    %v12322 = vunpack.c.l.b16 %v11806
    %v12323 = vunpack.c.l.b16 %v11807
    %v12324 = vunpack.c.l.b16 %v11808
    %v12325 = vunpack.c.l.b16 %v11809
    %v12326 = vunpack.c.l.b16 %v11810
    %v12327 = vunpack.c.l.b16 %v11811
    %v12328 = vunpack.c.l.b16 %v11812
    %v12329 = vunpack.c.l.b16 %v11813
    %v12330 = vunpack.c.l.b16 %v11814
    %v12331 = vunpack.c.l.b16 %v11815
    %v12332 = vunpack.c.l.b16 %v11816
    %v12333 = vunpack.c.l.b16 %v11817
    %v12334 = vunpack.c.l.b16 %v11818
    %v12335 = vunpack.c.l.b16 %v11819
    %v12336 = vunpack.c.l.b16 %v11820
    %v12337 = vunpack.c.l.b16 %v11821
    %v12338 = vunpack.c.l.b16 %v11822
    %v12339 = vunpack.c.l.b16 %v11823
    %v12340 = vunpack.c.l.b16 %v11824
    %v12341 = vunpack.c.l.b16 %v11825
    %v12342 = vunpack.c.l.b16 %v11826
    %v12343 = vunpack.c.l.b16 %v11827
    %v12344 = vunpack.c.l.b16 %v11828
    %v12345 = vunpack.c.l.b16 %v11829
    %v12346 = vunpack.c.l.b16 %v11830
    %v12347 = vunpack.c.l.b16 %v11831
    %v12348 = vunpack.c.l.b16 %v11832
    %v12349 = vunpack.c.l.b16 %v11833
    %v12350 = vunpack.c.l.b16 %v11834
    %v12351 = vunpack.c.l.b16 %v11835
    %v12352 = vunpack.c.l.b16 %v11836
    %v12353 = vunpack.c.l.b16 %v11837
    %v12354 = vunpack.c.l.b16 %v11838
    %v12355 = vunpack.c.l.b16 %v11839
    %v12356 = vunpack.c.l.b16 %v11840
    %v12357 = vunpack.c.l.b16 %v11841
    %v12358 = vunpack.c.l.b16 %v11842
    %v12359 = vunpack.c.l.b16 %v11843
    %v12360 = vunpack.c.l.b16 %v11844
    %v12361 = vunpack.c.l.b16 %v11845
    %v12362 = vunpack.c.l.b16 %v11846
    %v12363 = vunpack.c.l.b16 %v11847
    %v12364 = vunpack.c.l.b16 %v11848
    %v12365 = vunpack.c.l.b16 %v11849
    %v12366 = vunpack.c.l.b16 %v11850
    %v12367 = vunpack.c.l.b16 %v11851
    %v12368 = vunpack.c.l.b16 %v11852
    %v12369 = vunpack.c.l.b16 %v11853
    %v12370 = vunpack.c.l.b16 %v11854
    %v12371 = vunpack.c.l.b16 %v11855
    %v12372 = vunpack.c.l.b16 %v11856
    %v12373 = vunpack.c.l.b16 %v11857
    %v12374 = vunpack.c.l.b16 %v11858
    %v12375 = vunpack.c.l.b16 %v11859
    %v12376 = vunpack.c.l.b16 %v11860
    %v12377 = vunpack.c.l.b16 %v11861
    %v12378 = vunpack.c.l.b16 %v11862
    %v12379 = vunpack.c.l.b16 %v11863
    %v12380 = vunpack.c.l.b16 %v11864
    %v12381 = vunpack.c.l.b16 %v11865
    %v12382 = vunpack.c.l.b16 %v11866
    %v12383 = vunpack.c.l.b16 %v11867
    %v12384 = vunpack.c.l.b16 %v11868
    %v12385 = vunpack.c.l.b16 %v11869
    %v12386 = vunpack.c.l.b16 %v11870
    %v12387 = vunpack.c.l.b16 %v11871
    %v12388 = vunpack.c.l.b16 %v11872
    %v12389 = vunpack.c.l.b16 %v11873
    %v12390 = vunpack.c.l.b16 %v11874
    %v12391 = vunpack.c.l.b16 %v11875
    %v12392 = vunpack.c.l.b16 %v11876
    %v12393 = vunpack.c.l.b16 %v11877
    %v12394 = vunpack.c.l.b16 %v11878
    %v12395 = vunpack.c.l.b16 %v11879
    %v12396 = vunpack.c.l.b16 %v11880
    %v12397 = vunpack.c.l.b16 %v11881
    %v12398 = vunpack.c.l.b16 %v11882
    %v12399 = vunpack.c.l.b16 %v11883
    %v12400 = vunpack.c.l.b16 %v11884
    %v12401 = vunpack.c.l.b16 %v11885
    %v12402 = vunpack.c.l.b16 %v11886
    %v12403 = vunpack.c.l.b16 %v11887
    %v12404 = vunpack.c.l.b16 %v11888
    %v12405 = vunpack.c.l.b16 %v11889
    %v12406 = vunpack.c.l.b16 %v11890
    %v12407 = vunpack.c.l.b16 %v11891
    %v12408 = vunpack.c.l.b16 %v11892
    %v12409 = vunpack.c.l.b16 %v11893
    %v12410 = vunpack.c.l.b16 %v11894
    %v12411 = vunpack.c.l.b16 %v11895
    %v12412 = vunpack.c.l.b16 %v11896
    %v12413 = vunpack.c.l.b16 %v11897
    %v12414 = vunpack.c.l.b16 %v11898
    %v12415 = vunpack.c.l.b16 %v11899
    %v12416 = vunpack.c.l.b16 %v11900
    %v12417 = vunpack.c.l.b16 %v11901
    %v12418 = vunpack.c.l.b16 %v11902
    %v12419 = vunpack.c.l.b16 %v11903
    %v12420 = vunpack.c.l.b16 %v11904
    %v12421 = vunpack.c.l.b16 %v11905
    %v12422 = vunpack.c.l.b16 %v11906
    %v12423 = vunpack.c.l.b16 %v11907
    %v12424 = vunpack.c.l.b16 %v11908
    %v12425 = vunpack.c.l.b16 %v11909
    %v12426 = vunpack.c.l.b16 %v11910
    %v12427 = vunpack.c.l.b16 %v11911
    %v12428 = vunpack.c.l.b16 %v11912
    %v12429 = vunpack.c.l.b16 %v11913
    %v12430 = vunpack.c.l.b16 %v11914
    %v12431 = vunpack.c.l.b16 %v11915
    %v12432 = vunpack.c.l.b16 %v11916
    %v12433 = vunpack.c.l.b16 %v11917
    %v12434 = vunpack.c.l.b16 %v11918
    %v12435 = vunpack.c.l.b16 %v11919
    %v12436 = vunpack.c.l.b16 %v11920
    %v12437 = vunpack.c.l.b16 %v11921
    %v12438 = vunpack.c.l.b16 %v11922
    %v12439 = vunpack.c.l.b16 %v11923
    %v12440 = vunpack.c.l.b16 %v11924
    %v12441 = vunpack.c.l.b16 %v11925
    %v12442 = vunpack.c.l.b16 %v11926
    %v12443 = vunpack.c.l.b16 %v11927
    %v12444 = vpack.c.b16 %v12189, %v12188
    %v12445 = vpack.c.b16 %v12191, %v12190
    %v12446 = vpack.c.b16 %v12193, %v12192
    %v12447 = vpack.c.b16 %v12195, %v12194
    %v12448 = vpack.c.b16 %v12197, %v12196
    %v12449 = vpack.c.b16 %v12199, %v12198
    %v12450 = vpack.c.b16 %v12201, %v12200
    %v12451 = vpack.c.b16 %v12203, %v12202
    %v12452 = vpack.c.b16 %v12205, %v12204
    %v12453 = vpack.c.b16 %v12207, %v12206
    %v12454 = vpack.c.b16 %v12209, %v12208
    %v12455 = vpack.c.b16 %v12211, %v12210
    %v12456 = vpack.c.b16 %v12213, %v12212
    %v12457 = vpack.c.b16 %v12215, %v12214
    %v12458 = vpack.c.b16 %v12217, %v12216
    %v12459 = vpack.c.b16 %v12219, %v12218
    %v12460 = vpack.c.b16 %v12221, %v12220
    %v12461 = vpack.c.b16 %v12223, %v12222
    %v12462 = vpack.c.b16 %v12225, %v12224
    %v12463 = vpack.c.b16 %v12227, %v12226
    %v12464 = vpack.c.b16 %v12229, %v12228
    %v12465 = vpack.c.b16 %v12231, %v12230
    %v12466 = vpack.c.b16 %v12233, %v12232
    %v12467 = vpack.c.b16 %v12235, %v12234
    %v12468 = vpack.c.b16 %v12237, %v12236
    %v12469 = vpack.c.b16 %v12239, %v12238
    %v12470 = vpack.c.b16 %v12241, %v12240
    %v12471 = vpack.c.b16 %v12243, %v12242
    %v12472 = vpack.c.b16 %v12245, %v12244
    %v12473 = vpack.c.b16 %v12247, %v12246
    %v12474 = vpack.c.b16 %v12249, %v12248
    %v12475 = vpack.c.b16 %v12251, %v12250
    %v12476 = vpack.c.b16 %v12253, %v12252
    %v12477 = vpack.c.b16 %v12255, %v12254
    %v12478 = vpack.c.b16 %v12257, %v12256
    %v12479 = vpack.c.b16 %v12259, %v12258
    %v12480 = vpack.c.b16 %v12261, %v12260
    %v12481 = vpack.c.b16 %v12263, %v12262
    %v12482 = vpack.c.b16 %v12265, %v12264
    %v12483 = vpack.c.b16 %v12267, %v12266
    %v12484 = vpack.c.b16 %v12269, %v12268
    %v12485 = vpack.c.b16 %v12271, %v12270
    %v12486 = vpack.c.b16 %v12273, %v12272
    %v12487 = vpack.c.b16 %v12275, %v12274
    %v12488 = vpack.c.b16 %v12277, %v12276
    %v12489 = vpack.c.b16 %v12279, %v12278
    %v12490 = vpack.c.b16 %v12281, %v12280
    %v12491 = vpack.c.b16 %v12283, %v12282
    %v12492 = vpack.c.b16 %v12285, %v12284
    %v12493 = vpack.c.b16 %v12287, %v12286
    %v12494 = vpack.c.b16 %v12289, %v12288
    %v12495 = vpack.c.b16 %v12291, %v12290
    %v12496 = vpack.c.b16 %v12293, %v12292
    %v12497 = vpack.c.b16 %v12295, %v12294
    %v12498 = vpack.c.b16 %v12297, %v12296
    %v12499 = vpack.c.b16 %v12299, %v12298
    %v12500 = vpack.c.b16 %v12301, %v12300
    %v12501 = vpack.c.b16 %v12303, %v12302
    %v12502 = vpack.c.b16 %v12305, %v12304
    %v12503 = vpack.c.b16 %v12307, %v12306
    %v12504 = vpack.c.b16 %v12309, %v12308
    %v12505 = vpack.c.b16 %v12311, %v12310
    %v12506 = vpack.c.b16 %v12313, %v12312
    %v12507 = vpack.c.b16 %v12315, %v12314
    %v12508 = vpack.c.b16 %v12317, %v12316
    %v12509 = vpack.c.b16 %v12319, %v12318
    %v12510 = vpack.c.b16 %v12321, %v12320
    %v12511 = vpack.c.b16 %v12323, %v12322
    %v12512 = vpack.c.b16 %v12325, %v12324
    %v12513 = vpack.c.b16 %v12327, %v12326
    %v12514 = vpack.c.b16 %v12329, %v12328
    %v12515 = vpack.c.b16 %v12331, %v12330
    %v12516 = vpack.c.b16 %v12333, %v12332
    %v12517 = vpack.c.b16 %v12335, %v12334
    %v12518 = vpack.c.b16 %v12337, %v12336
    %v12519 = vpack.c.b16 %v12339, %v12338
    %v12520 = vpack.c.b16 %v12341, %v12340
    %v12521 = vpack.c.b16 %v12343, %v12342
    %v12522 = vpack.c.b16 %v12345, %v12344
    %v12523 = vpack.c.b16 %v12347, %v12346
    %v12524 = vpack.c.b16 %v12349, %v12348
    %v12525 = vpack.c.b16 %v12351, %v12350
    %v12526 = vpack.c.b16 %v12353, %v12352
    %v12527 = vpack.c.b16 %v12355, %v12354
    %v12528 = vpack.c.b16 %v12357, %v12356
    %v12529 = vpack.c.b16 %v12359, %v12358
    %v12530 = vpack.c.b16 %v12361, %v12360
    %v12531 = vpack.c.b16 %v12363, %v12362
    %v12532 = vpack.c.b16 %v12365, %v12364
    %v12533 = vpack.c.b16 %v12367, %v12366
    %v12534 = vpack.c.b16 %v12369, %v12368
    %v12535 = vpack.c.b16 %v12371, %v12370
    %v12536 = vpack.c.b16 %v12373, %v12372
    %v12537 = vpack.c.b16 %v12375, %v12374
    %v12538 = vpack.c.b16 %v12377, %v12376
    %v12539 = vpack.c.b16 %v12379, %v12378
    %v12540 = vpack.c.b16 %v12381, %v12380
    %v12541 = vpack.c.b16 %v12383, %v12382
    %v12542 = vpack.c.b16 %v12385, %v12384
    %v12543 = vpack.c.b16 %v12387, %v12386
    %v12544 = vpack.c.b16 %v12389, %v12388
    %v12545 = vpack.c.b16 %v12391, %v12390
    %v12546 = vpack.c.b16 %v12393, %v12392
    %v12547 = vpack.c.b16 %v12395, %v12394
    %v12548 = vpack.c.b16 %v12397, %v12396
    %v12549 = vpack.c.b16 %v12399, %v12398
    %v12550 = vpack.c.b16 %v12401, %v12400
    %v12551 = vpack.c.b16 %v12403, %v12402
    %v12552 = vpack.c.b16 %v12405, %v12404
    %v12553 = vpack.c.b16 %v12407, %v12406
    %v12554 = vpack.c.b16 %v12409, %v12408
    %v12555 = vpack.c.b16 %v12411, %v12410
    %v12556 = vpack.c.b16 %v12413, %v12412
    %v12557 = vpack.c.b16 %v12415, %v12414
    %v12558 = vpack.c.b16 %v12417, %v12416
    %v12559 = vpack.c.b16 %v12419, %v12418
    %v12560 = vpack.c.b16 %v12421, %v12420
    %v12561 = vpack.c.b16 %v12423, %v12422
    %v12562 = vpack.c.b16 %v12425, %v12424
    %v12563 = vpack.c.b16 %v12427, %v12426
    %v12564 = vpack.c.b16 %v12429, %v12428
    %v12565 = vpack.c.b16 %v12431, %v12430
    %v12566 = vpack.c.b16 %v12433, %v12432
    %v12567 = vpack.c.b16 %v12435, %v12434
    %v12568 = vpack.c.b16 %v12437, %v12436
    %v12569 = vpack.c.b16 %v12439, %v12438
    %v12570 = vpack.c.b16 %v12441, %v12440
    %v12571 = vpack.c.b16 %v12443, %v12442
    %12700 = vmatprep.subr.bf16.mxu0 0
    %12701 = vmatpush1.bf16.msra.mxu0 %v12444
    %12702 = vmatprep.subr.bf16.mxu0 0
    %12703 = vmatpush1.bf16.msra.mxu0 %v12445
    %12704 = vmatprep.subr.bf16.mxu0 0
    %12705 = vmatpush1.bf16.msra.mxu0 %v12446
    %12706 = vmatprep.subr.bf16.mxu0 0
    %12707 = vmatpush1.bf16.msra.mxu0 %v12447
    %12708 = vmatprep.subr.bf16.mxu0 0
    %12709 = vmatpush1.bf16.msra.mxu0 %v12448
    %12710 = vmatprep.subr.bf16.mxu0 0
    %12711 = vmatpush1.bf16.msra.mxu0 %v12449
    %12712 = vmatprep.subr.bf16.mxu0 0
    %12713 = vmatpush1.bf16.msra.mxu0 %v12450
    %12714 = vmatprep.subr.bf16.mxu0 0
    %12715 = vmatpush1.bf16.msra.mxu0 %v12451
    %12716 = vmatprep.subr.bf16.mxu0 0
    %12717 = vmatpush1.bf16.msra.mxu0 %v12452
    %12718 = vmatprep.subr.bf16.mxu0 0
    %12719 = vmatpush1.bf16.msra.mxu0 %v12453
    %12720 = vmatprep.subr.bf16.mxu0 0
    %12721 = vmatpush1.bf16.msra.mxu0 %v12454
    %12722 = vmatprep.subr.bf16.mxu0 0
    %12723 = vmatpush1.bf16.msra.mxu0 %v12455
    %12724 = vmatprep.subr.bf16.mxu0 0
    %12725 = vmatpush1.bf16.msra.mxu0 %v12456
    %12726 = vmatprep.subr.bf16.mxu0 0
    %12727 = vmatpush1.bf16.msra.mxu0 %v12457
    %12728 = vmatprep.subr.bf16.mxu0 0
    %12729 = vmatpush1.bf16.msra.mxu0 %v12458
    %12730 = vmatprep.subr.bf16.mxu0 0
    %12731 = vmatpush1.bf16.msra.mxu0 %v12459
    %12732 = vmatprep.mubr.bf16.mxu0 %v11656
    %12733 = vmatmul.mubr.bf16.gmra.mrb[0].mxu0 %v11655
    %v12734 = vpop.f32.mrb[0].mxu0
    %v12735 = vadd.f32 %v11931, %v12734
    %v12736 = vpop.f32.mrb[0].mxu0
    %v12737 = vpop.f32.mrb[0].mxu0
    %v12738 = vadd.f32 %v11931, %v12737
    %v12739 = vpop.f32.mrb[0].mxu0
    %12740 = vdwg.mxu0
    %12741 = vmatprep.subr.bf16.mxu0 0
    %12742 = vmatpush1.bf16.msra.mxu0 %v12460
    %12743 = vmatprep.subr.bf16.mxu0 0
    %12744 = vmatpush1.bf16.msra.mxu0 %v12461
    %12745 = vmatprep.subr.bf16.mxu0 0
    %12746 = vmatpush1.bf16.msra.mxu0 %v12462
    %12747 = vmatprep.subr.bf16.mxu0 0
    %12748 = vmatpush1.bf16.msra.mxu0 %v12463
    %12749 = vmatprep.subr.bf16.mxu0 0
    %12750 = vmatpush1.bf16.msra.mxu0 %v12464
    %12751 = vmatprep.subr.bf16.mxu0 0
    %12752 = vmatpush1.bf16.msra.mxu0 %v12465
    %12753 = vmatprep.subr.bf16.mxu0 0
    %12754 = vmatpush1.bf16.msra.mxu0 %v12466
    %12755 = vmatprep.subr.bf16.mxu0 0
    %12756 = vmatpush1.bf16.msra.mxu0 %v12467
    %12757 = vmatprep.subr.bf16.mxu0 0
    %12758 = vmatpush1.bf16.msra.mxu0 %v12468
    %12759 = vmatprep.subr.bf16.mxu0 0
    %12760 = vmatpush1.bf16.msra.mxu0 %v12469
    %12761 = vmatprep.subr.bf16.mxu0 0
    %12762 = vmatpush1.bf16.msra.mxu0 %v12470
    %12763 = vmatprep.subr.bf16.mxu0 0
    %12764 = vmatpush1.bf16.msra.mxu0 %v12471
    %12765 = vmatprep.subr.bf16.mxu0 0
    %12766 = vmatpush1.bf16.msra.mxu0 %v12472
    %12767 = vmatprep.subr.bf16.mxu0 0
    %12768 = vmatpush1.bf16.msra.mxu0 %v12473
    %12769 = vmatprep.subr.bf16.mxu0 0
    %12770 = vmatpush1.bf16.msra.mxu0 %v12474
    %12771 = vmatprep.subr.bf16.mxu0 0
    %12772 = vmatpush1.bf16.msra.mxu0 %v12475
    %12773 = vmatprep.mubr.bf16.mxu0 %v11658
    %12774 = vmatmul.mubr.bf16.gmra.mrb[0].mxu0 %v11657
    %v12775 = vpop.f32.mrb[0].mxu0
    %v12776 = vadd.f32 %v12735, %v12775
    %v12777 = vpop.f32.mrb[0].mxu0
    %v12778 = vpop.f32.mrb[0].mxu0
    %v12779 = vadd.f32 %v12738, %v12778
    %v12780 = vpop.f32.mrb[0].mxu0
    %12781 = vdwg.mxu0
    %12782 = vmatprep.subr.bf16.mxu0 0
    %12783 = vmatpush1.bf16.msra.mxu0 %v12476
    %12784 = vmatprep.subr.bf16.mxu0 0
    %12785 = vmatpush1.bf16.msra.mxu0 %v12477
    %12786 = vmatprep.subr.bf16.mxu0 0
    %12787 = vmatpush1.bf16.msra.mxu0 %v12478
    %12788 = vmatprep.subr.bf16.mxu0 0
    %12789 = vmatpush1.bf16.msra.mxu0 %v12479
    %12790 = vmatprep.subr.bf16.mxu0 0
    %12791 = vmatpush1.bf16.msra.mxu0 %v12480
    %12792 = vmatprep.subr.bf16.mxu0 0
    %12793 = vmatpush1.bf16.msra.mxu0 %v12481
    %12794 = vmatprep.subr.bf16.mxu0 0
    %12795 = vmatpush1.bf16.msra.mxu0 %v12482
    %12796 = vmatprep.subr.bf16.mxu0 0
    %12797 = vmatpush1.bf16.msra.mxu0 %v12483
    %12798 = vmatprep.subr.bf16.mxu0 0
    %12799 = vmatpush1.bf16.msra.mxu0 %v12484
    %12800 = vmatprep.subr.bf16.mxu0 0
    %12801 = vmatpush1.bf16.msra.mxu0 %v12485
    %12802 = vmatprep.subr.bf16.mxu0 0
    %12803 = vmatpush1.bf16.msra.mxu0 %v12486
    %12804 = vmatprep.subr.bf16.mxu0 0
    %12805 = vmatpush1.bf16.msra.mxu0 %v12487
    %12806 = vmatprep.subr.bf16.mxu0 0
    %12807 = vmatpush1.bf16.msra.mxu0 %v12488
    %12808 = vmatprep.subr.bf16.mxu0 0
    %12809 = vmatpush1.bf16.msra.mxu0 %v12489
    %12810 = vmatprep.subr.bf16.mxu0 0
    %12811 = vmatpush1.bf16.msra.mxu0 %v12490
    %12812 = vmatprep.subr.bf16.mxu0 0
    %12813 = vmatpush1.bf16.msra.mxu0 %v12491
    %12814 = vmatprep.mubr.bf16.mxu0 %v11660
    %12815 = vmatmul.mubr.bf16.gmra.mrb[0].mxu0 %v11659
    %v12816 = vpop.f32.mrb[0].mxu0
    %v12817 = vadd.f32 %v12776, %v12816
    %v12818 = vpop.f32.mrb[0].mxu0
    %v12819 = vpop.f32.mrb[0].mxu0
    %v12820 = vadd.f32 %v12779, %v12819
    %v12821 = vpop.f32.mrb[0].mxu0
    %12822 = vdwg.mxu0
    %12823 = vmatprep.subr.bf16.mxu0 0
    %12824 = vmatpush1.bf16.msra.mxu0 %v12492
    %12825 = vmatprep.subr.bf16.mxu0 0
    %12826 = vmatpush1.bf16.msra.mxu0 %v12493
    %12827 = vmatprep.subr.bf16.mxu0 0
    %12828 = vmatpush1.bf16.msra.mxu0 %v12494
    %12829 = vmatprep.subr.bf16.mxu0 0
    %12830 = vmatpush1.bf16.msra.mxu0 %v12495
    %12831 = vmatprep.subr.bf16.mxu0 0
    %12832 = vmatpush1.bf16.msra.mxu0 %v12496
    %12833 = vmatprep.subr.bf16.mxu0 0
    %12834 = vmatpush1.bf16.msra.mxu0 %v12497
    %12835 = vmatprep.subr.bf16.mxu0 0
    %12836 = vmatpush1.bf16.msra.mxu0 %v12498
    %12837 = vmatprep.subr.bf16.mxu0 0
    %12838 = vmatpush1.bf16.msra.mxu0 %v12499
    %12839 = vmatprep.subr.bf16.mxu0 0
    %12840 = vmatpush1.bf16.msra.mxu0 %v12500
    %12841 = vmatprep.subr.bf16.mxu0 0
    %12842 = vmatpush1.bf16.msra.mxu0 %v12501
    %12843 = vmatprep.subr.bf16.mxu0 0
    %12844 = vmatpush1.bf16.msra.mxu0 %v12502
    %12845 = vmatprep.subr.bf16.mxu0 0
    %12846 = vmatpush1.bf16.msra.mxu0 %v12503
    %12847 = vmatprep.subr.bf16.mxu0 0
    %12848 = vmatpush1.bf16.msra.mxu0 %v12504
    %12849 = vmatprep.subr.bf16.mxu0 0
    %12850 = vmatpush1.bf16.msra.mxu0 %v12505
    %12851 = vmatprep.subr.bf16.mxu0 0
    %12852 = vmatpush1.bf16.msra.mxu0 %v12506
    %12853 = vmatprep.subr.bf16.mxu0 0
    %12854 = vmatpush1.bf16.msra.mxu0 %v12507
    %12855 = vmatprep.mubr.bf16.mxu0 %v11662
    %12856 = vmatmul.mubr.bf16.gmra.mrb[0].mxu0 %v11661
    %v12857 = vpop.f32.mrb[0].mxu0
    %v12858 = vadd.f32 %v12817, %v12857
    %v12859 = vpop.f32.mrb[0].mxu0
    %v12860 = vpop.f32.mrb[0].mxu0
    %v12861 = vadd.f32 %v12820, %v12860
    %v12862 = vpop.f32.mrb[0].mxu0
    %12863 = vdwg.mxu0
    %12864 = vmatprep.subr.bf16.mxu0 0
    %12865 = vmatpush1.bf16.msra.mxu0 %v12508
    %12866 = vmatprep.subr.bf16.mxu0 0
    %12867 = vmatpush1.bf16.msra.mxu0 %v12509
    %12868 = vmatprep.subr.bf16.mxu0 0
    %12869 = vmatpush1.bf16.msra.mxu0 %v12510
    %12870 = vmatprep.subr.bf16.mxu0 0
    %12871 = vmatpush1.bf16.msra.mxu0 %v12511
    %12872 = vmatprep.subr.bf16.mxu0 0
    %12873 = vmatpush1.bf16.msra.mxu0 %v12512
    %12874 = vmatprep.subr.bf16.mxu0 0
    %12875 = vmatpush1.bf16.msra.mxu0 %v12513
    %12876 = vmatprep.subr.bf16.mxu0 0
    %12877 = vmatpush1.bf16.msra.mxu0 %v12514
    %12878 = vmatprep.subr.bf16.mxu0 0
    %12879 = vmatpush1.bf16.msra.mxu0 %v12515
    %12880 = vmatprep.subr.bf16.mxu0 0
    %12881 = vmatpush1.bf16.msra.mxu0 %v12516
    %12882 = vmatprep.subr.bf16.mxu0 0
    %12883 = vmatpush1.bf16.msra.mxu0 %v12517
    %12884 = vmatprep.subr.bf16.mxu0 0
    %12885 = vmatpush1.bf16.msra.mxu0 %v12518
    %12886 = vmatprep.subr.bf16.mxu0 0
    %12887 = vmatpush1.bf16.msra.mxu0 %v12519
    %12888 = vmatprep.subr.bf16.mxu0 0
    %12889 = vmatpush1.bf16.msra.mxu0 %v12520
    %12890 = vmatprep.subr.bf16.mxu0 0
    %12891 = vmatpush1.bf16.msra.mxu0 %v12521
    %12892 = vmatprep.subr.bf16.mxu0 0
    %12893 = vmatpush1.bf16.msra.mxu0 %v12522
    %12894 = vmatprep.subr.bf16.mxu0 0
    %12895 = vmatpush1.bf16.msra.mxu0 %v12523
    %12896 = vmatprep.mubr.bf16.mxu0 %v11664
    %12897 = vmatmul.mubr.bf16.gmra.mrb[0].mxu0 %v11663
    %v12898 = vpop.f32.mrb[0].mxu0
    %v12899 = vadd.f32 %v12858, %v12898
    %v12900 = vpop.f32.mrb[0].mxu0
    %v12901 = vpop.f32.mrb[0].mxu0
    %v12902 = vadd.f32 %v12861, %v12901
    %v12903 = vpop.f32.mrb[0].mxu0
    %12904 = vdwg.mxu0
    %12905 = vmatprep.subr.bf16.mxu0 0
    %12906 = vmatpush1.bf16.msra.mxu0 %v12524
    %12907 = vmatprep.subr.bf16.mxu0 0
    %12908 = vmatpush1.bf16.msra.mxu0 %v12525
    %12909 = vmatprep.subr.bf16.mxu0 0
    %12910 = vmatpush1.bf16.msra.mxu0 %v12526
    %12911 = vmatprep.subr.bf16.mxu0 0
    %12912 = vmatpush1.bf16.msra.mxu0 %v12527
    %12913 = vmatprep.subr.bf16.mxu0 0
    %12914 = vmatpush1.bf16.msra.mxu0 %v12528
    %12915 = vmatprep.subr.bf16.mxu0 0
    %12916 = vmatpush1.bf16.msra.mxu0 %v12529
    %12917 = vmatprep.subr.bf16.mxu0 0
    %12918 = vmatpush1.bf16.msra.mxu0 %v12530
    %12919 = vmatprep.subr.bf16.mxu0 0
    %12920 = vmatpush1.bf16.msra.mxu0 %v12531
    %12921 = vmatprep.subr.bf16.mxu0 0
    %12922 = vmatpush1.bf16.msra.mxu0 %v12532
    %12923 = vmatprep.subr.bf16.mxu0 0
    %12924 = vmatpush1.bf16.msra.mxu0 %v12533
    %12925 = vmatprep.subr.bf16.mxu0 0
    %12926 = vmatpush1.bf16.msra.mxu0 %v12534
    %12927 = vmatprep.subr.bf16.mxu0 0
    %12928 = vmatpush1.bf16.msra.mxu0 %v12535
    %12929 = vmatprep.subr.bf16.mxu0 0
    %12930 = vmatpush1.bf16.msra.mxu0 %v12536
    %12931 = vmatprep.subr.bf16.mxu0 0
    %12932 = vmatpush1.bf16.msra.mxu0 %v12537
    %12933 = vmatprep.subr.bf16.mxu0 0
    %12934 = vmatpush1.bf16.msra.mxu0 %v12538
    %12935 = vmatprep.subr.bf16.mxu0 0
    %12936 = vmatpush1.bf16.msra.mxu0 %v12539
    %12937 = vmatprep.mubr.bf16.mxu0 %v11666
    %12938 = vmatmul.mubr.bf16.gmra.mrb[0].mxu0 %v11665
    %v12939 = vpop.f32.mrb[0].mxu0
    %v12940 = vadd.f32 %v12899, %v12939
    %v12941 = vpop.f32.mrb[0].mxu0
    %v12942 = vpop.f32.mrb[0].mxu0
    %v12943 = vadd.f32 %v12902, %v12942
    %v12944 = vpop.f32.mrb[0].mxu0
    %12945 = vdwg.mxu0
    %12946 = vmatprep.subr.bf16.mxu0 0
    %12947 = vmatpush1.bf16.msra.mxu0 %v12540
    %12948 = vmatprep.subr.bf16.mxu0 0
    %12949 = vmatpush1.bf16.msra.mxu0 %v12541
    %12950 = vmatprep.subr.bf16.mxu0 0
    %12951 = vmatpush1.bf16.msra.mxu0 %v12542
    %12952 = vmatprep.subr.bf16.mxu0 0
    %12953 = vmatpush1.bf16.msra.mxu0 %v12543
    %12954 = vmatprep.subr.bf16.mxu0 0
    %12955 = vmatpush1.bf16.msra.mxu0 %v12544
    %12956 = vmatprep.subr.bf16.mxu0 0
    %12957 = vmatpush1.bf16.msra.mxu0 %v12545
    %12958 = vmatprep.subr.bf16.mxu0 0
    %12959 = vmatpush1.bf16.msra.mxu0 %v12546
    %12960 = vmatprep.subr.bf16.mxu0 0
    %12961 = vmatpush1.bf16.msra.mxu0 %v12547
    %12962 = vmatprep.subr.bf16.mxu0 0
    %12963 = vmatpush1.bf16.msra.mxu0 %v12548
    %12964 = vmatprep.subr.bf16.mxu0 0
    %12965 = vmatpush1.bf16.msra.mxu0 %v12549
    %12966 = vmatprep.subr.bf16.mxu0 0
    %12967 = vmatpush1.bf16.msra.mxu0 %v12550
    %12968 = vmatprep.subr.bf16.mxu0 0
    %12969 = vmatpush1.bf16.msra.mxu0 %v12551
    %12970 = vmatprep.subr.bf16.mxu0 0
    %12971 = vmatpush1.bf16.msra.mxu0 %v12552
    %12972 = vmatprep.subr.bf16.mxu0 0
    %12973 = vmatpush1.bf16.msra.mxu0 %v12553
    %12974 = vmatprep.subr.bf16.mxu0 0
    %12975 = vmatpush1.bf16.msra.mxu0 %v12554
    %12976 = vmatprep.subr.bf16.mxu0 0
    %12977 = vmatpush1.bf16.msra.mxu0 %v12555
    %12978 = vmatprep.mubr.bf16.mxu0 %v11668
    %12979 = vmatmul.mubr.bf16.gmra.mrb[0].mxu0 %v11667
    %v12980 = vpop.f32.mrb[0].mxu0
    %v12981 = vadd.f32 %v12940, %v12980
    %v12982 = vpop.f32.mrb[0].mxu0
    %v12983 = vpop.f32.mrb[0].mxu0
    %v12984 = vadd.f32 %v12943, %v12983
    %v12985 = vpop.f32.mrb[0].mxu0
    %12986 = vdwg.mxu0
    %12987 = vmatprep.subr.bf16.mxu0 0
    %12988 = vmatpush1.bf16.msra.mxu0 %v12556
    %12989 = vmatprep.subr.bf16.mxu0 0
    %12990 = vmatpush1.bf16.msra.mxu0 %v12557
    %12991 = vmatprep.subr.bf16.mxu0 0
    %12992 = vmatpush1.bf16.msra.mxu0 %v12558
    %12993 = vmatprep.subr.bf16.mxu0 0
    %12994 = vmatpush1.bf16.msra.mxu0 %v12559
    %12995 = vmatprep.subr.bf16.mxu0 0
    %12996 = vmatpush1.bf16.msra.mxu0 %v12560
    %12997 = vmatprep.subr.bf16.mxu0 0
    %12998 = vmatpush1.bf16.msra.mxu0 %v12561
    %12999 = vmatprep.subr.bf16.mxu0 0
    %13000 = vmatpush1.bf16.msra.mxu0 %v12562
    %13001 = vmatprep.subr.bf16.mxu0 0
    %13002 = vmatpush1.bf16.msra.mxu0 %v12563
    %13003 = vmatprep.subr.bf16.mxu0 0
    %13004 = vmatpush1.bf16.msra.mxu0 %v12564
    %13005 = vmatprep.subr.bf16.mxu0 0
    %13006 = vmatpush1.bf16.msra.mxu0 %v12565
    %13007 = vmatprep.subr.bf16.mxu0 0
    %13008 = vmatpush1.bf16.msra.mxu0 %v12566
    %13009 = vmatprep.subr.bf16.mxu0 0
    %13010 = vmatpush1.bf16.msra.mxu0 %v12567
    %13011 = vmatprep.subr.bf16.mxu0 0
    %13012 = vmatpush1.bf16.msra.mxu0 %v12568
    %13013 = vmatprep.subr.bf16.mxu0 0
    %13014 = vmatpush1.bf16.msra.mxu0 %v12569
    %13015 = vmatprep.subr.bf16.mxu0 0
    %13016 = vmatpush1.bf16.msra.mxu0 %v12570
    %13017 = vmatprep.subr.bf16.mxu0 0
    %13018 = vmatpush1.bf16.msra.mxu0 %v12571
    %13019 = vmatprep.mubr.bf16.mxu0 %v11670
    %13020 = vmatmul.mubr.bf16.gmra.mrb[0].mxu0 %v11669
    %v13021 = vpop.f32.mrb[0].mxu0
    %v13022 = vadd.f32 %v12981, %v13021
    %v13023 = vpop.f32.mrb[0].mxu0
    %v13024 = vpop.f32.mrb[0].mxu0
    %v13025 = vadd.f32 %v12984, %v13024
    %v13026 = vpop.f32.mrb[0].mxu0
    %13027 = vdwg.mxu0
    %v13030 = vcombine.high %v13022, %v13022
    %v13032 = vunpack.c.l.s4 1983009808
    %v13033 = vunpack.c.0.s8 %v13032
    %v13034 = vlaneseq
    %v13035 = vshrl.u32 %v13034, 7
    %v13036 = vsub.s32 %v13033, %v13035
    %v13037 = vrot.slane %v13022, %v13036
    %v13039 = vunpack.c.l.s4 1983009808
    %v13040 = vunpack.c.0.s8 %v13039
    %v13041 = vlaneseq
    %v13042 = vshrl.u32 %v13041, 7
    %v13043 = vsub.s32 %v13040, %v13042
    %v13044 = vrot.slane %v13030, %v13043
    %v13045 = vcombine.high %v13037, %v13037
    %v13046 = vcombine.high %v13044, %v13044
    %v13047 = vcombine.high %v13025, %v13025
    %v13049 = vunpack.c.l.s4 1983009808
    %v13050 = vunpack.c.0.s8 %v13049
    %v13051 = vlaneseq
    %v13052 = vshrl.u32 %v13051, 7
    %v13053 = vsub.s32 %v13050, %v13052
    %v13054 = vrot.slane %v13025, %v13053
    %v13056 = vunpack.c.l.s4 1983009808
    %v13057 = vunpack.c.0.s8 %v13056
    %v13058 = vlaneseq
    %v13059 = vshrl.u32 %v13058, 7
    %v13060 = vsub.s32 %v13057, %v13059
    %v13061 = vrot.slane %v13047, %v13060
    %v13062 = vcombine.high %v13054, %v13054
    %v13063 = vcombine.high %v13061, %v13061
    %v13072 = vadd.f32 %v11009, %v13037
    %v13073 = vadd.f32 %v11010, %v13045
    %v13074 = vadd.f32 %v11011, %v13044
    %v13075 = vadd.f32 %v11012, %v13046
    %v13076 = vadd.f32 %v11013, %v13054
    %v13077 = vadd.f32 %v11014, %v13062
    %v13078 = vadd.f32 %v11015, %v13061
    %v13079 = vadd.f32 %v11016, %v13063
    %v13088 = vcombine.low %v13072, %v13073
    %v13089 = vcombine.low %v13074, %v13075
    %v13091 = vunpack.c.l.s4 1983009808
    %v13092 = vunpack.c.0.s8 %v13091
    %v13093 = vlaneseq
    %v13094 = vshrl.u32 %v13093, 7
    %v13095 = vsub.s32 %v13092, %v13094
    %v13096 = vrot.slane %v13088, %v13095
    %v13098 = vunpack.c.l.s4 1983009808
    %v13099 = vunpack.c.0.s8 %v13098
    %v13100 = vlaneseq
    %v13101 = vshrl.u32 %v13100, 7
    %v13102 = vsub.s32 %v13099, %v13101
    %v13103 = vrot.slane %v13089, %v13102
    %v13104 = vcombine.low %v13096, %v13103
    %v13105 = vcombine.low %v13076, %v13077
    %v13106 = vcombine.low %v13078, %v13079
    %v13108 = vunpack.c.l.s4 1983009808
    %v13109 = vunpack.c.0.s8 %v13108
    %v13110 = vlaneseq
    %v13111 = vshrl.u32 %v13110, 7
    %v13112 = vsub.s32 %v13109, %v13111
    %v13113 = vrot.slane %v13105, %v13112
    %v13115 = vunpack.c.l.s4 1983009808
    %v13116 = vunpack.c.0.s8 %v13115
    %v13117 = vlaneseq
    %v13118 = vshrl.u32 %v13117, 7
    %v13119 = vsub.s32 %v13116, %v13118
    %v13120 = vrot.slane %v13106, %v13119
    %v13121 = vcombine.low %v13113, %v13120
    %v13124 = vsel %vm207, %v13104, 0.0
    %13125 = vadd.xlane.f32.xlu0 %v13124
    %v13126 = vpop.xlane.xlu0 %13125
    %v13127 = vsel %vm207, %v13121, 0.0
    %13128 = vadd.xlane.f32.xlu0 %v13127
    %v13129 = vpop.xlane.xlu0 %13128
    %v13130 = vmul.f32 %v13126, %v1936
    %v13131 = vmul.f32 %v13129, %v1936
    %v13135 = vunpack.c.l.s4 269488144
    %v13136 = vunpack.c.0.s8 %v13135
    %v13137 = vlaneseq
    %v13138 = vshrl.u32 %v13137, 7
    %v13139 = vsub.s32 %v13136, %v13138
    %v13140 = vrot.slane %v13130, %v13139
    %v13142 = vunpack.c.l.s4 842150450
    %v13143 = vunpack.c.0.s8 %v13142
    %v13144 = vlaneseq
    %v13145 = vshrl.u32 %v13144, 7
    %v13146 = vsub.s32 %v13143, %v13145
    %v13147 = vrot.slane %v13130, %v13146
    %v13149 = vunpack.c.l.s4 1414812756
    %v13150 = vunpack.c.0.s8 %v13149
    %v13151 = vlaneseq
    %v13152 = vshrl.u32 %v13151, 7
    %v13153 = vsub.s32 %v13150, %v13152
    %v13154 = vrot.slane %v13130, %v13153
    %v13156 = vunpack.c.l.s4 1987475062
    %v13157 = vunpack.c.0.s8 %v13156
    %v13158 = vlaneseq
    %v13159 = vshrl.u32 %v13158, 7
    %v13160 = vsub.s32 %v13157, %v13159
    %v13161 = vrot.slane %v13130, %v13160
    %v13163 = vunpack.c.l.s4 269488144
    %v13164 = vunpack.c.0.s8 %v13163
    %v13165 = vlaneseq
    %v13166 = vshrl.u32 %v13165, 7
    %v13167 = vsub.s32 %v13164, %v13166
    %v13168 = vrot.slane %v13131, %v13167
    %v13170 = vunpack.c.l.s4 842150450
    %v13171 = vunpack.c.0.s8 %v13170
    %v13172 = vlaneseq
    %v13173 = vshrl.u32 %v13172, 7
    %v13174 = vsub.s32 %v13171, %v13173
    %v13175 = vrot.slane %v13131, %v13174
    %v13177 = vunpack.c.l.s4 1414812756
    %v13178 = vunpack.c.0.s8 %v13177
    %v13179 = vlaneseq
    %v13180 = vshrl.u32 %v13179, 7
    %v13181 = vsub.s32 %v13178, %v13180
    %v13182 = vrot.slane %v13131, %v13181
    %v13184 = vunpack.c.l.s4 1987475062
    %v13185 = vunpack.c.0.s8 %v13184
    %v13186 = vlaneseq
    %v13187 = vshrl.u32 %v13186, 7
    %v13188 = vsub.s32 %v13185, %v13187
    %v13189 = vrot.slane %v13131, %v13188
    %v13198 = vsub.f32 %v13072, %v13140
    %v13199 = vsub.f32 %v13073, %v13147
    %v13200 = vsub.f32 %v13074, %v13154
    %v13201 = vsub.f32 %v13075, %v13161
    %v13202 = vsub.f32 %v13076, %v13168
    %v13203 = vsub.f32 %v13077, %v13175
    %v13204 = vsub.f32 %v13078, %v13182
    %v13205 = vsub.f32 %v13079, %v13189
    %v13206 = vmul.f32 %v13198, %v13198
    %v13207 = vmul.f32 %v13199, %v13199
    %v13208 = vmul.f32 %v13200, %v13200
    %v13209 = vmul.f32 %v13201, %v13201
    %v13210 = vmul.f32 %v13202, %v13202
    %v13211 = vmul.f32 %v13203, %v13203
    %v13212 = vmul.f32 %v13204, %v13204
    %v13213 = vmul.f32 %v13205, %v13205
    %v13222 = vcombine.low %v13206, %v13207
    %v13223 = vcombine.low %v13208, %v13209
    %v13225 = vunpack.c.l.s4 1983009808
    %v13226 = vunpack.c.0.s8 %v13225
    %v13227 = vlaneseq
    %v13228 = vshrl.u32 %v13227, 7
    %v13229 = vsub.s32 %v13226, %v13228
    %v13230 = vrot.slane %v13222, %v13229
    %v13232 = vunpack.c.l.s4 1983009808
    %v13233 = vunpack.c.0.s8 %v13232
    %v13234 = vlaneseq
    %v13235 = vshrl.u32 %v13234, 7
    %v13236 = vsub.s32 %v13233, %v13235
    %v13237 = vrot.slane %v13223, %v13236
    %v13238 = vcombine.low %v13230, %v13237
    %v13239 = vcombine.low %v13210, %v13211
    %v13240 = vcombine.low %v13212, %v13213
    %v13242 = vunpack.c.l.s4 1983009808
    %v13243 = vunpack.c.0.s8 %v13242
    %v13244 = vlaneseq
    %v13245 = vshrl.u32 %v13244, 7
    %v13246 = vsub.s32 %v13243, %v13245
    %v13247 = vrot.slane %v13239, %v13246
    %v13249 = vunpack.c.l.s4 1983009808
    %v13250 = vunpack.c.0.s8 %v13249
    %v13251 = vlaneseq
    %v13252 = vshrl.u32 %v13251, 7
    %v13253 = vsub.s32 %v13250, %v13252
    %v13254 = vrot.slane %v13240, %v13253
    %v13255 = vcombine.low %v13247, %v13254
    %v13258 = vsel %vm207, %v13238, 0.0
    %13259 = vadd.xlane.f32.xlu0 %v13258
    %v13260 = vpop.xlane.xlu0 %13259
    %v13261 = vsel %vm207, %v13255, 0.0
    %13262 = vadd.xlane.f32.xlu0 %v13261
    %v13263 = vpop.xlane.xlu0 %13262
    %v13264 = vmul.f32 %v13260, %v1936
    %v13265 = vmul.f32 %v13263, %v1936
    %v13266 = vadd.f32 %v13264, 1e-05
    %v13267 = vadd.f32 %v13265, 1e-05
    %v13268 = vrsqrt.pop %v13266
    %v13269 = vrsqrt.pop %v13267
    %v13273 = vunpack.c.l.s4 269488144
    %v13274 = vunpack.c.0.s8 %v13273
    %v13275 = vlaneseq
    %v13276 = vshrl.u32 %v13275, 7
    %v13277 = vsub.s32 %v13274, %v13276
    %v13278 = vrot.slane %v13268, %v13277
    %v13280 = vunpack.c.l.s4 842150450
    %v13281 = vunpack.c.0.s8 %v13280
    %v13282 = vlaneseq
    %v13283 = vshrl.u32 %v13282, 7
    %v13284 = vsub.s32 %v13281, %v13283
    %v13285 = vrot.slane %v13268, %v13284
    %v13287 = vunpack.c.l.s4 1414812756
    %v13288 = vunpack.c.0.s8 %v13287
    %v13289 = vlaneseq
    %v13290 = vshrl.u32 %v13289, 7
    %v13291 = vsub.s32 %v13288, %v13290
    %v13292 = vrot.slane %v13268, %v13291
    %v13294 = vunpack.c.l.s4 1987475062
    %v13295 = vunpack.c.0.s8 %v13294
    %v13296 = vlaneseq
    %v13297 = vshrl.u32 %v13296, 7
    %v13298 = vsub.s32 %v13295, %v13297
    %v13299 = vrot.slane %v13268, %v13298
    %v13301 = vunpack.c.l.s4 269488144
    %v13302 = vunpack.c.0.s8 %v13301
    %v13303 = vlaneseq
    %v13304 = vshrl.u32 %v13303, 7
    %v13305 = vsub.s32 %v13302, %v13304
    %v13306 = vrot.slane %v13269, %v13305
    %v13308 = vunpack.c.l.s4 842150450
    %v13309 = vunpack.c.0.s8 %v13308
    %v13310 = vlaneseq
    %v13311 = vshrl.u32 %v13310, 7
    %v13312 = vsub.s32 %v13309, %v13311
    %v13313 = vrot.slane %v13269, %v13312
    %v13315 = vunpack.c.l.s4 1414812756
    %v13316 = vunpack.c.0.s8 %v13315
    %v13317 = vlaneseq
    %v13318 = vshrl.u32 %v13317, 7
    %v13319 = vsub.s32 %v13316, %v13318
    %v13320 = vrot.slane %v13269, %v13319
    %v13322 = vunpack.c.l.s4 1987475062
    %v13323 = vunpack.c.0.s8 %v13322
    %v13324 = vlaneseq
    %v13325 = vshrl.u32 %v13324, 7
    %v13326 = vsub.s32 %v13323, %v13325
    %v13327 = vrot.slane %v13269, %v13326
    %v13336 = vmul.f32 %v13198, %v13278
    %v13337 = vmul.f32 %v13199, %v13285
    %v13338 = vmul.f32 %v13200, %v13292
    %v13339 = vmul.f32 %v13201, %v13299
    %v13340 = vmul.f32 %v13202, %v13306
    %v13341 = vmul.f32 %v13203, %v13313
    %v13342 = vmul.f32 %v13204, %v13320
    %v13343 = vmul.f32 %v13205, %v13327
    %v13344 = vlaneseq
    %v13345 = vshrl.u32 %v13344, 7
    %v13346 = vsub.s32 7, %v13345
    %v13347 = vrot.slane %v9013, %v13346
    %v13349 = vcombine.high %v13347, %v13347
    %v13351 = vunpack.c.l.s4 1983009808
    %v13352 = vunpack.c.0.s8 %v13351
    %v13353 = vlaneseq
    %v13354 = vshrl.u32 %v13353, 7
    %v13355 = vsub.s32 %v13352, %v13354
    %v13356 = vrot.slane %v13347, %v13355
    %v13358 = vunpack.c.l.s4 1983009808
    %v13359 = vunpack.c.0.s8 %v13358
    %v13360 = vlaneseq
    %v13361 = vshrl.u32 %v13360, 7
    %v13362 = vsub.s32 %v13359, %v13361
    %v13363 = vrot.slane %v13349, %v13362
    %v13364 = vcombine.high %v13356, %v13356
    %v13365 = vcombine.high %v13363, %v13363
    %v13370 = vmul.f32 %v13336, %v13356
    %v13371 = vmul.f32 %v13337, %v13364
    %v13372 = vmul.f32 %v13338, %v13363
    %v13373 = vmul.f32 %v13339, %v13365
    %v13374 = vmul.f32 %v13340, %v13356
    %v13375 = vmul.f32 %v13341, %v13364
    %v13376 = vmul.f32 %v13342, %v13363
    %v13377 = vmul.f32 %v13343, %v13365
    %v13378 = vlaneseq
    %v13379 = vshrl.u32 %v13378, 7
    %v13380 = vsub.s32 0, %v13379
    %v13381 = vrot.slane %v9014, %v13380
    %v13383 = vcombine.high %v13381, %v13381
    %v13385 = vunpack.c.l.s4 1983009808
    %v13386 = vunpack.c.0.s8 %v13385
    %v13387 = vlaneseq
    %v13388 = vshrl.u32 %v13387, 7
    %v13389 = vsub.s32 %v13386, %v13388
    %v13390 = vrot.slane %v13381, %v13389
    %v13392 = vunpack.c.l.s4 1983009808
    %v13393 = vunpack.c.0.s8 %v13392
    %v13394 = vlaneseq
    %v13395 = vshrl.u32 %v13394, 7
    %v13396 = vsub.s32 %v13393, %v13395
    %v13397 = vrot.slane %v13383, %v13396
    %v13398 = vcombine.high %v13390, %v13390
    %v13399 = vcombine.high %v13397, %v13397
    %v13404 = vadd.f32 %v13370, %v13390
    %v13405 = vadd.f32 %v13371, %v13398
    %v13406 = vadd.f32 %v13372, %v13397
    %v13407 = vadd.f32 %v13373, %v13399
    %v13408 = vadd.f32 %v13374, %v13390
    %v13409 = vadd.f32 %v13375, %v13398
    %v13410 = vadd.f32 %v13376, %v13397
    %v13411 = vadd.f32 %v13377, %v13399
    %v13412 = vlaneseq
    %v13413 = vshrl.u32 %v13412, 7
    %v13414 = vsub.s32 2, %v13413
    %v13415 = vrot.slane %v160, %v13414
    %v13424 = vcombine.low %v13404, %v13405
    %v13425 = vcombine.low %v13406, %v13407
    %v13427 = vunpack.c.l.s4 1983009808
    %v13428 = vunpack.c.0.s8 %v13427
    %v13429 = vlaneseq
    %v13430 = vshrl.u32 %v13429, 7
    %v13431 = vsub.s32 %v13428, %v13430
    %v13432 = vrot.slane %v13424, %v13431
    %v13434 = vunpack.c.l.s4 1983009808
    %v13435 = vunpack.c.0.s8 %v13434
    %v13436 = vlaneseq
    %v13437 = vshrl.u32 %v13436, 7
    %v13438 = vsub.s32 %v13435, %v13437
    %v13439 = vrot.slane %v13425, %v13438
    %v13440 = vcombine.low %v13432, %v13439
    %v13441 = vcombine.low %v13408, %v13409
    %v13442 = vcombine.low %v13410, %v13411
    %v13444 = vunpack.c.l.s4 1983009808
    %v13445 = vunpack.c.0.s8 %v13444
    %v13446 = vlaneseq
    %v13447 = vshrl.u32 %v13446, 7
    %v13448 = vsub.s32 %v13445, %v13447
    %v13449 = vrot.slane %v13441, %v13448
    %v13451 = vunpack.c.l.s4 1983009808
    %v13452 = vunpack.c.0.s8 %v13451
    %v13453 = vlaneseq
    %v13454 = vshrl.u32 %v13453, 7
    %v13455 = vsub.s32 %v13452, %v13454
    %v13456 = vrot.slane %v13442, %v13455
    %v13457 = vcombine.low %v13449, %v13456
    %v13458 = vsel %vm207, %v13440, 0
    %v13460 = vsel %vm207, %v13457, 0
    %v13463 = vsel %vm212, %v160, 0
    %13465 = vmatprep.subr.mxu0 0.0
    %13466 = vmatpush1.msra.mxu0 %v159
    %13467 = vmatprep.subr.mxu0 0.0
    %13468 = vmatpush1.msra.mxu0 %v13463
    %13469 = vmatprep.subr.mxu0 0.0
    %13470 = vmatpush1.msra.mxu0 0.0
    %13471 = vmatprep.subr.mxu0 0.0
    %13472 = vmatpush1.msra.mxu0 0.0
    %13473 = vmatprep.subr.mxu0 0.0
    %13474 = vmatpush1.msra.mxu0 0.0
    %13475 = vmatprep.subr.mxu0 0.0
    %13476 = vmatpush1.msra.mxu0 0.0
    %13477 = vmatprep.subr.mxu0 0.0
    %13478 = vmatpush1.msra.mxu0 0.0
    %13479 = vmatprep.subr.mxu0 0.0
    %13480 = vmatpush1.msra.mxu0 0.0
    %13481 = vmatprep.subr.mxu0 0.0
    %13482 = vmatpush1.msra.mxu0 0.0
    %13483 = vmatprep.subr.mxu0 0.0
    %13484 = vmatpush1.msra.mxu0 0.0
    %13485 = vmatprep.subr.mxu0 0.0
    %13486 = vmatpush1.msra.mxu0 0.0
    %13487 = vmatprep.subr.mxu0 0.0
    %13488 = vmatpush1.msra.mxu0 0.0
    %13489 = vmatprep.subr.mxu0 0.0
    %13490 = vmatpush1.msra.mxu0 0.0
    %13491 = vmatprep.subr.mxu0 0.0
    %13492 = vmatpush1.msra.mxu0 0.0
    %13493 = vmatprep.subr.mxu0 0.0
    %13494 = vmatpush1.msra.mxu0 0.0
    %13495 = vmatprep.subr.mxu0 0.0
    %13496 = vmatpush1.msra.mxu0 0.0
    %13497 = vmatprep.subr.mxu0 0.0
    %13498 = vmatpush1.msra.mxu0 0.0
    %13499 = vmatprep.subr.mxu0 0.0
    %13500 = vmatpush1.msra.mxu0 0.0
    %13501 = vmatprep.subr.mxu0 0.0
    %13502 = vmatpush1.msra.mxu0 0.0
    %13503 = vmatprep.subr.mxu0 0.0
    %13504 = vmatpush1.msra.mxu0 0.0
    %13505 = vmatprep.subr.mxu0 0.0
    %13506 = vmatpush1.msra.mxu0 0.0
    %13507 = vmatprep.subr.mxu0 0.0
    %13508 = vmatpush1.msra.mxu0 0.0
    %13509 = vmatprep.subr.mxu0 0.0
    %13510 = vmatpush1.msra.mxu0 0.0
    %13511 = vmatprep.subr.mxu0 0.0
    %13512 = vmatpush1.msra.mxu0 0.0
    %13513 = vmatprep.subr.mxu0 0.0
    %13514 = vmatpush1.msra.mxu0 0.0
    %13515 = vmatprep.subr.mxu0 0.0
    %13516 = vmatpush1.msra.mxu0 0.0
    %13517 = vmatprep.subr.mxu0 0.0
    %13518 = vmatpush1.msra.mxu0 0.0
    %13519 = vmatprep.subr.mxu0 0.0
    %13520 = vmatpush1.msra.mxu0 0.0
    %13521 = vmatprep.subr.mxu0 0.0
    %13522 = vmatpush1.msra.mxu0 0.0
    %13523 = vmatprep.subr.mxu0 0.0
    %13524 = vmatpush1.msra.mxu0 0.0
    %13525 = vmatprep.subr.mxu0 0.0
    %13526 = vmatpush1.msra.mxu0 0.0
    %13527 = vmatprep.subr.mxu0 0.0
    %13528 = vmatpush1.msra.mxu0 0.0
    %13529 = vmatprep.mubr.f32.mxu0 0.0
    %13530 = vmatmul.mubr.f32.gmra.mrb[0].mxu0 %v13458
    %v13531 = vpop.f32.mrb[0].mxu0
    %v13532 = vadd.f32 %v13415, %v13531
    %v13533 = vpop.f32.mrb[0].mxu0
    %13534 = vmatprep.mubr.f32.mxu0 0.0
    %13535 = vmatmul.mubr.f32.gmra.mrb[0].mxu0 %v13460
    %v13536 = vpop.f32.mrb[0].mxu0
    %v13537 = vadd.f32 %v13415, %v13536
    %v13538 = vpop.f32.mrb[0].mxu0
    %13539 = vdwg.mxu0
    %v13542 = vcombine.high %v13532, %v13532
    %v13544 = vunpack.c.l.s4 1983009808
    %v13545 = vunpack.c.0.s8 %v13544
    %v13546 = vlaneseq
    %v13547 = vshrl.u32 %v13546, 7
    %v13548 = vsub.s32 %v13545, %v13547
    %v13549 = vrot.slane %v13532, %v13548
    %v13551 = vunpack.c.l.s4 1983009808
    %v13552 = vunpack.c.0.s8 %v13551
    %v13553 = vlaneseq
    %v13554 = vshrl.u32 %v13553, 7
    %v13555 = vsub.s32 %v13552, %v13554
    %v13556 = vrot.slane %v13542, %v13555
    %v13557 = vcombine.high %v13549, %v13549
    %v13558 = vcombine.high %v13556, %v13556
    %v13559 = vcombine.high %v13537, %v13537
    %v13561 = vunpack.c.l.s4 1983009808
    %v13562 = vunpack.c.0.s8 %v13561
    %v13563 = vlaneseq
    %v13564 = vshrl.u32 %v13563, 7
    %v13565 = vsub.s32 %v13562, %v13564
    %v13566 = vrot.slane %v13537, %v13565
    %v13568 = vunpack.c.l.s4 1983009808
    %v13569 = vunpack.c.0.s8 %v13568
    %v13570 = vlaneseq
    %v13571 = vshrl.u32 %v13570, 7
    %v13572 = vsub.s32 %v13569, %v13571
    %v13573 = vrot.slane %v13559, %v13572
    %v13574 = vcombine.high %v13566, %v13566
    %v13575 = vcombine.high %v13573, %v13573
    %vm13584 = vcmask 74752
    %13585 = vst.msk [vmem:[#allocation2] sm:$0x3] %vm13584, %v13549
    %13586 = vst.msk [vmem:[#allocation2 + $0x2] sm:$0x3] %vm13584, %v13557
    %13587 = vst.msk [vmem:[#allocation2 + $0x4] sm:$0x3] %vm13584, %v13556
    %13588 = vst.msk [vmem:[#allocation2 + $0x6] sm:$0x3] %vm13584, %v13558
    %13589 = vst.msk [vmem:[#allocation2 + $0x8] sm:$0x3] %vm13584, %v13566
    %13590 = vst.msk [vmem:[#allocation2 + $0xa] sm:$0x3] %vm13584, %v13574
    %13591 = vst.msk [vmem:[#allocation2 + $0xc] sm:$0x3] %vm13584, %v13573
    %13592 = vst.msk [vmem:[#allocation2 + $0xe] sm:$0x3] %vm13584, %v13575
    // Predicated region
    $region34: #{_transam_forward.1} parent=1 // pred_check
      _
    $region35: #{_transam_forward.1} parent=1 // pred_check_branch
      %13594 = sbr.rel (0) target = $region37
    $region36: #{_transam_forward.1} parent=1 // pred_region
      %s13596 = ssub.s32 256, 256
      %13597 = vsyncadd [#allocation3], %s13596
      %s13598 = sshll.u32 [#allocation2], 4
      %s13599 = int_to_ptr.vmem [resolvable:$true] %s13598
      %13604 = dma.vmem_to_hbm [thread:$0]  %s13599, 256, %s8, [#allocation3], 32, 32, 2
    $region37: #{_transam_forward.1} parent=1 // pred_fallthru
      _
    // Predicated region
    $region38: #{_transam_forward.1} parent=1 // pred_check
      _
    $region39: #{_transam_forward.1} parent=1 // pred_check_branch
      %13606 = sbr.rel (0) target = $region41
    $region40: #{_transam_forward.1} parent=1 // pred_region
      %13607 = dma.done [#allocation3], 256
    $region41: #{_transam_forward.1} parent=1 // pred_fallthru
      _
    %13608 = vsyncpa [#allocation3], 1

</llo_original>
